<compile_context>
chip_gen: v7x
topology: tpu7x:2x2x1
jax: 0.10.0
libtpu: 0.0.40
codegen_flags: <defaults>
</compile_context>

<pallas_src>
import numpy as np
import jax
import jax.numpy as jnp
from jax.experimental import pallas as pl
from jax.experimental.pallas import tpu as pltpu

# ---------------- synthetic CriticConfig (shapes only; deterministic init) ----------------
OBS_DIM, ACTION_DIM, REWARD_DIM = 16, 4, 3
EMBED_FEATURES = (32, 32)                       # hypernet_cfg.layer_features ('mlp' embedding, relu)
HEAD_HIDDEN_DIM = 32                            # hypernet_cfg.head_hidden_dim
LAYER_DIMS = (32, 32)                           # cfg.layer_dims (target-net hidden widths)
HYPERNET_INPUTS = ("obs", "prefs")              # cfg.hypernet_inputs
TARGET_NET_INPUTS = ("obs", "action", "prefs")  # cfg.target_net_inputs

HYPER_IN_DIM = OBS_DIM + REWARD_DIM
TARGET_IN_DIM = OBS_DIM + ACTION_DIM + REWARD_DIM
TARGET_IN_DIMS = (TARGET_IN_DIM,) + LAYER_DIMS
TARGET_OUT_DIMS = LAYER_DIMS + (REWARD_DIM,)
N_LAYERS = len(TARGET_OUT_DIMS)
# torch: self._activation_mask = np.arange(n_layers + 1) < n_layers  -> relu on all but last layer
ACTIVATION_MASK = np.arange(N_LAYERS) < (N_LAYERS - 1)

_HP = jax.lax.Precision.HIGHEST
_DP = jax.lax.Precision.DEFAULT


def _round_up(n, m):
    return ((n + m - 1) // m) * m


# ---------------- lane-aligned packed layouts (all offsets multiples of 128) ----------------
PACK_W = 128                                    # packed input width: [obs | action | prefs | 0]
OBS_OFF, ACT_OFF, PREF_OFF = 0, OBS_DIM, OBS_DIM + ACTION_DIM
OUT_PAD = 128                                   # lane-dense output width (cols >= 3 are zero)

SEG_PAD = 128                                   # bias / scale segments padded to 128 lanes
W_PAD = tuple(_round_up(TARGET_OUT_DIMS[l] * TARGET_IN_DIMS[l], 128) for l in range(N_LAYERS))
GEN_OFFSETS = []                                # per-layer (w_off, b_off, s_off), all 128-aligned
_off = 0
for _l in range(N_LAYERS):
    GEN_OFFSETS.append((_off, _off + W_PAD[_l], _off + W_PAD[_l] + SEG_PAD))
    _off += W_PAD[_l] + 2 * SEG_PAD
GEN_WIDTH = _off                                # 2688 (vs 1990 unpadded)

# output width of each layer's segmented reduce (last layer produced lane-dense at 128)
G_OUT_W = tuple(TARGET_OUT_DIMS[l] if l < N_LAYERS - 1 else OUT_PAD for l in range(N_LAYERS))


def _segment_sum_matrix(i_dim, o_dim, w_pad, out_w):
    """G with G[o*i_dim + i, o] = 1 : prod @ G sums each length-i_dim segment (reduce over i).

    Rows >= o_dim*i_dim (lane padding of w_flat) and cols >= o_dim (lane padding of the
    output) are zero.
    """
    g = np.zeros((w_pad, out_w), np.float32)
    for o in range(o_dim):
        g[o * i_dim + np.arange(i_dim), o] = 1.0
    return jnp.asarray(g)


G_MATS = tuple(
    _segment_sum_matrix(TARGET_IN_DIMS[l], TARGET_OUT_DIMS[l], W_PAD[l], G_OUT_W[l])
    for l in range(N_LAYERS))


def _replicate_lanes(x, reps):
    """Replicate x `reps` times along the lane axis via log-depth concatenation (no MXU)."""
    pieces, cur, r = [], x, reps
    while r:
        if r & 1:
            pieces.append(cur)
        r >>= 1
        if r:
            cur = jnp.concatenate([cur, cur], axis=1)
    return pieces[0] if len(pieces) == 1 else jnp.concatenate(pieces, axis=1)


# ---------------- fused Pallas kernel ----------------
def _fused_kernel(*refs):
    """Hypernet (embedding MLP + HeadNet) + dynamic target network, all in VMEM.

    refs = (packed_in,
            e1_w_packed, e1_b, e2_w, e2_b, head_hidden_w, head_hidden_b,
            head_w_all, head_b_all,
            G_0, ..., G_{L-1},
            out)
    """
    pin_ref = refs[0]
    e1w, e1b, e2w, e2b, hw, hb, hww, hwb = refs[1:9]
    g_refs = refs[9:9 + N_LAYERS]
    o_ref = refs[9 + N_LAYERS]
    f32 = jnp.float32

    pin = pin_ref[...]                                 # (TB, 128) = [obs | action | prefs | 0]

    # ---- embedding MLP (relu) + HeadNet shared hidden layer ----
    # hypernet input selection (obs, prefs) is folded into the zero-row-padded e1_w.
    z = jnp.maximum(
        jnp.dot(pin, e1w[...], precision=_HP, preferred_element_type=f32) + e1b[...], 0.0)
    z = jnp.maximum(
        jnp.dot(z, e2w[...], precision=_HP, preferred_element_type=f32) + e2b[...], 0.0)
    h = jnp.maximum(
        jnp.dot(z, hw[...], precision=_HP, preferred_element_type=f32) + hb[...], 0.0)

    # ---- ALL weight/bias/scale generator heads in one lane-dense MXU matmul ----
    # Dominant MXU consumer -> DEFAULT precision (single-pass bf16 emulation).
    gen = jnp.dot(h, hww[...], precision=_DP, preferred_element_type=f32) + hwb[...]  # (TB, 2688)

    # ---- dynamic target network; generated params never leave VMEM ----
    x = pin[:, :TARGET_IN_DIM]                          # (TB, 23): obs|action|prefs order
    for l in range(N_LAYERS):
        o, i = TARGET_OUT_DIMS[l], TARGET_IN_DIMS[l]
        w_off, b_off, s_off = GEN_OFFSETS[l]
        w_pad, out_w = W_PAD[l], G_OUT_W[l]
        w_flat = gen[:, w_off:w_off + w_pad]            # 128-aligned slice, (TB, w_pad)
        b = gen[:, b_off:b_off + out_w]                 # (TB, o) / (TB, 128) for last layer
        s = gen[:, s_off:s_off + out_w]
        # replicate x into the flat o-major/i-minor layout (lane concat, no MXU)
        x_rep = _replicate_lanes(x, o)                  # (TB, o*i)
        if w_pad > o * i:                               # lane padding (matches zero head cols)
            x_rep = jnp.concatenate(
                [x_rep, jnp.zeros((x_rep.shape[0], w_pad - o * i), f32)], axis=1)
        prod = w_flat * x_rep                           # VPU
        # segmented reduce over i (0/1 matrix, HIGHEST -> exact)
        y = jnp.dot(prod, g_refs[l][...], precision=_HP, preferred_element_type=f32)
        y = y * s + b
        if ACTIVATION_MASK[l]:
            y = jnp.maximum(y, 0.0)
        x = y
    o_ref[...] = x                                      # (TB, 128); cols >= REWARD_DIM are zero


# ---------------- wrapper ----------------
def _choose_tb(batch, tb_max):
    """Batch tile: multiple of 8, bounded by tb_max, >= 2 tiles for large batches (megacore)."""
    tb_max = max(8, (int(tb_max) // 8) * 8)             # clamp to a multiple of 8
    b8 = _round_up(batch, 8)
    if b8 <= tb_max:
        tb = b8
        if tb >= 1024:                                   # split so both v7x TCs get work
            tb = _round_up((tb + 1) // 2, 8)
    else:
        tb = tb_max
    return tb


def hyper_critic_forward(packed, obs, action, prefs, tb_max=1024):
    """Fused HyperCritic forward: Q(s, a, w) of shape (B, reward_dim)."""
    B = obs.shape[0]
    # one lane-dense packed input: [obs | action | prefs | zeros] (128 cols)
    pin = jnp.concatenate(
        [obs, action, prefs, jnp.zeros((B, PACK_W - TARGET_IN_DIM), jnp.float32)], axis=1)

    TB = _choose_tb(B, tb_max)
    B_pad = _round_up(B, TB)
    if B_pad != B:
        pin = jnp.pad(pin, ((0, B_pad - B), (0, 0)))

    const_ins = [packed["e1_w"], packed["e1_b"], packed["e2_w"], packed["e2_b"],
                 packed["head_hidden_w"], packed["head_hidden_b"],
                 packed["head_w_all"], packed["head_b_all"], *G_MATS]

    in_specs = [pl.BlockSpec((TB, PACK_W), lambda i: (i, 0))]
    # static parameters: constant index_map -> VMEM-resident across grid steps (no re-DMA)
    in_specs += [pl.BlockSpec(a.shape, lambda i: (0, 0)) for a in const_ins]

    out = pl.pallas_call(
        _fused_kernel,
        grid=(B_pad // TB,),
        out_shape=jax.ShapeDtypeStruct((B_pad, OUT_PAD), jnp.float32),
        in_specs=in_specs,
        out_specs=pl.BlockSpec((TB, OUT_PAD), lambda i: (i, 0)),
        compiler_params=pltpu.CompilerParams(
            dimension_semantics=("parallel",),
            vmem_limit_bytes=48 * 1024 * 1024),
    )(pin, *const_ins)
    return out[:B, :REWARD_DIM]


# ---------------- deterministic parameter init + packing ----------------
def init_params(key):
    def dense(k, fan_in, fan_out):
        kw, kb = jax.random.split(k)
        bound = 1.0 / np.sqrt(fan_in)
        w = jax.random.uniform(kw, (fan_in, fan_out), jnp.float32, -bound, bound)
        b = jax.random.uniform(kb, (1, fan_out), jnp.float32, -bound, bound)
        return w, b

    params = {}
    keys = jax.random.split(key, 3 + 3 * N_LAYERS)
    params["e1_w"], params["e1_b"] = dense(keys[0], HYPER_IN_DIM, EMBED_FEATURES[0])
    params["e2_w"], params["e2_b"] = dense(keys[1], EMBED_FEATURES[0], EMBED_FEATURES[1])
    params["head_hidden_w"], params["head_hidden_b"] = dense(keys[2], EMBED_FEATURES[1], HEAD_HIDDEN_DIM)
    # TODO(synk): exact HeadNet init_method / init_stds are config-dependent; using a
    # deterministic uniform fan-in init for the weight/bias/scale generator heads.
    for l in range(N_LAYERS):
        o, i = TARGET_OUT_DIMS[l], TARGET_IN_DIMS[l]
        params[f"w_head_w_{l}"], params[f"w_head_b_{l}"] = dense(keys[3 + 3 * l], HEAD_HIDDEN_DIM, o * i)
        params[f"b_head_w_{l}"], params[f"b_head_b_{l}"] = dense(keys[4 + 3 * l], HEAD_HIDDEN_DIM, o)
        params[f"s_head_w_{l}"], params[f"s_head_b_{l}"] = dense(keys[5 + 3 * l], HEAD_HIDDEN_DIM, o)
    return params


def pack_params(params):
    """Build 128-lane-aligned packed parameters (done once, outside the kernel).

    head_w_all / head_b_all: all per-layer [w_flat | bias | scale] generator heads
    concatenated with zero-padding so every segment starts on a 128-lane boundary.
    e1_w: lifted into the 128-wide packed-input layout (zero rows select obs|prefs).
    """
    hww = np.zeros((HEAD_HIDDEN_DIM, GEN_WIDTH), np.float32)
    hwb = np.zeros((1, GEN_WIDTH), np.float32)
    for l in range(N_LAYERS):
        o, i = TARGET_OUT_DIMS[l], TARGET_IN_DIMS[l]
        w_off, b_off, s_off = GEN_OFFSETS[l]
        hww[:, w_off:w_off + o * i] = np.asarray(params[f"w_head_w_{l}"])
        hwb[:, w_off:w_off + o * i] = np.asarray(params[f"w_head_b_{l}"])
        hww[:, b_off:b_off + o] = np.asarray(params[f"b_head_w_{l}"])
        hwb[:, b_off:b_off + o] = np.asarray(params[f"b_head_b_{l}"])
        hww[:, s_off:s_off + o] = np.asarray(params[f"s_head_w_{l}"])
        hwb[:, s_off:s_off + o] = np.asarray(params[f"s_head_b_{l}"])

    e1w_packed = np.zeros((PACK_W, EMBED_FEATURES[0]), np.float32)
    e1 = np.asarray(params["e1_w"])                      # (19, 32) for (obs, prefs)
    e1w_packed[OBS_OFF:OBS_OFF + OBS_DIM] = e1[:OBS_DIM]
    e1w_packed[PREF_OFF:PREF_OFF + REWARD_DIM] = e1[OBS_DIM:]

    return {
        "e1_w": jnp.asarray(e1w_packed), "e1_b": params["e1_b"],
        "e2_w": params["e2_w"], "e2_b": params["e2_b"],
        "head_hidden_w": params["head_hidden_w"], "head_hidden_b": params["head_hidden_b"],
        "head_w_all": jnp.asarray(hww), "head_b_all": jnp.asarray(hwb),
    }


# ---------------- pure-JAX reference (full f32 precision) ----------------
def reference_forward(params, obs, action, prefs):
    feats = {"obs": obs, "action": action, "prefs": prefs}
    hin = jnp.concatenate([feats[k] for k in HYPERNET_INPUTS], axis=-1)
    x = jnp.concatenate([feats[k] for k in TARGET_NET_INPUTS], axis=-1)
    relu = jax.nn.relu
    z = relu(jnp.dot(hin, params["e1_w"], precision=_HP) + params["e1_b"])
    z = relu(jnp.dot(z, params["e2_w"], precision=_HP) + params["e2_b"])
    h = relu(jnp.dot(z, params["head_hidden_w"], precision=_HP) + params["head_hidden_b"])
    for l in range(N_LAYERS):
        o, i = TARGET_OUT_DIMS[l], TARGET_IN_DIMS[l]
        w = (jnp.dot(h, params[f"w_head_w_{l}"], precision=_HP) + params[f"w_head_b_{l}"]).reshape(-1, o, i)
        b = jnp.dot(h, params[f"b_head_w_{l}"], precision=_HP) + params[f"b_head_b_{l}"]
        s = jnp.dot(h, params[f"s_head_w_{l}"], precision=_HP) + params[f"s_head_b_{l}"]
        y = jnp.einsum("boi,bi->bo", w, x, precision=_HP) * s + b
        if ACTIVATION_MASK[l]:
            y = relu(y)
        x = y
    return x


if __name__ == "__main__":
    key = jax.random.PRNGKey(0)
    pkey, okey, akey, wkey = jax.random.split(key, 4)
    params = init_params(pkey)
    packed = pack_params(params)

    # kernel uses DEFAULT precision on the dominant gen matmul -> ~1e-3 abs deviation
    # from the full-f32 reference; validate at 1e-2.
    RTOL = ATOL = 1e-2

    # small-shape check (B=2, single tile)
    B = 2
    obs = jax.random.normal(okey, (B, OBS_DIM), jnp.float32)
    action = jax.random.normal(akey, (B, ACTION_DIM), jnp.float32)
    prefs = jax.nn.softmax(jax.random.normal(wkey, (B, REWARD_DIM), jnp.float32), axis=-1)

    out = jax.block_until_ready(hyper_critic_forward(packed, obs, action, prefs))
    ref = jax.block_until_ready(reference_forward(params, obs, action, prefs))
    assert out.shape == (B, REWARD_DIM), out.shape
    np.testing.assert_allclose(np.asarray(out), np.asarray(ref), rtol=RTOL, atol=ATOL)

    # gridded / padded path: grid > 1, batch padding masked off, non-multiple-of-8 tb_max
    B2 = 20
    obs2 = jax.random.normal(jax.random.PRNGKey(1), (B2, OBS_DIM), jnp.float32)
    action2 = jax.random.normal(jax.random.PRNGKey(2), (B2, ACTION_DIM), jnp.float32)
    prefs2 = jax.nn.softmax(jax.random.normal(jax.random.PRNGKey(3), (B2, REWARD_DIM), jnp.float32), axis=-1)
    out2 = jax.block_until_ready(hyper_critic_forward(packed, obs2, action2, prefs2, tb_max=12))
    ref2 = jax.block_until_ready(reference_forward(params, obs2, action2, prefs2))
    assert out2.shape == (B2, REWARD_DIM), out2.shape
    np.testing.assert_allclose(np.asarray(out2), np.asarray(ref2), rtol=RTOL, atol=ATOL)

    print("KERNEL_OK")
</pallas_src>

<mosaic_0001>
module attributes {stable_mosaic.version = 11 : i64} {
  func.func @_fused_kernel(%arg0: i32, %arg1: memref<8x128xf32, #tpu.memory_space<vmem>>, %arg2: memref<128x32xf32, #tpu.memory_space<vmem>>, %arg3: memref<1x32xf32, #tpu.memory_space<vmem>>, %arg4: memref<32x32xf32, #tpu.memory_space<vmem>>, %arg5: memref<1x32xf32, #tpu.memory_space<vmem>>, %arg6: memref<32x32xf32, #tpu.memory_space<vmem>>, %arg7: memref<1x32xf32, #tpu.memory_space<vmem>>, %arg8: memref<32x2688xf32, #tpu.memory_space<vmem>>, %arg9: memref<1x2688xf32, #tpu.memory_space<vmem>>, %arg10: memref<768x32xf32, #tpu.memory_space<vmem>>, %arg11: memref<1024x32xf32, #tpu.memory_space<vmem>>, %arg12: memref<128x128xf32, #tpu.memory_space<vmem>>, %arg13: memref<8x128xf32, #tpu.memory_space<vmem>>) attributes {dimension_semantics = [#tpu.dimension_semantics<parallel>], iteration_bounds = array<i64: 1>, scalar_prefetch = 0 : i64, scratch_operands = 0 : i64, tpu.core_type = #tpu.core_type<tc>, window_params = [{transform_indices = @transform_0, window_bounds = array<i64: 8, 128>}, {pipeline_mode = #tpu.pipeline_mode<synchronous>, transform_indices = @transform_1, window_bounds = array<i64: 128, 32>}, {pipeline_mode = #tpu.pipeline_mode<synchronous>, transform_indices = @transform_2, window_bounds = array<i64: 1, 32>}, {pipeline_mode = #tpu.pipeline_mode<synchronous>, transform_indices = @transform_3, window_bounds = array<i64: 32, 32>}, {pipeline_mode = #tpu.pipeline_mode<synchronous>, transform_indices = @transform_4, window_bounds = array<i64: 1, 32>}, {pipeline_mode = #tpu.pipeline_mode<synchronous>, transform_indices = @transform_5, window_bounds = array<i64: 32, 32>}, {pipeline_mode = #tpu.pipeline_mode<synchronous>, transform_indices = @transform_6, window_bounds = array<i64: 1, 32>}, {pipeline_mode = #tpu.pipeline_mode<synchronous>, transform_indices = @transform_7, window_bounds = array<i64: 32, 2688>}, {pipeline_mode = #tpu.pipeline_mode<synchronous>, transform_indices = @transform_8, window_bounds = array<i64: 1, 2688>}, {pipeline_mode = #tpu.pipeline_mode<synchronous>, transform_indices = @transform_9, window_bounds = array<i64: 768, 32>}, {pipeline_mode = #tpu.pipeline_mode<synchronous>, transform_indices = @transform_10, window_bounds = array<i64: 1024, 32>}, {pipeline_mode = #tpu.pipeline_mode<synchronous>, transform_indices = @transform_11, window_bounds = array<i64: 128, 128>}, {transform_indices = @transform_12, window_bounds = array<i64: 8, 128>}]} {
    %c0 = arith.constant 0 : index
    %c0_0 = arith.constant 0 : index
    %0 = vector.load %arg1[%c0, %c0_0] : memref<8x128xf32, #tpu.memory_space<vmem>>, vector<8x128xf32>
    %c0_1 = arith.constant 0 : index
    %c0_2 = arith.constant 0 : index
    %1 = vector.load %arg2[%c0_1, %c0_2] : memref<128x32xf32, #tpu.memory_space<vmem>>, vector<128x32xf32>
    %cst = arith.constant dense<0.000000e+00> : vector<8x32xf32>
    %2 = tpu.matmul %0, %1, %cst {dimension_numbers = #tpu.dot_dimension_numbers<[1], [0], [0], [1], [0, 0, 1, 1], [], []>, precision = #tpu.contract_precision<fp32>} : vector<8x128xf32>, vector<128x32xf32>, vector<8x32xf32> -> vector<8x32xf32>
    %c0_3 = arith.constant 0 : index
    %c0_4 = arith.constant 0 : index
    %3 = vector.load %arg3[%c0_3, %c0_4] : memref<1x32xf32, #tpu.memory_space<vmem>>, vector<1x32xf32>
    %4 = vector.broadcast %3 : vector<1x32xf32> to vector<8x32xf32>
    %5 = arith.addf %2, %4 : vector<8x32xf32>
    %cst_5 = arith.constant 0.000000e+00 : f32
    %6 = vector.broadcast %cst_5 : f32 to vector<8x32xf32>
    %7 = arith.maximumf %5, %6 : vector<8x32xf32>
    %c0_6 = arith.constant 0 : index
    %c0_7 = arith.constant 0 : index
    %8 = vector.load %arg4[%c0_6, %c0_7] : memref<32x32xf32, #tpu.memory_space<vmem>>, vector<32x32xf32>
    %cst_8 = arith.constant dense<0.000000e+00> : vector<8x32xf32>
    %9 = tpu.matmul %7, %8, %cst_8 {dimension_numbers = #tpu.dot_dimension_numbers<[1], [0], [0], [1], [0, 0, 1, 1], [], []>, precision = #tpu.contract_precision<fp32>} : vector<8x32xf32>, vector<32x32xf32>, vector<8x32xf32> -> vector<8x32xf32>
    %c0_9 = arith.constant 0 : index
    %c0_10 = arith.constant 0 : index
    %10 = vector.load %arg5[%c0_9, %c0_10] : memref<1x32xf32, #tpu.memory_space<vmem>>, vector<1x32xf32>
    %11 = vector.broadcast %10 : vector<1x32xf32> to vector<8x32xf32>
    %12 = arith.addf %9, %11 : vector<8x32xf32>
    %cst_11 = arith.constant 0.000000e+00 : f32
    %13 = vector.broadcast %cst_11 : f32 to vector<8x32xf32>
    %14 = arith.maximumf %12, %13 : vector<8x32xf32>
    %c0_12 = arith.constant 0 : index
    %c0_13 = arith.constant 0 : index
    %15 = vector.load %arg6[%c0_12, %c0_13] : memref<32x32xf32, #tpu.memory_space<vmem>>, vector<32x32xf32>
    %cst_14 = arith.constant dense<0.000000e+00> : vector<8x32xf32>
    %16 = tpu.matmul %14, %15, %cst_14 {dimension_numbers = #tpu.dot_dimension_numbers<[1], [0], [0], [1], [0, 0, 1, 1], [], []>, precision = #tpu.contract_precision<fp32>} : vector<8x32xf32>, vector<32x32xf32>, vector<8x32xf32> -> vector<8x32xf32>
    %c0_15 = arith.constant 0 : index
    %c0_16 = arith.constant 0 : index
    %17 = vector.load %arg7[%c0_15, %c0_16] : memref<1x32xf32, #tpu.memory_space<vmem>>, vector<1x32xf32>
    %18 = vector.broadcast %17 : vector<1x32xf32> to vector<8x32xf32>
    %19 = arith.addf %16, %18 : vector<8x32xf32>
    %cst_17 = arith.constant 0.000000e+00 : f32
    %20 = vector.broadcast %cst_17 : f32 to vector<8x32xf32>
    %21 = arith.maximumf %19, %20 : vector<8x32xf32>
    %c0_18 = arith.constant 0 : index
    %c0_19 = arith.constant 0 : index
    %22 = vector.load %arg8[%c0_18, %c0_19] : memref<32x2688xf32, #tpu.memory_space<vmem>>, vector<32x2688xf32>
    %cst_20 = arith.constant dense<0.000000e+00> : vector<8x2688xf32>
    %23 = tpu.matmul %21, %22, %cst_20 {dimension_numbers = #tpu.dot_dimension_numbers<[1], [0], [0], [1], [0, 0, 1, 1], [], []>} : vector<8x32xf32>, vector<32x2688xf32>, vector<8x2688xf32> -> vector<8x2688xf32>
    %c0_21 = arith.constant 0 : index
    %c0_22 = arith.constant 0 : index
    %24 = vector.load %arg9[%c0_21, %c0_22] : memref<1x2688xf32, #tpu.memory_space<vmem>>, vector<1x2688xf32>
    %25 = vector.broadcast %24 : vector<1x2688xf32> to vector<8x2688xf32>
    %26 = arith.addf %23, %25 : vector<8x2688xf32>
    %27 = vector.extract_strided_slice %0 {offsets = [0, 0], sizes = [8, 23], strides = [1, 1]} : vector<8x128xf32> to vector<8x23xf32>
    %28 = vector.extract_strided_slice %26 {offsets = [0, 0], sizes = [8, 768], strides = [1, 1]} : vector<8x2688xf32> to vector<8x768xf32>
    %29 = vector.extract_strided_slice %26 {offsets = [0, 768], sizes = [8, 32], strides = [1, 1]} : vector<8x2688xf32> to vector<8x32xf32>
    %30 = vector.extract_strided_slice %26 {offsets = [0, 896], sizes = [8, 32], strides = [1, 1]} : vector<8x2688xf32> to vector<8x32xf32>
    %31 = tpu.concatenate %27, %27 in 1 : vector<8x23xf32>, vector<8x23xf32> -> vector<8x46xf32>
    %32 = tpu.concatenate %31, %31 in 1 : vector<8x46xf32>, vector<8x46xf32> -> vector<8x92xf32>
    %33 = tpu.concatenate %32, %32 in 1 : vector<8x92xf32>, vector<8x92xf32> -> vector<8x184xf32>
    %34 = tpu.concatenate %33, %33 in 1 : vector<8x184xf32>, vector<8x184xf32> -> vector<8x368xf32>
    %35 = tpu.concatenate %34, %34 in 1 : vector<8x368xf32>, vector<8x368xf32> -> vector<8x736xf32>
    %cst_23 = arith.constant 0.000000e+00 : f32
    %36 = vector.broadcast %cst_23 : f32 to vector<8x32xf32>
    %37 = tpu.concatenate %35, %36 in 1 : vector<8x736xf32>, vector<8x32xf32> -> vector<8x768xf32>
    %38 = arith.mulf %28, %37 : vector<8x768xf32>
    %c0_24 = arith.constant 0 : index
    %c0_25 = arith.constant 0 : index
    %39 = vector.load %arg10[%c0_24, %c0_25] : memref<768x32xf32, #tpu.memory_space<vmem>>, vector<768x32xf32>
    %cst_26 = arith.constant dense<0.000000e+00> : vector<8x32xf32>
    %40 = tpu.matmul %38, %39, %cst_26 {dimension_numbers = #tpu.dot_dimension_numbers<[1], [0], [0], [1], [0, 0, 1, 1], [], []>, precision = #tpu.contract_precision<fp32>} : vector<8x768xf32>, vector<768x32xf32>, vector<8x32xf32> -> vector<8x32xf32>
    %41 = arith.mulf %40, %30 : vector<8x32xf32>
    %42 = arith.addf %41, %29 : vector<8x32xf32>
    %cst_27 = arith.constant 0.000000e+00 : f32
    %43 = vector.broadcast %cst_27 : f32 to vector<8x32xf32>
    %44 = arith.maximumf %42, %43 : vector<8x32xf32>
    %45 = vector.extract_strided_slice %26 {offsets = [0, 1024], sizes = [8, 1024], strides = [1, 1]} : vector<8x2688xf32> to vector<8x1024xf32>
    %46 = vector.extract_strided_slice %26 {offsets = [0, 2048], sizes = [8, 32], strides = [1, 1]} : vector<8x2688xf32> to vector<8x32xf32>
    %47 = vector.extract_strided_slice %26 {offsets = [0, 2176], sizes = [8, 32], strides = [1, 1]} : vector<8x2688xf32> to vector<8x32xf32>
    %48 = tpu.concatenate %44, %44 in 1 : vector<8x32xf32>, vector<8x32xf32> -> vector<8x64xf32>
    %49 = tpu.concatenate %48, %48 in 1 : vector<8x64xf32>, vector<8x64xf32> -> vector<8x128xf32>
    %50 = tpu.concatenate %49, %49 in 1 : vector<8x128xf32>, vector<8x128xf32> -> vector<8x256xf32>
    %51 = tpu.concatenate %50, %50 in 1 : vector<8x256xf32>, vector<8x256xf32> -> vector<8x512xf32>
    %52 = tpu.concatenate %51, %51 in 1 : vector<8x512xf32>, vector<8x512xf32> -> vector<8x1024xf32>
    %53 = arith.mulf %45, %52 : vector<8x1024xf32>
    %c0_28 = arith.constant 0 : index
    %c0_29 = arith.constant 0 : index
    %54 = vector.load %arg11[%c0_28, %c0_29] : memref<1024x32xf32, #tpu.memory_space<vmem>>, vector<1024x32xf32>
    %cst_30 = arith.constant dense<0.000000e+00> : vector<8x32xf32>
    %55 = tpu.matmul %53, %54, %cst_30 {dimension_numbers = #tpu.dot_dimension_numbers<[1], [0], [0], [1], [0, 0, 1, 1], [], []>, precision = #tpu.contract_precision<fp32>} : vector<8x1024xf32>, vector<1024x32xf32>, vector<8x32xf32> -> vector<8x32xf32>
    %56 = arith.mulf %55, %47 : vector<8x32xf32>
    %57 = arith.addf %56, %46 : vector<8x32xf32>
    %cst_31 = arith.constant 0.000000e+00 : f32
    %58 = vector.broadcast %cst_31 : f32 to vector<8x32xf32>
    %59 = arith.maximumf %57, %58 : vector<8x32xf32>
    %60 = vector.extract_strided_slice %26 {offsets = [0, 2304], sizes = [8, 128], strides = [1, 1]} : vector<8x2688xf32> to vector<8x128xf32>
    %61 = vector.extract_strided_slice %26 {offsets = [0, 2432], sizes = [8, 128], strides = [1, 1]} : vector<8x2688xf32> to vector<8x128xf32>
    %62 = vector.extract_strided_slice %26 {offsets = [0, 2560], sizes = [8, 128], strides = [1, 1]} : vector<8x2688xf32> to vector<8x128xf32>
    %63 = tpu.concatenate %59, %59 in 1 : vector<8x32xf32>, vector<8x32xf32> -> vector<8x64xf32>
    %64 = tpu.concatenate %59, %63 in 1 : vector<8x32xf32>, vector<8x64xf32> -> vector<8x96xf32>
    %cst_32 = arith.constant 0.000000e+00 : f32
    %65 = vector.broadcast %cst_32 : f32 to vector<8x32xf32>
    %66 = tpu.concatenate %64, %65 in 1 : vector<8x96xf32>, vector<8x32xf32> -> vector<8x128xf32>
    %67 = arith.mulf %60, %66 : vector<8x128xf32>
    %c0_33 = arith.constant 0 : index
    %c0_34 = arith.constant 0 : index
    %68 = vector.load %arg12[%c0_33, %c0_34] : memref<128x128xf32, #tpu.memory_space<vmem>>, vector<128x128xf32>
    %cst_35 = arith.constant dense<0.000000e+00> : vector<8x128xf32>
    %69 = tpu.matmul %67, %68, %cst_35 {dimension_numbers = #tpu.dot_dimension_numbers<[1], [0], [0], [1], [0, 0, 1, 1], [], []>, precision = #tpu.contract_precision<fp32>} : vector<8x128xf32>, vector<128x128xf32>, vector<8x128xf32> -> vector<8x128xf32>
    %70 = arith.mulf %69, %62 : vector<8x128xf32>
    %71 = arith.addf %70, %61 : vector<8x128xf32>
    %c0_36 = arith.constant 0 : index
    %c0_37 = arith.constant 0 : index
    %72 = vector.load %arg13[%c0_36, %c0_37] : memref<8x128xf32, #tpu.memory_space<vmem>>, vector<8x128xf32>
    tpu.vector_store %arg13[%c0_36, %c0_37], %71 {strides = array<i32>} : memref<8x128xf32, #tpu.memory_space<vmem>>, vector<8x128xf32>,
    return
  }
  func.func @transform_0(%arg0: i32) -> (i32, i32) {
    %c0_i32 = arith.constant 0 : i32
    %c0_i32_0 = arith.constant 0 : i32
    return %arg0, %c0_i32 : i32, i32
  }
  func.func @transform_1(%arg0: i32) -> (i32, i32) {
    %c0_i32 = arith.constant 0 : i32
    %c0_i32_0 = arith.constant 0 : i32
    %c0_i32_1 = arith.constant 0 : i32
    return %c0_i32, %c0_i32_0 : i32, i32
  }
  func.func @transform_2(%arg0: i32) -> (i32, i32) {
    %c0_i32 = arith.constant 0 : i32
    %c0_i32_0 = arith.constant 0 : i32
    %c0_i32_1 = arith.constant 0 : i32
    return %c0_i32, %c0_i32_0 : i32, i32
  }
  func.func @transform_3(%arg0: i32) -> (i32, i32) {
    %c0_i32 = arith.constant 0 : i32
    %c0_i32_0 = arith.constant 0 : i32
    %c0_i32_1 = arith.constant 0 : i32
    return %c0_i32, %c0_i32_0 : i32, i32
  }
  func.func @transform_4(%arg0: i32) -> (i32, i32) {
    %c0_i32 = arith.constant 0 : i32
    %c0_i32_0 = arith.constant 0 : i32
    %c0_i32_1 = arith.constant 0 : i32
    return %c0_i32, %c0_i32_0 : i32, i32
  }
  func.func @transform_5(%arg0: i32) -> (i32, i32) {
    %c0_i32 = arith.constant 0 : i32
    %c0_i32_0 = arith.constant 0 : i32
    %c0_i32_1 = arith.constant 0 : i32
    return %c0_i32, %c0_i32_0 : i32, i32
  }
  func.func @transform_6(%arg0: i32) -> (i32, i32) {
    %c0_i32 = arith.constant 0 : i32
    %c0_i32_0 = arith.constant 0 : i32
    %c0_i32_1 = arith.constant 0 : i32
    return %c0_i32, %c0_i32_0 : i32, i32
  }
  func.func @transform_7(%arg0: i32) -> (i32, i32) {
    %c0_i32 = arith.constant 0 : i32
    %c0_i32_0 = arith.constant 0 : i32
    %c0_i32_1 = arith.constant 0 : i32
    return %c0_i32, %c0_i32_0 : i32, i32
  }
  func.func @transform_8(%arg0: i32) -> (i32, i32) {
    %c0_i32 = arith.constant 0 : i32
    %c0_i32_0 = arith.constant 0 : i32
    %c0_i32_1 = arith.constant 0 : i32
    return %c0_i32, %c0_i32_0 : i32, i32
  }
  func.func @transform_9(%arg0: i32) -> (i32, i32) {
    %c0_i32 = arith.constant 0 : i32
    %c0_i32_0 = arith.constant 0 : i32
    %c0_i32_1 = arith.constant 0 : i32
    return %c0_i32, %c0_i32_0 : i32, i32
  }
  func.func @transform_10(%arg0: i32) -> (i32, i32) {
    %c0_i32 = arith.constant 0 : i32
    %c0_i32_0 = arith.constant 0 : i32
    %c0_i32_1 = arith.constant 0 : i32
    return %c0_i32, %c0_i32_0 : i32, i32
  }
  func.func @transform_11(%arg0: i32) -> (i32, i32) {
    %c0_i32 = arith.constant 0 : i32
    %c0_i32_0 = arith.constant 0 : i32
    %c0_i32_1 = arith.constant 0 : i32
    return %c0_i32, %c0_i32_0 : i32, i32
  }
  func.func @transform_12(%arg0: i32) -> (i32, i32) {
    %c0_i32 = arith.constant 0 : i32
    %c0_i32_0 = arith.constant 0 : i32
    return %arg0, %c0_i32 : i32, i32
  }
}

</mosaic_0001>

<llo_original>
// kernel: tpu_custom_call.1
$region0: #{tpu_custom_call.1}
  #allocation0 [shape = 'u32[]', space=smem, size = 0x4, offset = 0x4, fixed_abs, tag = 'smem constant byte address 0x4 - core index']
  #allocation1 [shape = 'u32[144,128]{1,0:T(1,128)}', space=vmem, size = 0x12000, scoped, tag = 'internal scratch']
  %s0 = inlined_call_operand.vmem [shape: f32[8,128], index: 0, kind: input, shape index: {}]
  %s1 = inlined_call_operand.vmem [shape: f32[128,32], index: 1, kind: input, shape index: {}]
  %s2 = inlined_call_operand.vmem [shape: f32[1,32], index: 2, kind: input, shape index: {}]
  %s3 = inlined_call_operand.vmem [shape: f32[32,32], index: 3, kind: input, shape index: {}]
  %s4 = inlined_call_operand.vmem [shape: f32[1,32], index: 4, kind: input, shape index: {}]
  %s5 = inlined_call_operand.vmem [shape: f32[32,32], index: 5, kind: input, shape index: {}]
  %s6 = inlined_call_operand.vmem [shape: f32[1,32], index: 6, kind: input, shape index: {}]
  %s7 = inlined_call_operand.vmem [shape: f32[32,2688], index: 7, kind: input, shape index: {}]
  %s8 = inlined_call_operand.vmem [shape: f32[1,2688], index: 8, kind: input, shape index: {}]
  %s9 = inlined_call_operand.vmem [shape: f32[768,32], index: 9, kind: input, shape index: {}]
  %s10 = inlined_call_operand.vmem [shape: f32[1024,32], index: 10, kind: input, shape index: {}]
  %s11 = inlined_call_operand.vmem [shape: f32[128,128], index: 11, kind: input, shape index: {}]
  %s12 = inlined_call_operand.hbm [shape: f32[8,128], index: 12, kind: output, shape index: {}]
  %s13 = sld [smem:[#allocation0]]
  $region58: #{tpu_custom_call.1} parent=0
    _
  %s15 = ssub.s32 1, %s13
  %s16 = scalar_select 0, %s15, %s13
  $region1: #{tpu_custom_call.1} parent=0
    #allocation2 [shape = 'u8[4096]{0}', space=vmem, size = 0x1000, scoped, tag = 'output window, operand 0, single buffered']
    #allocation3 [shape = 's32[1]{0}', space=sflag, size = 0x4, scoped, tag = 'scoped memory for tpu_custom_call.1']
    %17 = vsyncpa [#allocation3], 0
    // Predicated region
    $region2: #{tpu_custom_call.1} parent=1 // pred_check
      _
    $region3: #{tpu_custom_call.1} parent=1 // pred_check_branch
      %19 = sbr.rel (0) target = $region5
    $region4: #{tpu_custom_call.1} parent=1 // pred_region
      _
    $region5: #{tpu_custom_call.1} parent=1 // pred_fallthru
      _
    // Predicated region
    $region6: #{tpu_custom_call.1} parent=1 // pred_check
      _
    $region7: #{tpu_custom_call.1} parent=1 // pred_check_branch
      %21 = sbr.rel (0) target = $region9
    $region8: #{tpu_custom_call.1} parent=1 // pred_region
      _
    $region9: #{tpu_custom_call.1} parent=1 // pred_fallthru
      _
    // Predicated region
    $region10: #{tpu_custom_call.1} parent=1 // pred_check
      _
    $region11: #{tpu_custom_call.1} parent=1 // pred_check_branch
      %23 = sbr.rel (0) target = $region13
    $region12: #{tpu_custom_call.1} parent=1 // pred_region
      _
    $region13: #{tpu_custom_call.1} parent=1 // pred_fallthru
      _
    // Predicated region
    $region14: #{tpu_custom_call.1} parent=1 // pred_check
      _
    $region15: #{tpu_custom_call.1} parent=1 // pred_check_branch
      %25 = sbr.rel (0) target = $region17
    $region16: #{tpu_custom_call.1} parent=1 // pred_region
      _
    $region17: #{tpu_custom_call.1} parent=1 // pred_fallthru
      _
    // Predicated region
    $region18: #{tpu_custom_call.1} parent=1 // pred_check
      _
    $region19: #{tpu_custom_call.1} parent=1 // pred_check_branch
      %27 = sbr.rel (0) target = $region21
    $region20: #{tpu_custom_call.1} parent=1 // pred_region
      _
    $region21: #{tpu_custom_call.1} parent=1 // pred_fallthru
      _
    // Predicated region
    $region22: #{tpu_custom_call.1} parent=1 // pred_check
      _
    $region23: #{tpu_custom_call.1} parent=1 // pred_check_branch
      %29 = sbr.rel (0) target = $region25
    $region24: #{tpu_custom_call.1} parent=1 // pred_region
      _
    $region25: #{tpu_custom_call.1} parent=1 // pred_fallthru
      _
    // Predicated region
    $region26: #{tpu_custom_call.1} parent=1 // pred_check
      _
    $region27: #{tpu_custom_call.1} parent=1 // pred_check_branch
      %31 = sbr.rel (0) target = $region29
    $region28: #{tpu_custom_call.1} parent=1 // pred_region
      _
    $region29: #{tpu_custom_call.1} parent=1 // pred_fallthru
      _
    // Predicated region
    $region30: #{tpu_custom_call.1} parent=1 // pred_check
      _
    $region31: #{tpu_custom_call.1} parent=1 // pred_check_branch
      %33 = sbr.rel (0) target = $region33
    $region32: #{tpu_custom_call.1} parent=1 // pred_region
      _
    $region33: #{tpu_custom_call.1} parent=1 // pred_fallthru
      _
    // Predicated region
    $region34: #{tpu_custom_call.1} parent=1 // pred_check
      _
    $region35: #{tpu_custom_call.1} parent=1 // pred_check_branch
      %35 = sbr.rel (0) target = $region37
    $region36: #{tpu_custom_call.1} parent=1 // pred_region
      _
    $region37: #{tpu_custom_call.1} parent=1 // pred_fallthru
      _
    // Predicated region
    $region38: #{tpu_custom_call.1} parent=1 // pred_check
      _
    $region39: #{tpu_custom_call.1} parent=1 // pred_check_branch
      %37 = sbr.rel (0) target = $region41
    $region40: #{tpu_custom_call.1} parent=1 // pred_region
      _
    $region41: #{tpu_custom_call.1} parent=1 // pred_fallthru
      _
    // Predicated region
    $region42: #{tpu_custom_call.1} parent=1 // pred_check
      _
    $region43: #{tpu_custom_call.1} parent=1 // pred_check_branch
      %39 = sbr.rel (0) target = $region45
    $region44: #{tpu_custom_call.1} parent=1 // pred_region
      _
    $region45: #{tpu_custom_call.1} parent=1 // pred_fallthru
      _
    // Predicated region
    $region46: #{tpu_custom_call.1} parent=1 // pred_check
      _
    $region47: #{tpu_custom_call.1} parent=1 // pred_check_branch
      %41 = sbr.rel (0) target = $region49
    $region48: #{tpu_custom_call.1} parent=1 // pred_region
      _
    $region49: #{tpu_custom_call.1} parent=1 // pred_fallthru
      _
    %v42 = vld [vmem:[%s0] sm:$0xff]
    %v43 = vld [vmem:[%s1] sm:$0xff]
    %v44 = vld [vmem:[%s1 + $0x8] sm:$0xff]
    %v45 = vld [vmem:[%s1 + $0x10] sm:$0xff]
    %v46 = vld [vmem:[%s1 + $0x18] sm:$0xff]
    %v47 = vld [vmem:[%s1 + $0x20] sm:$0xff]
    %v48 = vld [vmem:[%s1 + $0x28] sm:$0xff]
    %v49 = vld [vmem:[%s1 + $0x30] sm:$0xff]
    %v50 = vld [vmem:[%s1 + $0x38] sm:$0xff]
    %v51 = vld [vmem:[%s1 + $0x40] sm:$0xff]
    %v52 = vld [vmem:[%s1 + $0x48] sm:$0xff]
    %v53 = vld [vmem:[%s1 + $0x50] sm:$0xff]
    %v54 = vld [vmem:[%s1 + $0x58] sm:$0xff]
    %v55 = vld [vmem:[%s1 + $0x60] sm:$0xff]
    %v56 = vld [vmem:[%s1 + $0x68] sm:$0xff]
    %v57 = vld [vmem:[%s1 + $0x70] sm:$0xff]
    %v58 = vld [vmem:[%s1 + $0x78] sm:$0xff]
    %v59 = vld [vmem:[%s2] sm:$0x1]
    %v61 = vlaneseq
    %v62 = vshrl.u32 %v61, 7
    %v63 = vsub.s32 0, %v62
    %v64 = vrot.slane %v59, %v63
    %66 = vmatprep.subr.mxu0 0.0
    %v67 = vand.u32 %v43, 4294901760
    %68 = vmatpush1.msra.mxu0 %v67
    %69 = vmatprep.subr.mxu0 0.0
    %v70 = vand.u32 %v44, 4294901760
    %71 = vmatpush1.msra.mxu0 %v70
    %72 = vmatprep.subr.mxu0 0.0
    %v73 = vand.u32 %v45, 4294901760
    %74 = vmatpush1.msra.mxu0 %v73
    %75 = vmatprep.subr.mxu0 0.0
    %v76 = vand.u32 %v46, 4294901760
    %77 = vmatpush1.msra.mxu0 %v76
    %78 = vmatprep.subr.mxu0 0.0
    %v79 = vand.u32 %v47, 4294901760
    %80 = vmatpush1.msra.mxu0 %v79
    %81 = vmatprep.subr.mxu0 0.0
    %v82 = vand.u32 %v48, 4294901760
    %83 = vmatpush1.msra.mxu0 %v82
    %84 = vmatprep.subr.mxu0 0.0
    %v85 = vand.u32 %v49, 4294901760
    %86 = vmatpush1.msra.mxu0 %v85
    %87 = vmatprep.subr.mxu0 0.0
    %v88 = vand.u32 %v50, 4294901760
    %89 = vmatpush1.msra.mxu0 %v88
    %90 = vmatprep.subr.mxu0 0.0
    %v91 = vand.u32 %v51, 4294901760
    %92 = vmatpush1.msra.mxu0 %v91
    %93 = vmatprep.subr.mxu0 0.0
    %v94 = vand.u32 %v52, 4294901760
    %95 = vmatpush1.msra.mxu0 %v94
    %96 = vmatprep.subr.mxu0 0.0
    %v97 = vand.u32 %v53, 4294901760
    %98 = vmatpush1.msra.mxu0 %v97
    %99 = vmatprep.subr.mxu0 0.0
    %v100 = vand.u32 %v54, 4294901760
    %101 = vmatpush1.msra.mxu0 %v100
    %102 = vmatprep.subr.mxu0 0.0
    %v103 = vand.u32 %v55, 4294901760
    %104 = vmatpush1.msra.mxu0 %v103
    %105 = vmatprep.subr.mxu0 0.0
    %v106 = vand.u32 %v56, 4294901760
    %107 = vmatpush1.msra.mxu0 %v106
    %108 = vmatprep.subr.mxu0 0.0
    %v109 = vand.u32 %v57, 4294901760
    %110 = vmatpush1.msra.mxu0 %v109
    %111 = vmatprep.subr.mxu0 0.0
    %v112 = vand.u32 %v58, 4294901760
    %113 = vmatpush1.msra.mxu0 %v112
    %114 = vmatprep.subr.mxu0 0.0
    %115 = vmatpush1.msra.mxu0 0.0
    %116 = vmatprep.subr.mxu0 0.0
    %117 = vmatpush1.msra.mxu0 0.0
    %118 = vmatprep.subr.mxu0 0.0
    %119 = vmatpush1.msra.mxu0 0.0
    %120 = vmatprep.subr.mxu0 0.0
    %121 = vmatpush1.msra.mxu0 0.0
    %122 = vmatprep.subr.mxu0 0.0
    %123 = vmatpush1.msra.mxu0 0.0
    %124 = vmatprep.subr.mxu0 0.0
    %125 = vmatpush1.msra.mxu0 0.0
    %126 = vmatprep.subr.mxu0 0.0
    %127 = vmatpush1.msra.mxu0 0.0
    %128 = vmatprep.subr.mxu0 0.0
    %129 = vmatpush1.msra.mxu0 0.0
    %130 = vmatprep.subr.mxu0 0.0
    %131 = vmatpush1.msra.mxu0 0.0
    %132 = vmatprep.subr.mxu0 0.0
    %133 = vmatpush1.msra.mxu0 0.0
    %134 = vmatprep.subr.mxu0 0.0
    %135 = vmatpush1.msra.mxu0 0.0
    %136 = vmatprep.subr.mxu0 0.0
    %137 = vmatpush1.msra.mxu0 0.0
    %138 = vmatprep.subr.mxu0 0.0
    %139 = vmatpush1.msra.mxu0 0.0
    %140 = vmatprep.subr.mxu0 0.0
    %141 = vmatpush1.msra.mxu0 0.0
    %142 = vmatprep.subr.mxu0 0.0
    %143 = vmatpush1.msra.mxu0 0.0
    %144 = vmatprep.subr.mxu0 0.0
    %145 = vmatpush1.msra.mxu0 0.0
    %146 = vmatprep.mubr.f32.mxu0 0.0
    %v147 = vand.u32 %v42, 4294901760
    %v148 = vsub.f32 %v42, %v147
    %v149 = vand.u32 %v148, 4294901760
    %v150 = vsub.f32 %v148, %v149
    %v151 = vand.u32 %v150, 4294901760
    %152 = vmatmul.mubr.f32.gmra.mrb[0].mxu0 %v151
    %v153 = vpop.f32.mrb[0].mxu0
    %v154 = vadd.f32 %v64, %v153
    %v155 = vpop.f32.mrb[0].mxu0
    %156 = vdwg.mxu0
    %157 = vmatprep.subr.mxu0 0.0
    %v158 = vand.u32 %v43, 4294901760
    %v159 = vsub.f32 %v43, %v158
    %v160 = vand.u32 %v159, 4294901760
    %v161 = vsub.f32 %v159, %v160
    %v162 = vand.u32 %v161, 4294901760
    %163 = vmatpush1.msra.mxu0 %v162
    %164 = vmatprep.subr.mxu0 0.0
    %v165 = vand.u32 %v44, 4294901760
    %v166 = vsub.f32 %v44, %v165
    %v167 = vand.u32 %v166, 4294901760
    %v168 = vsub.f32 %v166, %v167
    %v169 = vand.u32 %v168, 4294901760
    %170 = vmatpush1.msra.mxu0 %v169
    %171 = vmatprep.subr.mxu0 0.0
    %v172 = vand.u32 %v45, 4294901760
    %v173 = vsub.f32 %v45, %v172
    %v174 = vand.u32 %v173, 4294901760
    %v175 = vsub.f32 %v173, %v174
    %v176 = vand.u32 %v175, 4294901760
    %177 = vmatpush1.msra.mxu0 %v176
    %178 = vmatprep.subr.mxu0 0.0
    %v179 = vand.u32 %v46, 4294901760
    %v180 = vsub.f32 %v46, %v179
    %v181 = vand.u32 %v180, 4294901760
    %v182 = vsub.f32 %v180, %v181
    %v183 = vand.u32 %v182, 4294901760
    %184 = vmatpush1.msra.mxu0 %v183
    %185 = vmatprep.subr.mxu0 0.0
    %v186 = vand.u32 %v47, 4294901760
    %v187 = vsub.f32 %v47, %v186
    %v188 = vand.u32 %v187, 4294901760
    %v189 = vsub.f32 %v187, %v188
    %v190 = vand.u32 %v189, 4294901760
    %191 = vmatpush1.msra.mxu0 %v190
    %192 = vmatprep.subr.mxu0 0.0
    %v193 = vand.u32 %v48, 4294901760
    %v194 = vsub.f32 %v48, %v193
    %v195 = vand.u32 %v194, 4294901760
    %v196 = vsub.f32 %v194, %v195
    %v197 = vand.u32 %v196, 4294901760
    %198 = vmatpush1.msra.mxu0 %v197
    %199 = vmatprep.subr.mxu0 0.0
    %v200 = vand.u32 %v49, 4294901760
    %v201 = vsub.f32 %v49, %v200
    %v202 = vand.u32 %v201, 4294901760
    %v203 = vsub.f32 %v201, %v202
    %v204 = vand.u32 %v203, 4294901760
    %205 = vmatpush1.msra.mxu0 %v204
    %206 = vmatprep.subr.mxu0 0.0
    %v207 = vand.u32 %v50, 4294901760
    %v208 = vsub.f32 %v50, %v207
    %v209 = vand.u32 %v208, 4294901760
    %v210 = vsub.f32 %v208, %v209
    %v211 = vand.u32 %v210, 4294901760
    %212 = vmatpush1.msra.mxu0 %v211
    %213 = vmatprep.subr.mxu0 0.0
    %v214 = vand.u32 %v51, 4294901760
    %v215 = vsub.f32 %v51, %v214
    %v216 = vand.u32 %v215, 4294901760
    %v217 = vsub.f32 %v215, %v216
    %v218 = vand.u32 %v217, 4294901760
    %219 = vmatpush1.msra.mxu0 %v218
    %220 = vmatprep.subr.mxu0 0.0
    %v221 = vand.u32 %v52, 4294901760
    %v222 = vsub.f32 %v52, %v221
    %v223 = vand.u32 %v222, 4294901760
    %v224 = vsub.f32 %v222, %v223
    %v225 = vand.u32 %v224, 4294901760
    %226 = vmatpush1.msra.mxu0 %v225
    %227 = vmatprep.subr.mxu0 0.0
    %v228 = vand.u32 %v53, 4294901760
    %v229 = vsub.f32 %v53, %v228
    %v230 = vand.u32 %v229, 4294901760
    %v231 = vsub.f32 %v229, %v230
    %v232 = vand.u32 %v231, 4294901760
    %233 = vmatpush1.msra.mxu0 %v232
    %234 = vmatprep.subr.mxu0 0.0
    %v235 = vand.u32 %v54, 4294901760
    %v236 = vsub.f32 %v54, %v235
    %v237 = vand.u32 %v236, 4294901760
    %v238 = vsub.f32 %v236, %v237
    %v239 = vand.u32 %v238, 4294901760
    %240 = vmatpush1.msra.mxu0 %v239
    %241 = vmatprep.subr.mxu0 0.0
    %v242 = vand.u32 %v55, 4294901760
    %v243 = vsub.f32 %v55, %v242
    %v244 = vand.u32 %v243, 4294901760
    %v245 = vsub.f32 %v243, %v244
    %v246 = vand.u32 %v245, 4294901760
    %247 = vmatpush1.msra.mxu0 %v246
    %248 = vmatprep.subr.mxu0 0.0
    %v249 = vand.u32 %v56, 4294901760
    %v250 = vsub.f32 %v56, %v249
    %v251 = vand.u32 %v250, 4294901760
    %v252 = vsub.f32 %v250, %v251
    %v253 = vand.u32 %v252, 4294901760
    %254 = vmatpush1.msra.mxu0 %v253
    %255 = vmatprep.subr.mxu0 0.0
    %v256 = vand.u32 %v57, 4294901760
    %v257 = vsub.f32 %v57, %v256
    %v258 = vand.u32 %v257, 4294901760
    %v259 = vsub.f32 %v257, %v258
    %v260 = vand.u32 %v259, 4294901760
    %261 = vmatpush1.msra.mxu0 %v260
    %262 = vmatprep.subr.mxu0 0.0
    %v263 = vand.u32 %v58, 4294901760
    %v264 = vsub.f32 %v58, %v263
    %v265 = vand.u32 %v264, 4294901760
    %v266 = vsub.f32 %v264, %v265
    %v267 = vand.u32 %v266, 4294901760
    %268 = vmatpush1.msra.mxu0 %v267
    %269 = vmatprep.subr.mxu0 0.0
    %270 = vmatpush1.msra.mxu0 0.0
    %271 = vmatprep.subr.mxu0 0.0
    %272 = vmatpush1.msra.mxu0 0.0
    %273 = vmatprep.subr.mxu0 0.0
    %274 = vmatpush1.msra.mxu0 0.0
    %275 = vmatprep.subr.mxu0 0.0
    %276 = vmatpush1.msra.mxu0 0.0
    %277 = vmatprep.subr.mxu0 0.0
    %278 = vmatpush1.msra.mxu0 0.0
    %279 = vmatprep.subr.mxu0 0.0
    %280 = vmatpush1.msra.mxu0 0.0
    %281 = vmatprep.subr.mxu0 0.0
    %282 = vmatpush1.msra.mxu0 0.0
    %283 = vmatprep.subr.mxu0 0.0
    %284 = vmatpush1.msra.mxu0 0.0
    %285 = vmatprep.subr.mxu0 0.0
    %286 = vmatpush1.msra.mxu0 0.0
    %287 = vmatprep.subr.mxu0 0.0
    %288 = vmatpush1.msra.mxu0 0.0
    %289 = vmatprep.subr.mxu0 0.0
    %290 = vmatpush1.msra.mxu0 0.0
    %291 = vmatprep.subr.mxu0 0.0
    %292 = vmatpush1.msra.mxu0 0.0
    %293 = vmatprep.subr.mxu0 0.0
    %294 = vmatpush1.msra.mxu0 0.0
    %295 = vmatprep.subr.mxu0 0.0
    %296 = vmatpush1.msra.mxu0 0.0
    %297 = vmatprep.subr.mxu0 0.0
    %298 = vmatpush1.msra.mxu0 0.0
    %299 = vmatprep.subr.mxu0 0.0
    %300 = vmatpush1.msra.mxu0 0.0
    %301 = vmatprep.mubr.f32.mxu0 0.0
    %v302 = vand.u32 %v42, 4294901760
    %303 = vmatmul.mubr.f32.gmra.mrb[0].mxu0 %v302
    %v304 = vpop.f32.mrb[0].mxu0
    %v305 = vadd.f32 %v154, %v304
    %v306 = vpop.f32.mrb[0].mxu0
    %307 = vdwg.mxu0
    %308 = vmatprep.subr.mxu0 0.0
    %v309 = vand.u32 %v43, 4294901760
    %v310 = vsub.f32 %v43, %v309
    %311 = vmatpush1.msra.mxu0 %v310
    %312 = vmatprep.subr.mxu0 0.0
    %v313 = vand.u32 %v44, 4294901760
    %v314 = vsub.f32 %v44, %v313
    %315 = vmatpush1.msra.mxu0 %v314
    %316 = vmatprep.subr.mxu0 0.0
    %v317 = vand.u32 %v45, 4294901760
    %v318 = vsub.f32 %v45, %v317
    %319 = vmatpush1.msra.mxu0 %v318
    %320 = vmatprep.subr.mxu0 0.0
    %v321 = vand.u32 %v46, 4294901760
    %v322 = vsub.f32 %v46, %v321
    %323 = vmatpush1.msra.mxu0 %v322
    %324 = vmatprep.subr.mxu0 0.0
    %v325 = vand.u32 %v47, 4294901760
    %v326 = vsub.f32 %v47, %v325
    %327 = vmatpush1.msra.mxu0 %v326
    %328 = vmatprep.subr.mxu0 0.0
    %v329 = vand.u32 %v48, 4294901760
    %v330 = vsub.f32 %v48, %v329
    %331 = vmatpush1.msra.mxu0 %v330
    %332 = vmatprep.subr.mxu0 0.0
    %v333 = vand.u32 %v49, 4294901760
    %v334 = vsub.f32 %v49, %v333
    %335 = vmatpush1.msra.mxu0 %v334
    %336 = vmatprep.subr.mxu0 0.0
    %v337 = vand.u32 %v50, 4294901760
    %v338 = vsub.f32 %v50, %v337
    %339 = vmatpush1.msra.mxu0 %v338
    %340 = vmatprep.subr.mxu0 0.0
    %v341 = vand.u32 %v51, 4294901760
    %v342 = vsub.f32 %v51, %v341
    %343 = vmatpush1.msra.mxu0 %v342
    %344 = vmatprep.subr.mxu0 0.0
    %v345 = vand.u32 %v52, 4294901760
    %v346 = vsub.f32 %v52, %v345
    %347 = vmatpush1.msra.mxu0 %v346
    %348 = vmatprep.subr.mxu0 0.0
    %v349 = vand.u32 %v53, 4294901760
    %v350 = vsub.f32 %v53, %v349
    %351 = vmatpush1.msra.mxu0 %v350
    %352 = vmatprep.subr.mxu0 0.0
    %v353 = vand.u32 %v54, 4294901760
    %v354 = vsub.f32 %v54, %v353
    %355 = vmatpush1.msra.mxu0 %v354
    %356 = vmatprep.subr.mxu0 0.0
    %v357 = vand.u32 %v55, 4294901760
    %v358 = vsub.f32 %v55, %v357
    %359 = vmatpush1.msra.mxu0 %v358
    %360 = vmatprep.subr.mxu0 0.0
    %v361 = vand.u32 %v56, 4294901760
    %v362 = vsub.f32 %v56, %v361
    %363 = vmatpush1.msra.mxu0 %v362
    %364 = vmatprep.subr.mxu0 0.0
    %v365 = vand.u32 %v57, 4294901760
    %v366 = vsub.f32 %v57, %v365
    %367 = vmatpush1.msra.mxu0 %v366
    %368 = vmatprep.subr.mxu0 0.0
    %v369 = vand.u32 %v58, 4294901760
    %v370 = vsub.f32 %v58, %v369
    %371 = vmatpush1.msra.mxu0 %v370
    %372 = vmatprep.subr.mxu0 0.0
    %373 = vmatpush1.msra.mxu0 0.0
    %374 = vmatprep.subr.mxu0 0.0
    %375 = vmatpush1.msra.mxu0 0.0
    %376 = vmatprep.subr.mxu0 0.0
    %377 = vmatpush1.msra.mxu0 0.0
    %378 = vmatprep.subr.mxu0 0.0
    %379 = vmatpush1.msra.mxu0 0.0
    %380 = vmatprep.subr.mxu0 0.0
    %381 = vmatpush1.msra.mxu0 0.0
    %382 = vmatprep.subr.mxu0 0.0
    %383 = vmatpush1.msra.mxu0 0.0
    %384 = vmatprep.subr.mxu0 0.0
    %385 = vmatpush1.msra.mxu0 0.0
    %386 = vmatprep.subr.mxu0 0.0
    %387 = vmatpush1.msra.mxu0 0.0
    %388 = vmatprep.subr.mxu0 0.0
    %389 = vmatpush1.msra.mxu0 0.0
    %390 = vmatprep.subr.mxu0 0.0
    %391 = vmatpush1.msra.mxu0 0.0
    %392 = vmatprep.subr.mxu0 0.0
    %393 = vmatpush1.msra.mxu0 0.0
    %394 = vmatprep.subr.mxu0 0.0
    %395 = vmatpush1.msra.mxu0 0.0
    %396 = vmatprep.subr.mxu0 0.0
    %397 = vmatpush1.msra.mxu0 0.0
    %398 = vmatprep.subr.mxu0 0.0
    %399 = vmatpush1.msra.mxu0 0.0
    %400 = vmatprep.subr.mxu0 0.0
    %401 = vmatpush1.msra.mxu0 0.0
    %402 = vmatprep.subr.mxu0 0.0
    %403 = vmatpush1.msra.mxu0 0.0
    %404 = vmatprep.mubr.f32.mxu0 0.0
    %v405 = vand.u32 %v42, 4294901760
    %v406 = vsub.f32 %v42, %v405
    %407 = vmatmul.mubr.f32.gmra.mrb[0].mxu0 %v406
    %v408 = vpop.f32.mrb[0].mxu0
    %v409 = vadd.f32 %v305, %v408
    %v410 = vpop.f32.mrb[0].mxu0
    %411 = vdwg.mxu0
    %412 = vmatprep.subr.mxu0 0.0
    %v413 = vand.u32 %v43, 4294901760
    %414 = vmatpush1.msra.mxu0 %v413
    %415 = vmatprep.subr.mxu0 0.0
    %v416 = vand.u32 %v44, 4294901760
    %417 = vmatpush1.msra.mxu0 %v416
    %418 = vmatprep.subr.mxu0 0.0
    %v419 = vand.u32 %v45, 4294901760
    %420 = vmatpush1.msra.mxu0 %v419
    %421 = vmatprep.subr.mxu0 0.0
    %v422 = vand.u32 %v46, 4294901760
    %423 = vmatpush1.msra.mxu0 %v422
    %424 = vmatprep.subr.mxu0 0.0
    %v425 = vand.u32 %v47, 4294901760
    %426 = vmatpush1.msra.mxu0 %v425
    %427 = vmatprep.subr.mxu0 0.0
    %v428 = vand.u32 %v48, 4294901760
    %429 = vmatpush1.msra.mxu0 %v428
    %430 = vmatprep.subr.mxu0 0.0
    %v431 = vand.u32 %v49, 4294901760
    %432 = vmatpush1.msra.mxu0 %v431
    %433 = vmatprep.subr.mxu0 0.0
    %v434 = vand.u32 %v50, 4294901760
    %435 = vmatpush1.msra.mxu0 %v434
    %436 = vmatprep.subr.mxu0 0.0
    %v437 = vand.u32 %v51, 4294901760
    %438 = vmatpush1.msra.mxu0 %v437
    %439 = vmatprep.subr.mxu0 0.0
    %v440 = vand.u32 %v52, 4294901760
    %441 = vmatpush1.msra.mxu0 %v440
    %442 = vmatprep.subr.mxu0 0.0
    %v443 = vand.u32 %v53, 4294901760
    %444 = vmatpush1.msra.mxu0 %v443
    %445 = vmatprep.subr.mxu0 0.0
    %v446 = vand.u32 %v54, 4294901760
    %447 = vmatpush1.msra.mxu0 %v446
    %448 = vmatprep.subr.mxu0 0.0
    %v449 = vand.u32 %v55, 4294901760
    %450 = vmatpush1.msra.mxu0 %v449
    %451 = vmatprep.subr.mxu0 0.0
    %v452 = vand.u32 %v56, 4294901760
    %453 = vmatpush1.msra.mxu0 %v452
    %454 = vmatprep.subr.mxu0 0.0
    %v455 = vand.u32 %v57, 4294901760
    %456 = vmatpush1.msra.mxu0 %v455
    %457 = vmatprep.subr.mxu0 0.0
    %v458 = vand.u32 %v58, 4294901760
    %459 = vmatpush1.msra.mxu0 %v458
    %460 = vmatprep.subr.mxu0 0.0
    %461 = vmatpush1.msra.mxu0 0.0
    %462 = vmatprep.subr.mxu0 0.0
    %463 = vmatpush1.msra.mxu0 0.0
    %464 = vmatprep.subr.mxu0 0.0
    %465 = vmatpush1.msra.mxu0 0.0
    %466 = vmatprep.subr.mxu0 0.0
    %467 = vmatpush1.msra.mxu0 0.0
    %468 = vmatprep.subr.mxu0 0.0
    %469 = vmatpush1.msra.mxu0 0.0
    %470 = vmatprep.subr.mxu0 0.0
    %471 = vmatpush1.msra.mxu0 0.0
    %472 = vmatprep.subr.mxu0 0.0
    %473 = vmatpush1.msra.mxu0 0.0
    %474 = vmatprep.subr.mxu0 0.0
    %475 = vmatpush1.msra.mxu0 0.0
    %476 = vmatprep.subr.mxu0 0.0
    %477 = vmatpush1.msra.mxu0 0.0
    %478 = vmatprep.subr.mxu0 0.0
    %479 = vmatpush1.msra.mxu0 0.0
    %480 = vmatprep.subr.mxu0 0.0
    %481 = vmatpush1.msra.mxu0 0.0
    %482 = vmatprep.subr.mxu0 0.0
    %483 = vmatpush1.msra.mxu0 0.0
    %484 = vmatprep.subr.mxu0 0.0
    %485 = vmatpush1.msra.mxu0 0.0
    %486 = vmatprep.subr.mxu0 0.0
    %487 = vmatpush1.msra.mxu0 0.0
    %488 = vmatprep.subr.mxu0 0.0
    %489 = vmatpush1.msra.mxu0 0.0
    %490 = vmatprep.subr.mxu0 0.0
    %491 = vmatpush1.msra.mxu0 0.0
    %492 = vmatprep.mubr.f32.mxu0 0.0
    %v493 = vand.u32 %v42, 4294901760
    %v494 = vsub.f32 %v42, %v493
    %v495 = vand.u32 %v494, 4294901760
    %496 = vmatmul.mubr.f32.gmra.mrb[0].mxu0 %v495
    %v497 = vpop.f32.mrb[0].mxu0
    %v498 = vadd.f32 %v409, %v497
    %v499 = vpop.f32.mrb[0].mxu0
    %500 = vdwg.mxu0
    %501 = vmatprep.subr.mxu0 0.0
    %v502 = vand.u32 %v43, 4294901760
    %v503 = vsub.f32 %v43, %v502
    %v504 = vand.u32 %v503, 4294901760
    %505 = vmatpush1.msra.mxu0 %v504
    %506 = vmatprep.subr.mxu0 0.0
    %v507 = vand.u32 %v44, 4294901760
    %v508 = vsub.f32 %v44, %v507
    %v509 = vand.u32 %v508, 4294901760
    %510 = vmatpush1.msra.mxu0 %v509
    %511 = vmatprep.subr.mxu0 0.0
    %v512 = vand.u32 %v45, 4294901760
    %v513 = vsub.f32 %v45, %v512
    %v514 = vand.u32 %v513, 4294901760
    %515 = vmatpush1.msra.mxu0 %v514
    %516 = vmatprep.subr.mxu0 0.0
    %v517 = vand.u32 %v46, 4294901760
    %v518 = vsub.f32 %v46, %v517
    %v519 = vand.u32 %v518, 4294901760
    %520 = vmatpush1.msra.mxu0 %v519
    %521 = vmatprep.subr.mxu0 0.0
    %v522 = vand.u32 %v47, 4294901760
    %v523 = vsub.f32 %v47, %v522
    %v524 = vand.u32 %v523, 4294901760
    %525 = vmatpush1.msra.mxu0 %v524
    %526 = vmatprep.subr.mxu0 0.0
    %v527 = vand.u32 %v48, 4294901760
    %v528 = vsub.f32 %v48, %v527
    %v529 = vand.u32 %v528, 4294901760
    %530 = vmatpush1.msra.mxu0 %v529
    %531 = vmatprep.subr.mxu0 0.0
    %v532 = vand.u32 %v49, 4294901760
    %v533 = vsub.f32 %v49, %v532
    %v534 = vand.u32 %v533, 4294901760
    %535 = vmatpush1.msra.mxu0 %v534
    %536 = vmatprep.subr.mxu0 0.0
    %v537 = vand.u32 %v50, 4294901760
    %v538 = vsub.f32 %v50, %v537
    %v539 = vand.u32 %v538, 4294901760
    %540 = vmatpush1.msra.mxu0 %v539
    %541 = vmatprep.subr.mxu0 0.0
    %v542 = vand.u32 %v51, 4294901760
    %v543 = vsub.f32 %v51, %v542
    %v544 = vand.u32 %v543, 4294901760
    %545 = vmatpush1.msra.mxu0 %v544
    %546 = vmatprep.subr.mxu0 0.0
    %v547 = vand.u32 %v52, 4294901760
    %v548 = vsub.f32 %v52, %v547
    %v549 = vand.u32 %v548, 4294901760
    %550 = vmatpush1.msra.mxu0 %v549
    %551 = vmatprep.subr.mxu0 0.0
    %v552 = vand.u32 %v53, 4294901760
    %v553 = vsub.f32 %v53, %v552
    %v554 = vand.u32 %v553, 4294901760
    %555 = vmatpush1.msra.mxu0 %v554
    %556 = vmatprep.subr.mxu0 0.0
    %v557 = vand.u32 %v54, 4294901760
    %v558 = vsub.f32 %v54, %v557
    %v559 = vand.u32 %v558, 4294901760
    %560 = vmatpush1.msra.mxu0 %v559
    %561 = vmatprep.subr.mxu0 0.0
    %v562 = vand.u32 %v55, 4294901760
    %v563 = vsub.f32 %v55, %v562
    %v564 = vand.u32 %v563, 4294901760
    %565 = vmatpush1.msra.mxu0 %v564
    %566 = vmatprep.subr.mxu0 0.0
    %v567 = vand.u32 %v56, 4294901760
    %v568 = vsub.f32 %v56, %v567
    %v569 = vand.u32 %v568, 4294901760
    %570 = vmatpush1.msra.mxu0 %v569
    %571 = vmatprep.subr.mxu0 0.0
    %v572 = vand.u32 %v57, 4294901760
    %v573 = vsub.f32 %v57, %v572
    %v574 = vand.u32 %v573, 4294901760
    %575 = vmatpush1.msra.mxu0 %v574
    %576 = vmatprep.subr.mxu0 0.0
    %v577 = vand.u32 %v58, 4294901760
    %v578 = vsub.f32 %v58, %v577
    %v579 = vand.u32 %v578, 4294901760
    %580 = vmatpush1.msra.mxu0 %v579
    %581 = vmatprep.subr.mxu0 0.0
    %582 = vmatpush1.msra.mxu0 0.0
    %583 = vmatprep.subr.mxu0 0.0
    %584 = vmatpush1.msra.mxu0 0.0
    %585 = vmatprep.subr.mxu0 0.0
    %586 = vmatpush1.msra.mxu0 0.0
    %587 = vmatprep.subr.mxu0 0.0
    %588 = vmatpush1.msra.mxu0 0.0
    %589 = vmatprep.subr.mxu0 0.0
    %590 = vmatpush1.msra.mxu0 0.0
    %591 = vmatprep.subr.mxu0 0.0
    %592 = vmatpush1.msra.mxu0 0.0
    %593 = vmatprep.subr.mxu0 0.0
    %594 = vmatpush1.msra.mxu0 0.0
    %595 = vmatprep.subr.mxu0 0.0
    %596 = vmatpush1.msra.mxu0 0.0
    %597 = vmatprep.subr.mxu0 0.0
    %598 = vmatpush1.msra.mxu0 0.0
    %599 = vmatprep.subr.mxu0 0.0
    %600 = vmatpush1.msra.mxu0 0.0
    %601 = vmatprep.subr.mxu0 0.0
    %602 = vmatpush1.msra.mxu0 0.0
    %603 = vmatprep.subr.mxu0 0.0
    %604 = vmatpush1.msra.mxu0 0.0
    %605 = vmatprep.subr.mxu0 0.0
    %606 = vmatpush1.msra.mxu0 0.0
    %607 = vmatprep.subr.mxu0 0.0
    %608 = vmatpush1.msra.mxu0 0.0
    %609 = vmatprep.subr.mxu0 0.0
    %610 = vmatpush1.msra.mxu0 0.0
    %611 = vmatprep.subr.mxu0 0.0
    %612 = vmatpush1.msra.mxu0 0.0
    %613 = vmatprep.mubr.f32.mxu0 0.0
    %v614 = vand.u32 %v42, 4294901760
    %615 = vmatmul.mubr.f32.gmra.mrb[0].mxu0 %v614
    %v616 = vpop.f32.mrb[0].mxu0
    %v617 = vadd.f32 %v498, %v616
    %v618 = vpop.f32.mrb[0].mxu0
    %619 = vdwg.mxu0
    %620 = vmatprep.subr.mxu0 0.0
    %v621 = vand.u32 %v43, 4294901760
    %622 = vmatpush1.msra.mxu0 %v621
    %623 = vmatprep.subr.mxu0 0.0
    %v624 = vand.u32 %v44, 4294901760
    %625 = vmatpush1.msra.mxu0 %v624
    %626 = vmatprep.subr.mxu0 0.0
    %v627 = vand.u32 %v45, 4294901760
    %628 = vmatpush1.msra.mxu0 %v627
    %629 = vmatprep.subr.mxu0 0.0
    %v630 = vand.u32 %v46, 4294901760
    %631 = vmatpush1.msra.mxu0 %v630
    %632 = vmatprep.subr.mxu0 0.0
    %v633 = vand.u32 %v47, 4294901760
    %634 = vmatpush1.msra.mxu0 %v633
    %635 = vmatprep.subr.mxu0 0.0
    %v636 = vand.u32 %v48, 4294901760
    %637 = vmatpush1.msra.mxu0 %v636
    %638 = vmatprep.subr.mxu0 0.0
    %v639 = vand.u32 %v49, 4294901760
    %640 = vmatpush1.msra.mxu0 %v639
    %641 = vmatprep.subr.mxu0 0.0
    %v642 = vand.u32 %v50, 4294901760
    %643 = vmatpush1.msra.mxu0 %v642
    %644 = vmatprep.subr.mxu0 0.0
    %v645 = vand.u32 %v51, 4294901760
    %646 = vmatpush1.msra.mxu0 %v645
    %647 = vmatprep.subr.mxu0 0.0
    %v648 = vand.u32 %v52, 4294901760
    %649 = vmatpush1.msra.mxu0 %v648
    %650 = vmatprep.subr.mxu0 0.0
    %v651 = vand.u32 %v53, 4294901760
    %652 = vmatpush1.msra.mxu0 %v651
    %653 = vmatprep.subr.mxu0 0.0
    %v654 = vand.u32 %v54, 4294901760
    %655 = vmatpush1.msra.mxu0 %v654
    %656 = vmatprep.subr.mxu0 0.0
    %v657 = vand.u32 %v55, 4294901760
    %658 = vmatpush1.msra.mxu0 %v657
    %659 = vmatprep.subr.mxu0 0.0
    %v660 = vand.u32 %v56, 4294901760
    %661 = vmatpush1.msra.mxu0 %v660
    %662 = vmatprep.subr.mxu0 0.0
    %v663 = vand.u32 %v57, 4294901760
    %664 = vmatpush1.msra.mxu0 %v663
    %665 = vmatprep.subr.mxu0 0.0
    %v666 = vand.u32 %v58, 4294901760
    %667 = vmatpush1.msra.mxu0 %v666
    %668 = vmatprep.subr.mxu0 0.0
    %669 = vmatpush1.msra.mxu0 0.0
    %670 = vmatprep.subr.mxu0 0.0
    %671 = vmatpush1.msra.mxu0 0.0
    %672 = vmatprep.subr.mxu0 0.0
    %673 = vmatpush1.msra.mxu0 0.0
    %674 = vmatprep.subr.mxu0 0.0
    %675 = vmatpush1.msra.mxu0 0.0
    %676 = vmatprep.subr.mxu0 0.0
    %677 = vmatpush1.msra.mxu0 0.0
    %678 = vmatprep.subr.mxu0 0.0
    %679 = vmatpush1.msra.mxu0 0.0
    %680 = vmatprep.subr.mxu0 0.0
    %681 = vmatpush1.msra.mxu0 0.0
    %682 = vmatprep.subr.mxu0 0.0
    %683 = vmatpush1.msra.mxu0 0.0
    %684 = vmatprep.subr.mxu0 0.0
    %685 = vmatpush1.msra.mxu0 0.0
    %686 = vmatprep.subr.mxu0 0.0
    %687 = vmatpush1.msra.mxu0 0.0
    %688 = vmatprep.subr.mxu0 0.0
    %689 = vmatpush1.msra.mxu0 0.0
    %690 = vmatprep.subr.mxu0 0.0
    %691 = vmatpush1.msra.mxu0 0.0
    %692 = vmatprep.subr.mxu0 0.0
    %693 = vmatpush1.msra.mxu0 0.0
    %694 = vmatprep.subr.mxu0 0.0
    %695 = vmatpush1.msra.mxu0 0.0
    %696 = vmatprep.subr.mxu0 0.0
    %697 = vmatpush1.msra.mxu0 0.0
    %698 = vmatprep.subr.mxu0 0.0
    %699 = vmatpush1.msra.mxu0 0.0
    %700 = vmatprep.mubr.f32.mxu0 0.0
    %v701 = vand.u32 %v42, 4294901760
    %702 = vmatmul.mubr.f32.gmra.mrb[0].mxu0 %v701
    %v703 = vpop.f32.mrb[0].mxu0
    %v704 = vadd.f32 %v617, %v703
    %v705 = vpop.f32.mrb[0].mxu0
    %706 = vdwg.mxu0
    %v707 = vmax.f32 %v704, 0.0
    %v708 = vld [vmem:[%s3] sm:$0xff]
    %v709 = vld [vmem:[%s3 + $0x8] sm:$0xff]
    %v710 = vld [vmem:[%s3 + $0x10] sm:$0xff]
    %v711 = vld [vmem:[%s3 + $0x18] sm:$0xff]
    %v712 = vld [vmem:[%s4] sm:$0x1]
    %v714 = vlaneseq
    %v715 = vshrl.u32 %v714, 7
    %v716 = vsub.s32 0, %v715
    %v717 = vrot.slane %v712, %v716
    %vm719 = vcmask 261120
    %v721 = vsel %vm719, %v707, 0
    %723 = vmatprep.subr.mxu0 0.0
    %v724 = vand.u32 %v708, 4294901760
    %725 = vmatpush1.msra.mxu0 %v724
    %726 = vmatprep.subr.mxu0 0.0
    %v727 = vand.u32 %v709, 4294901760
    %728 = vmatpush1.msra.mxu0 %v727
    %729 = vmatprep.subr.mxu0 0.0
    %v730 = vand.u32 %v710, 4294901760
    %731 = vmatpush1.msra.mxu0 %v730
    %732 = vmatprep.subr.mxu0 0.0
    %v733 = vand.u32 %v711, 4294901760
    %734 = vmatpush1.msra.mxu0 %v733
    %735 = vmatprep.subr.mxu0 0.0
    %736 = vmatpush1.msra.mxu0 0.0
    %737 = vmatprep.subr.mxu0 0.0
    %738 = vmatpush1.msra.mxu0 0.0
    %739 = vmatprep.subr.mxu0 0.0
    %740 = vmatpush1.msra.mxu0 0.0
    %741 = vmatprep.subr.mxu0 0.0
    %742 = vmatpush1.msra.mxu0 0.0
    %743 = vmatprep.subr.mxu0 0.0
    %744 = vmatpush1.msra.mxu0 0.0
    %745 = vmatprep.subr.mxu0 0.0
    %746 = vmatpush1.msra.mxu0 0.0
    %747 = vmatprep.subr.mxu0 0.0
    %748 = vmatpush1.msra.mxu0 0.0
    %749 = vmatprep.subr.mxu0 0.0
    %750 = vmatpush1.msra.mxu0 0.0
    %751 = vmatprep.subr.mxu0 0.0
    %752 = vmatpush1.msra.mxu0 0.0
    %753 = vmatprep.subr.mxu0 0.0
    %754 = vmatpush1.msra.mxu0 0.0
    %755 = vmatprep.subr.mxu0 0.0
    %756 = vmatpush1.msra.mxu0 0.0
    %757 = vmatprep.subr.mxu0 0.0
    %758 = vmatpush1.msra.mxu0 0.0
    %759 = vmatprep.subr.mxu0 0.0
    %760 = vmatpush1.msra.mxu0 0.0
    %761 = vmatprep.subr.mxu0 0.0
    %762 = vmatpush1.msra.mxu0 0.0
    %763 = vmatprep.subr.mxu0 0.0
    %764 = vmatpush1.msra.mxu0 0.0
    %765 = vmatprep.subr.mxu0 0.0
    %766 = vmatpush1.msra.mxu0 0.0
    %767 = vmatprep.subr.mxu0 0.0
    %768 = vmatpush1.msra.mxu0 0.0
    %769 = vmatprep.subr.mxu0 0.0
    %770 = vmatpush1.msra.mxu0 0.0
    %771 = vmatprep.subr.mxu0 0.0
    %772 = vmatpush1.msra.mxu0 0.0
    %773 = vmatprep.subr.mxu0 0.0
    %774 = vmatpush1.msra.mxu0 0.0
    %775 = vmatprep.subr.mxu0 0.0
    %776 = vmatpush1.msra.mxu0 0.0
    %777 = vmatprep.subr.mxu0 0.0
    %778 = vmatpush1.msra.mxu0 0.0
    %779 = vmatprep.subr.mxu0 0.0
    %780 = vmatpush1.msra.mxu0 0.0
    %781 = vmatprep.subr.mxu0 0.0
    %782 = vmatpush1.msra.mxu0 0.0
    %783 = vmatprep.subr.mxu0 0.0
    %784 = vmatpush1.msra.mxu0 0.0
    %785 = vmatprep.subr.mxu0 0.0
    %786 = vmatpush1.msra.mxu0 0.0
    %787 = vmatprep.subr.mxu0 0.0
    %788 = vmatpush1.msra.mxu0 0.0
    %789 = vmatprep.subr.mxu0 0.0
    %790 = vmatpush1.msra.mxu0 0.0
    %791 = vmatprep.mubr.f32.mxu0 0.0
    %v792 = vand.u32 %v721, 4294901760
    %v793 = vsub.f32 %v721, %v792
    %v794 = vand.u32 %v793, 4294901760
    %v795 = vsub.f32 %v793, %v794
    %v796 = vand.u32 %v795, 4294901760
    %797 = vmatmul.mubr.f32.gmra.mrb[0].mxu0 %v796
    %v798 = vpop.f32.mrb[0].mxu0
    %v799 = vadd.f32 %v717, %v798
    %v800 = vpop.f32.mrb[0].mxu0
    %801 = vdwg.mxu0
    %802 = vmatprep.subr.mxu0 0.0
    %v803 = vand.u32 %v708, 4294901760
    %v804 = vsub.f32 %v708, %v803
    %v805 = vand.u32 %v804, 4294901760
    %v806 = vsub.f32 %v804, %v805
    %v807 = vand.u32 %v806, 4294901760
    %808 = vmatpush1.msra.mxu0 %v807
    %809 = vmatprep.subr.mxu0 0.0
    %v810 = vand.u32 %v709, 4294901760
    %v811 = vsub.f32 %v709, %v810
    %v812 = vand.u32 %v811, 4294901760
    %v813 = vsub.f32 %v811, %v812
    %v814 = vand.u32 %v813, 4294901760
    %815 = vmatpush1.msra.mxu0 %v814
    %816 = vmatprep.subr.mxu0 0.0
    %v817 = vand.u32 %v710, 4294901760
    %v818 = vsub.f32 %v710, %v817
    %v819 = vand.u32 %v818, 4294901760
    %v820 = vsub.f32 %v818, %v819
    %v821 = vand.u32 %v820, 4294901760
    %822 = vmatpush1.msra.mxu0 %v821
    %823 = vmatprep.subr.mxu0 0.0
    %v824 = vand.u32 %v711, 4294901760
    %v825 = vsub.f32 %v711, %v824
    %v826 = vand.u32 %v825, 4294901760
    %v827 = vsub.f32 %v825, %v826
    %v828 = vand.u32 %v827, 4294901760
    %829 = vmatpush1.msra.mxu0 %v828
    %830 = vmatprep.subr.mxu0 0.0
    %831 = vmatpush1.msra.mxu0 0.0
    %832 = vmatprep.subr.mxu0 0.0
    %833 = vmatpush1.msra.mxu0 0.0
    %834 = vmatprep.subr.mxu0 0.0
    %835 = vmatpush1.msra.mxu0 0.0
    %836 = vmatprep.subr.mxu0 0.0
    %837 = vmatpush1.msra.mxu0 0.0
    %838 = vmatprep.subr.mxu0 0.0
    %839 = vmatpush1.msra.mxu0 0.0
    %840 = vmatprep.subr.mxu0 0.0
    %841 = vmatpush1.msra.mxu0 0.0
    %842 = vmatprep.subr.mxu0 0.0
    %843 = vmatpush1.msra.mxu0 0.0
    %844 = vmatprep.subr.mxu0 0.0
    %845 = vmatpush1.msra.mxu0 0.0
    %846 = vmatprep.subr.mxu0 0.0
    %847 = vmatpush1.msra.mxu0 0.0
    %848 = vmatprep.subr.mxu0 0.0
    %849 = vmatpush1.msra.mxu0 0.0
    %850 = vmatprep.subr.mxu0 0.0
    %851 = vmatpush1.msra.mxu0 0.0
    %852 = vmatprep.subr.mxu0 0.0
    %853 = vmatpush1.msra.mxu0 0.0
    %854 = vmatprep.subr.mxu0 0.0
    %855 = vmatpush1.msra.mxu0 0.0
    %856 = vmatprep.subr.mxu0 0.0
    %857 = vmatpush1.msra.mxu0 0.0
    %858 = vmatprep.subr.mxu0 0.0
    %859 = vmatpush1.msra.mxu0 0.0
    %860 = vmatprep.subr.mxu0 0.0
    %861 = vmatpush1.msra.mxu0 0.0
    %862 = vmatprep.subr.mxu0 0.0
    %863 = vmatpush1.msra.mxu0 0.0
    %864 = vmatprep.subr.mxu0 0.0
    %865 = vmatpush1.msra.mxu0 0.0
    %866 = vmatprep.subr.mxu0 0.0
    %867 = vmatpush1.msra.mxu0 0.0
    %868 = vmatprep.subr.mxu0 0.0
    %869 = vmatpush1.msra.mxu0 0.0
    %870 = vmatprep.subr.mxu0 0.0
    %871 = vmatpush1.msra.mxu0 0.0
    %872 = vmatprep.subr.mxu0 0.0
    %873 = vmatpush1.msra.mxu0 0.0
    %874 = vmatprep.subr.mxu0 0.0
    %875 = vmatpush1.msra.mxu0 0.0
    %876 = vmatprep.subr.mxu0 0.0
    %877 = vmatpush1.msra.mxu0 0.0
    %878 = vmatprep.subr.mxu0 0.0
    %879 = vmatpush1.msra.mxu0 0.0
    %880 = vmatprep.subr.mxu0 0.0
    %881 = vmatpush1.msra.mxu0 0.0
    %882 = vmatprep.subr.mxu0 0.0
    %883 = vmatpush1.msra.mxu0 0.0
    %884 = vmatprep.subr.mxu0 0.0
    %885 = vmatpush1.msra.mxu0 0.0
    %886 = vmatprep.mubr.f32.mxu0 0.0
    %v887 = vand.u32 %v721, 4294901760
    %888 = vmatmul.mubr.f32.gmra.mrb[0].mxu0 %v887
    %v889 = vpop.f32.mrb[0].mxu0
    %v890 = vadd.f32 %v799, %v889
    %v891 = vpop.f32.mrb[0].mxu0
    %892 = vdwg.mxu0
    %893 = vmatprep.subr.mxu0 0.0
    %v894 = vand.u32 %v708, 4294901760
    %v895 = vsub.f32 %v708, %v894
    %896 = vmatpush1.msra.mxu0 %v895
    %897 = vmatprep.subr.mxu0 0.0
    %v898 = vand.u32 %v709, 4294901760
    %v899 = vsub.f32 %v709, %v898
    %900 = vmatpush1.msra.mxu0 %v899
    %901 = vmatprep.subr.mxu0 0.0
    %v902 = vand.u32 %v710, 4294901760
    %v903 = vsub.f32 %v710, %v902
    %904 = vmatpush1.msra.mxu0 %v903
    %905 = vmatprep.subr.mxu0 0.0
    %v906 = vand.u32 %v711, 4294901760
    %v907 = vsub.f32 %v711, %v906
    %908 = vmatpush1.msra.mxu0 %v907
    %909 = vmatprep.subr.mxu0 0.0
    %910 = vmatpush1.msra.mxu0 0.0
    %911 = vmatprep.subr.mxu0 0.0
    %912 = vmatpush1.msra.mxu0 0.0
    %913 = vmatprep.subr.mxu0 0.0
    %914 = vmatpush1.msra.mxu0 0.0
    %915 = vmatprep.subr.mxu0 0.0
    %916 = vmatpush1.msra.mxu0 0.0
    %917 = vmatprep.subr.mxu0 0.0
    %918 = vmatpush1.msra.mxu0 0.0
    %919 = vmatprep.subr.mxu0 0.0
    %920 = vmatpush1.msra.mxu0 0.0
    %921 = vmatprep.subr.mxu0 0.0
    %922 = vmatpush1.msra.mxu0 0.0
    %923 = vmatprep.subr.mxu0 0.0
    %924 = vmatpush1.msra.mxu0 0.0
    %925 = vmatprep.subr.mxu0 0.0
    %926 = vmatpush1.msra.mxu0 0.0
    %927 = vmatprep.subr.mxu0 0.0
    %928 = vmatpush1.msra.mxu0 0.0
    %929 = vmatprep.subr.mxu0 0.0
    %930 = vmatpush1.msra.mxu0 0.0
    %931 = vmatprep.subr.mxu0 0.0
    %932 = vmatpush1.msra.mxu0 0.0
    %933 = vmatprep.subr.mxu0 0.0
    %934 = vmatpush1.msra.mxu0 0.0
    %935 = vmatprep.subr.mxu0 0.0
    %936 = vmatpush1.msra.mxu0 0.0
    %937 = vmatprep.subr.mxu0 0.0
    %938 = vmatpush1.msra.mxu0 0.0
    %939 = vmatprep.subr.mxu0 0.0
    %940 = vmatpush1.msra.mxu0 0.0
    %941 = vmatprep.subr.mxu0 0.0
    %942 = vmatpush1.msra.mxu0 0.0
    %943 = vmatprep.subr.mxu0 0.0
    %944 = vmatpush1.msra.mxu0 0.0
    %945 = vmatprep.subr.mxu0 0.0
    %946 = vmatpush1.msra.mxu0 0.0
    %947 = vmatprep.subr.mxu0 0.0
    %948 = vmatpush1.msra.mxu0 0.0
    %949 = vmatprep.subr.mxu0 0.0
    %950 = vmatpush1.msra.mxu0 0.0
    %951 = vmatprep.subr.mxu0 0.0
    %952 = vmatpush1.msra.mxu0 0.0
    %953 = vmatprep.subr.mxu0 0.0
    %954 = vmatpush1.msra.mxu0 0.0
    %955 = vmatprep.subr.mxu0 0.0
    %956 = vmatpush1.msra.mxu0 0.0
    %957 = vmatprep.subr.mxu0 0.0
    %958 = vmatpush1.msra.mxu0 0.0
    %959 = vmatprep.subr.mxu0 0.0
    %960 = vmatpush1.msra.mxu0 0.0
    %961 = vmatprep.subr.mxu0 0.0
    %962 = vmatpush1.msra.mxu0 0.0
    %963 = vmatprep.subr.mxu0 0.0
    %964 = vmatpush1.msra.mxu0 0.0
    %965 = vmatprep.mubr.f32.mxu0 0.0
    %v966 = vand.u32 %v721, 4294901760
    %v967 = vsub.f32 %v721, %v966
    %968 = vmatmul.mubr.f32.gmra.mrb[0].mxu0 %v967
    %v969 = vpop.f32.mrb[0].mxu0
    %v970 = vadd.f32 %v890, %v969
    %v971 = vpop.f32.mrb[0].mxu0
    %972 = vdwg.mxu0
    %973 = vmatprep.subr.mxu0 0.0
    %v974 = vand.u32 %v708, 4294901760
    %975 = vmatpush1.msra.mxu0 %v974
    %976 = vmatprep.subr.mxu0 0.0
    %v977 = vand.u32 %v709, 4294901760
    %978 = vmatpush1.msra.mxu0 %v977
    %979 = vmatprep.subr.mxu0 0.0
    %v980 = vand.u32 %v710, 4294901760
    %981 = vmatpush1.msra.mxu0 %v980
    %982 = vmatprep.subr.mxu0 0.0
    %v983 = vand.u32 %v711, 4294901760
    %984 = vmatpush1.msra.mxu0 %v983
    %985 = vmatprep.subr.mxu0 0.0
    %986 = vmatpush1.msra.mxu0 0.0
    %987 = vmatprep.subr.mxu0 0.0
    %988 = vmatpush1.msra.mxu0 0.0
    %989 = vmatprep.subr.mxu0 0.0
    %990 = vmatpush1.msra.mxu0 0.0
    %991 = vmatprep.subr.mxu0 0.0
    %992 = vmatpush1.msra.mxu0 0.0
    %993 = vmatprep.subr.mxu0 0.0
    %994 = vmatpush1.msra.mxu0 0.0
    %995 = vmatprep.subr.mxu0 0.0
    %996 = vmatpush1.msra.mxu0 0.0
    %997 = vmatprep.subr.mxu0 0.0
    %998 = vmatpush1.msra.mxu0 0.0
    %999 = vmatprep.subr.mxu0 0.0
    %1000 = vmatpush1.msra.mxu0 0.0
    %1001 = vmatprep.subr.mxu0 0.0
    %1002 = vmatpush1.msra.mxu0 0.0
    %1003 = vmatprep.subr.mxu0 0.0
    %1004 = vmatpush1.msra.mxu0 0.0
    %1005 = vmatprep.subr.mxu0 0.0
    %1006 = vmatpush1.msra.mxu0 0.0
    %1007 = vmatprep.subr.mxu0 0.0
    %1008 = vmatpush1.msra.mxu0 0.0
    %1009 = vmatprep.subr.mxu0 0.0
    %1010 = vmatpush1.msra.mxu0 0.0
    %1011 = vmatprep.subr.mxu0 0.0
    %1012 = vmatpush1.msra.mxu0 0.0
    %1013 = vmatprep.subr.mxu0 0.0
    %1014 = vmatpush1.msra.mxu0 0.0
    %1015 = vmatprep.subr.mxu0 0.0
    %1016 = vmatpush1.msra.mxu0 0.0
    %1017 = vmatprep.subr.mxu0 0.0
    %1018 = vmatpush1.msra.mxu0 0.0
    %1019 = vmatprep.subr.mxu0 0.0
    %1020 = vmatpush1.msra.mxu0 0.0
    %1021 = vmatprep.subr.mxu0 0.0
    %1022 = vmatpush1.msra.mxu0 0.0
    %1023 = vmatprep.subr.mxu0 0.0
    %1024 = vmatpush1.msra.mxu0 0.0
    %1025 = vmatprep.subr.mxu0 0.0
    %1026 = vmatpush1.msra.mxu0 0.0
    %1027 = vmatprep.subr.mxu0 0.0
    %1028 = vmatpush1.msra.mxu0 0.0
    %1029 = vmatprep.subr.mxu0 0.0
    %1030 = vmatpush1.msra.mxu0 0.0
    %1031 = vmatprep.subr.mxu0 0.0
    %1032 = vmatpush1.msra.mxu0 0.0
    %1033 = vmatprep.subr.mxu0 0.0
    %1034 = vmatpush1.msra.mxu0 0.0
    %1035 = vmatprep.subr.mxu0 0.0
    %1036 = vmatpush1.msra.mxu0 0.0
    %1037 = vmatprep.subr.mxu0 0.0
    %1038 = vmatpush1.msra.mxu0 0.0
    %1039 = vmatprep.subr.mxu0 0.0
    %1040 = vmatpush1.msra.mxu0 0.0
    %1041 = vmatprep.mubr.f32.mxu0 0.0
    %v1042 = vand.u32 %v721, 4294901760
    %v1043 = vsub.f32 %v721, %v1042
    %v1044 = vand.u32 %v1043, 4294901760
    %1045 = vmatmul.mubr.f32.gmra.mrb[0].mxu0 %v1044
    %v1046 = vpop.f32.mrb[0].mxu0
    %v1047 = vadd.f32 %v970, %v1046
    %v1048 = vpop.f32.mrb[0].mxu0
    %1049 = vdwg.mxu0
    %1050 = vmatprep.subr.mxu0 0.0
    %v1051 = vand.u32 %v708, 4294901760
    %v1052 = vsub.f32 %v708, %v1051
    %v1053 = vand.u32 %v1052, 4294901760
    %1054 = vmatpush1.msra.mxu0 %v1053
    %1055 = vmatprep.subr.mxu0 0.0
    %v1056 = vand.u32 %v709, 4294901760
    %v1057 = vsub.f32 %v709, %v1056
    %v1058 = vand.u32 %v1057, 4294901760
    %1059 = vmatpush1.msra.mxu0 %v1058
    %1060 = vmatprep.subr.mxu0 0.0
    %v1061 = vand.u32 %v710, 4294901760
    %v1062 = vsub.f32 %v710, %v1061
    %v1063 = vand.u32 %v1062, 4294901760
    %1064 = vmatpush1.msra.mxu0 %v1063
    %1065 = vmatprep.subr.mxu0 0.0
    %v1066 = vand.u32 %v711, 4294901760
    %v1067 = vsub.f32 %v711, %v1066
    %v1068 = vand.u32 %v1067, 4294901760
    %1069 = vmatpush1.msra.mxu0 %v1068
    %1070 = vmatprep.subr.mxu0 0.0
    %1071 = vmatpush1.msra.mxu0 0.0
    %1072 = vmatprep.subr.mxu0 0.0
    %1073 = vmatpush1.msra.mxu0 0.0
    %1074 = vmatprep.subr.mxu0 0.0
    %1075 = vmatpush1.msra.mxu0 0.0
    %1076 = vmatprep.subr.mxu0 0.0
    %1077 = vmatpush1.msra.mxu0 0.0
    %1078 = vmatprep.subr.mxu0 0.0
    %1079 = vmatpush1.msra.mxu0 0.0
    %1080 = vmatprep.subr.mxu0 0.0
    %1081 = vmatpush1.msra.mxu0 0.0
    %1082 = vmatprep.subr.mxu0 0.0
    %1083 = vmatpush1.msra.mxu0 0.0
    %1084 = vmatprep.subr.mxu0 0.0
    %1085 = vmatpush1.msra.mxu0 0.0
    %1086 = vmatprep.subr.mxu0 0.0
    %1087 = vmatpush1.msra.mxu0 0.0
    %1088 = vmatprep.subr.mxu0 0.0
    %1089 = vmatpush1.msra.mxu0 0.0
    %1090 = vmatprep.subr.mxu0 0.0
    %1091 = vmatpush1.msra.mxu0 0.0
    %1092 = vmatprep.subr.mxu0 0.0
    %1093 = vmatpush1.msra.mxu0 0.0
    %1094 = vmatprep.subr.mxu0 0.0
    %1095 = vmatpush1.msra.mxu0 0.0
    %1096 = vmatprep.subr.mxu0 0.0
    %1097 = vmatpush1.msra.mxu0 0.0
    %1098 = vmatprep.subr.mxu0 0.0
    %1099 = vmatpush1.msra.mxu0 0.0
    %1100 = vmatprep.subr.mxu0 0.0
    %1101 = vmatpush1.msra.mxu0 0.0
    %1102 = vmatprep.subr.mxu0 0.0
    %1103 = vmatpush1.msra.mxu0 0.0
    %1104 = vmatprep.subr.mxu0 0.0
    %1105 = vmatpush1.msra.mxu0 0.0
    %1106 = vmatprep.subr.mxu0 0.0
    %1107 = vmatpush1.msra.mxu0 0.0
    %1108 = vmatprep.subr.mxu0 0.0
    %1109 = vmatpush1.msra.mxu0 0.0
    %1110 = vmatprep.subr.mxu0 0.0
    %1111 = vmatpush1.msra.mxu0 0.0
    %1112 = vmatprep.subr.mxu0 0.0
    %1113 = vmatpush1.msra.mxu0 0.0
    %1114 = vmatprep.subr.mxu0 0.0
    %1115 = vmatpush1.msra.mxu0 0.0
    %1116 = vmatprep.subr.mxu0 0.0
    %1117 = vmatpush1.msra.mxu0 0.0
    %1118 = vmatprep.subr.mxu0 0.0
    %1119 = vmatpush1.msra.mxu0 0.0
    %1120 = vmatprep.subr.mxu0 0.0
    %1121 = vmatpush1.msra.mxu0 0.0
    %1122 = vmatprep.subr.mxu0 0.0
    %1123 = vmatpush1.msra.mxu0 0.0
    %1124 = vmatprep.subr.mxu0 0.0
    %1125 = vmatpush1.msra.mxu0 0.0
    %1126 = vmatprep.mubr.f32.mxu0 0.0
    %v1127 = vand.u32 %v721, 4294901760
    %1128 = vmatmul.mubr.f32.gmra.mrb[0].mxu0 %v1127
    %v1129 = vpop.f32.mrb[0].mxu0
    %v1130 = vadd.f32 %v1047, %v1129
    %v1131 = vpop.f32.mrb[0].mxu0
    %1132 = vdwg.mxu0
    %1133 = vmatprep.subr.mxu0 0.0
    %v1134 = vand.u32 %v708, 4294901760
    %1135 = vmatpush1.msra.mxu0 %v1134
    %1136 = vmatprep.subr.mxu0 0.0
    %v1137 = vand.u32 %v709, 4294901760
    %1138 = vmatpush1.msra.mxu0 %v1137
    %1139 = vmatprep.subr.mxu0 0.0
    %v1140 = vand.u32 %v710, 4294901760
    %1141 = vmatpush1.msra.mxu0 %v1140
    %1142 = vmatprep.subr.mxu0 0.0
    %v1143 = vand.u32 %v711, 4294901760
    %1144 = vmatpush1.msra.mxu0 %v1143
    %1145 = vmatprep.subr.mxu0 0.0
    %1146 = vmatpush1.msra.mxu0 0.0
    %1147 = vmatprep.subr.mxu0 0.0
    %1148 = vmatpush1.msra.mxu0 0.0
    %1149 = vmatprep.subr.mxu0 0.0
    %1150 = vmatpush1.msra.mxu0 0.0
    %1151 = vmatprep.subr.mxu0 0.0
    %1152 = vmatpush1.msra.mxu0 0.0
    %1153 = vmatprep.subr.mxu0 0.0
    %1154 = vmatpush1.msra.mxu0 0.0
    %1155 = vmatprep.subr.mxu0 0.0
    %1156 = vmatpush1.msra.mxu0 0.0
    %1157 = vmatprep.subr.mxu0 0.0
    %1158 = vmatpush1.msra.mxu0 0.0
    %1159 = vmatprep.subr.mxu0 0.0
    %1160 = vmatpush1.msra.mxu0 0.0
    %1161 = vmatprep.subr.mxu0 0.0
    %1162 = vmatpush1.msra.mxu0 0.0
    %1163 = vmatprep.subr.mxu0 0.0
    %1164 = vmatpush1.msra.mxu0 0.0
    %1165 = vmatprep.subr.mxu0 0.0
    %1166 = vmatpush1.msra.mxu0 0.0
    %1167 = vmatprep.subr.mxu0 0.0
    %1168 = vmatpush1.msra.mxu0 0.0
    %1169 = vmatprep.subr.mxu0 0.0
    %1170 = vmatpush1.msra.mxu0 0.0
    %1171 = vmatprep.subr.mxu0 0.0
    %1172 = vmatpush1.msra.mxu0 0.0
    %1173 = vmatprep.subr.mxu0 0.0
    %1174 = vmatpush1.msra.mxu0 0.0
    %1175 = vmatprep.subr.mxu0 0.0
    %1176 = vmatpush1.msra.mxu0 0.0
    %1177 = vmatprep.subr.mxu0 0.0
    %1178 = vmatpush1.msra.mxu0 0.0
    %1179 = vmatprep.subr.mxu0 0.0
    %1180 = vmatpush1.msra.mxu0 0.0
    %1181 = vmatprep.subr.mxu0 0.0
    %1182 = vmatpush1.msra.mxu0 0.0
    %1183 = vmatprep.subr.mxu0 0.0
    %1184 = vmatpush1.msra.mxu0 0.0
    %1185 = vmatprep.subr.mxu0 0.0
    %1186 = vmatpush1.msra.mxu0 0.0
    %1187 = vmatprep.subr.mxu0 0.0
    %1188 = vmatpush1.msra.mxu0 0.0
    %1189 = vmatprep.subr.mxu0 0.0
    %1190 = vmatpush1.msra.mxu0 0.0
    %1191 = vmatprep.subr.mxu0 0.0
    %1192 = vmatpush1.msra.mxu0 0.0
    %1193 = vmatprep.subr.mxu0 0.0
    %1194 = vmatpush1.msra.mxu0 0.0
    %1195 = vmatprep.subr.mxu0 0.0
    %1196 = vmatpush1.msra.mxu0 0.0
    %1197 = vmatprep.subr.mxu0 0.0
    %1198 = vmatpush1.msra.mxu0 0.0
    %1199 = vmatprep.subr.mxu0 0.0
    %1200 = vmatpush1.msra.mxu0 0.0
    %1201 = vmatprep.mubr.f32.mxu0 0.0
    %v1202 = vand.u32 %v721, 4294901760
    %1203 = vmatmul.mubr.f32.gmra.mrb[0].mxu0 %v1202
    %v1204 = vpop.f32.mrb[0].mxu0
    %v1205 = vadd.f32 %v1130, %v1204
    %v1206 = vpop.f32.mrb[0].mxu0
    %1207 = vdwg.mxu0
    %v1208 = vmax.f32 %v1205, 0.0
    %v1209 = vld [vmem:[%s5] sm:$0xff]
    %v1210 = vld [vmem:[%s5 + $0x8] sm:$0xff]
    %v1211 = vld [vmem:[%s5 + $0x10] sm:$0xff]
    %v1212 = vld [vmem:[%s5 + $0x18] sm:$0xff]
    %v1213 = vld [vmem:[%s6] sm:$0x1]
    %v1215 = vlaneseq
    %v1216 = vshrl.u32 %v1215, 7
    %v1217 = vsub.s32 0, %v1216
    %v1218 = vrot.slane %v1213, %v1217
    %v1221 = vsel %vm719, %v1208, 0
    %1223 = vmatprep.subr.mxu0 0.0
    %v1224 = vand.u32 %v1209, 4294901760
    %1225 = vmatpush1.msra.mxu0 %v1224
    %1226 = vmatprep.subr.mxu0 0.0
    %v1227 = vand.u32 %v1210, 4294901760
    %1228 = vmatpush1.msra.mxu0 %v1227
    %1229 = vmatprep.subr.mxu0 0.0
    %v1230 = vand.u32 %v1211, 4294901760
    %1231 = vmatpush1.msra.mxu0 %v1230
    %1232 = vmatprep.subr.mxu0 0.0
    %v1233 = vand.u32 %v1212, 4294901760
    %1234 = vmatpush1.msra.mxu0 %v1233
    %1235 = vmatprep.subr.mxu0 0.0
    %1236 = vmatpush1.msra.mxu0 0.0
    %1237 = vmatprep.subr.mxu0 0.0
    %1238 = vmatpush1.msra.mxu0 0.0
    %1239 = vmatprep.subr.mxu0 0.0
    %1240 = vmatpush1.msra.mxu0 0.0
    %1241 = vmatprep.subr.mxu0 0.0
    %1242 = vmatpush1.msra.mxu0 0.0
    %1243 = vmatprep.subr.mxu0 0.0
    %1244 = vmatpush1.msra.mxu0 0.0
    %1245 = vmatprep.subr.mxu0 0.0
    %1246 = vmatpush1.msra.mxu0 0.0
    %1247 = vmatprep.subr.mxu0 0.0
    %1248 = vmatpush1.msra.mxu0 0.0
    %1249 = vmatprep.subr.mxu0 0.0
    %1250 = vmatpush1.msra.mxu0 0.0
    %1251 = vmatprep.subr.mxu0 0.0
    %1252 = vmatpush1.msra.mxu0 0.0
    %1253 = vmatprep.subr.mxu0 0.0
    %1254 = vmatpush1.msra.mxu0 0.0
    %1255 = vmatprep.subr.mxu0 0.0
    %1256 = vmatpush1.msra.mxu0 0.0
    %1257 = vmatprep.subr.mxu0 0.0
    %1258 = vmatpush1.msra.mxu0 0.0
    %1259 = vmatprep.subr.mxu0 0.0
    %1260 = vmatpush1.msra.mxu0 0.0
    %1261 = vmatprep.subr.mxu0 0.0
    %1262 = vmatpush1.msra.mxu0 0.0
    %1263 = vmatprep.subr.mxu0 0.0
    %1264 = vmatpush1.msra.mxu0 0.0
    %1265 = vmatprep.subr.mxu0 0.0
    %1266 = vmatpush1.msra.mxu0 0.0
    %1267 = vmatprep.subr.mxu0 0.0
    %1268 = vmatpush1.msra.mxu0 0.0
    %1269 = vmatprep.subr.mxu0 0.0
    %1270 = vmatpush1.msra.mxu0 0.0
    %1271 = vmatprep.subr.mxu0 0.0
    %1272 = vmatpush1.msra.mxu0 0.0
    %1273 = vmatprep.subr.mxu0 0.0
    %1274 = vmatpush1.msra.mxu0 0.0
    %1275 = vmatprep.subr.mxu0 0.0
    %1276 = vmatpush1.msra.mxu0 0.0
    %1277 = vmatprep.subr.mxu0 0.0
    %1278 = vmatpush1.msra.mxu0 0.0
    %1279 = vmatprep.subr.mxu0 0.0
    %1280 = vmatpush1.msra.mxu0 0.0
    %1281 = vmatprep.subr.mxu0 0.0
    %1282 = vmatpush1.msra.mxu0 0.0
    %1283 = vmatprep.subr.mxu0 0.0
    %1284 = vmatpush1.msra.mxu0 0.0
    %1285 = vmatprep.subr.mxu0 0.0
    %1286 = vmatpush1.msra.mxu0 0.0
    %1287 = vmatprep.subr.mxu0 0.0
    %1288 = vmatpush1.msra.mxu0 0.0
    %1289 = vmatprep.subr.mxu0 0.0
    %1290 = vmatpush1.msra.mxu0 0.0
    %1291 = vmatprep.mubr.f32.mxu0 0.0
    %v1292 = vand.u32 %v1221, 4294901760
    %v1293 = vsub.f32 %v1221, %v1292
    %v1294 = vand.u32 %v1293, 4294901760
    %v1295 = vsub.f32 %v1293, %v1294
    %v1296 = vand.u32 %v1295, 4294901760
    %1297 = vmatmul.mubr.f32.gmra.mrb[0].mxu0 %v1296
    %v1298 = vpop.f32.mrb[0].mxu0
    %v1299 = vadd.f32 %v1218, %v1298
    %v1300 = vpop.f32.mrb[0].mxu0
    %1301 = vdwg.mxu0
    %1302 = vmatprep.subr.mxu0 0.0
    %v1303 = vand.u32 %v1209, 4294901760
    %v1304 = vsub.f32 %v1209, %v1303
    %v1305 = vand.u32 %v1304, 4294901760
    %v1306 = vsub.f32 %v1304, %v1305
    %v1307 = vand.u32 %v1306, 4294901760
    %1308 = vmatpush1.msra.mxu0 %v1307
    %1309 = vmatprep.subr.mxu0 0.0
    %v1310 = vand.u32 %v1210, 4294901760
    %v1311 = vsub.f32 %v1210, %v1310
    %v1312 = vand.u32 %v1311, 4294901760
    %v1313 = vsub.f32 %v1311, %v1312
    %v1314 = vand.u32 %v1313, 4294901760
    %1315 = vmatpush1.msra.mxu0 %v1314
    %1316 = vmatprep.subr.mxu0 0.0
    %v1317 = vand.u32 %v1211, 4294901760
    %v1318 = vsub.f32 %v1211, %v1317
    %v1319 = vand.u32 %v1318, 4294901760
    %v1320 = vsub.f32 %v1318, %v1319
    %v1321 = vand.u32 %v1320, 4294901760
    %1322 = vmatpush1.msra.mxu0 %v1321
    %1323 = vmatprep.subr.mxu0 0.0
    %v1324 = vand.u32 %v1212, 4294901760
    %v1325 = vsub.f32 %v1212, %v1324
    %v1326 = vand.u32 %v1325, 4294901760
    %v1327 = vsub.f32 %v1325, %v1326
    %v1328 = vand.u32 %v1327, 4294901760
    %1329 = vmatpush1.msra.mxu0 %v1328
    %1330 = vmatprep.subr.mxu0 0.0
    %1331 = vmatpush1.msra.mxu0 0.0
    %1332 = vmatprep.subr.mxu0 0.0
    %1333 = vmatpush1.msra.mxu0 0.0
    %1334 = vmatprep.subr.mxu0 0.0
    %1335 = vmatpush1.msra.mxu0 0.0
    %1336 = vmatprep.subr.mxu0 0.0
    %1337 = vmatpush1.msra.mxu0 0.0
    %1338 = vmatprep.subr.mxu0 0.0
    %1339 = vmatpush1.msra.mxu0 0.0
    %1340 = vmatprep.subr.mxu0 0.0
    %1341 = vmatpush1.msra.mxu0 0.0
    %1342 = vmatprep.subr.mxu0 0.0
    %1343 = vmatpush1.msra.mxu0 0.0
    %1344 = vmatprep.subr.mxu0 0.0
    %1345 = vmatpush1.msra.mxu0 0.0
    %1346 = vmatprep.subr.mxu0 0.0
    %1347 = vmatpush1.msra.mxu0 0.0
    %1348 = vmatprep.subr.mxu0 0.0
    %1349 = vmatpush1.msra.mxu0 0.0
    %1350 = vmatprep.subr.mxu0 0.0
    %1351 = vmatpush1.msra.mxu0 0.0
    %1352 = vmatprep.subr.mxu0 0.0
    %1353 = vmatpush1.msra.mxu0 0.0
    %1354 = vmatprep.subr.mxu0 0.0
    %1355 = vmatpush1.msra.mxu0 0.0
    %1356 = vmatprep.subr.mxu0 0.0
    %1357 = vmatpush1.msra.mxu0 0.0
    %1358 = vmatprep.subr.mxu0 0.0
    %1359 = vmatpush1.msra.mxu0 0.0
    %1360 = vmatprep.subr.mxu0 0.0
    %1361 = vmatpush1.msra.mxu0 0.0
    %1362 = vmatprep.subr.mxu0 0.0
    %1363 = vmatpush1.msra.mxu0 0.0
    %1364 = vmatprep.subr.mxu0 0.0
    %1365 = vmatpush1.msra.mxu0 0.0
    %1366 = vmatprep.subr.mxu0 0.0
    %1367 = vmatpush1.msra.mxu0 0.0
    %1368 = vmatprep.subr.mxu0 0.0
    %1369 = vmatpush1.msra.mxu0 0.0
    %1370 = vmatprep.subr.mxu0 0.0
    %1371 = vmatpush1.msra.mxu0 0.0
    %1372 = vmatprep.subr.mxu0 0.0
    %1373 = vmatpush1.msra.mxu0 0.0
    %1374 = vmatprep.subr.mxu0 0.0
    %1375 = vmatpush1.msra.mxu0 0.0
    %1376 = vmatprep.subr.mxu0 0.0
    %1377 = vmatpush1.msra.mxu0 0.0
    %1378 = vmatprep.subr.mxu0 0.0
    %1379 = vmatpush1.msra.mxu0 0.0
    %1380 = vmatprep.subr.mxu0 0.0
    %1381 = vmatpush1.msra.mxu0 0.0
    %1382 = vmatprep.subr.mxu0 0.0
    %1383 = vmatpush1.msra.mxu0 0.0
    %1384 = vmatprep.subr.mxu0 0.0
    %1385 = vmatpush1.msra.mxu0 0.0
    %1386 = vmatprep.mubr.f32.mxu0 0.0
    %v1387 = vand.u32 %v1221, 4294901760
    %1388 = vmatmul.mubr.f32.gmra.mrb[0].mxu0 %v1387
    %v1389 = vpop.f32.mrb[0].mxu0
    %v1390 = vadd.f32 %v1299, %v1389
    %v1391 = vpop.f32.mrb[0].mxu0
    %1392 = vdwg.mxu0
    %1393 = vmatprep.subr.mxu0 0.0
    %v1394 = vand.u32 %v1209, 4294901760
    %v1395 = vsub.f32 %v1209, %v1394
    %1396 = vmatpush1.msra.mxu0 %v1395
    %1397 = vmatprep.subr.mxu0 0.0
    %v1398 = vand.u32 %v1210, 4294901760
    %v1399 = vsub.f32 %v1210, %v1398
    %1400 = vmatpush1.msra.mxu0 %v1399
    %1401 = vmatprep.subr.mxu0 0.0
    %v1402 = vand.u32 %v1211, 4294901760
    %v1403 = vsub.f32 %v1211, %v1402
    %1404 = vmatpush1.msra.mxu0 %v1403
    %1405 = vmatprep.subr.mxu0 0.0
    %v1406 = vand.u32 %v1212, 4294901760
    %v1407 = vsub.f32 %v1212, %v1406
    %1408 = vmatpush1.msra.mxu0 %v1407
    %1409 = vmatprep.subr.mxu0 0.0
    %1410 = vmatpush1.msra.mxu0 0.0
    %1411 = vmatprep.subr.mxu0 0.0
    %1412 = vmatpush1.msra.mxu0 0.0
    %1413 = vmatprep.subr.mxu0 0.0
    %1414 = vmatpush1.msra.mxu0 0.0
    %1415 = vmatprep.subr.mxu0 0.0
    %1416 = vmatpush1.msra.mxu0 0.0
    %1417 = vmatprep.subr.mxu0 0.0
    %1418 = vmatpush1.msra.mxu0 0.0
    %1419 = vmatprep.subr.mxu0 0.0
    %1420 = vmatpush1.msra.mxu0 0.0
    %1421 = vmatprep.subr.mxu0 0.0
    %1422 = vmatpush1.msra.mxu0 0.0
    %1423 = vmatprep.subr.mxu0 0.0
    %1424 = vmatpush1.msra.mxu0 0.0
    %1425 = vmatprep.subr.mxu0 0.0
    %1426 = vmatpush1.msra.mxu0 0.0
    %1427 = vmatprep.subr.mxu0 0.0
    %1428 = vmatpush1.msra.mxu0 0.0
    %1429 = vmatprep.subr.mxu0 0.0
    %1430 = vmatpush1.msra.mxu0 0.0
    %1431 = vmatprep.subr.mxu0 0.0
    %1432 = vmatpush1.msra.mxu0 0.0
    %1433 = vmatprep.subr.mxu0 0.0
    %1434 = vmatpush1.msra.mxu0 0.0
    %1435 = vmatprep.subr.mxu0 0.0
    %1436 = vmatpush1.msra.mxu0 0.0
    %1437 = vmatprep.subr.mxu0 0.0
    %1438 = vmatpush1.msra.mxu0 0.0
    %1439 = vmatprep.subr.mxu0 0.0
    %1440 = vmatpush1.msra.mxu0 0.0
    %1441 = vmatprep.subr.mxu0 0.0
    %1442 = vmatpush1.msra.mxu0 0.0
    %1443 = vmatprep.subr.mxu0 0.0
    %1444 = vmatpush1.msra.mxu0 0.0
    %1445 = vmatprep.subr.mxu0 0.0
    %1446 = vmatpush1.msra.mxu0 0.0
    %1447 = vmatprep.subr.mxu0 0.0
    %1448 = vmatpush1.msra.mxu0 0.0
    %1449 = vmatprep.subr.mxu0 0.0
    %1450 = vmatpush1.msra.mxu0 0.0
    %1451 = vmatprep.subr.mxu0 0.0
    %1452 = vmatpush1.msra.mxu0 0.0
    %1453 = vmatprep.subr.mxu0 0.0
    %1454 = vmatpush1.msra.mxu0 0.0
    %1455 = vmatprep.subr.mxu0 0.0
    %1456 = vmatpush1.msra.mxu0 0.0
    %1457 = vmatprep.subr.mxu0 0.0
    %1458 = vmatpush1.msra.mxu0 0.0
    %1459 = vmatprep.subr.mxu0 0.0
    %1460 = vmatpush1.msra.mxu0 0.0
    %1461 = vmatprep.subr.mxu0 0.0
    %1462 = vmatpush1.msra.mxu0 0.0
    %1463 = vmatprep.subr.mxu0 0.0
    %1464 = vmatpush1.msra.mxu0 0.0
    %1465 = vmatprep.mubr.f32.mxu0 0.0
    %v1466 = vand.u32 %v1221, 4294901760
    %v1467 = vsub.f32 %v1221, %v1466
    %1468 = vmatmul.mubr.f32.gmra.mrb[0].mxu0 %v1467
    %v1469 = vpop.f32.mrb[0].mxu0
    %v1470 = vadd.f32 %v1390, %v1469
    %v1471 = vpop.f32.mrb[0].mxu0
    %1472 = vdwg.mxu0
    %1473 = vmatprep.subr.mxu0 0.0
    %v1474 = vand.u32 %v1209, 4294901760
    %1475 = vmatpush1.msra.mxu0 %v1474
    %1476 = vmatprep.subr.mxu0 0.0
    %v1477 = vand.u32 %v1210, 4294901760
    %1478 = vmatpush1.msra.mxu0 %v1477
    %1479 = vmatprep.subr.mxu0 0.0
    %v1480 = vand.u32 %v1211, 4294901760
    %1481 = vmatpush1.msra.mxu0 %v1480
    %1482 = vmatprep.subr.mxu0 0.0
    %v1483 = vand.u32 %v1212, 4294901760
    %1484 = vmatpush1.msra.mxu0 %v1483
    %1485 = vmatprep.subr.mxu0 0.0
    %1486 = vmatpush1.msra.mxu0 0.0
    %1487 = vmatprep.subr.mxu0 0.0
    %1488 = vmatpush1.msra.mxu0 0.0
    %1489 = vmatprep.subr.mxu0 0.0
    %1490 = vmatpush1.msra.mxu0 0.0
    %1491 = vmatprep.subr.mxu0 0.0
    %1492 = vmatpush1.msra.mxu0 0.0
    %1493 = vmatprep.subr.mxu0 0.0
    %1494 = vmatpush1.msra.mxu0 0.0
    %1495 = vmatprep.subr.mxu0 0.0
    %1496 = vmatpush1.msra.mxu0 0.0
    %1497 = vmatprep.subr.mxu0 0.0
    %1498 = vmatpush1.msra.mxu0 0.0
    %1499 = vmatprep.subr.mxu0 0.0
    %1500 = vmatpush1.msra.mxu0 0.0
    %1501 = vmatprep.subr.mxu0 0.0
    %1502 = vmatpush1.msra.mxu0 0.0
    %1503 = vmatprep.subr.mxu0 0.0
    %1504 = vmatpush1.msra.mxu0 0.0
    %1505 = vmatprep.subr.mxu0 0.0
    %1506 = vmatpush1.msra.mxu0 0.0
    %1507 = vmatprep.subr.mxu0 0.0
    %1508 = vmatpush1.msra.mxu0 0.0
    %1509 = vmatprep.subr.mxu0 0.0
    %1510 = vmatpush1.msra.mxu0 0.0
    %1511 = vmatprep.subr.mxu0 0.0
    %1512 = vmatpush1.msra.mxu0 0.0
    %1513 = vmatprep.subr.mxu0 0.0
    %1514 = vmatpush1.msra.mxu0 0.0
    %1515 = vmatprep.subr.mxu0 0.0
    %1516 = vmatpush1.msra.mxu0 0.0
    %1517 = vmatprep.subr.mxu0 0.0
    %1518 = vmatpush1.msra.mxu0 0.0
    %1519 = vmatprep.subr.mxu0 0.0
    %1520 = vmatpush1.msra.mxu0 0.0
    %1521 = vmatprep.subr.mxu0 0.0
    %1522 = vmatpush1.msra.mxu0 0.0
    %1523 = vmatprep.subr.mxu0 0.0
    %1524 = vmatpush1.msra.mxu0 0.0
    %1525 = vmatprep.subr.mxu0 0.0
    %1526 = vmatpush1.msra.mxu0 0.0
    %1527 = vmatprep.subr.mxu0 0.0
    %1528 = vmatpush1.msra.mxu0 0.0
    %1529 = vmatprep.subr.mxu0 0.0
    %1530 = vmatpush1.msra.mxu0 0.0
    %1531 = vmatprep.subr.mxu0 0.0
    %1532 = vmatpush1.msra.mxu0 0.0
    %1533 = vmatprep.subr.mxu0 0.0
    %1534 = vmatpush1.msra.mxu0 0.0
    %1535 = vmatprep.subr.mxu0 0.0
    %1536 = vmatpush1.msra.mxu0 0.0
    %1537 = vmatprep.subr.mxu0 0.0
    %1538 = vmatpush1.msra.mxu0 0.0
    %1539 = vmatprep.subr.mxu0 0.0
    %1540 = vmatpush1.msra.mxu0 0.0
    %1541 = vmatprep.mubr.f32.mxu0 0.0
    %v1542 = vand.u32 %v1221, 4294901760
    %v1543 = vsub.f32 %v1221, %v1542
    %v1544 = vand.u32 %v1543, 4294901760
    %1545 = vmatmul.mubr.f32.gmra.mrb[0].mxu0 %v1544
    %v1546 = vpop.f32.mrb[0].mxu0
    %v1547 = vadd.f32 %v1470, %v1546
    %v1548 = vpop.f32.mrb[0].mxu0
    %1549 = vdwg.mxu0
    %1550 = vmatprep.subr.mxu0 0.0
    %v1551 = vand.u32 %v1209, 4294901760
    %v1552 = vsub.f32 %v1209, %v1551
    %v1553 = vand.u32 %v1552, 4294901760
    %1554 = vmatpush1.msra.mxu0 %v1553
    %1555 = vmatprep.subr.mxu0 0.0
    %v1556 = vand.u32 %v1210, 4294901760
    %v1557 = vsub.f32 %v1210, %v1556
    %v1558 = vand.u32 %v1557, 4294901760
    %1559 = vmatpush1.msra.mxu0 %v1558
    %1560 = vmatprep.subr.mxu0 0.0
    %v1561 = vand.u32 %v1211, 4294901760
    %v1562 = vsub.f32 %v1211, %v1561
    %v1563 = vand.u32 %v1562, 4294901760
    %1564 = vmatpush1.msra.mxu0 %v1563
    %1565 = vmatprep.subr.mxu0 0.0
    %v1566 = vand.u32 %v1212, 4294901760
    %v1567 = vsub.f32 %v1212, %v1566
    %v1568 = vand.u32 %v1567, 4294901760
    %1569 = vmatpush1.msra.mxu0 %v1568
    %1570 = vmatprep.subr.mxu0 0.0
    %1571 = vmatpush1.msra.mxu0 0.0
    %1572 = vmatprep.subr.mxu0 0.0
    %1573 = vmatpush1.msra.mxu0 0.0
    %1574 = vmatprep.subr.mxu0 0.0
    %1575 = vmatpush1.msra.mxu0 0.0
    %1576 = vmatprep.subr.mxu0 0.0
    %1577 = vmatpush1.msra.mxu0 0.0
    %1578 = vmatprep.subr.mxu0 0.0
    %1579 = vmatpush1.msra.mxu0 0.0
    %1580 = vmatprep.subr.mxu0 0.0
    %1581 = vmatpush1.msra.mxu0 0.0
    %1582 = vmatprep.subr.mxu0 0.0
    %1583 = vmatpush1.msra.mxu0 0.0
    %1584 = vmatprep.subr.mxu0 0.0
    %1585 = vmatpush1.msra.mxu0 0.0
    %1586 = vmatprep.subr.mxu0 0.0
    %1587 = vmatpush1.msra.mxu0 0.0
    %1588 = vmatprep.subr.mxu0 0.0
    %1589 = vmatpush1.msra.mxu0 0.0
    %1590 = vmatprep.subr.mxu0 0.0
    %1591 = vmatpush1.msra.mxu0 0.0
    %1592 = vmatprep.subr.mxu0 0.0
    %1593 = vmatpush1.msra.mxu0 0.0
    %1594 = vmatprep.subr.mxu0 0.0
    %1595 = vmatpush1.msra.mxu0 0.0
    %1596 = vmatprep.subr.mxu0 0.0
    %1597 = vmatpush1.msra.mxu0 0.0
    %1598 = vmatprep.subr.mxu0 0.0
    %1599 = vmatpush1.msra.mxu0 0.0
    %1600 = vmatprep.subr.mxu0 0.0
    %1601 = vmatpush1.msra.mxu0 0.0
    %1602 = vmatprep.subr.mxu0 0.0
    %1603 = vmatpush1.msra.mxu0 0.0
    %1604 = vmatprep.subr.mxu0 0.0
    %1605 = vmatpush1.msra.mxu0 0.0
    %1606 = vmatprep.subr.mxu0 0.0
    %1607 = vmatpush1.msra.mxu0 0.0
    %1608 = vmatprep.subr.mxu0 0.0
    %1609 = vmatpush1.msra.mxu0 0.0
    %1610 = vmatprep.subr.mxu0 0.0
    %1611 = vmatpush1.msra.mxu0 0.0
    %1612 = vmatprep.subr.mxu0 0.0
    %1613 = vmatpush1.msra.mxu0 0.0
    %1614 = vmatprep.subr.mxu0 0.0
    %1615 = vmatpush1.msra.mxu0 0.0
    %1616 = vmatprep.subr.mxu0 0.0
    %1617 = vmatpush1.msra.mxu0 0.0
    %1618 = vmatprep.subr.mxu0 0.0
    %1619 = vmatpush1.msra.mxu0 0.0
    %1620 = vmatprep.subr.mxu0 0.0
    %1621 = vmatpush1.msra.mxu0 0.0
    %1622 = vmatprep.subr.mxu0 0.0
    %1623 = vmatpush1.msra.mxu0 0.0
    %1624 = vmatprep.subr.mxu0 0.0
    %1625 = vmatpush1.msra.mxu0 0.0
    %1626 = vmatprep.mubr.f32.mxu0 0.0
    %v1627 = vand.u32 %v1221, 4294901760
    %1628 = vmatmul.mubr.f32.gmra.mrb[0].mxu0 %v1627
    %v1629 = vpop.f32.mrb[0].mxu0
    %v1630 = vadd.f32 %v1547, %v1629
    %v1631 = vpop.f32.mrb[0].mxu0
    %1632 = vdwg.mxu0
    %1633 = vmatprep.subr.mxu0 0.0
    %v1634 = vand.u32 %v1209, 4294901760
    %1635 = vmatpush1.msra.mxu0 %v1634
    %1636 = vmatprep.subr.mxu0 0.0
    %v1637 = vand.u32 %v1210, 4294901760
    %1638 = vmatpush1.msra.mxu0 %v1637
    %1639 = vmatprep.subr.mxu0 0.0
    %v1640 = vand.u32 %v1211, 4294901760
    %1641 = vmatpush1.msra.mxu0 %v1640
    %1642 = vmatprep.subr.mxu0 0.0
    %v1643 = vand.u32 %v1212, 4294901760
    %1644 = vmatpush1.msra.mxu0 %v1643
    %1645 = vmatprep.subr.mxu0 0.0
    %1646 = vmatpush1.msra.mxu0 0.0
    %1647 = vmatprep.subr.mxu0 0.0
    %1648 = vmatpush1.msra.mxu0 0.0
    %1649 = vmatprep.subr.mxu0 0.0
    %1650 = vmatpush1.msra.mxu0 0.0
    %1651 = vmatprep.subr.mxu0 0.0
    %1652 = vmatpush1.msra.mxu0 0.0
    %1653 = vmatprep.subr.mxu0 0.0
    %1654 = vmatpush1.msra.mxu0 0.0
    %1655 = vmatprep.subr.mxu0 0.0
    %1656 = vmatpush1.msra.mxu0 0.0
    %1657 = vmatprep.subr.mxu0 0.0
    %1658 = vmatpush1.msra.mxu0 0.0
    %1659 = vmatprep.subr.mxu0 0.0
    %1660 = vmatpush1.msra.mxu0 0.0
    %1661 = vmatprep.subr.mxu0 0.0
    %1662 = vmatpush1.msra.mxu0 0.0
    %1663 = vmatprep.subr.mxu0 0.0
    %1664 = vmatpush1.msra.mxu0 0.0
    %1665 = vmatprep.subr.mxu0 0.0
    %1666 = vmatpush1.msra.mxu0 0.0
    %1667 = vmatprep.subr.mxu0 0.0
    %1668 = vmatpush1.msra.mxu0 0.0
    %1669 = vmatprep.subr.mxu0 0.0
    %1670 = vmatpush1.msra.mxu0 0.0
    %1671 = vmatprep.subr.mxu0 0.0
    %1672 = vmatpush1.msra.mxu0 0.0
    %1673 = vmatprep.subr.mxu0 0.0
    %1674 = vmatpush1.msra.mxu0 0.0
    %1675 = vmatprep.subr.mxu0 0.0
    %1676 = vmatpush1.msra.mxu0 0.0
    %1677 = vmatprep.subr.mxu0 0.0
    %1678 = vmatpush1.msra.mxu0 0.0
    %1679 = vmatprep.subr.mxu0 0.0
    %1680 = vmatpush1.msra.mxu0 0.0
    %1681 = vmatprep.subr.mxu0 0.0
    %1682 = vmatpush1.msra.mxu0 0.0
    %1683 = vmatprep.subr.mxu0 0.0
    %1684 = vmatpush1.msra.mxu0 0.0
    %1685 = vmatprep.subr.mxu0 0.0
    %1686 = vmatpush1.msra.mxu0 0.0
    %1687 = vmatprep.subr.mxu0 0.0
    %1688 = vmatpush1.msra.mxu0 0.0
    %1689 = vmatprep.subr.mxu0 0.0
    %1690 = vmatpush1.msra.mxu0 0.0
    %1691 = vmatprep.subr.mxu0 0.0
    %1692 = vmatpush1.msra.mxu0 0.0
    %1693 = vmatprep.subr.mxu0 0.0
    %1694 = vmatpush1.msra.mxu0 0.0
    %1695 = vmatprep.subr.mxu0 0.0
    %1696 = vmatpush1.msra.mxu0 0.0
    %1697 = vmatprep.subr.mxu0 0.0
    %1698 = vmatpush1.msra.mxu0 0.0
    %1699 = vmatprep.subr.mxu0 0.0
    %1700 = vmatpush1.msra.mxu0 0.0
    %1701 = vmatprep.mubr.f32.mxu0 0.0
    %v1702 = vand.u32 %v1221, 4294901760
    %1703 = vmatmul.mubr.f32.gmra.mrb[0].mxu0 %v1702
    %v1704 = vpop.f32.mrb[0].mxu0
    %v1705 = vadd.f32 %v1630, %v1704
    %v1706 = vpop.f32.mrb[0].mxu0
    %1707 = vdwg.mxu0
    %v1708 = vmax.f32 %v1705, 0.0
    %v1709 = vld [vmem:[%s7] sm:$0xff]
    %v1710 = vld [vmem:[%s7 + $0x8] sm:$0xff]
    %v1711 = vld [vmem:[%s7 + $0x10] sm:$0xff]
    %v1712 = vld [vmem:[%s7 + $0x18] sm:$0xff]
    %v1713 = vld [vmem:[%s7 + $0x20] sm:$0xff]
    %v1714 = vld [vmem:[%s7 + $0x28] sm:$0xff]
    %v1715 = vld [vmem:[%s7 + $0x30] sm:$0xff]
    %v1716 = vld [vmem:[%s7 + $0x38] sm:$0xff]
    %v1717 = vld [vmem:[%s7 + $0x40] sm:$0xff]
    %v1718 = vld [vmem:[%s7 + $0x48] sm:$0xff]
    %v1719 = vld [vmem:[%s7 + $0x50] sm:$0xff]
    %v1720 = vld [vmem:[%s7 + $0x58] sm:$0xff]
    %v1721 = vld [vmem:[%s7 + $0x60] sm:$0xff]
    %v1722 = vld [vmem:[%s7 + $0x68] sm:$0xff]
    %v1723 = vld [vmem:[%s7 + $0x70] sm:$0xff]
    %v1724 = vld [vmem:[%s7 + $0x78] sm:$0xff]
    %v1725 = vld [vmem:[%s7 + $0x80] sm:$0xff]
    %v1726 = vld [vmem:[%s7 + $0x88] sm:$0xff]
    %v1727 = vld [vmem:[%s7 + $0x90] sm:$0xff]
    %v1728 = vld [vmem:[%s7 + $0x98] sm:$0xff]
    %v1729 = vld [vmem:[%s7 + $0xa0] sm:$0xff]
    %v1730 = vld [vmem:[%s7 + $0xa8] sm:$0xff]
    %v1731 = vld [vmem:[%s7 + $0xb0] sm:$0xff]
    %v1732 = vld [vmem:[%s7 + $0xb8] sm:$0xff]
    %v1733 = vld [vmem:[%s7 + $0xc0] sm:$0xff]
    %v1734 = vld [vmem:[%s7 + $0xc8] sm:$0xff]
    %v1735 = vld [vmem:[%s7 + $0xd0] sm:$0xff]
    %v1736 = vld [vmem:[%s7 + $0xd8] sm:$0xff]
    %v1737 = vld [vmem:[%s7 + $0xe0] sm:$0xff]
    %v1738 = vld [vmem:[%s7 + $0xe8] sm:$0xff]
    %v1739 = vld [vmem:[%s7 + $0xf0] sm:$0xff]
    %v1740 = vld [vmem:[%s7 + $0xf8] sm:$0xff]
    %v1741 = vld [vmem:[%s7 + $0x100] sm:$0xff]
    %v1742 = vld [vmem:[%s7 + $0x108] sm:$0xff]
    %v1743 = vld [vmem:[%s7 + $0x110] sm:$0xff]
    %v1744 = vld [vmem:[%s7 + $0x118] sm:$0xff]
    %v1745 = vld [vmem:[%s7 + $0x120] sm:$0xff]
    %v1746 = vld [vmem:[%s7 + $0x128] sm:$0xff]
    %v1747 = vld [vmem:[%s7 + $0x130] sm:$0xff]
    %v1748 = vld [vmem:[%s7 + $0x138] sm:$0xff]
    %v1749 = vld [vmem:[%s7 + $0x140] sm:$0xff]
    %v1750 = vld [vmem:[%s7 + $0x148] sm:$0xff]
    %v1751 = vld [vmem:[%s7 + $0x150] sm:$0xff]
    %v1752 = vld [vmem:[%s7 + $0x158] sm:$0xff]
    %v1753 = vld [vmem:[%s7 + $0x160] sm:$0xff]
    %v1754 = vld [vmem:[%s7 + $0x168] sm:$0xff]
    %v1755 = vld [vmem:[%s7 + $0x170] sm:$0xff]
    %v1756 = vld [vmem:[%s7 + $0x178] sm:$0xff]
    %v1757 = vld [vmem:[%s7 + $0x180] sm:$0xff]
    %v1758 = vld [vmem:[%s7 + $0x188] sm:$0xff]
    %v1759 = vld [vmem:[%s7 + $0x190] sm:$0xff]
    %v1760 = vld [vmem:[%s7 + $0x198] sm:$0xff]
    %v1761 = vld [vmem:[%s7 + $0x1a0] sm:$0xff]
    %v1762 = vld [vmem:[%s7 + $0x1a8] sm:$0xff]
    %v1763 = vld [vmem:[%s7 + $0x1b0] sm:$0xff]
    %v1764 = vld [vmem:[%s7 + $0x1b8] sm:$0xff]
    %v1765 = vld [vmem:[%s7 + $0x1c0] sm:$0xff]
    %v1766 = vld [vmem:[%s7 + $0x1c8] sm:$0xff]
    %v1767 = vld [vmem:[%s7 + $0x1d0] sm:$0xff]
    %v1768 = vld [vmem:[%s7 + $0x1d8] sm:$0xff]
    %v1769 = vld [vmem:[%s7 + $0x1e0] sm:$0xff]
    %v1770 = vld [vmem:[%s7 + $0x1e8] sm:$0xff]
    %v1771 = vld [vmem:[%s7 + $0x1f0] sm:$0xff]
    %v1772 = vld [vmem:[%s7 + $0x1f8] sm:$0xff]
    %v1773 = vld [vmem:[%s7 + $0x200] sm:$0xff]
    %v1774 = vld [vmem:[%s7 + $0x208] sm:$0xff]
    %v1775 = vld [vmem:[%s7 + $0x210] sm:$0xff]
    %v1776 = vld [vmem:[%s7 + $0x218] sm:$0xff]
    %v1777 = vld [vmem:[%s7 + $0x220] sm:$0xff]
    %v1778 = vld [vmem:[%s7 + $0x228] sm:$0xff]
    %v1779 = vld [vmem:[%s7 + $0x230] sm:$0xff]
    %v1780 = vld [vmem:[%s7 + $0x238] sm:$0xff]
    %v1781 = vld [vmem:[%s7 + $0x240] sm:$0xff]
    %v1782 = vld [vmem:[%s7 + $0x248] sm:$0xff]
    %v1783 = vld [vmem:[%s7 + $0x250] sm:$0xff]
    %v1784 = vld [vmem:[%s7 + $0x258] sm:$0xff]
    %v1785 = vld [vmem:[%s7 + $0x260] sm:$0xff]
    %v1786 = vld [vmem:[%s7 + $0x268] sm:$0xff]
    %v1787 = vld [vmem:[%s7 + $0x270] sm:$0xff]
    %v1788 = vld [vmem:[%s7 + $0x278] sm:$0xff]
    %v1789 = vld [vmem:[%s7 + $0x280] sm:$0xff]
    %v1790 = vld [vmem:[%s7 + $0x288] sm:$0xff]
    %v1791 = vld [vmem:[%s7 + $0x290] sm:$0xff]
    %v1792 = vld [vmem:[%s7 + $0x298] sm:$0xff]
    %v1793 = vld [vmem:[%s8] sm:$0xff]
    %v1794 = vld [vmem:[%s8 + $0x8] sm:$0xff]
    %v1795 = vld [vmem:[%s8 + $0x10] sm:$0x1f]
    %v1799 = vlaneseq
    %v1800 = vshrl.u32 %v1799, 7
    %v1801 = vsub.s32 0, %v1800
    %v1802 = vrot.slane %v1793, %v1801
    %v1803 = vlaneseq
    %v1804 = vshrl.u32 %v1803, 7
    %v1805 = vsub.s32 1, %v1804
    %v1806 = vrot.slane %v1793, %v1805
    %v1807 = vlaneseq
    %v1808 = vshrl.u32 %v1807, 7
    %v1809 = vsub.s32 2, %v1808
    %v1810 = vrot.slane %v1793, %v1809
    %v1811 = vlaneseq
    %v1812 = vshrl.u32 %v1811, 7
    %v1813 = vsub.s32 3, %v1812
    %v1814 = vrot.slane %v1793, %v1813
    %v1815 = vlaneseq
    %v1816 = vshrl.u32 %v1815, 7
    %v1817 = vsub.s32 4, %v1816
    %v1818 = vrot.slane %v1793, %v1817
    %v1819 = vlaneseq
    %v1820 = vshrl.u32 %v1819, 7
    %v1821 = vsub.s32 5, %v1820
    %v1822 = vrot.slane %v1793, %v1821
    %v1823 = vlaneseq
    %v1824 = vshrl.u32 %v1823, 7
    %v1825 = vsub.s32 6, %v1824
    %v1826 = vrot.slane %v1793, %v1825
    %v1827 = vlaneseq
    %v1828 = vshrl.u32 %v1827, 7
    %v1829 = vsub.s32 7, %v1828
    %v1830 = vrot.slane %v1793, %v1829
    %v1831 = vlaneseq
    %v1832 = vshrl.u32 %v1831, 7
    %v1833 = vsub.s32 0, %v1832
    %v1834 = vrot.slane %v1794, %v1833
    %v1835 = vlaneseq
    %v1836 = vshrl.u32 %v1835, 7
    %v1837 = vsub.s32 1, %v1836
    %v1838 = vrot.slane %v1794, %v1837
    %v1839 = vlaneseq
    %v1840 = vshrl.u32 %v1839, 7
    %v1841 = vsub.s32 2, %v1840
    %v1842 = vrot.slane %v1794, %v1841
    %v1843 = vlaneseq
    %v1844 = vshrl.u32 %v1843, 7
    %v1845 = vsub.s32 3, %v1844
    %v1846 = vrot.slane %v1794, %v1845
    %v1847 = vlaneseq
    %v1848 = vshrl.u32 %v1847, 7
    %v1849 = vsub.s32 4, %v1848
    %v1850 = vrot.slane %v1794, %v1849
    %v1851 = vlaneseq
    %v1852 = vshrl.u32 %v1851, 7
    %v1853 = vsub.s32 5, %v1852
    %v1854 = vrot.slane %v1794, %v1853
    %v1855 = vlaneseq
    %v1856 = vshrl.u32 %v1855, 7
    %v1857 = vsub.s32 6, %v1856
    %v1858 = vrot.slane %v1794, %v1857
    %v1859 = vlaneseq
    %v1860 = vshrl.u32 %v1859, 7
    %v1861 = vsub.s32 7, %v1860
    %v1862 = vrot.slane %v1794, %v1861
    %v1863 = vlaneseq
    %v1864 = vshrl.u32 %v1863, 7
    %v1865 = vsub.s32 0, %v1864
    %v1866 = vrot.slane %v1795, %v1865
    %v1867 = vlaneseq
    %v1868 = vshrl.u32 %v1867, 7
    %v1869 = vsub.s32 1, %v1868
    %v1870 = vrot.slane %v1795, %v1869
    %v1871 = vlaneseq
    %v1872 = vshrl.u32 %v1871, 7
    %v1873 = vsub.s32 2, %v1872
    %v1874 = vrot.slane %v1795, %v1873
    %v1875 = vlaneseq
    %v1876 = vshrl.u32 %v1875, 7
    %v1877 = vsub.s32 3, %v1876
    %v1878 = vrot.slane %v1795, %v1877
    %v1879 = vlaneseq
    %v1880 = vshrl.u32 %v1879, 7
    %v1881 = vsub.s32 4, %v1880
    %v1882 = vrot.slane %v1795, %v1881
    %v1905 = vsel %vm719, %v1708, 0
    %1907 = vmatprep.subr.mxu0 %v1710
    %1908 = vmatpush1.msra.mxu0 %v1709
    %1909 = vmatprep.subr.mxu0 %v1731
    %1910 = vmatpush1.msra.mxu0 %v1730
    %1911 = vmatprep.subr.mxu0 %v1752
    %1912 = vmatpush1.msra.mxu0 %v1751
    %1913 = vmatprep.subr.mxu0 %v1773
    %1914 = vmatpush1.msra.mxu0 %v1772
    %1915 = vmatprep.subr.mxu0 0.0
    %1916 = vmatpush1.msra.mxu0 0.0
    %1917 = vmatprep.subr.mxu0 0.0
    %1918 = vmatpush1.msra.mxu0 0.0
    %1919 = vmatprep.subr.mxu0 0.0
    %1920 = vmatpush1.msra.mxu0 0.0
    %1921 = vmatprep.subr.mxu0 0.0
    %1922 = vmatpush1.msra.mxu0 0.0
    %1923 = vmatprep.subr.mxu0 0.0
    %1924 = vmatpush1.msra.mxu0 0.0
    %1925 = vmatprep.subr.mxu0 0.0
    %1926 = vmatpush1.msra.mxu0 0.0
    %1927 = vmatprep.subr.mxu0 0.0
    %1928 = vmatpush1.msra.mxu0 0.0
    %1929 = vmatprep.subr.mxu0 0.0
    %1930 = vmatpush1.msra.mxu0 0.0
    %1931 = vmatprep.subr.mxu0 0.0
    %1932 = vmatpush1.msra.mxu0 0.0
    %1933 = vmatprep.subr.mxu0 0.0
    %1934 = vmatpush1.msra.mxu0 0.0
    %1935 = vmatprep.subr.mxu0 0.0
    %1936 = vmatpush1.msra.mxu0 0.0
    %1937 = vmatprep.subr.mxu0 0.0
    %1938 = vmatpush1.msra.mxu0 0.0
    %1939 = vmatprep.subr.mxu0 0.0
    %1940 = vmatpush1.msra.mxu0 0.0
    %1941 = vmatprep.subr.mxu0 0.0
    %1942 = vmatpush1.msra.mxu0 0.0
    %1943 = vmatprep.subr.mxu0 0.0
    %1944 = vmatpush1.msra.mxu0 0.0
    %1945 = vmatprep.subr.mxu0 0.0
    %1946 = vmatpush1.msra.mxu0 0.0
    %1947 = vmatprep.subr.mxu0 0.0
    %1948 = vmatpush1.msra.mxu0 0.0
    %1949 = vmatprep.subr.mxu0 0.0
    %1950 = vmatpush1.msra.mxu0 0.0
    %1951 = vmatprep.subr.mxu0 0.0
    %1952 = vmatpush1.msra.mxu0 0.0
    %1953 = vmatprep.subr.mxu0 0.0
    %1954 = vmatpush1.msra.mxu0 0.0
    %1955 = vmatprep.subr.mxu0 0.0
    %1956 = vmatpush1.msra.mxu0 0.0
    %1957 = vmatprep.subr.mxu0 0.0
    %1958 = vmatpush1.msra.mxu0 0.0
    %1959 = vmatprep.subr.mxu0 0.0
    %1960 = vmatpush1.msra.mxu0 0.0
    %1961 = vmatprep.subr.mxu0 0.0
    %1962 = vmatpush1.msra.mxu0 0.0
    %1963 = vmatprep.subr.mxu0 0.0
    %1964 = vmatpush1.msra.mxu0 0.0
    %1965 = vmatprep.subr.mxu0 0.0
    %1966 = vmatpush1.msra.mxu0 0.0
    %1967 = vmatprep.subr.mxu0 0.0
    %1968 = vmatpush1.msra.mxu0 0.0
    %1969 = vmatprep.subr.mxu0 0.0
    %1970 = vmatpush1.msra.mxu0 0.0
    %1971 = vmatprep.mubr.f32.mxu0 0.0
    %1972 = vmatmul.mubr.f32.gmra.mrb[0].mxu0 %v1905
    %v1973 = vpop.f32.mrb[0].mxu0
    %v1974 = vadd.f32 %v1802, %v1973
    %v1975 = vpop.f32.mrb[0].mxu0
    %v1976 = vadd.f32 %v1806, %v1975
    %1977 = vdwg.mxu0
    %1978 = vmatprep.subr.mxu0 %v1712
    %1979 = vmatpush1.msra.mxu0 %v1711
    %1980 = vmatprep.subr.mxu0 %v1733
    %1981 = vmatpush1.msra.mxu0 %v1732
    %1982 = vmatprep.subr.mxu0 %v1754
    %1983 = vmatpush1.msra.mxu0 %v1753
    %1984 = vmatprep.subr.mxu0 %v1775
    %1985 = vmatpush1.msra.mxu0 %v1774
    %1986 = vmatprep.subr.mxu0 0.0
    %1987 = vmatpush1.msra.mxu0 0.0
    %1988 = vmatprep.subr.mxu0 0.0
    %1989 = vmatpush1.msra.mxu0 0.0
    %1990 = vmatprep.subr.mxu0 0.0
    %1991 = vmatpush1.msra.mxu0 0.0
    %1992 = vmatprep.subr.mxu0 0.0
    %1993 = vmatpush1.msra.mxu0 0.0
    %1994 = vmatprep.subr.mxu0 0.0
    %1995 = vmatpush1.msra.mxu0 0.0
    %1996 = vmatprep.subr.mxu0 0.0
    %1997 = vmatpush1.msra.mxu0 0.0
    %1998 = vmatprep.subr.mxu0 0.0
    %1999 = vmatpush1.msra.mxu0 0.0
    %2000 = vmatprep.subr.mxu0 0.0
    %2001 = vmatpush1.msra.mxu0 0.0
    %2002 = vmatprep.subr.mxu0 0.0
    %2003 = vmatpush1.msra.mxu0 0.0
    %2004 = vmatprep.subr.mxu0 0.0
    %2005 = vmatpush1.msra.mxu0 0.0
    %2006 = vmatprep.subr.mxu0 0.0
    %2007 = vmatpush1.msra.mxu0 0.0
    %2008 = vmatprep.subr.mxu0 0.0
    %2009 = vmatpush1.msra.mxu0 0.0
    %2010 = vmatprep.subr.mxu0 0.0
    %2011 = vmatpush1.msra.mxu0 0.0
    %2012 = vmatprep.subr.mxu0 0.0
    %2013 = vmatpush1.msra.mxu0 0.0
    %2014 = vmatprep.subr.mxu0 0.0
    %2015 = vmatpush1.msra.mxu0 0.0
    %2016 = vmatprep.subr.mxu0 0.0
    %2017 = vmatpush1.msra.mxu0 0.0
    %2018 = vmatprep.subr.mxu0 0.0
    %2019 = vmatpush1.msra.mxu0 0.0
    %2020 = vmatprep.subr.mxu0 0.0
    %2021 = vmatpush1.msra.mxu0 0.0
    %2022 = vmatprep.subr.mxu0 0.0
    %2023 = vmatpush1.msra.mxu0 0.0
    %2024 = vmatprep.subr.mxu0 0.0
    %2025 = vmatpush1.msra.mxu0 0.0
    %2026 = vmatprep.subr.mxu0 0.0
    %2027 = vmatpush1.msra.mxu0 0.0
    %2028 = vmatprep.subr.mxu0 0.0
    %2029 = vmatpush1.msra.mxu0 0.0
    %2030 = vmatprep.subr.mxu0 0.0
    %2031 = vmatpush1.msra.mxu0 0.0
    %2032 = vmatprep.subr.mxu0 0.0
    %2033 = vmatpush1.msra.mxu0 0.0
    %2034 = vmatprep.subr.mxu0 0.0
    %2035 = vmatpush1.msra.mxu0 0.0
    %2036 = vmatprep.subr.mxu0 0.0
    %2037 = vmatpush1.msra.mxu0 0.0
    %2038 = vmatprep.subr.mxu0 0.0
    %2039 = vmatpush1.msra.mxu0 0.0
    %2040 = vmatprep.subr.mxu0 0.0
    %2041 = vmatpush1.msra.mxu0 0.0
    %2042 = vmatprep.mubr.f32.mxu0 0.0
    %2043 = vmatmul.mubr.f32.gmra.mrb[0].mxu0 %v1905
    %v2044 = vpop.f32.mrb[0].mxu0
    %v2045 = vadd.f32 %v1810, %v2044
    %v2046 = vpop.f32.mrb[0].mxu0
    %v2047 = vadd.f32 %v1814, %v2046
    %2048 = vdwg.mxu0
    %2049 = vmatprep.subr.mxu0 %v1714
    %2050 = vmatpush1.msra.mxu0 %v1713
    %2051 = vmatprep.subr.mxu0 %v1735
    %2052 = vmatpush1.msra.mxu0 %v1734
    %2053 = vmatprep.subr.mxu0 %v1756
    %2054 = vmatpush1.msra.mxu0 %v1755
    %2055 = vmatprep.subr.mxu0 %v1777
    %2056 = vmatpush1.msra.mxu0 %v1776
    %2057 = vmatprep.subr.mxu0 0.0
    %2058 = vmatpush1.msra.mxu0 0.0
    %2059 = vmatprep.subr.mxu0 0.0
    %2060 = vmatpush1.msra.mxu0 0.0
    %2061 = vmatprep.subr.mxu0 0.0
    %2062 = vmatpush1.msra.mxu0 0.0
    %2063 = vmatprep.subr.mxu0 0.0
    %2064 = vmatpush1.msra.mxu0 0.0
    %2065 = vmatprep.subr.mxu0 0.0
    %2066 = vmatpush1.msra.mxu0 0.0
    %2067 = vmatprep.subr.mxu0 0.0
    %2068 = vmatpush1.msra.mxu0 0.0
    %2069 = vmatprep.subr.mxu0 0.0
    %2070 = vmatpush1.msra.mxu0 0.0
    %2071 = vmatprep.subr.mxu0 0.0
    %2072 = vmatpush1.msra.mxu0 0.0
    %2073 = vmatprep.subr.mxu0 0.0
    %2074 = vmatpush1.msra.mxu0 0.0
    %2075 = vmatprep.subr.mxu0 0.0
    %2076 = vmatpush1.msra.mxu0 0.0
    %2077 = vmatprep.subr.mxu0 0.0
    %2078 = vmatpush1.msra.mxu0 0.0
    %2079 = vmatprep.subr.mxu0 0.0
    %2080 = vmatpush1.msra.mxu0 0.0
    %2081 = vmatprep.subr.mxu0 0.0
    %2082 = vmatpush1.msra.mxu0 0.0
    %2083 = vmatprep.subr.mxu0 0.0
    %2084 = vmatpush1.msra.mxu0 0.0
    %2085 = vmatprep.subr.mxu0 0.0
    %2086 = vmatpush1.msra.mxu0 0.0
    %2087 = vmatprep.subr.mxu0 0.0
    %2088 = vmatpush1.msra.mxu0 0.0
    %2089 = vmatprep.subr.mxu0 0.0
    %2090 = vmatpush1.msra.mxu0 0.0
    %2091 = vmatprep.subr.mxu0 0.0
    %2092 = vmatpush1.msra.mxu0 0.0
    %2093 = vmatprep.subr.mxu0 0.0
    %2094 = vmatpush1.msra.mxu0 0.0
    %2095 = vmatprep.subr.mxu0 0.0
    %2096 = vmatpush1.msra.mxu0 0.0
    %2097 = vmatprep.subr.mxu0 0.0
    %2098 = vmatpush1.msra.mxu0 0.0
    %2099 = vmatprep.subr.mxu0 0.0
    %2100 = vmatpush1.msra.mxu0 0.0
    %2101 = vmatprep.subr.mxu0 0.0
    %2102 = vmatpush1.msra.mxu0 0.0
    %2103 = vmatprep.subr.mxu0 0.0
    %2104 = vmatpush1.msra.mxu0 0.0
    %2105 = vmatprep.subr.mxu0 0.0
    %2106 = vmatpush1.msra.mxu0 0.0
    %2107 = vmatprep.subr.mxu0 0.0
    %2108 = vmatpush1.msra.mxu0 0.0
    %2109 = vmatprep.subr.mxu0 0.0
    %2110 = vmatpush1.msra.mxu0 0.0
    %2111 = vmatprep.subr.mxu0 0.0
    %2112 = vmatpush1.msra.mxu0 0.0
    %2113 = vmatprep.mubr.f32.mxu0 0.0
    %2114 = vmatmul.mubr.f32.gmra.mrb[0].mxu0 %v1905
    %v2115 = vpop.f32.mrb[0].mxu0
    %v2116 = vadd.f32 %v1818, %v2115
    %v2117 = vpop.f32.mrb[0].mxu0
    %v2118 = vadd.f32 %v1822, %v2117
    %2119 = vdwg.mxu0
    %2120 = vmatprep.subr.mxu0 %v1716
    %2121 = vmatpush1.msra.mxu0 %v1715
    %2122 = vmatprep.subr.mxu0 %v1737
    %2123 = vmatpush1.msra.mxu0 %v1736
    %2124 = vmatprep.subr.mxu0 %v1758
    %2125 = vmatpush1.msra.mxu0 %v1757
    %2126 = vmatprep.subr.mxu0 %v1779
    %2127 = vmatpush1.msra.mxu0 %v1778
    %2128 = vmatprep.subr.mxu0 0.0
    %2129 = vmatpush1.msra.mxu0 0.0
    %2130 = vmatprep.subr.mxu0 0.0
    %2131 = vmatpush1.msra.mxu0 0.0
    %2132 = vmatprep.subr.mxu0 0.0
    %2133 = vmatpush1.msra.mxu0 0.0
    %2134 = vmatprep.subr.mxu0 0.0
    %2135 = vmatpush1.msra.mxu0 0.0
    %2136 = vmatprep.subr.mxu0 0.0
    %2137 = vmatpush1.msra.mxu0 0.0
    %2138 = vmatprep.subr.mxu0 0.0
    %2139 = vmatpush1.msra.mxu0 0.0
    %2140 = vmatprep.subr.mxu0 0.0
    %2141 = vmatpush1.msra.mxu0 0.0
    %2142 = vmatprep.subr.mxu0 0.0
    %2143 = vmatpush1.msra.mxu0 0.0
    %2144 = vmatprep.subr.mxu0 0.0
    %2145 = vmatpush1.msra.mxu0 0.0
    %2146 = vmatprep.subr.mxu0 0.0
    %2147 = vmatpush1.msra.mxu0 0.0
    %2148 = vmatprep.subr.mxu0 0.0
    %2149 = vmatpush1.msra.mxu0 0.0
    %2150 = vmatprep.subr.mxu0 0.0
    %2151 = vmatpush1.msra.mxu0 0.0
    %2152 = vmatprep.subr.mxu0 0.0
    %2153 = vmatpush1.msra.mxu0 0.0
    %2154 = vmatprep.subr.mxu0 0.0
    %2155 = vmatpush1.msra.mxu0 0.0
    %2156 = vmatprep.subr.mxu0 0.0
    %2157 = vmatpush1.msra.mxu0 0.0
    %2158 = vmatprep.subr.mxu0 0.0
    %2159 = vmatpush1.msra.mxu0 0.0
    %2160 = vmatprep.subr.mxu0 0.0
    %2161 = vmatpush1.msra.mxu0 0.0
    %2162 = vmatprep.subr.mxu0 0.0
    %2163 = vmatpush1.msra.mxu0 0.0
    %2164 = vmatprep.subr.mxu0 0.0
    %2165 = vmatpush1.msra.mxu0 0.0
    %2166 = vmatprep.subr.mxu0 0.0
    %2167 = vmatpush1.msra.mxu0 0.0
    %2168 = vmatprep.subr.mxu0 0.0
    %2169 = vmatpush1.msra.mxu0 0.0
    %2170 = vmatprep.subr.mxu0 0.0
    %2171 = vmatpush1.msra.mxu0 0.0
    %2172 = vmatprep.subr.mxu0 0.0
    %2173 = vmatpush1.msra.mxu0 0.0
    %2174 = vmatprep.subr.mxu0 0.0
    %2175 = vmatpush1.msra.mxu0 0.0
    %2176 = vmatprep.subr.mxu0 0.0
    %2177 = vmatpush1.msra.mxu0 0.0
    %2178 = vmatprep.subr.mxu0 0.0
    %2179 = vmatpush1.msra.mxu0 0.0
    %2180 = vmatprep.subr.mxu0 0.0
    %2181 = vmatpush1.msra.mxu0 0.0
    %2182 = vmatprep.subr.mxu0 0.0
    %2183 = vmatpush1.msra.mxu0 0.0
    %2184 = vmatprep.mubr.f32.mxu0 0.0
    %2185 = vmatmul.mubr.f32.gmra.mrb[0].mxu0 %v1905
    %v2186 = vpop.f32.mrb[0].mxu0
    %v2187 = vadd.f32 %v1826, %v2186
    %v2188 = vpop.f32.mrb[0].mxu0
    %v2189 = vadd.f32 %v1830, %v2188
    %2190 = vdwg.mxu0
    %2191 = vmatprep.subr.mxu0 %v1718
    %2192 = vmatpush1.msra.mxu0 %v1717
    %2193 = vmatprep.subr.mxu0 %v1739
    %2194 = vmatpush1.msra.mxu0 %v1738
    %2195 = vmatprep.subr.mxu0 %v1760
    %2196 = vmatpush1.msra.mxu0 %v1759
    %2197 = vmatprep.subr.mxu0 %v1781
    %2198 = vmatpush1.msra.mxu0 %v1780
    %2199 = vmatprep.subr.mxu0 0.0
    %2200 = vmatpush1.msra.mxu0 0.0
    %2201 = vmatprep.subr.mxu0 0.0
    %2202 = vmatpush1.msra.mxu0 0.0
    %2203 = vmatprep.subr.mxu0 0.0
    %2204 = vmatpush1.msra.mxu0 0.0
    %2205 = vmatprep.subr.mxu0 0.0
    %2206 = vmatpush1.msra.mxu0 0.0
    %2207 = vmatprep.subr.mxu0 0.0
    %2208 = vmatpush1.msra.mxu0 0.0
    %2209 = vmatprep.subr.mxu0 0.0
    %2210 = vmatpush1.msra.mxu0 0.0
    %2211 = vmatprep.subr.mxu0 0.0
    %2212 = vmatpush1.msra.mxu0 0.0
    %2213 = vmatprep.subr.mxu0 0.0
    %2214 = vmatpush1.msra.mxu0 0.0
    %2215 = vmatprep.subr.mxu0 0.0
    %2216 = vmatpush1.msra.mxu0 0.0
    %2217 = vmatprep.subr.mxu0 0.0
    %2218 = vmatpush1.msra.mxu0 0.0
    %2219 = vmatprep.subr.mxu0 0.0
    %2220 = vmatpush1.msra.mxu0 0.0
    %2221 = vmatprep.subr.mxu0 0.0
    %2222 = vmatpush1.msra.mxu0 0.0
    %2223 = vmatprep.subr.mxu0 0.0
    %2224 = vmatpush1.msra.mxu0 0.0
    %2225 = vmatprep.subr.mxu0 0.0
    %2226 = vmatpush1.msra.mxu0 0.0
    %2227 = vmatprep.subr.mxu0 0.0
    %2228 = vmatpush1.msra.mxu0 0.0
    %2229 = vmatprep.subr.mxu0 0.0
    %2230 = vmatpush1.msra.mxu0 0.0
    %2231 = vmatprep.subr.mxu0 0.0
    %2232 = vmatpush1.msra.mxu0 0.0
    %2233 = vmatprep.subr.mxu0 0.0
    %2234 = vmatpush1.msra.mxu0 0.0
    %2235 = vmatprep.subr.mxu0 0.0
    %2236 = vmatpush1.msra.mxu0 0.0
    %2237 = vmatprep.subr.mxu0 0.0
    %2238 = vmatpush1.msra.mxu0 0.0
    %2239 = vmatprep.subr.mxu0 0.0
    %2240 = vmatpush1.msra.mxu0 0.0
    %2241 = vmatprep.subr.mxu0 0.0
    %2242 = vmatpush1.msra.mxu0 0.0
    %2243 = vmatprep.subr.mxu0 0.0
    %2244 = vmatpush1.msra.mxu0 0.0
    %2245 = vmatprep.subr.mxu0 0.0
    %2246 = vmatpush1.msra.mxu0 0.0
    %2247 = vmatprep.subr.mxu0 0.0
    %2248 = vmatpush1.msra.mxu0 0.0
    %2249 = vmatprep.subr.mxu0 0.0
    %2250 = vmatpush1.msra.mxu0 0.0
    %2251 = vmatprep.subr.mxu0 0.0
    %2252 = vmatpush1.msra.mxu0 0.0
    %2253 = vmatprep.subr.mxu0 0.0
    %2254 = vmatpush1.msra.mxu0 0.0
    %2255 = vmatprep.mubr.f32.mxu0 0.0
    %2256 = vmatmul.mubr.f32.gmra.mrb[0].mxu0 %v1905
    %v2257 = vpop.f32.mrb[0].mxu0
    %v2258 = vadd.f32 %v1834, %v2257
    %v2259 = vpop.f32.mrb[0].mxu0
    %v2260 = vadd.f32 %v1838, %v2259
    %2261 = vdwg.mxu0
    %2262 = vmatprep.subr.mxu0 %v1720
    %2263 = vmatpush1.msra.mxu0 %v1719
    %2264 = vmatprep.subr.mxu0 %v1741
    %2265 = vmatpush1.msra.mxu0 %v1740
    %2266 = vmatprep.subr.mxu0 %v1762
    %2267 = vmatpush1.msra.mxu0 %v1761
    %2268 = vmatprep.subr.mxu0 %v1783
    %2269 = vmatpush1.msra.mxu0 %v1782
    %2270 = vmatprep.subr.mxu0 0.0
    %2271 = vmatpush1.msra.mxu0 0.0
    %2272 = vmatprep.subr.mxu0 0.0
    %2273 = vmatpush1.msra.mxu0 0.0
    %2274 = vmatprep.subr.mxu0 0.0
    %2275 = vmatpush1.msra.mxu0 0.0
    %2276 = vmatprep.subr.mxu0 0.0
    %2277 = vmatpush1.msra.mxu0 0.0
    %2278 = vmatprep.subr.mxu0 0.0
    %2279 = vmatpush1.msra.mxu0 0.0
    %2280 = vmatprep.subr.mxu0 0.0
    %2281 = vmatpush1.msra.mxu0 0.0
    %2282 = vmatprep.subr.mxu0 0.0
    %2283 = vmatpush1.msra.mxu0 0.0
    %2284 = vmatprep.subr.mxu0 0.0
    %2285 = vmatpush1.msra.mxu0 0.0
    %2286 = vmatprep.subr.mxu0 0.0
    %2287 = vmatpush1.msra.mxu0 0.0
    %2288 = vmatprep.subr.mxu0 0.0
    %2289 = vmatpush1.msra.mxu0 0.0
    %2290 = vmatprep.subr.mxu0 0.0
    %2291 = vmatpush1.msra.mxu0 0.0
    %2292 = vmatprep.subr.mxu0 0.0
    %2293 = vmatpush1.msra.mxu0 0.0
    %2294 = vmatprep.subr.mxu0 0.0
    %2295 = vmatpush1.msra.mxu0 0.0
    %2296 = vmatprep.subr.mxu0 0.0
    %2297 = vmatpush1.msra.mxu0 0.0
    %2298 = vmatprep.subr.mxu0 0.0
    %2299 = vmatpush1.msra.mxu0 0.0
    %2300 = vmatprep.subr.mxu0 0.0
    %2301 = vmatpush1.msra.mxu0 0.0
    %2302 = vmatprep.subr.mxu0 0.0
    %2303 = vmatpush1.msra.mxu0 0.0
    %2304 = vmatprep.subr.mxu0 0.0
    %2305 = vmatpush1.msra.mxu0 0.0
    %2306 = vmatprep.subr.mxu0 0.0
    %2307 = vmatpush1.msra.mxu0 0.0
    %2308 = vmatprep.subr.mxu0 0.0
    %2309 = vmatpush1.msra.mxu0 0.0
    %2310 = vmatprep.subr.mxu0 0.0
    %2311 = vmatpush1.msra.mxu0 0.0
    %2312 = vmatprep.subr.mxu0 0.0
    %2313 = vmatpush1.msra.mxu0 0.0
    %2314 = vmatprep.subr.mxu0 0.0
    %2315 = vmatpush1.msra.mxu0 0.0
    %2316 = vmatprep.subr.mxu0 0.0
    %2317 = vmatpush1.msra.mxu0 0.0
    %2318 = vmatprep.subr.mxu0 0.0
    %2319 = vmatpush1.msra.mxu0 0.0
    %2320 = vmatprep.subr.mxu0 0.0
    %2321 = vmatpush1.msra.mxu0 0.0
    %2322 = vmatprep.subr.mxu0 0.0
    %2323 = vmatpush1.msra.mxu0 0.0
    %2324 = vmatprep.subr.mxu0 0.0
    %2325 = vmatpush1.msra.mxu0 0.0
    %2326 = vmatprep.mubr.f32.mxu0 0.0
    %2327 = vmatmul.mubr.f32.gmra.mrb[0].mxu0 %v1905
    %v2328 = vpop.f32.mrb[0].mxu0
    %v2329 = vadd.f32 %v1842, %v2328
    %v2330 = vpop.f32.mrb[0].mxu0
    %v2331 = vadd.f32 %v1846, %v2330
    %2332 = vdwg.mxu0
    %2333 = vmatprep.subr.mxu0 %v1722
    %2334 = vmatpush1.msra.mxu0 %v1721
    %2335 = vmatprep.subr.mxu0 %v1743
    %2336 = vmatpush1.msra.mxu0 %v1742
    %2337 = vmatprep.subr.mxu0 %v1764
    %2338 = vmatpush1.msra.mxu0 %v1763
    %2339 = vmatprep.subr.mxu0 %v1785
    %2340 = vmatpush1.msra.mxu0 %v1784
    %2341 = vmatprep.subr.mxu0 0.0
    %2342 = vmatpush1.msra.mxu0 0.0
    %2343 = vmatprep.subr.mxu0 0.0
    %2344 = vmatpush1.msra.mxu0 0.0
    %2345 = vmatprep.subr.mxu0 0.0
    %2346 = vmatpush1.msra.mxu0 0.0
    %2347 = vmatprep.subr.mxu0 0.0
    %2348 = vmatpush1.msra.mxu0 0.0
    %2349 = vmatprep.subr.mxu0 0.0
    %2350 = vmatpush1.msra.mxu0 0.0
    %2351 = vmatprep.subr.mxu0 0.0
    %2352 = vmatpush1.msra.mxu0 0.0
    %2353 = vmatprep.subr.mxu0 0.0
    %2354 = vmatpush1.msra.mxu0 0.0
    %2355 = vmatprep.subr.mxu0 0.0
    %2356 = vmatpush1.msra.mxu0 0.0
    %2357 = vmatprep.subr.mxu0 0.0
    %2358 = vmatpush1.msra.mxu0 0.0
    %2359 = vmatprep.subr.mxu0 0.0
    %2360 = vmatpush1.msra.mxu0 0.0
    %2361 = vmatprep.subr.mxu0 0.0
    %2362 = vmatpush1.msra.mxu0 0.0
    %2363 = vmatprep.subr.mxu0 0.0
    %2364 = vmatpush1.msra.mxu0 0.0
    %2365 = vmatprep.subr.mxu0 0.0
    %2366 = vmatpush1.msra.mxu0 0.0
    %2367 = vmatprep.subr.mxu0 0.0
    %2368 = vmatpush1.msra.mxu0 0.0
    %2369 = vmatprep.subr.mxu0 0.0
    %2370 = vmatpush1.msra.mxu0 0.0
    %2371 = vmatprep.subr.mxu0 0.0
    %2372 = vmatpush1.msra.mxu0 0.0
    %2373 = vmatprep.subr.mxu0 0.0
    %2374 = vmatpush1.msra.mxu0 0.0
    %2375 = vmatprep.subr.mxu0 0.0
    %2376 = vmatpush1.msra.mxu0 0.0
    %2377 = vmatprep.subr.mxu0 0.0
    %2378 = vmatpush1.msra.mxu0 0.0
    %2379 = vmatprep.subr.mxu0 0.0
    %2380 = vmatpush1.msra.mxu0 0.0
    %2381 = vmatprep.subr.mxu0 0.0
    %2382 = vmatpush1.msra.mxu0 0.0
    %2383 = vmatprep.subr.mxu0 0.0
    %2384 = vmatpush1.msra.mxu0 0.0
    %2385 = vmatprep.subr.mxu0 0.0
    %2386 = vmatpush1.msra.mxu0 0.0
    %2387 = vmatprep.subr.mxu0 0.0
    %2388 = vmatpush1.msra.mxu0 0.0
    %2389 = vmatprep.subr.mxu0 0.0
    %2390 = vmatpush1.msra.mxu0 0.0
    %2391 = vmatprep.subr.mxu0 0.0
    %2392 = vmatpush1.msra.mxu0 0.0
    %2393 = vmatprep.subr.mxu0 0.0
    %2394 = vmatpush1.msra.mxu0 0.0
    %2395 = vmatprep.subr.mxu0 0.0
    %2396 = vmatpush1.msra.mxu0 0.0
    %2397 = vmatprep.mubr.f32.mxu0 0.0
    %2398 = vmatmul.mubr.f32.gmra.mrb[0].mxu0 %v1905
    %v2399 = vpop.f32.mrb[0].mxu0
    %v2400 = vadd.f32 %v1850, %v2399
    %v2401 = vpop.f32.mrb[0].mxu0
    %v2402 = vadd.f32 %v1854, %v2401
    %2403 = vdwg.mxu0
    %2404 = vmatprep.subr.mxu0 %v1724
    %2405 = vmatpush1.msra.mxu0 %v1723
    %2406 = vmatprep.subr.mxu0 %v1745
    %2407 = vmatpush1.msra.mxu0 %v1744
    %2408 = vmatprep.subr.mxu0 %v1766
    %2409 = vmatpush1.msra.mxu0 %v1765
    %2410 = vmatprep.subr.mxu0 %v1787
    %2411 = vmatpush1.msra.mxu0 %v1786
    %2412 = vmatprep.subr.mxu0 0.0
    %2413 = vmatpush1.msra.mxu0 0.0
    %2414 = vmatprep.subr.mxu0 0.0
    %2415 = vmatpush1.msra.mxu0 0.0
    %2416 = vmatprep.subr.mxu0 0.0
    %2417 = vmatpush1.msra.mxu0 0.0
    %2418 = vmatprep.subr.mxu0 0.0
    %2419 = vmatpush1.msra.mxu0 0.0
    %2420 = vmatprep.subr.mxu0 0.0
    %2421 = vmatpush1.msra.mxu0 0.0
    %2422 = vmatprep.subr.mxu0 0.0
    %2423 = vmatpush1.msra.mxu0 0.0
    %2424 = vmatprep.subr.mxu0 0.0
    %2425 = vmatpush1.msra.mxu0 0.0
    %2426 = vmatprep.subr.mxu0 0.0
    %2427 = vmatpush1.msra.mxu0 0.0
    %2428 = vmatprep.subr.mxu0 0.0
    %2429 = vmatpush1.msra.mxu0 0.0
    %2430 = vmatprep.subr.mxu0 0.0
    %2431 = vmatpush1.msra.mxu0 0.0
    %2432 = vmatprep.subr.mxu0 0.0
    %2433 = vmatpush1.msra.mxu0 0.0
    %2434 = vmatprep.subr.mxu0 0.0
    %2435 = vmatpush1.msra.mxu0 0.0
    %2436 = vmatprep.subr.mxu0 0.0
    %2437 = vmatpush1.msra.mxu0 0.0
    %2438 = vmatprep.subr.mxu0 0.0
    %2439 = vmatpush1.msra.mxu0 0.0
    %2440 = vmatprep.subr.mxu0 0.0
    %2441 = vmatpush1.msra.mxu0 0.0
    %2442 = vmatprep.subr.mxu0 0.0
    %2443 = vmatpush1.msra.mxu0 0.0
    %2444 = vmatprep.subr.mxu0 0.0
    %2445 = vmatpush1.msra.mxu0 0.0
    %2446 = vmatprep.subr.mxu0 0.0
    %2447 = vmatpush1.msra.mxu0 0.0
    %2448 = vmatprep.subr.mxu0 0.0
    %2449 = vmatpush1.msra.mxu0 0.0
    %2450 = vmatprep.subr.mxu0 0.0
    %2451 = vmatpush1.msra.mxu0 0.0
    %2452 = vmatprep.subr.mxu0 0.0
    %2453 = vmatpush1.msra.mxu0 0.0
    %2454 = vmatprep.subr.mxu0 0.0
    %2455 = vmatpush1.msra.mxu0 0.0
    %2456 = vmatprep.subr.mxu0 0.0
    %2457 = vmatpush1.msra.mxu0 0.0
    %2458 = vmatprep.subr.mxu0 0.0
    %2459 = vmatpush1.msra.mxu0 0.0
    %2460 = vmatprep.subr.mxu0 0.0
    %2461 = vmatpush1.msra.mxu0 0.0
    %2462 = vmatprep.subr.mxu0 0.0
    %2463 = vmatpush1.msra.mxu0 0.0
    %2464 = vmatprep.subr.mxu0 0.0
    %2465 = vmatpush1.msra.mxu0 0.0
    %2466 = vmatprep.subr.mxu0 0.0
    %2467 = vmatpush1.msra.mxu0 0.0
    %2468 = vmatprep.mubr.f32.mxu0 0.0
    %2469 = vmatmul.mubr.f32.gmra.mrb[0].mxu0 %v1905
    %v2470 = vpop.f32.mrb[0].mxu0
    %v2471 = vadd.f32 %v1858, %v2470
    %v2472 = vpop.f32.mrb[0].mxu0
    %v2473 = vadd.f32 %v1862, %v2472
    %2474 = vdwg.mxu0
    %2475 = vmatprep.subr.mxu0 %v1726
    %2476 = vmatpush1.msra.mxu0 %v1725
    %2477 = vmatprep.subr.mxu0 %v1747
    %2478 = vmatpush1.msra.mxu0 %v1746
    %2479 = vmatprep.subr.mxu0 %v1768
    %2480 = vmatpush1.msra.mxu0 %v1767
    %2481 = vmatprep.subr.mxu0 %v1789
    %2482 = vmatpush1.msra.mxu0 %v1788
    %2483 = vmatprep.subr.mxu0 0.0
    %2484 = vmatpush1.msra.mxu0 0.0
    %2485 = vmatprep.subr.mxu0 0.0
    %2486 = vmatpush1.msra.mxu0 0.0
    %2487 = vmatprep.subr.mxu0 0.0
    %2488 = vmatpush1.msra.mxu0 0.0
    %2489 = vmatprep.subr.mxu0 0.0
    %2490 = vmatpush1.msra.mxu0 0.0
    %2491 = vmatprep.subr.mxu0 0.0
    %2492 = vmatpush1.msra.mxu0 0.0
    %2493 = vmatprep.subr.mxu0 0.0
    %2494 = vmatpush1.msra.mxu0 0.0
    %2495 = vmatprep.subr.mxu0 0.0
    %2496 = vmatpush1.msra.mxu0 0.0
    %2497 = vmatprep.subr.mxu0 0.0
    %2498 = vmatpush1.msra.mxu0 0.0
    %2499 = vmatprep.subr.mxu0 0.0
    %2500 = vmatpush1.msra.mxu0 0.0
    %2501 = vmatprep.subr.mxu0 0.0
    %2502 = vmatpush1.msra.mxu0 0.0
    %2503 = vmatprep.subr.mxu0 0.0
    %2504 = vmatpush1.msra.mxu0 0.0
    %2505 = vmatprep.subr.mxu0 0.0
    %2506 = vmatpush1.msra.mxu0 0.0
    %2507 = vmatprep.subr.mxu0 0.0
    %2508 = vmatpush1.msra.mxu0 0.0
    %2509 = vmatprep.subr.mxu0 0.0
    %2510 = vmatpush1.msra.mxu0 0.0
    %2511 = vmatprep.subr.mxu0 0.0
    %2512 = vmatpush1.msra.mxu0 0.0
    %2513 = vmatprep.subr.mxu0 0.0
    %2514 = vmatpush1.msra.mxu0 0.0
    %2515 = vmatprep.subr.mxu0 0.0
    %2516 = vmatpush1.msra.mxu0 0.0
    %2517 = vmatprep.subr.mxu0 0.0
    %2518 = vmatpush1.msra.mxu0 0.0
    %2519 = vmatprep.subr.mxu0 0.0
    %2520 = vmatpush1.msra.mxu0 0.0
    %2521 = vmatprep.subr.mxu0 0.0
    %2522 = vmatpush1.msra.mxu0 0.0
    %2523 = vmatprep.subr.mxu0 0.0
    %2524 = vmatpush1.msra.mxu0 0.0
    %2525 = vmatprep.subr.mxu0 0.0
    %2526 = vmatpush1.msra.mxu0 0.0
    %2527 = vmatprep.subr.mxu0 0.0
    %2528 = vmatpush1.msra.mxu0 0.0
    %2529 = vmatprep.subr.mxu0 0.0
    %2530 = vmatpush1.msra.mxu0 0.0
    %2531 = vmatprep.subr.mxu0 0.0
    %2532 = vmatpush1.msra.mxu0 0.0
    %2533 = vmatprep.subr.mxu0 0.0
    %2534 = vmatpush1.msra.mxu0 0.0
    %2535 = vmatprep.subr.mxu0 0.0
    %2536 = vmatpush1.msra.mxu0 0.0
    %2537 = vmatprep.subr.mxu0 0.0
    %2538 = vmatpush1.msra.mxu0 0.0
    %2539 = vmatprep.mubr.f32.mxu0 0.0
    %2540 = vmatmul.mubr.f32.gmra.mrb[0].mxu0 %v1905
    %v2541 = vpop.f32.mrb[0].mxu0
    %v2542 = vadd.f32 %v1866, %v2541
    %v2543 = vpop.f32.mrb[0].mxu0
    %v2544 = vadd.f32 %v1870, %v2543
    %2545 = vdwg.mxu0
    %2546 = vmatprep.subr.mxu0 %v1728
    %2547 = vmatpush1.msra.mxu0 %v1727
    %2548 = vmatprep.subr.mxu0 %v1749
    %2549 = vmatpush1.msra.mxu0 %v1748
    %2550 = vmatprep.subr.mxu0 %v1770
    %2551 = vmatpush1.msra.mxu0 %v1769
    %2552 = vmatprep.subr.mxu0 %v1791
    %2553 = vmatpush1.msra.mxu0 %v1790
    %2554 = vmatprep.subr.mxu0 0.0
    %2555 = vmatpush1.msra.mxu0 0.0
    %2556 = vmatprep.subr.mxu0 0.0
    %2557 = vmatpush1.msra.mxu0 0.0
    %2558 = vmatprep.subr.mxu0 0.0
    %2559 = vmatpush1.msra.mxu0 0.0
    %2560 = vmatprep.subr.mxu0 0.0
    %2561 = vmatpush1.msra.mxu0 0.0
    %2562 = vmatprep.subr.mxu0 0.0
    %2563 = vmatpush1.msra.mxu0 0.0
    %2564 = vmatprep.subr.mxu0 0.0
    %2565 = vmatpush1.msra.mxu0 0.0
    %2566 = vmatprep.subr.mxu0 0.0
    %2567 = vmatpush1.msra.mxu0 0.0
    %2568 = vmatprep.subr.mxu0 0.0
    %2569 = vmatpush1.msra.mxu0 0.0
    %2570 = vmatprep.subr.mxu0 0.0
    %2571 = vmatpush1.msra.mxu0 0.0
    %2572 = vmatprep.subr.mxu0 0.0
    %2573 = vmatpush1.msra.mxu0 0.0
    %2574 = vmatprep.subr.mxu0 0.0
    %2575 = vmatpush1.msra.mxu0 0.0
    %2576 = vmatprep.subr.mxu0 0.0
    %2577 = vmatpush1.msra.mxu0 0.0
    %2578 = vmatprep.subr.mxu0 0.0
    %2579 = vmatpush1.msra.mxu0 0.0
    %2580 = vmatprep.subr.mxu0 0.0
    %2581 = vmatpush1.msra.mxu0 0.0
    %2582 = vmatprep.subr.mxu0 0.0
    %2583 = vmatpush1.msra.mxu0 0.0
    %2584 = vmatprep.subr.mxu0 0.0
    %2585 = vmatpush1.msra.mxu0 0.0
    %2586 = vmatprep.subr.mxu0 0.0
    %2587 = vmatpush1.msra.mxu0 0.0
    %2588 = vmatprep.subr.mxu0 0.0
    %2589 = vmatpush1.msra.mxu0 0.0
    %2590 = vmatprep.subr.mxu0 0.0
    %2591 = vmatpush1.msra.mxu0 0.0
    %2592 = vmatprep.subr.mxu0 0.0
    %2593 = vmatpush1.msra.mxu0 0.0
    %2594 = vmatprep.subr.mxu0 0.0
    %2595 = vmatpush1.msra.mxu0 0.0
    %2596 = vmatprep.subr.mxu0 0.0
    %2597 = vmatpush1.msra.mxu0 0.0
    %2598 = vmatprep.subr.mxu0 0.0
    %2599 = vmatpush1.msra.mxu0 0.0
    %2600 = vmatprep.subr.mxu0 0.0
    %2601 = vmatpush1.msra.mxu0 0.0
    %2602 = vmatprep.subr.mxu0 0.0
    %2603 = vmatpush1.msra.mxu0 0.0
    %2604 = vmatprep.subr.mxu0 0.0
    %2605 = vmatpush1.msra.mxu0 0.0
    %2606 = vmatprep.subr.mxu0 0.0
    %2607 = vmatpush1.msra.mxu0 0.0
    %2608 = vmatprep.subr.mxu0 0.0
    %2609 = vmatpush1.msra.mxu0 0.0
    %2610 = vmatprep.mubr.f32.mxu0 0.0
    %2611 = vmatmul.mubr.f32.gmra.mrb[0].mxu0 %v1905
    %v2612 = vpop.f32.mrb[0].mxu0
    %v2613 = vadd.f32 %v1874, %v2612
    %v2614 = vpop.f32.mrb[0].mxu0
    %v2615 = vadd.f32 %v1878, %v2614
    %2616 = vdwg.mxu0
    %2617 = vmatprep.subr.mxu0 0.0
    %2618 = vmatpush1.msra.mxu0 %v1729
    %2619 = vmatprep.subr.mxu0 0.0
    %2620 = vmatpush1.msra.mxu0 %v1750
    %2621 = vmatprep.subr.mxu0 0.0
    %2622 = vmatpush1.msra.mxu0 %v1771
    %2623 = vmatprep.subr.mxu0 0.0
    %2624 = vmatpush1.msra.mxu0 %v1792
    %2625 = vmatprep.subr.mxu0 0.0
    %2626 = vmatpush1.msra.mxu0 0.0
    %2627 = vmatprep.subr.mxu0 0.0
    %2628 = vmatpush1.msra.mxu0 0.0
    %2629 = vmatprep.subr.mxu0 0.0
    %2630 = vmatpush1.msra.mxu0 0.0
    %2631 = vmatprep.subr.mxu0 0.0
    %2632 = vmatpush1.msra.mxu0 0.0
    %2633 = vmatprep.subr.mxu0 0.0
    %2634 = vmatpush1.msra.mxu0 0.0
    %2635 = vmatprep.subr.mxu0 0.0
    %2636 = vmatpush1.msra.mxu0 0.0
    %2637 = vmatprep.subr.mxu0 0.0
    %2638 = vmatpush1.msra.mxu0 0.0
    %2639 = vmatprep.subr.mxu0 0.0
    %2640 = vmatpush1.msra.mxu0 0.0
    %2641 = vmatprep.subr.mxu0 0.0
    %2642 = vmatpush1.msra.mxu0 0.0
    %2643 = vmatprep.subr.mxu0 0.0
    %2644 = vmatpush1.msra.mxu0 0.0
    %2645 = vmatprep.subr.mxu0 0.0
    %2646 = vmatpush1.msra.mxu0 0.0
    %2647 = vmatprep.subr.mxu0 0.0
    %2648 = vmatpush1.msra.mxu0 0.0
    %2649 = vmatprep.subr.mxu0 0.0
    %2650 = vmatpush1.msra.mxu0 0.0
    %2651 = vmatprep.subr.mxu0 0.0
    %2652 = vmatpush1.msra.mxu0 0.0
    %2653 = vmatprep.subr.mxu0 0.0
    %2654 = vmatpush1.msra.mxu0 0.0
    %2655 = vmatprep.subr.mxu0 0.0
    %2656 = vmatpush1.msra.mxu0 0.0
    %2657 = vmatprep.subr.mxu0 0.0
    %2658 = vmatpush1.msra.mxu0 0.0
    %2659 = vmatprep.subr.mxu0 0.0
    %2660 = vmatpush1.msra.mxu0 0.0
    %2661 = vmatprep.subr.mxu0 0.0
    %2662 = vmatpush1.msra.mxu0 0.0
    %2663 = vmatprep.subr.mxu0 0.0
    %2664 = vmatpush1.msra.mxu0 0.0
    %2665 = vmatprep.subr.mxu0 0.0
    %2666 = vmatpush1.msra.mxu0 0.0
    %2667 = vmatprep.subr.mxu0 0.0
    %2668 = vmatpush1.msra.mxu0 0.0
    %2669 = vmatprep.subr.mxu0 0.0
    %2670 = vmatpush1.msra.mxu0 0.0
    %2671 = vmatprep.subr.mxu0 0.0
    %2672 = vmatpush1.msra.mxu0 0.0
    %2673 = vmatprep.subr.mxu0 0.0
    %2674 = vmatpush1.msra.mxu0 0.0
    %2675 = vmatprep.subr.mxu0 0.0
    %2676 = vmatpush1.msra.mxu0 0.0
    %2677 = vmatprep.subr.mxu0 0.0
    %2678 = vmatpush1.msra.mxu0 0.0
    %2679 = vmatprep.subr.mxu0 0.0
    %2680 = vmatpush1.msra.mxu0 0.0
    %2681 = vmatprep.mubr.f32.mxu0 0.0
    %2682 = vmatmul.mubr.f32.gmra.mrb[0].mxu0 %v1905
    %v2683 = vpop.f32.mrb[0].mxu0
    %v2684 = vadd.f32 %v1882, %v2683
    %v2685 = vpop.f32.mrb[0].mxu0
    %2686 = vdwg.mxu0
    %2688 = vrot.lane.b32.xlu0 %v42, 23
    %v2689 = vpop.permute.xlu0 %2688
    %vm2691 = vcmask 187392
    %v2692 = vsel %vm2691, %v42, %v2689
    %2694 = vrot.lane.b32.xlu0 %v2692, 46
    %v2695 = vpop.permute.xlu0 %2694
    %vm2697 = vcmask 375808
    %v2698 = vsel %vm2697, %v2692, %v2695
    %2700 = vrot.lane.b32.xlu0 %v2698, 92
    %v2701 = vpop.permute.xlu0 %2700
    %vm2703 = vcmask 752640
    %v2704 = vsel %vm2703, %v2698, %v2701
    %2706 = vrot.lane.b32.xlu0 %v2704, 56
    %v2707 = vpop.permute.xlu0 %2706
    %2708 = vrot.lane.b32.xlu0 %v2701, 56
    %v2709 = vpop.permute.xlu0 %2708
    %vm2710 = vcmask 457728
    %v2711 = vsel %vm2710, %v2707, %v2709
    %v2714 = vsel %vm2710, %v2701, %v2707
    %2716 = vrot.lane.b32.xlu0 %v2704, 112
    %v2717 = vpop.permute.xlu0 %2716
    %2718 = vrot.lane.b32.xlu0 %v2714, 112
    %v2719 = vpop.permute.xlu0 %2718
    %2720 = vrot.lane.b32.xlu0 %v2711, 112
    %v2721 = vpop.permute.xlu0 %2720
    %vm2722 = vcmask 916480
    %v2723 = vsel %vm2722, %v2717, %v2719
    %v2724 = vsel %vm2722, %v2719, %v2721
    %v2729 = vsel %vm2722, %v2711, %v2717
    %vm2730 = vcmask 785408
    %v2731 = vsel %vm2730, %v2721, 0.0
    %v2732 = vmul.f32 %v1974, %v2704
    %v2733 = vmul.f32 %v1976, %v2714
    %v2734 = vmul.f32 %v2045, %v2729
    %v2735 = vmul.f32 %v2047, %v2723
    %v2736 = vmul.f32 %v2116, %v2724
    %v2737 = vmul.f32 %v2118, %v2731
    %v2738 = vld [vmem:[%s9] sm:$0xff]
    %v2739 = vld [vmem:[%s9 + $0x8] sm:$0xff]
    %v2740 = vld [vmem:[%s9 + $0x10] sm:$0xff]
    %v2741 = vld [vmem:[%s9 + $0x18] sm:$0xff]
    %v2742 = vld [vmem:[%s9 + $0x20] sm:$0xff]
    %v2743 = vld [vmem:[%s9 + $0x28] sm:$0xff]
    %v2744 = vld [vmem:[%s9 + $0x30] sm:$0xff]
    %v2745 = vld [vmem:[%s9 + $0x38] sm:$0xff]
    %v2746 = vld [vmem:[%s9 + $0x40] sm:$0xff]
    %v2747 = vld [vmem:[%s9 + $0x48] sm:$0xff]
    %v2748 = vld [vmem:[%s9 + $0x50] sm:$0xff]
    %v2749 = vld [vmem:[%s9 + $0x58] sm:$0xff]
    %v2750 = vld [vmem:[%s9 + $0x60] sm:$0xff]
    %v2751 = vld [vmem:[%s9 + $0x68] sm:$0xff]
    %v2752 = vld [vmem:[%s9 + $0x70] sm:$0xff]
    %v2753 = vld [vmem:[%s9 + $0x78] sm:$0xff]
    %v2754 = vld [vmem:[%s9 + $0x80] sm:$0xff]
    %v2755 = vld [vmem:[%s9 + $0x88] sm:$0xff]
    %v2756 = vld [vmem:[%s9 + $0x90] sm:$0xff]
    %v2757 = vld [vmem:[%s9 + $0x98] sm:$0xff]
    %v2758 = vld [vmem:[%s9 + $0xa0] sm:$0xff]
    %v2759 = vld [vmem:[%s9 + $0xa8] sm:$0xff]
    %v2760 = vld [vmem:[%s9 + $0xb0] sm:$0xff]
    %v2761 = vld [vmem:[%s9 + $0xb8] sm:$0xff]
    %v2762 = vld [vmem:[%s9 + $0xc0] sm:$0xff]
    %v2763 = vld [vmem:[%s9 + $0xc8] sm:$0xff]
    %v2764 = vld [vmem:[%s9 + $0xd0] sm:$0xff]
    %v2765 = vld [vmem:[%s9 + $0xd8] sm:$0xff]
    %v2766 = vld [vmem:[%s9 + $0xe0] sm:$0xff]
    %v2767 = vld [vmem:[%s9 + $0xe8] sm:$0xff]
    %v2768 = vld [vmem:[%s9 + $0xf0] sm:$0xff]
    %v2769 = vld [vmem:[%s9 + $0xf8] sm:$0xff]
    %v2770 = vld [vmem:[%s9 + $0x100] sm:$0xff]
    %v2771 = vld [vmem:[%s9 + $0x108] sm:$0xff]
    %v2772 = vld [vmem:[%s9 + $0x110] sm:$0xff]
    %v2773 = vld [vmem:[%s9 + $0x118] sm:$0xff]
    %v2774 = vld [vmem:[%s9 + $0x120] sm:$0xff]
    %v2775 = vld [vmem:[%s9 + $0x128] sm:$0xff]
    %v2776 = vld [vmem:[%s9 + $0x130] sm:$0xff]
    %v2777 = vld [vmem:[%s9 + $0x138] sm:$0xff]
    %v2778 = vld [vmem:[%s9 + $0x140] sm:$0xff]
    %v2779 = vld [vmem:[%s9 + $0x148] sm:$0xff]
    %v2780 = vld [vmem:[%s9 + $0x150] sm:$0xff]
    %v2781 = vld [vmem:[%s9 + $0x158] sm:$0xff]
    %v2782 = vld [vmem:[%s9 + $0x160] sm:$0xff]
    %v2783 = vld [vmem:[%s9 + $0x168] sm:$0xff]
    %v2784 = vld [vmem:[%s9 + $0x170] sm:$0xff]
    %v2785 = vld [vmem:[%s9 + $0x178] sm:$0xff]
    %v2786 = vld [vmem:[%s9 + $0x180] sm:$0xff]
    %v2787 = vld [vmem:[%s9 + $0x188] sm:$0xff]
    %v2788 = vld [vmem:[%s9 + $0x190] sm:$0xff]
    %v2789 = vld [vmem:[%s9 + $0x198] sm:$0xff]
    %v2790 = vld [vmem:[%s9 + $0x1a0] sm:$0xff]
    %v2791 = vld [vmem:[%s9 + $0x1a8] sm:$0xff]
    %v2792 = vld [vmem:[%s9 + $0x1b0] sm:$0xff]
    %v2793 = vld [vmem:[%s9 + $0x1b8] sm:$0xff]
    %v2794 = vld [vmem:[%s9 + $0x1c0] sm:$0xff]
    %v2795 = vld [vmem:[%s9 + $0x1c8] sm:$0xff]
    %v2796 = vld [vmem:[%s9 + $0x1d0] sm:$0xff]
    %v2797 = vld [vmem:[%s9 + $0x1d8] sm:$0xff]
    %v2798 = vld [vmem:[%s9 + $0x1e0] sm:$0xff]
    %v2799 = vld [vmem:[%s9 + $0x1e8] sm:$0xff]
    %v2800 = vld [vmem:[%s9 + $0x1f0] sm:$0xff]
    %v2801 = vld [vmem:[%s9 + $0x1f8] sm:$0xff]
    %v2802 = vld [vmem:[%s9 + $0x200] sm:$0xff]
    %v2803 = vld [vmem:[%s9 + $0x208] sm:$0xff]
    %v2804 = vld [vmem:[%s9 + $0x210] sm:$0xff]
    %v2805 = vld [vmem:[%s9 + $0x218] sm:$0xff]
    %v2806 = vld [vmem:[%s9 + $0x220] sm:$0xff]
    %v2807 = vld [vmem:[%s9 + $0x228] sm:$0xff]
    %v2808 = vld [vmem:[%s9 + $0x230] sm:$0xff]
    %v2809 = vld [vmem:[%s9 + $0x238] sm:$0xff]
    %v2810 = vld [vmem:[%s9 + $0x240] sm:$0xff]
    %v2811 = vld [vmem:[%s9 + $0x248] sm:$0xff]
    %v2812 = vld [vmem:[%s9 + $0x250] sm:$0xff]
    %v2813 = vld [vmem:[%s9 + $0x258] sm:$0xff]
    %v2814 = vld [vmem:[%s9 + $0x260] sm:$0xff]
    %v2815 = vld [vmem:[%s9 + $0x268] sm:$0xff]
    %v2816 = vld [vmem:[%s9 + $0x270] sm:$0xff]
    %v2817 = vld [vmem:[%s9 + $0x278] sm:$0xff]
    %v2818 = vld [vmem:[%s9 + $0x280] sm:$0xff]
    %v2819 = vld [vmem:[%s9 + $0x288] sm:$0xff]
    %v2820 = vld [vmem:[%s9 + $0x290] sm:$0xff]
    %v2821 = vld [vmem:[%s9 + $0x298] sm:$0xff]
    %v2822 = vld [vmem:[%s9 + $0x2a0] sm:$0xff]
    %v2823 = vld [vmem:[%s9 + $0x2a8] sm:$0xff]
    %v2824 = vld [vmem:[%s9 + $0x2b0] sm:$0xff]
    %v2825 = vld [vmem:[%s9 + $0x2b8] sm:$0xff]
    %v2826 = vld [vmem:[%s9 + $0x2c0] sm:$0xff]
    %v2827 = vld [vmem:[%s9 + $0x2c8] sm:$0xff]
    %v2828 = vld [vmem:[%s9 + $0x2d0] sm:$0xff]
    %v2829 = vld [vmem:[%s9 + $0x2d8] sm:$0xff]
    %v2830 = vld [vmem:[%s9 + $0x2e0] sm:$0xff]
    %v2831 = vld [vmem:[%s9 + $0x2e8] sm:$0xff]
    %v2832 = vld [vmem:[%s9 + $0x2f0] sm:$0xff]
    %v2833 = vld [vmem:[%s9 + $0x2f8] sm:$0xff]
    %2834 = vmatprep.subr.mxu0 0.0
    %v2835 = vand.u32 %v2738, 4294901760
    %2836 = vmatpush1.msra.mxu0 %v2835
    %2837 = vmatprep.subr.mxu0 0.0
    %v2838 = vand.u32 %v2739, 4294901760
    %2839 = vmatpush1.msra.mxu0 %v2838
    %2840 = vmatprep.subr.mxu0 0.0
    %v2841 = vand.u32 %v2740, 4294901760
    %2842 = vmatpush1.msra.mxu0 %v2841
    %2843 = vmatprep.subr.mxu0 0.0
    %v2844 = vand.u32 %v2741, 4294901760
    %2845 = vmatpush1.msra.mxu0 %v2844
    %2846 = vmatprep.subr.mxu0 0.0
    %v2847 = vand.u32 %v2742, 4294901760
    %2848 = vmatpush1.msra.mxu0 %v2847
    %2849 = vmatprep.subr.mxu0 0.0
    %v2850 = vand.u32 %v2743, 4294901760
    %2851 = vmatpush1.msra.mxu0 %v2850
    %2852 = vmatprep.subr.mxu0 0.0
    %v2853 = vand.u32 %v2744, 4294901760
    %2854 = vmatpush1.msra.mxu0 %v2853
    %2855 = vmatprep.subr.mxu0 0.0
    %v2856 = vand.u32 %v2745, 4294901760
    %2857 = vmatpush1.msra.mxu0 %v2856
    %2858 = vmatprep.subr.mxu0 0.0
    %v2859 = vand.u32 %v2746, 4294901760
    %2860 = vmatpush1.msra.mxu0 %v2859
    %2861 = vmatprep.subr.mxu0 0.0
    %v2862 = vand.u32 %v2747, 4294901760
    %2863 = vmatpush1.msra.mxu0 %v2862
    %2864 = vmatprep.subr.mxu0 0.0
    %v2865 = vand.u32 %v2748, 4294901760
    %2866 = vmatpush1.msra.mxu0 %v2865
    %2867 = vmatprep.subr.mxu0 0.0
    %v2868 = vand.u32 %v2749, 4294901760
    %2869 = vmatpush1.msra.mxu0 %v2868
    %2870 = vmatprep.subr.mxu0 0.0
    %v2871 = vand.u32 %v2750, 4294901760
    %2872 = vmatpush1.msra.mxu0 %v2871
    %2873 = vmatprep.subr.mxu0 0.0
    %v2874 = vand.u32 %v2751, 4294901760
    %2875 = vmatpush1.msra.mxu0 %v2874
    %2876 = vmatprep.subr.mxu0 0.0
    %v2877 = vand.u32 %v2752, 4294901760
    %2878 = vmatpush1.msra.mxu0 %v2877
    %2879 = vmatprep.subr.mxu0 0.0
    %v2880 = vand.u32 %v2753, 4294901760
    %2881 = vmatpush1.msra.mxu0 %v2880
    %2882 = vmatprep.subr.mxu0 0.0
    %v2883 = vand.u32 %v2754, 4294901760
    %2884 = vmatpush1.msra.mxu0 %v2883
    %2885 = vmatprep.subr.mxu0 0.0
    %v2886 = vand.u32 %v2755, 4294901760
    %2887 = vmatpush1.msra.mxu0 %v2886
    %2888 = vmatprep.subr.mxu0 0.0
    %v2889 = vand.u32 %v2756, 4294901760
    %2890 = vmatpush1.msra.mxu0 %v2889
    %2891 = vmatprep.subr.mxu0 0.0
    %v2892 = vand.u32 %v2757, 4294901760
    %2893 = vmatpush1.msra.mxu0 %v2892
    %2894 = vmatprep.subr.mxu0 0.0
    %v2895 = vand.u32 %v2758, 4294901760
    %2896 = vmatpush1.msra.mxu0 %v2895
    %2897 = vmatprep.subr.mxu0 0.0
    %v2898 = vand.u32 %v2759, 4294901760
    %2899 = vmatpush1.msra.mxu0 %v2898
    %2900 = vmatprep.subr.mxu0 0.0
    %v2901 = vand.u32 %v2760, 4294901760
    %2902 = vmatpush1.msra.mxu0 %v2901
    %2903 = vmatprep.subr.mxu0 0.0
    %v2904 = vand.u32 %v2761, 4294901760
    %2905 = vmatpush1.msra.mxu0 %v2904
    %2906 = vmatprep.subr.mxu0 0.0
    %v2907 = vand.u32 %v2762, 4294901760
    %2908 = vmatpush1.msra.mxu0 %v2907
    %2909 = vmatprep.subr.mxu0 0.0
    %v2910 = vand.u32 %v2763, 4294901760
    %2911 = vmatpush1.msra.mxu0 %v2910
    %2912 = vmatprep.subr.mxu0 0.0
    %v2913 = vand.u32 %v2764, 4294901760
    %2914 = vmatpush1.msra.mxu0 %v2913
    %2915 = vmatprep.subr.mxu0 0.0
    %v2916 = vand.u32 %v2765, 4294901760
    %2917 = vmatpush1.msra.mxu0 %v2916
    %2918 = vmatprep.subr.mxu0 0.0
    %v2919 = vand.u32 %v2766, 4294901760
    %2920 = vmatpush1.msra.mxu0 %v2919
    %2921 = vmatprep.subr.mxu0 0.0
    %v2922 = vand.u32 %v2767, 4294901760
    %2923 = vmatpush1.msra.mxu0 %v2922
    %2924 = vmatprep.subr.mxu0 0.0
    %v2925 = vand.u32 %v2768, 4294901760
    %2926 = vmatpush1.msra.mxu0 %v2925
    %2927 = vmatprep.subr.mxu0 0.0
    %v2928 = vand.u32 %v2769, 4294901760
    %2929 = vmatpush1.msra.mxu0 %v2928
    %v2930 = vand.u32 %v2733, 4294901760
    %v2931 = vsub.f32 %v2733, %v2930
    %v2932 = vand.u32 %v2931, 4294901760
    %v2933 = vsub.f32 %v2931, %v2932
    %v2934 = vand.u32 %v2933, 4294901760
    %2935 = vmatprep.mubr.f32.mxu0 %v2934
    %v2936 = vand.u32 %v2732, 4294901760
    %v2937 = vsub.f32 %v2732, %v2936
    %v2938 = vand.u32 %v2937, 4294901760
    %v2939 = vsub.f32 %v2937, %v2938
    %v2940 = vand.u32 %v2939, 4294901760
    %2941 = vmatmul.mubr.f32.gmra.mrb[0].mxu0 %v2940
    %v2942 = vpop.f32.mrb[0].mxu0
    %v2943 = vadd.f32 0.0, %v2942
    %v2944 = vpop.f32.mrb[0].mxu0
    %2945 = vdwg.mxu0
    %2946 = vmatprep.subr.mxu0 0.0
    %v2947 = vand.u32 %v2738, 4294901760
    %v2948 = vsub.f32 %v2738, %v2947
    %v2949 = vand.u32 %v2948, 4294901760
    %v2950 = vsub.f32 %v2948, %v2949
    %v2951 = vand.u32 %v2950, 4294901760
    %2952 = vmatpush1.msra.mxu0 %v2951
    %2953 = vmatprep.subr.mxu0 0.0
    %v2954 = vand.u32 %v2739, 4294901760
    %v2955 = vsub.f32 %v2739, %v2954
    %v2956 = vand.u32 %v2955, 4294901760
    %v2957 = vsub.f32 %v2955, %v2956
    %v2958 = vand.u32 %v2957, 4294901760
    %2959 = vmatpush1.msra.mxu0 %v2958
    %2960 = vmatprep.subr.mxu0 0.0
    %v2961 = vand.u32 %v2740, 4294901760
    %v2962 = vsub.f32 %v2740, %v2961
    %v2963 = vand.u32 %v2962, 4294901760
    %v2964 = vsub.f32 %v2962, %v2963
    %v2965 = vand.u32 %v2964, 4294901760
    %2966 = vmatpush1.msra.mxu0 %v2965
    %2967 = vmatprep.subr.mxu0 0.0
    %v2968 = vand.u32 %v2741, 4294901760
    %v2969 = vsub.f32 %v2741, %v2968
    %v2970 = vand.u32 %v2969, 4294901760
    %v2971 = vsub.f32 %v2969, %v2970
    %v2972 = vand.u32 %v2971, 4294901760
    %2973 = vmatpush1.msra.mxu0 %v2972
    %2974 = vmatprep.subr.mxu0 0.0
    %v2975 = vand.u32 %v2742, 4294901760
    %v2976 = vsub.f32 %v2742, %v2975
    %v2977 = vand.u32 %v2976, 4294901760
    %v2978 = vsub.f32 %v2976, %v2977
    %v2979 = vand.u32 %v2978, 4294901760
    %2980 = vmatpush1.msra.mxu0 %v2979
    %2981 = vmatprep.subr.mxu0 0.0
    %v2982 = vand.u32 %v2743, 4294901760
    %v2983 = vsub.f32 %v2743, %v2982
    %v2984 = vand.u32 %v2983, 4294901760
    %v2985 = vsub.f32 %v2983, %v2984
    %v2986 = vand.u32 %v2985, 4294901760
    %2987 = vmatpush1.msra.mxu0 %v2986
    %2988 = vmatprep.subr.mxu0 0.0
    %v2989 = vand.u32 %v2744, 4294901760
    %v2990 = vsub.f32 %v2744, %v2989
    %v2991 = vand.u32 %v2990, 4294901760
    %v2992 = vsub.f32 %v2990, %v2991
    %v2993 = vand.u32 %v2992, 4294901760
    %2994 = vmatpush1.msra.mxu0 %v2993
    %2995 = vmatprep.subr.mxu0 0.0
    %v2996 = vand.u32 %v2745, 4294901760
    %v2997 = vsub.f32 %v2745, %v2996
    %v2998 = vand.u32 %v2997, 4294901760
    %v2999 = vsub.f32 %v2997, %v2998
    %v3000 = vand.u32 %v2999, 4294901760
    %3001 = vmatpush1.msra.mxu0 %v3000
    %3002 = vmatprep.subr.mxu0 0.0
    %v3003 = vand.u32 %v2746, 4294901760
    %v3004 = vsub.f32 %v2746, %v3003
    %v3005 = vand.u32 %v3004, 4294901760
    %v3006 = vsub.f32 %v3004, %v3005
    %v3007 = vand.u32 %v3006, 4294901760
    %3008 = vmatpush1.msra.mxu0 %v3007
    %3009 = vmatprep.subr.mxu0 0.0
    %v3010 = vand.u32 %v2747, 4294901760
    %v3011 = vsub.f32 %v2747, %v3010
    %v3012 = vand.u32 %v3011, 4294901760
    %v3013 = vsub.f32 %v3011, %v3012
    %v3014 = vand.u32 %v3013, 4294901760
    %3015 = vmatpush1.msra.mxu0 %v3014
    %3016 = vmatprep.subr.mxu0 0.0
    %v3017 = vand.u32 %v2748, 4294901760
    %v3018 = vsub.f32 %v2748, %v3017
    %v3019 = vand.u32 %v3018, 4294901760
    %v3020 = vsub.f32 %v3018, %v3019
    %v3021 = vand.u32 %v3020, 4294901760
    %3022 = vmatpush1.msra.mxu0 %v3021
    %3023 = vmatprep.subr.mxu0 0.0
    %v3024 = vand.u32 %v2749, 4294901760
    %v3025 = vsub.f32 %v2749, %v3024
    %v3026 = vand.u32 %v3025, 4294901760
    %v3027 = vsub.f32 %v3025, %v3026
    %v3028 = vand.u32 %v3027, 4294901760
    %3029 = vmatpush1.msra.mxu0 %v3028
    %3030 = vmatprep.subr.mxu0 0.0
    %v3031 = vand.u32 %v2750, 4294901760
    %v3032 = vsub.f32 %v2750, %v3031
    %v3033 = vand.u32 %v3032, 4294901760
    %v3034 = vsub.f32 %v3032, %v3033
    %v3035 = vand.u32 %v3034, 4294901760
    %3036 = vmatpush1.msra.mxu0 %v3035
    %3037 = vmatprep.subr.mxu0 0.0
    %v3038 = vand.u32 %v2751, 4294901760
    %v3039 = vsub.f32 %v2751, %v3038
    %v3040 = vand.u32 %v3039, 4294901760
    %v3041 = vsub.f32 %v3039, %v3040
    %v3042 = vand.u32 %v3041, 4294901760
    %3043 = vmatpush1.msra.mxu0 %v3042
    %3044 = vmatprep.subr.mxu0 0.0
    %v3045 = vand.u32 %v2752, 4294901760
    %v3046 = vsub.f32 %v2752, %v3045
    %v3047 = vand.u32 %v3046, 4294901760
    %v3048 = vsub.f32 %v3046, %v3047
    %v3049 = vand.u32 %v3048, 4294901760
    %3050 = vmatpush1.msra.mxu0 %v3049
    %3051 = vmatprep.subr.mxu0 0.0
    %v3052 = vand.u32 %v2753, 4294901760
    %v3053 = vsub.f32 %v2753, %v3052
    %v3054 = vand.u32 %v3053, 4294901760
    %v3055 = vsub.f32 %v3053, %v3054
    %v3056 = vand.u32 %v3055, 4294901760
    %3057 = vmatpush1.msra.mxu0 %v3056
    %3058 = vmatprep.subr.mxu0 0.0
    %v3059 = vand.u32 %v2754, 4294901760
    %v3060 = vsub.f32 %v2754, %v3059
    %v3061 = vand.u32 %v3060, 4294901760
    %v3062 = vsub.f32 %v3060, %v3061
    %v3063 = vand.u32 %v3062, 4294901760
    %3064 = vmatpush1.msra.mxu0 %v3063
    %3065 = vmatprep.subr.mxu0 0.0
    %v3066 = vand.u32 %v2755, 4294901760
    %v3067 = vsub.f32 %v2755, %v3066
    %v3068 = vand.u32 %v3067, 4294901760
    %v3069 = vsub.f32 %v3067, %v3068
    %v3070 = vand.u32 %v3069, 4294901760
    %3071 = vmatpush1.msra.mxu0 %v3070
    %3072 = vmatprep.subr.mxu0 0.0
    %v3073 = vand.u32 %v2756, 4294901760
    %v3074 = vsub.f32 %v2756, %v3073
    %v3075 = vand.u32 %v3074, 4294901760
    %v3076 = vsub.f32 %v3074, %v3075
    %v3077 = vand.u32 %v3076, 4294901760
    %3078 = vmatpush1.msra.mxu0 %v3077
    %3079 = vmatprep.subr.mxu0 0.0
    %v3080 = vand.u32 %v2757, 4294901760
    %v3081 = vsub.f32 %v2757, %v3080
    %v3082 = vand.u32 %v3081, 4294901760
    %v3083 = vsub.f32 %v3081, %v3082
    %v3084 = vand.u32 %v3083, 4294901760
    %3085 = vmatpush1.msra.mxu0 %v3084
    %3086 = vmatprep.subr.mxu0 0.0
    %v3087 = vand.u32 %v2758, 4294901760
    %v3088 = vsub.f32 %v2758, %v3087
    %v3089 = vand.u32 %v3088, 4294901760
    %v3090 = vsub.f32 %v3088, %v3089
    %v3091 = vand.u32 %v3090, 4294901760
    %3092 = vmatpush1.msra.mxu0 %v3091
    %3093 = vmatprep.subr.mxu0 0.0
    %v3094 = vand.u32 %v2759, 4294901760
    %v3095 = vsub.f32 %v2759, %v3094
    %v3096 = vand.u32 %v3095, 4294901760
    %v3097 = vsub.f32 %v3095, %v3096
    %v3098 = vand.u32 %v3097, 4294901760
    %3099 = vmatpush1.msra.mxu0 %v3098
    %3100 = vmatprep.subr.mxu0 0.0
    %v3101 = vand.u32 %v2760, 4294901760
    %v3102 = vsub.f32 %v2760, %v3101
    %v3103 = vand.u32 %v3102, 4294901760
    %v3104 = vsub.f32 %v3102, %v3103
    %v3105 = vand.u32 %v3104, 4294901760
    %3106 = vmatpush1.msra.mxu0 %v3105
    %3107 = vmatprep.subr.mxu0 0.0
    %v3108 = vand.u32 %v2761, 4294901760
    %v3109 = vsub.f32 %v2761, %v3108
    %v3110 = vand.u32 %v3109, 4294901760
    %v3111 = vsub.f32 %v3109, %v3110
    %v3112 = vand.u32 %v3111, 4294901760
    %3113 = vmatpush1.msra.mxu0 %v3112
    %3114 = vmatprep.subr.mxu0 0.0
    %v3115 = vand.u32 %v2762, 4294901760
    %v3116 = vsub.f32 %v2762, %v3115
    %v3117 = vand.u32 %v3116, 4294901760
    %v3118 = vsub.f32 %v3116, %v3117
    %v3119 = vand.u32 %v3118, 4294901760
    %3120 = vmatpush1.msra.mxu0 %v3119
    %3121 = vmatprep.subr.mxu0 0.0
    %v3122 = vand.u32 %v2763, 4294901760
    %v3123 = vsub.f32 %v2763, %v3122
    %v3124 = vand.u32 %v3123, 4294901760
    %v3125 = vsub.f32 %v3123, %v3124
    %v3126 = vand.u32 %v3125, 4294901760
    %3127 = vmatpush1.msra.mxu0 %v3126
    %3128 = vmatprep.subr.mxu0 0.0
    %v3129 = vand.u32 %v2764, 4294901760
    %v3130 = vsub.f32 %v2764, %v3129
    %v3131 = vand.u32 %v3130, 4294901760
    %v3132 = vsub.f32 %v3130, %v3131
    %v3133 = vand.u32 %v3132, 4294901760
    %3134 = vmatpush1.msra.mxu0 %v3133
    %3135 = vmatprep.subr.mxu0 0.0
    %v3136 = vand.u32 %v2765, 4294901760
    %v3137 = vsub.f32 %v2765, %v3136
    %v3138 = vand.u32 %v3137, 4294901760
    %v3139 = vsub.f32 %v3137, %v3138
    %v3140 = vand.u32 %v3139, 4294901760
    %3141 = vmatpush1.msra.mxu0 %v3140
    %3142 = vmatprep.subr.mxu0 0.0
    %v3143 = vand.u32 %v2766, 4294901760
    %v3144 = vsub.f32 %v2766, %v3143
    %v3145 = vand.u32 %v3144, 4294901760
    %v3146 = vsub.f32 %v3144, %v3145
    %v3147 = vand.u32 %v3146, 4294901760
    %3148 = vmatpush1.msra.mxu0 %v3147
    %3149 = vmatprep.subr.mxu0 0.0
    %v3150 = vand.u32 %v2767, 4294901760
    %v3151 = vsub.f32 %v2767, %v3150
    %v3152 = vand.u32 %v3151, 4294901760
    %v3153 = vsub.f32 %v3151, %v3152
    %v3154 = vand.u32 %v3153, 4294901760
    %3155 = vmatpush1.msra.mxu0 %v3154
    %3156 = vmatprep.subr.mxu0 0.0
    %v3157 = vand.u32 %v2768, 4294901760
    %v3158 = vsub.f32 %v2768, %v3157
    %v3159 = vand.u32 %v3158, 4294901760
    %v3160 = vsub.f32 %v3158, %v3159
    %v3161 = vand.u32 %v3160, 4294901760
    %3162 = vmatpush1.msra.mxu0 %v3161
    %3163 = vmatprep.subr.mxu0 0.0
    %v3164 = vand.u32 %v2769, 4294901760
    %v3165 = vsub.f32 %v2769, %v3164
    %v3166 = vand.u32 %v3165, 4294901760
    %v3167 = vsub.f32 %v3165, %v3166
    %v3168 = vand.u32 %v3167, 4294901760
    %3169 = vmatpush1.msra.mxu0 %v3168
    %v3170 = vand.u32 %v2733, 4294901760
    %3171 = vmatprep.mubr.f32.mxu0 %v3170
    %v3172 = vand.u32 %v2732, 4294901760
    %3173 = vmatmul.mubr.f32.gmra.mrb[0].mxu0 %v3172
    %v3174 = vpop.f32.mrb[0].mxu0
    %v3175 = vadd.f32 %v2943, %v3174
    %v3176 = vpop.f32.mrb[0].mxu0
    %3177 = vdwg.mxu0
    %3178 = vmatprep.subr.mxu0 0.0
    %v3179 = vand.u32 %v2738, 4294901760
    %v3180 = vsub.f32 %v2738, %v3179
    %3181 = vmatpush1.msra.mxu0 %v3180
    %3182 = vmatprep.subr.mxu0 0.0
    %v3183 = vand.u32 %v2739, 4294901760
    %v3184 = vsub.f32 %v2739, %v3183
    %3185 = vmatpush1.msra.mxu0 %v3184
    %3186 = vmatprep.subr.mxu0 0.0
    %v3187 = vand.u32 %v2740, 4294901760
    %v3188 = vsub.f32 %v2740, %v3187
    %3189 = vmatpush1.msra.mxu0 %v3188
    %3190 = vmatprep.subr.mxu0 0.0
    %v3191 = vand.u32 %v2741, 4294901760
    %v3192 = vsub.f32 %v2741, %v3191
    %3193 = vmatpush1.msra.mxu0 %v3192
    %3194 = vmatprep.subr.mxu0 0.0
    %v3195 = vand.u32 %v2742, 4294901760
    %v3196 = vsub.f32 %v2742, %v3195
    %3197 = vmatpush1.msra.mxu0 %v3196
    %3198 = vmatprep.subr.mxu0 0.0
    %v3199 = vand.u32 %v2743, 4294901760
    %v3200 = vsub.f32 %v2743, %v3199
    %3201 = vmatpush1.msra.mxu0 %v3200
    %3202 = vmatprep.subr.mxu0 0.0
    %v3203 = vand.u32 %v2744, 4294901760
    %v3204 = vsub.f32 %v2744, %v3203
    %3205 = vmatpush1.msra.mxu0 %v3204
    %3206 = vmatprep.subr.mxu0 0.0
    %v3207 = vand.u32 %v2745, 4294901760
    %v3208 = vsub.f32 %v2745, %v3207
    %3209 = vmatpush1.msra.mxu0 %v3208
    %3210 = vmatprep.subr.mxu0 0.0
    %v3211 = vand.u32 %v2746, 4294901760
    %v3212 = vsub.f32 %v2746, %v3211
    %3213 = vmatpush1.msra.mxu0 %v3212
    %3214 = vmatprep.subr.mxu0 0.0
    %v3215 = vand.u32 %v2747, 4294901760
    %v3216 = vsub.f32 %v2747, %v3215
    %3217 = vmatpush1.msra.mxu0 %v3216
    %3218 = vmatprep.subr.mxu0 0.0
    %v3219 = vand.u32 %v2748, 4294901760
    %v3220 = vsub.f32 %v2748, %v3219
    %3221 = vmatpush1.msra.mxu0 %v3220
    %3222 = vmatprep.subr.mxu0 0.0
    %v3223 = vand.u32 %v2749, 4294901760
    %v3224 = vsub.f32 %v2749, %v3223
    %3225 = vmatpush1.msra.mxu0 %v3224
    %3226 = vmatprep.subr.mxu0 0.0
    %v3227 = vand.u32 %v2750, 4294901760
    %v3228 = vsub.f32 %v2750, %v3227
    %3229 = vmatpush1.msra.mxu0 %v3228
    %3230 = vmatprep.subr.mxu0 0.0
    %v3231 = vand.u32 %v2751, 4294901760
    %v3232 = vsub.f32 %v2751, %v3231
    %3233 = vmatpush1.msra.mxu0 %v3232
    %3234 = vmatprep.subr.mxu0 0.0
    %v3235 = vand.u32 %v2752, 4294901760
    %v3236 = vsub.f32 %v2752, %v3235
    %3237 = vmatpush1.msra.mxu0 %v3236
    %3238 = vmatprep.subr.mxu0 0.0
    %v3239 = vand.u32 %v2753, 4294901760
    %v3240 = vsub.f32 %v2753, %v3239
    %3241 = vmatpush1.msra.mxu0 %v3240
    %3242 = vmatprep.subr.mxu0 0.0
    %v3243 = vand.u32 %v2754, 4294901760
    %v3244 = vsub.f32 %v2754, %v3243
    %3245 = vmatpush1.msra.mxu0 %v3244
    %3246 = vmatprep.subr.mxu0 0.0
    %v3247 = vand.u32 %v2755, 4294901760
    %v3248 = vsub.f32 %v2755, %v3247
    %3249 = vmatpush1.msra.mxu0 %v3248
    %3250 = vmatprep.subr.mxu0 0.0
    %v3251 = vand.u32 %v2756, 4294901760
    %v3252 = vsub.f32 %v2756, %v3251
    %3253 = vmatpush1.msra.mxu0 %v3252
    %3254 = vmatprep.subr.mxu0 0.0
    %v3255 = vand.u32 %v2757, 4294901760
    %v3256 = vsub.f32 %v2757, %v3255
    %3257 = vmatpush1.msra.mxu0 %v3256
    %3258 = vmatprep.subr.mxu0 0.0
    %v3259 = vand.u32 %v2758, 4294901760
    %v3260 = vsub.f32 %v2758, %v3259
    %3261 = vmatpush1.msra.mxu0 %v3260
    %3262 = vmatprep.subr.mxu0 0.0
    %v3263 = vand.u32 %v2759, 4294901760
    %v3264 = vsub.f32 %v2759, %v3263
    %3265 = vmatpush1.msra.mxu0 %v3264
    %3266 = vmatprep.subr.mxu0 0.0
    %v3267 = vand.u32 %v2760, 4294901760
    %v3268 = vsub.f32 %v2760, %v3267
    %3269 = vmatpush1.msra.mxu0 %v3268
    %3270 = vmatprep.subr.mxu0 0.0
    %v3271 = vand.u32 %v2761, 4294901760
    %v3272 = vsub.f32 %v2761, %v3271
    %3273 = vmatpush1.msra.mxu0 %v3272
    %3274 = vmatprep.subr.mxu0 0.0
    %v3275 = vand.u32 %v2762, 4294901760
    %v3276 = vsub.f32 %v2762, %v3275
    %3277 = vmatpush1.msra.mxu0 %v3276
    %3278 = vmatprep.subr.mxu0 0.0
    %v3279 = vand.u32 %v2763, 4294901760
    %v3280 = vsub.f32 %v2763, %v3279
    %3281 = vmatpush1.msra.mxu0 %v3280
    %3282 = vmatprep.subr.mxu0 0.0
    %v3283 = vand.u32 %v2764, 4294901760
    %v3284 = vsub.f32 %v2764, %v3283
    %3285 = vmatpush1.msra.mxu0 %v3284
    %3286 = vmatprep.subr.mxu0 0.0
    %v3287 = vand.u32 %v2765, 4294901760
    %v3288 = vsub.f32 %v2765, %v3287
    %3289 = vmatpush1.msra.mxu0 %v3288
    %3290 = vmatprep.subr.mxu0 0.0
    %v3291 = vand.u32 %v2766, 4294901760
    %v3292 = vsub.f32 %v2766, %v3291
    %3293 = vmatpush1.msra.mxu0 %v3292
    %3294 = vmatprep.subr.mxu0 0.0
    %v3295 = vand.u32 %v2767, 4294901760
    %v3296 = vsub.f32 %v2767, %v3295
    %3297 = vmatpush1.msra.mxu0 %v3296
    %3298 = vmatprep.subr.mxu0 0.0
    %v3299 = vand.u32 %v2768, 4294901760
    %v3300 = vsub.f32 %v2768, %v3299
    %3301 = vmatpush1.msra.mxu0 %v3300
    %3302 = vmatprep.subr.mxu0 0.0
    %v3303 = vand.u32 %v2769, 4294901760
    %v3304 = vsub.f32 %v2769, %v3303
    %3305 = vmatpush1.msra.mxu0 %v3304
    %v3306 = vand.u32 %v2733, 4294901760
    %v3307 = vsub.f32 %v2733, %v3306
    %3308 = vmatprep.mubr.f32.mxu0 %v3307
    %v3309 = vand.u32 %v2732, 4294901760
    %v3310 = vsub.f32 %v2732, %v3309
    %3311 = vmatmul.mubr.f32.gmra.mrb[0].mxu0 %v3310
    %v3312 = vpop.f32.mrb[0].mxu0
    %v3313 = vadd.f32 %v3175, %v3312
    %v3314 = vpop.f32.mrb[0].mxu0
    %3315 = vdwg.mxu0
    %3316 = vmatprep.subr.mxu0 0.0
    %v3317 = vand.u32 %v2738, 4294901760
    %3318 = vmatpush1.msra.mxu0 %v3317
    %3319 = vmatprep.subr.mxu0 0.0
    %v3320 = vand.u32 %v2739, 4294901760
    %3321 = vmatpush1.msra.mxu0 %v3320
    %3322 = vmatprep.subr.mxu0 0.0
    %v3323 = vand.u32 %v2740, 4294901760
    %3324 = vmatpush1.msra.mxu0 %v3323
    %3325 = vmatprep.subr.mxu0 0.0
    %v3326 = vand.u32 %v2741, 4294901760
    %3327 = vmatpush1.msra.mxu0 %v3326
    %3328 = vmatprep.subr.mxu0 0.0
    %v3329 = vand.u32 %v2742, 4294901760
    %3330 = vmatpush1.msra.mxu0 %v3329
    %3331 = vmatprep.subr.mxu0 0.0
    %v3332 = vand.u32 %v2743, 4294901760
    %3333 = vmatpush1.msra.mxu0 %v3332
    %3334 = vmatprep.subr.mxu0 0.0
    %v3335 = vand.u32 %v2744, 4294901760
    %3336 = vmatpush1.msra.mxu0 %v3335
    %3337 = vmatprep.subr.mxu0 0.0
    %v3338 = vand.u32 %v2745, 4294901760
    %3339 = vmatpush1.msra.mxu0 %v3338
    %3340 = vmatprep.subr.mxu0 0.0
    %v3341 = vand.u32 %v2746, 4294901760
    %3342 = vmatpush1.msra.mxu0 %v3341
    %3343 = vmatprep.subr.mxu0 0.0
    %v3344 = vand.u32 %v2747, 4294901760
    %3345 = vmatpush1.msra.mxu0 %v3344
    %3346 = vmatprep.subr.mxu0 0.0
    %v3347 = vand.u32 %v2748, 4294901760
    %3348 = vmatpush1.msra.mxu0 %v3347
    %3349 = vmatprep.subr.mxu0 0.0
    %v3350 = vand.u32 %v2749, 4294901760
    %3351 = vmatpush1.msra.mxu0 %v3350
    %3352 = vmatprep.subr.mxu0 0.0
    %v3353 = vand.u32 %v2750, 4294901760
    %3354 = vmatpush1.msra.mxu0 %v3353
    %3355 = vmatprep.subr.mxu0 0.0
    %v3356 = vand.u32 %v2751, 4294901760
    %3357 = vmatpush1.msra.mxu0 %v3356
    %3358 = vmatprep.subr.mxu0 0.0
    %v3359 = vand.u32 %v2752, 4294901760
    %3360 = vmatpush1.msra.mxu0 %v3359
    %3361 = vmatprep.subr.mxu0 0.0
    %v3362 = vand.u32 %v2753, 4294901760
    %3363 = vmatpush1.msra.mxu0 %v3362
    %3364 = vmatprep.subr.mxu0 0.0
    %v3365 = vand.u32 %v2754, 4294901760
    %3366 = vmatpush1.msra.mxu0 %v3365
    %3367 = vmatprep.subr.mxu0 0.0
    %v3368 = vand.u32 %v2755, 4294901760
    %3369 = vmatpush1.msra.mxu0 %v3368
    %3370 = vmatprep.subr.mxu0 0.0
    %v3371 = vand.u32 %v2756, 4294901760
    %3372 = vmatpush1.msra.mxu0 %v3371
    %3373 = vmatprep.subr.mxu0 0.0
    %v3374 = vand.u32 %v2757, 4294901760
    %3375 = vmatpush1.msra.mxu0 %v3374
    %3376 = vmatprep.subr.mxu0 0.0
    %v3377 = vand.u32 %v2758, 4294901760
    %3378 = vmatpush1.msra.mxu0 %v3377
    %3379 = vmatprep.subr.mxu0 0.0
    %v3380 = vand.u32 %v2759, 4294901760
    %3381 = vmatpush1.msra.mxu0 %v3380
    %3382 = vmatprep.subr.mxu0 0.0
    %v3383 = vand.u32 %v2760, 4294901760
    %3384 = vmatpush1.msra.mxu0 %v3383
    %3385 = vmatprep.subr.mxu0 0.0
    %v3386 = vand.u32 %v2761, 4294901760
    %3387 = vmatpush1.msra.mxu0 %v3386
    %3388 = vmatprep.subr.mxu0 0.0
    %v3389 = vand.u32 %v2762, 4294901760
    %3390 = vmatpush1.msra.mxu0 %v3389
    %3391 = vmatprep.subr.mxu0 0.0
    %v3392 = vand.u32 %v2763, 4294901760
    %3393 = vmatpush1.msra.mxu0 %v3392
    %3394 = vmatprep.subr.mxu0 0.0
    %v3395 = vand.u32 %v2764, 4294901760
    %3396 = vmatpush1.msra.mxu0 %v3395
    %3397 = vmatprep.subr.mxu0 0.0
    %v3398 = vand.u32 %v2765, 4294901760
    %3399 = vmatpush1.msra.mxu0 %v3398
    %3400 = vmatprep.subr.mxu0 0.0
    %v3401 = vand.u32 %v2766, 4294901760
    %3402 = vmatpush1.msra.mxu0 %v3401
    %3403 = vmatprep.subr.mxu0 0.0
    %v3404 = vand.u32 %v2767, 4294901760
    %3405 = vmatpush1.msra.mxu0 %v3404
    %3406 = vmatprep.subr.mxu0 0.0
    %v3407 = vand.u32 %v2768, 4294901760
    %3408 = vmatpush1.msra.mxu0 %v3407
    %3409 = vmatprep.subr.mxu0 0.0
    %v3410 = vand.u32 %v2769, 4294901760
    %3411 = vmatpush1.msra.mxu0 %v3410
    %v3412 = vand.u32 %v2733, 4294901760
    %v3413 = vsub.f32 %v2733, %v3412
    %v3414 = vand.u32 %v3413, 4294901760
    %3415 = vmatprep.mubr.f32.mxu0 %v3414
    %v3416 = vand.u32 %v2732, 4294901760
    %v3417 = vsub.f32 %v2732, %v3416
    %v3418 = vand.u32 %v3417, 4294901760
    %3419 = vmatmul.mubr.f32.gmra.mrb[0].mxu0 %v3418
    %v3420 = vpop.f32.mrb[0].mxu0
    %v3421 = vadd.f32 %v3313, %v3420
    %v3422 = vpop.f32.mrb[0].mxu0
    %3423 = vdwg.mxu0
    %3424 = vmatprep.subr.mxu0 0.0
    %v3425 = vand.u32 %v2738, 4294901760
    %v3426 = vsub.f32 %v2738, %v3425
    %v3427 = vand.u32 %v3426, 4294901760
    %3428 = vmatpush1.msra.mxu0 %v3427
    %3429 = vmatprep.subr.mxu0 0.0
    %v3430 = vand.u32 %v2739, 4294901760
    %v3431 = vsub.f32 %v2739, %v3430
    %v3432 = vand.u32 %v3431, 4294901760
    %3433 = vmatpush1.msra.mxu0 %v3432
    %3434 = vmatprep.subr.mxu0 0.0
    %v3435 = vand.u32 %v2740, 4294901760
    %v3436 = vsub.f32 %v2740, %v3435
    %v3437 = vand.u32 %v3436, 4294901760
    %3438 = vmatpush1.msra.mxu0 %v3437
    %3439 = vmatprep.subr.mxu0 0.0
    %v3440 = vand.u32 %v2741, 4294901760
    %v3441 = vsub.f32 %v2741, %v3440
    %v3442 = vand.u32 %v3441, 4294901760
    %3443 = vmatpush1.msra.mxu0 %v3442
    %3444 = vmatprep.subr.mxu0 0.0
    %v3445 = vand.u32 %v2742, 4294901760
    %v3446 = vsub.f32 %v2742, %v3445
    %v3447 = vand.u32 %v3446, 4294901760
    %3448 = vmatpush1.msra.mxu0 %v3447
    %3449 = vmatprep.subr.mxu0 0.0
    %v3450 = vand.u32 %v2743, 4294901760
    %v3451 = vsub.f32 %v2743, %v3450
    %v3452 = vand.u32 %v3451, 4294901760
    %3453 = vmatpush1.msra.mxu0 %v3452
    %3454 = vmatprep.subr.mxu0 0.0
    %v3455 = vand.u32 %v2744, 4294901760
    %v3456 = vsub.f32 %v2744, %v3455
    %v3457 = vand.u32 %v3456, 4294901760
    %3458 = vmatpush1.msra.mxu0 %v3457
    %3459 = vmatprep.subr.mxu0 0.0
    %v3460 = vand.u32 %v2745, 4294901760
    %v3461 = vsub.f32 %v2745, %v3460
    %v3462 = vand.u32 %v3461, 4294901760
    %3463 = vmatpush1.msra.mxu0 %v3462
    %3464 = vmatprep.subr.mxu0 0.0
    %v3465 = vand.u32 %v2746, 4294901760
    %v3466 = vsub.f32 %v2746, %v3465
    %v3467 = vand.u32 %v3466, 4294901760
    %3468 = vmatpush1.msra.mxu0 %v3467
    %3469 = vmatprep.subr.mxu0 0.0
    %v3470 = vand.u32 %v2747, 4294901760
    %v3471 = vsub.f32 %v2747, %v3470
    %v3472 = vand.u32 %v3471, 4294901760
    %3473 = vmatpush1.msra.mxu0 %v3472
    %3474 = vmatprep.subr.mxu0 0.0
    %v3475 = vand.u32 %v2748, 4294901760
    %v3476 = vsub.f32 %v2748, %v3475
    %v3477 = vand.u32 %v3476, 4294901760
    %3478 = vmatpush1.msra.mxu0 %v3477
    %3479 = vmatprep.subr.mxu0 0.0
    %v3480 = vand.u32 %v2749, 4294901760
    %v3481 = vsub.f32 %v2749, %v3480
    %v3482 = vand.u32 %v3481, 4294901760
    %3483 = vmatpush1.msra.mxu0 %v3482
    %3484 = vmatprep.subr.mxu0 0.0
    %v3485 = vand.u32 %v2750, 4294901760
    %v3486 = vsub.f32 %v2750, %v3485
    %v3487 = vand.u32 %v3486, 4294901760
    %3488 = vmatpush1.msra.mxu0 %v3487
    %3489 = vmatprep.subr.mxu0 0.0
    %v3490 = vand.u32 %v2751, 4294901760
    %v3491 = vsub.f32 %v2751, %v3490
    %v3492 = vand.u32 %v3491, 4294901760
    %3493 = vmatpush1.msra.mxu0 %v3492
    %3494 = vmatprep.subr.mxu0 0.0
    %v3495 = vand.u32 %v2752, 4294901760
    %v3496 = vsub.f32 %v2752, %v3495
    %v3497 = vand.u32 %v3496, 4294901760
    %3498 = vmatpush1.msra.mxu0 %v3497
    %3499 = vmatprep.subr.mxu0 0.0
    %v3500 = vand.u32 %v2753, 4294901760
    %v3501 = vsub.f32 %v2753, %v3500
    %v3502 = vand.u32 %v3501, 4294901760
    %3503 = vmatpush1.msra.mxu0 %v3502
    %3504 = vmatprep.subr.mxu0 0.0
    %v3505 = vand.u32 %v2754, 4294901760
    %v3506 = vsub.f32 %v2754, %v3505
    %v3507 = vand.u32 %v3506, 4294901760
    %3508 = vmatpush1.msra.mxu0 %v3507
    %3509 = vmatprep.subr.mxu0 0.0
    %v3510 = vand.u32 %v2755, 4294901760
    %v3511 = vsub.f32 %v2755, %v3510
    %v3512 = vand.u32 %v3511, 4294901760
    %3513 = vmatpush1.msra.mxu0 %v3512
    %3514 = vmatprep.subr.mxu0 0.0
    %v3515 = vand.u32 %v2756, 4294901760
    %v3516 = vsub.f32 %v2756, %v3515
    %v3517 = vand.u32 %v3516, 4294901760
    %3518 = vmatpush1.msra.mxu0 %v3517
    %3519 = vmatprep.subr.mxu0 0.0
    %v3520 = vand.u32 %v2757, 4294901760
    %v3521 = vsub.f32 %v2757, %v3520
    %v3522 = vand.u32 %v3521, 4294901760
    %3523 = vmatpush1.msra.mxu0 %v3522
    %3524 = vmatprep.subr.mxu0 0.0
    %v3525 = vand.u32 %v2758, 4294901760
    %v3526 = vsub.f32 %v2758, %v3525
    %v3527 = vand.u32 %v3526, 4294901760
    %3528 = vmatpush1.msra.mxu0 %v3527
    %3529 = vmatprep.subr.mxu0 0.0
    %v3530 = vand.u32 %v2759, 4294901760
    %v3531 = vsub.f32 %v2759, %v3530
    %v3532 = vand.u32 %v3531, 4294901760
    %3533 = vmatpush1.msra.mxu0 %v3532
    %3534 = vmatprep.subr.mxu0 0.0
    %v3535 = vand.u32 %v2760, 4294901760
    %v3536 = vsub.f32 %v2760, %v3535
    %v3537 = vand.u32 %v3536, 4294901760
    %3538 = vmatpush1.msra.mxu0 %v3537
    %3539 = vmatprep.subr.mxu0 0.0
    %v3540 = vand.u32 %v2761, 4294901760
    %v3541 = vsub.f32 %v2761, %v3540
    %v3542 = vand.u32 %v3541, 4294901760
    %3543 = vmatpush1.msra.mxu0 %v3542
    %3544 = vmatprep.subr.mxu0 0.0
    %v3545 = vand.u32 %v2762, 4294901760
    %v3546 = vsub.f32 %v2762, %v3545
    %v3547 = vand.u32 %v3546, 4294901760
    %3548 = vmatpush1.msra.mxu0 %v3547
    %3549 = vmatprep.subr.mxu0 0.0
    %v3550 = vand.u32 %v2763, 4294901760
    %v3551 = vsub.f32 %v2763, %v3550
    %v3552 = vand.u32 %v3551, 4294901760
    %3553 = vmatpush1.msra.mxu0 %v3552
    %3554 = vmatprep.subr.mxu0 0.0
    %v3555 = vand.u32 %v2764, 4294901760
    %v3556 = vsub.f32 %v2764, %v3555
    %v3557 = vand.u32 %v3556, 4294901760
    %3558 = vmatpush1.msra.mxu0 %v3557
    %3559 = vmatprep.subr.mxu0 0.0
    %v3560 = vand.u32 %v2765, 4294901760
    %v3561 = vsub.f32 %v2765, %v3560
    %v3562 = vand.u32 %v3561, 4294901760
    %3563 = vmatpush1.msra.mxu0 %v3562
    %3564 = vmatprep.subr.mxu0 0.0
    %v3565 = vand.u32 %v2766, 4294901760
    %v3566 = vsub.f32 %v2766, %v3565
    %v3567 = vand.u32 %v3566, 4294901760
    %3568 = vmatpush1.msra.mxu0 %v3567
    %3569 = vmatprep.subr.mxu0 0.0
    %v3570 = vand.u32 %v2767, 4294901760
    %v3571 = vsub.f32 %v2767, %v3570
    %v3572 = vand.u32 %v3571, 4294901760
    %3573 = vmatpush1.msra.mxu0 %v3572
    %3574 = vmatprep.subr.mxu0 0.0
    %v3575 = vand.u32 %v2768, 4294901760
    %v3576 = vsub.f32 %v2768, %v3575
    %v3577 = vand.u32 %v3576, 4294901760
    %3578 = vmatpush1.msra.mxu0 %v3577
    %3579 = vmatprep.subr.mxu0 0.0
    %v3580 = vand.u32 %v2769, 4294901760
    %v3581 = vsub.f32 %v2769, %v3580
    %v3582 = vand.u32 %v3581, 4294901760
    %3583 = vmatpush1.msra.mxu0 %v3582
    %v3584 = vand.u32 %v2733, 4294901760
    %3585 = vmatprep.mubr.f32.mxu0 %v3584
    %v3586 = vand.u32 %v2732, 4294901760
    %3587 = vmatmul.mubr.f32.gmra.mrb[0].mxu0 %v3586
    %v3588 = vpop.f32.mrb[0].mxu0
    %v3589 = vadd.f32 %v3421, %v3588
    %v3590 = vpop.f32.mrb[0].mxu0
    %3591 = vdwg.mxu0
    %3592 = vmatprep.subr.mxu0 0.0
    %v3593 = vand.u32 %v2738, 4294901760
    %3594 = vmatpush1.msra.mxu0 %v3593
    %3595 = vmatprep.subr.mxu0 0.0
    %v3596 = vand.u32 %v2739, 4294901760
    %3597 = vmatpush1.msra.mxu0 %v3596
    %3598 = vmatprep.subr.mxu0 0.0
    %v3599 = vand.u32 %v2740, 4294901760
    %3600 = vmatpush1.msra.mxu0 %v3599
    %3601 = vmatprep.subr.mxu0 0.0
    %v3602 = vand.u32 %v2741, 4294901760
    %3603 = vmatpush1.msra.mxu0 %v3602
    %3604 = vmatprep.subr.mxu0 0.0
    %v3605 = vand.u32 %v2742, 4294901760
    %3606 = vmatpush1.msra.mxu0 %v3605
    %3607 = vmatprep.subr.mxu0 0.0
    %v3608 = vand.u32 %v2743, 4294901760
    %3609 = vmatpush1.msra.mxu0 %v3608
    %3610 = vmatprep.subr.mxu0 0.0
    %v3611 = vand.u32 %v2744, 4294901760
    %3612 = vmatpush1.msra.mxu0 %v3611
    %3613 = vmatprep.subr.mxu0 0.0
    %v3614 = vand.u32 %v2745, 4294901760
    %3615 = vmatpush1.msra.mxu0 %v3614
    %3616 = vmatprep.subr.mxu0 0.0
    %v3617 = vand.u32 %v2746, 4294901760
    %3618 = vmatpush1.msra.mxu0 %v3617
    %3619 = vmatprep.subr.mxu0 0.0
    %v3620 = vand.u32 %v2747, 4294901760
    %3621 = vmatpush1.msra.mxu0 %v3620
    %3622 = vmatprep.subr.mxu0 0.0
    %v3623 = vand.u32 %v2748, 4294901760
    %3624 = vmatpush1.msra.mxu0 %v3623
    %3625 = vmatprep.subr.mxu0 0.0
    %v3626 = vand.u32 %v2749, 4294901760
    %3627 = vmatpush1.msra.mxu0 %v3626
    %3628 = vmatprep.subr.mxu0 0.0
    %v3629 = vand.u32 %v2750, 4294901760
    %3630 = vmatpush1.msra.mxu0 %v3629
    %3631 = vmatprep.subr.mxu0 0.0
    %v3632 = vand.u32 %v2751, 4294901760
    %3633 = vmatpush1.msra.mxu0 %v3632
    %3634 = vmatprep.subr.mxu0 0.0
    %v3635 = vand.u32 %v2752, 4294901760
    %3636 = vmatpush1.msra.mxu0 %v3635
    %3637 = vmatprep.subr.mxu0 0.0
    %v3638 = vand.u32 %v2753, 4294901760
    %3639 = vmatpush1.msra.mxu0 %v3638
    %3640 = vmatprep.subr.mxu0 0.0
    %v3641 = vand.u32 %v2754, 4294901760
    %3642 = vmatpush1.msra.mxu0 %v3641
    %3643 = vmatprep.subr.mxu0 0.0
    %v3644 = vand.u32 %v2755, 4294901760
    %3645 = vmatpush1.msra.mxu0 %v3644
    %3646 = vmatprep.subr.mxu0 0.0
    %v3647 = vand.u32 %v2756, 4294901760
    %3648 = vmatpush1.msra.mxu0 %v3647
    %3649 = vmatprep.subr.mxu0 0.0
    %v3650 = vand.u32 %v2757, 4294901760
    %3651 = vmatpush1.msra.mxu0 %v3650
    %3652 = vmatprep.subr.mxu0 0.0
    %v3653 = vand.u32 %v2758, 4294901760
    %3654 = vmatpush1.msra.mxu0 %v3653
    %3655 = vmatprep.subr.mxu0 0.0
    %v3656 = vand.u32 %v2759, 4294901760
    %3657 = vmatpush1.msra.mxu0 %v3656
    %3658 = vmatprep.subr.mxu0 0.0
    %v3659 = vand.u32 %v2760, 4294901760
    %3660 = vmatpush1.msra.mxu0 %v3659
    %3661 = vmatprep.subr.mxu0 0.0
    %v3662 = vand.u32 %v2761, 4294901760
    %3663 = vmatpush1.msra.mxu0 %v3662
    %3664 = vmatprep.subr.mxu0 0.0
    %v3665 = vand.u32 %v2762, 4294901760
    %3666 = vmatpush1.msra.mxu0 %v3665
    %3667 = vmatprep.subr.mxu0 0.0
    %v3668 = vand.u32 %v2763, 4294901760
    %3669 = vmatpush1.msra.mxu0 %v3668
    %3670 = vmatprep.subr.mxu0 0.0
    %v3671 = vand.u32 %v2764, 4294901760
    %3672 = vmatpush1.msra.mxu0 %v3671
    %3673 = vmatprep.subr.mxu0 0.0
    %v3674 = vand.u32 %v2765, 4294901760
    %3675 = vmatpush1.msra.mxu0 %v3674
    %3676 = vmatprep.subr.mxu0 0.0
    %v3677 = vand.u32 %v2766, 4294901760
    %3678 = vmatpush1.msra.mxu0 %v3677
    %3679 = vmatprep.subr.mxu0 0.0
    %v3680 = vand.u32 %v2767, 4294901760
    %3681 = vmatpush1.msra.mxu0 %v3680
    %3682 = vmatprep.subr.mxu0 0.0
    %v3683 = vand.u32 %v2768, 4294901760
    %3684 = vmatpush1.msra.mxu0 %v3683
    %3685 = vmatprep.subr.mxu0 0.0
    %v3686 = vand.u32 %v2769, 4294901760
    %3687 = vmatpush1.msra.mxu0 %v3686
    %v3688 = vand.u32 %v2733, 4294901760
    %3689 = vmatprep.mubr.f32.mxu0 %v3688
    %v3690 = vand.u32 %v2732, 4294901760
    %3691 = vmatmul.mubr.f32.gmra.mrb[0].mxu0 %v3690
    %v3692 = vpop.f32.mrb[0].mxu0
    %v3693 = vadd.f32 %v3589, %v3692
    %v3694 = vpop.f32.mrb[0].mxu0
    %3695 = vdwg.mxu0
    %3696 = vmatprep.subr.mxu0 0.0
    %v3697 = vand.u32 %v2770, 4294901760
    %3698 = vmatpush1.msra.mxu0 %v3697
    %3699 = vmatprep.subr.mxu0 0.0
    %v3700 = vand.u32 %v2771, 4294901760
    %3701 = vmatpush1.msra.mxu0 %v3700
    %3702 = vmatprep.subr.mxu0 0.0
    %v3703 = vand.u32 %v2772, 4294901760
    %3704 = vmatpush1.msra.mxu0 %v3703
    %3705 = vmatprep.subr.mxu0 0.0
    %v3706 = vand.u32 %v2773, 4294901760
    %3707 = vmatpush1.msra.mxu0 %v3706
    %3708 = vmatprep.subr.mxu0 0.0
    %v3709 = vand.u32 %v2774, 4294901760
    %3710 = vmatpush1.msra.mxu0 %v3709
    %3711 = vmatprep.subr.mxu0 0.0
    %v3712 = vand.u32 %v2775, 4294901760
    %3713 = vmatpush1.msra.mxu0 %v3712
    %3714 = vmatprep.subr.mxu0 0.0
    %v3715 = vand.u32 %v2776, 4294901760
    %3716 = vmatpush1.msra.mxu0 %v3715
    %3717 = vmatprep.subr.mxu0 0.0
    %v3718 = vand.u32 %v2777, 4294901760
    %3719 = vmatpush1.msra.mxu0 %v3718
    %3720 = vmatprep.subr.mxu0 0.0
    %v3721 = vand.u32 %v2778, 4294901760
    %3722 = vmatpush1.msra.mxu0 %v3721
    %3723 = vmatprep.subr.mxu0 0.0
    %v3724 = vand.u32 %v2779, 4294901760
    %3725 = vmatpush1.msra.mxu0 %v3724
    %3726 = vmatprep.subr.mxu0 0.0
    %v3727 = vand.u32 %v2780, 4294901760
    %3728 = vmatpush1.msra.mxu0 %v3727
    %3729 = vmatprep.subr.mxu0 0.0
    %v3730 = vand.u32 %v2781, 4294901760
    %3731 = vmatpush1.msra.mxu0 %v3730
    %3732 = vmatprep.subr.mxu0 0.0
    %v3733 = vand.u32 %v2782, 4294901760
    %3734 = vmatpush1.msra.mxu0 %v3733
    %3735 = vmatprep.subr.mxu0 0.0
    %v3736 = vand.u32 %v2783, 4294901760
    %3737 = vmatpush1.msra.mxu0 %v3736
    %3738 = vmatprep.subr.mxu0 0.0
    %v3739 = vand.u32 %v2784, 4294901760
    %3740 = vmatpush1.msra.mxu0 %v3739
    %3741 = vmatprep.subr.mxu0 0.0
    %v3742 = vand.u32 %v2785, 4294901760
    %3743 = vmatpush1.msra.mxu0 %v3742
    %3744 = vmatprep.subr.mxu0 0.0
    %v3745 = vand.u32 %v2786, 4294901760
    %3746 = vmatpush1.msra.mxu0 %v3745
    %3747 = vmatprep.subr.mxu0 0.0
    %v3748 = vand.u32 %v2787, 4294901760
    %3749 = vmatpush1.msra.mxu0 %v3748
    %3750 = vmatprep.subr.mxu0 0.0
    %v3751 = vand.u32 %v2788, 4294901760
    %3752 = vmatpush1.msra.mxu0 %v3751
    %3753 = vmatprep.subr.mxu0 0.0
    %v3754 = vand.u32 %v2789, 4294901760
    %3755 = vmatpush1.msra.mxu0 %v3754
    %3756 = vmatprep.subr.mxu0 0.0
    %v3757 = vand.u32 %v2790, 4294901760
    %3758 = vmatpush1.msra.mxu0 %v3757
    %3759 = vmatprep.subr.mxu0 0.0
    %v3760 = vand.u32 %v2791, 4294901760
    %3761 = vmatpush1.msra.mxu0 %v3760
    %3762 = vmatprep.subr.mxu0 0.0
    %v3763 = vand.u32 %v2792, 4294901760
    %3764 = vmatpush1.msra.mxu0 %v3763
    %3765 = vmatprep.subr.mxu0 0.0
    %v3766 = vand.u32 %v2793, 4294901760
    %3767 = vmatpush1.msra.mxu0 %v3766
    %3768 = vmatprep.subr.mxu0 0.0
    %v3769 = vand.u32 %v2794, 4294901760
    %3770 = vmatpush1.msra.mxu0 %v3769
    %3771 = vmatprep.subr.mxu0 0.0
    %v3772 = vand.u32 %v2795, 4294901760
    %3773 = vmatpush1.msra.mxu0 %v3772
    %3774 = vmatprep.subr.mxu0 0.0
    %v3775 = vand.u32 %v2796, 4294901760
    %3776 = vmatpush1.msra.mxu0 %v3775
    %3777 = vmatprep.subr.mxu0 0.0
    %v3778 = vand.u32 %v2797, 4294901760
    %3779 = vmatpush1.msra.mxu0 %v3778
    %3780 = vmatprep.subr.mxu0 0.0
    %v3781 = vand.u32 %v2798, 4294901760
    %3782 = vmatpush1.msra.mxu0 %v3781
    %3783 = vmatprep.subr.mxu0 0.0
    %v3784 = vand.u32 %v2799, 4294901760
    %3785 = vmatpush1.msra.mxu0 %v3784
    %3786 = vmatprep.subr.mxu0 0.0
    %v3787 = vand.u32 %v2800, 4294901760
    %3788 = vmatpush1.msra.mxu0 %v3787
    %3789 = vmatprep.subr.mxu0 0.0
    %v3790 = vand.u32 %v2801, 4294901760
    %3791 = vmatpush1.msra.mxu0 %v3790
    %v3792 = vand.u32 %v2735, 4294901760
    %v3793 = vsub.f32 %v2735, %v3792
    %v3794 = vand.u32 %v3793, 4294901760
    %v3795 = vsub.f32 %v3793, %v3794
    %v3796 = vand.u32 %v3795, 4294901760
    %3797 = vmatprep.mubr.f32.mxu0 %v3796
    %v3798 = vand.u32 %v2734, 4294901760
    %v3799 = vsub.f32 %v2734, %v3798
    %v3800 = vand.u32 %v3799, 4294901760
    %v3801 = vsub.f32 %v3799, %v3800
    %v3802 = vand.u32 %v3801, 4294901760
    %3803 = vmatmul.mubr.f32.gmra.mrb[0].mxu0 %v3802
    %v3804 = vpop.f32.mrb[0].mxu0
    %v3805 = vadd.f32 %v3693, %v3804
    %v3806 = vpop.f32.mrb[0].mxu0
    %3807 = vdwg.mxu0
    %3808 = vmatprep.subr.mxu0 0.0
    %v3809 = vand.u32 %v2770, 4294901760
    %v3810 = vsub.f32 %v2770, %v3809
    %v3811 = vand.u32 %v3810, 4294901760
    %v3812 = vsub.f32 %v3810, %v3811
    %v3813 = vand.u32 %v3812, 4294901760
    %3814 = vmatpush1.msra.mxu0 %v3813
    %3815 = vmatprep.subr.mxu0 0.0
    %v3816 = vand.u32 %v2771, 4294901760
    %v3817 = vsub.f32 %v2771, %v3816
    %v3818 = vand.u32 %v3817, 4294901760
    %v3819 = vsub.f32 %v3817, %v3818
    %v3820 = vand.u32 %v3819, 4294901760
    %3821 = vmatpush1.msra.mxu0 %v3820
    %3822 = vmatprep.subr.mxu0 0.0
    %v3823 = vand.u32 %v2772, 4294901760
    %v3824 = vsub.f32 %v2772, %v3823
    %v3825 = vand.u32 %v3824, 4294901760
    %v3826 = vsub.f32 %v3824, %v3825
    %v3827 = vand.u32 %v3826, 4294901760
    %3828 = vmatpush1.msra.mxu0 %v3827
    %3829 = vmatprep.subr.mxu0 0.0
    %v3830 = vand.u32 %v2773, 4294901760
    %v3831 = vsub.f32 %v2773, %v3830
    %v3832 = vand.u32 %v3831, 4294901760
    %v3833 = vsub.f32 %v3831, %v3832
    %v3834 = vand.u32 %v3833, 4294901760
    %3835 = vmatpush1.msra.mxu0 %v3834
    %3836 = vmatprep.subr.mxu0 0.0
    %v3837 = vand.u32 %v2774, 4294901760
    %v3838 = vsub.f32 %v2774, %v3837
    %v3839 = vand.u32 %v3838, 4294901760
    %v3840 = vsub.f32 %v3838, %v3839
    %v3841 = vand.u32 %v3840, 4294901760
    %3842 = vmatpush1.msra.mxu0 %v3841
    %3843 = vmatprep.subr.mxu0 0.0
    %v3844 = vand.u32 %v2775, 4294901760
    %v3845 = vsub.f32 %v2775, %v3844
    %v3846 = vand.u32 %v3845, 4294901760
    %v3847 = vsub.f32 %v3845, %v3846
    %v3848 = vand.u32 %v3847, 4294901760
    %3849 = vmatpush1.msra.mxu0 %v3848
    %3850 = vmatprep.subr.mxu0 0.0
    %v3851 = vand.u32 %v2776, 4294901760
    %v3852 = vsub.f32 %v2776, %v3851
    %v3853 = vand.u32 %v3852, 4294901760
    %v3854 = vsub.f32 %v3852, %v3853
    %v3855 = vand.u32 %v3854, 4294901760
    %3856 = vmatpush1.msra.mxu0 %v3855
    %3857 = vmatprep.subr.mxu0 0.0
    %v3858 = vand.u32 %v2777, 4294901760
    %v3859 = vsub.f32 %v2777, %v3858
    %v3860 = vand.u32 %v3859, 4294901760
    %v3861 = vsub.f32 %v3859, %v3860
    %v3862 = vand.u32 %v3861, 4294901760
    %3863 = vmatpush1.msra.mxu0 %v3862
    %3864 = vmatprep.subr.mxu0 0.0
    %v3865 = vand.u32 %v2778, 4294901760
    %v3866 = vsub.f32 %v2778, %v3865
    %v3867 = vand.u32 %v3866, 4294901760
    %v3868 = vsub.f32 %v3866, %v3867
    %v3869 = vand.u32 %v3868, 4294901760
    %3870 = vmatpush1.msra.mxu0 %v3869
    %3871 = vmatprep.subr.mxu0 0.0
    %v3872 = vand.u32 %v2779, 4294901760
    %v3873 = vsub.f32 %v2779, %v3872
    %v3874 = vand.u32 %v3873, 4294901760
    %v3875 = vsub.f32 %v3873, %v3874
    %v3876 = vand.u32 %v3875, 4294901760
    %3877 = vmatpush1.msra.mxu0 %v3876
    %3878 = vmatprep.subr.mxu0 0.0
    %v3879 = vand.u32 %v2780, 4294901760
    %v3880 = vsub.f32 %v2780, %v3879
    %v3881 = vand.u32 %v3880, 4294901760
    %v3882 = vsub.f32 %v3880, %v3881
    %v3883 = vand.u32 %v3882, 4294901760
    %3884 = vmatpush1.msra.mxu0 %v3883
    %3885 = vmatprep.subr.mxu0 0.0
    %v3886 = vand.u32 %v2781, 4294901760
    %v3887 = vsub.f32 %v2781, %v3886
    %v3888 = vand.u32 %v3887, 4294901760
    %v3889 = vsub.f32 %v3887, %v3888
    %v3890 = vand.u32 %v3889, 4294901760
    %3891 = vmatpush1.msra.mxu0 %v3890
    %3892 = vmatprep.subr.mxu0 0.0
    %v3893 = vand.u32 %v2782, 4294901760
    %v3894 = vsub.f32 %v2782, %v3893
    %v3895 = vand.u32 %v3894, 4294901760
    %v3896 = vsub.f32 %v3894, %v3895
    %v3897 = vand.u32 %v3896, 4294901760
    %3898 = vmatpush1.msra.mxu0 %v3897
    %3899 = vmatprep.subr.mxu0 0.0
    %v3900 = vand.u32 %v2783, 4294901760
    %v3901 = vsub.f32 %v2783, %v3900
    %v3902 = vand.u32 %v3901, 4294901760
    %v3903 = vsub.f32 %v3901, %v3902
    %v3904 = vand.u32 %v3903, 4294901760
    %3905 = vmatpush1.msra.mxu0 %v3904
    %3906 = vmatprep.subr.mxu0 0.0
    %v3907 = vand.u32 %v2784, 4294901760
    %v3908 = vsub.f32 %v2784, %v3907
    %v3909 = vand.u32 %v3908, 4294901760
    %v3910 = vsub.f32 %v3908, %v3909
    %v3911 = vand.u32 %v3910, 4294901760
    %3912 = vmatpush1.msra.mxu0 %v3911
    %3913 = vmatprep.subr.mxu0 0.0
    %v3914 = vand.u32 %v2785, 4294901760
    %v3915 = vsub.f32 %v2785, %v3914
    %v3916 = vand.u32 %v3915, 4294901760
    %v3917 = vsub.f32 %v3915, %v3916
    %v3918 = vand.u32 %v3917, 4294901760
    %3919 = vmatpush1.msra.mxu0 %v3918
    %3920 = vmatprep.subr.mxu0 0.0
    %v3921 = vand.u32 %v2786, 4294901760
    %v3922 = vsub.f32 %v2786, %v3921
    %v3923 = vand.u32 %v3922, 4294901760
    %v3924 = vsub.f32 %v3922, %v3923
    %v3925 = vand.u32 %v3924, 4294901760
    %3926 = vmatpush1.msra.mxu0 %v3925
    %3927 = vmatprep.subr.mxu0 0.0
    %v3928 = vand.u32 %v2787, 4294901760
    %v3929 = vsub.f32 %v2787, %v3928
    %v3930 = vand.u32 %v3929, 4294901760
    %v3931 = vsub.f32 %v3929, %v3930
    %v3932 = vand.u32 %v3931, 4294901760
    %3933 = vmatpush1.msra.mxu0 %v3932
    %3934 = vmatprep.subr.mxu0 0.0
    %v3935 = vand.u32 %v2788, 4294901760
    %v3936 = vsub.f32 %v2788, %v3935
    %v3937 = vand.u32 %v3936, 4294901760
    %v3938 = vsub.f32 %v3936, %v3937
    %v3939 = vand.u32 %v3938, 4294901760
    %3940 = vmatpush1.msra.mxu0 %v3939
    %3941 = vmatprep.subr.mxu0 0.0
    %v3942 = vand.u32 %v2789, 4294901760
    %v3943 = vsub.f32 %v2789, %v3942
    %v3944 = vand.u32 %v3943, 4294901760
    %v3945 = vsub.f32 %v3943, %v3944
    %v3946 = vand.u32 %v3945, 4294901760
    %3947 = vmatpush1.msra.mxu0 %v3946
    %3948 = vmatprep.subr.mxu0 0.0
    %v3949 = vand.u32 %v2790, 4294901760
    %v3950 = vsub.f32 %v2790, %v3949
    %v3951 = vand.u32 %v3950, 4294901760
    %v3952 = vsub.f32 %v3950, %v3951
    %v3953 = vand.u32 %v3952, 4294901760
    %3954 = vmatpush1.msra.mxu0 %v3953
    %3955 = vmatprep.subr.mxu0 0.0
    %v3956 = vand.u32 %v2791, 4294901760
    %v3957 = vsub.f32 %v2791, %v3956
    %v3958 = vand.u32 %v3957, 4294901760
    %v3959 = vsub.f32 %v3957, %v3958
    %v3960 = vand.u32 %v3959, 4294901760
    %3961 = vmatpush1.msra.mxu0 %v3960
    %3962 = vmatprep.subr.mxu0 0.0
    %v3963 = vand.u32 %v2792, 4294901760
    %v3964 = vsub.f32 %v2792, %v3963
    %v3965 = vand.u32 %v3964, 4294901760
    %v3966 = vsub.f32 %v3964, %v3965
    %v3967 = vand.u32 %v3966, 4294901760
    %3968 = vmatpush1.msra.mxu0 %v3967
    %3969 = vmatprep.subr.mxu0 0.0
    %v3970 = vand.u32 %v2793, 4294901760
    %v3971 = vsub.f32 %v2793, %v3970
    %v3972 = vand.u32 %v3971, 4294901760
    %v3973 = vsub.f32 %v3971, %v3972
    %v3974 = vand.u32 %v3973, 4294901760
    %3975 = vmatpush1.msra.mxu0 %v3974
    %3976 = vmatprep.subr.mxu0 0.0
    %v3977 = vand.u32 %v2794, 4294901760
    %v3978 = vsub.f32 %v2794, %v3977
    %v3979 = vand.u32 %v3978, 4294901760
    %v3980 = vsub.f32 %v3978, %v3979
    %v3981 = vand.u32 %v3980, 4294901760
    %3982 = vmatpush1.msra.mxu0 %v3981
    %3983 = vmatprep.subr.mxu0 0.0
    %v3984 = vand.u32 %v2795, 4294901760
    %v3985 = vsub.f32 %v2795, %v3984
    %v3986 = vand.u32 %v3985, 4294901760
    %v3987 = vsub.f32 %v3985, %v3986
    %v3988 = vand.u32 %v3987, 4294901760
    %3989 = vmatpush1.msra.mxu0 %v3988
    %3990 = vmatprep.subr.mxu0 0.0
    %v3991 = vand.u32 %v2796, 4294901760
    %v3992 = vsub.f32 %v2796, %v3991
    %v3993 = vand.u32 %v3992, 4294901760
    %v3994 = vsub.f32 %v3992, %v3993
    %v3995 = vand.u32 %v3994, 4294901760
    %3996 = vmatpush1.msra.mxu0 %v3995
    %3997 = vmatprep.subr.mxu0 0.0
    %v3998 = vand.u32 %v2797, 4294901760
    %v3999 = vsub.f32 %v2797, %v3998
    %v4000 = vand.u32 %v3999, 4294901760
    %v4001 = vsub.f32 %v3999, %v4000
    %v4002 = vand.u32 %v4001, 4294901760
    %4003 = vmatpush1.msra.mxu0 %v4002
    %4004 = vmatprep.subr.mxu0 0.0
    %v4005 = vand.u32 %v2798, 4294901760
    %v4006 = vsub.f32 %v2798, %v4005
    %v4007 = vand.u32 %v4006, 4294901760
    %v4008 = vsub.f32 %v4006, %v4007
    %v4009 = vand.u32 %v4008, 4294901760
    %4010 = vmatpush1.msra.mxu0 %v4009
    %4011 = vmatprep.subr.mxu0 0.0
    %v4012 = vand.u32 %v2799, 4294901760
    %v4013 = vsub.f32 %v2799, %v4012
    %v4014 = vand.u32 %v4013, 4294901760
    %v4015 = vsub.f32 %v4013, %v4014
    %v4016 = vand.u32 %v4015, 4294901760
    %4017 = vmatpush1.msra.mxu0 %v4016
    %4018 = vmatprep.subr.mxu0 0.0
    %v4019 = vand.u32 %v2800, 4294901760
    %v4020 = vsub.f32 %v2800, %v4019
    %v4021 = vand.u32 %v4020, 4294901760
    %v4022 = vsub.f32 %v4020, %v4021
    %v4023 = vand.u32 %v4022, 4294901760
    %4024 = vmatpush1.msra.mxu0 %v4023
    %4025 = vmatprep.subr.mxu0 0.0
    %v4026 = vand.u32 %v2801, 4294901760
    %v4027 = vsub.f32 %v2801, %v4026
    %v4028 = vand.u32 %v4027, 4294901760
    %v4029 = vsub.f32 %v4027, %v4028
    %v4030 = vand.u32 %v4029, 4294901760
    %4031 = vmatpush1.msra.mxu0 %v4030
    %v4032 = vand.u32 %v2735, 4294901760
    %4033 = vmatprep.mubr.f32.mxu0 %v4032
    %v4034 = vand.u32 %v2734, 4294901760
    %4035 = vmatmul.mubr.f32.gmra.mrb[0].mxu0 %v4034
    %v4036 = vpop.f32.mrb[0].mxu0
    %v4037 = vadd.f32 %v3805, %v4036
    %v4038 = vpop.f32.mrb[0].mxu0
    %4039 = vdwg.mxu0
    %4040 = vmatprep.subr.mxu0 0.0
    %v4041 = vand.u32 %v2770, 4294901760
    %v4042 = vsub.f32 %v2770, %v4041
    %4043 = vmatpush1.msra.mxu0 %v4042
    %4044 = vmatprep.subr.mxu0 0.0
    %v4045 = vand.u32 %v2771, 4294901760
    %v4046 = vsub.f32 %v2771, %v4045
    %4047 = vmatpush1.msra.mxu0 %v4046
    %4048 = vmatprep.subr.mxu0 0.0
    %v4049 = vand.u32 %v2772, 4294901760
    %v4050 = vsub.f32 %v2772, %v4049
    %4051 = vmatpush1.msra.mxu0 %v4050
    %4052 = vmatprep.subr.mxu0 0.0
    %v4053 = vand.u32 %v2773, 4294901760
    %v4054 = vsub.f32 %v2773, %v4053
    %4055 = vmatpush1.msra.mxu0 %v4054
    %4056 = vmatprep.subr.mxu0 0.0
    %v4057 = vand.u32 %v2774, 4294901760
    %v4058 = vsub.f32 %v2774, %v4057
    %4059 = vmatpush1.msra.mxu0 %v4058
    %4060 = vmatprep.subr.mxu0 0.0
    %v4061 = vand.u32 %v2775, 4294901760
    %v4062 = vsub.f32 %v2775, %v4061
    %4063 = vmatpush1.msra.mxu0 %v4062
    %4064 = vmatprep.subr.mxu0 0.0
    %v4065 = vand.u32 %v2776, 4294901760
    %v4066 = vsub.f32 %v2776, %v4065
    %4067 = vmatpush1.msra.mxu0 %v4066
    %4068 = vmatprep.subr.mxu0 0.0
    %v4069 = vand.u32 %v2777, 4294901760
    %v4070 = vsub.f32 %v2777, %v4069
    %4071 = vmatpush1.msra.mxu0 %v4070
    %4072 = vmatprep.subr.mxu0 0.0
    %v4073 = vand.u32 %v2778, 4294901760
    %v4074 = vsub.f32 %v2778, %v4073
    %4075 = vmatpush1.msra.mxu0 %v4074
    %4076 = vmatprep.subr.mxu0 0.0
    %v4077 = vand.u32 %v2779, 4294901760
    %v4078 = vsub.f32 %v2779, %v4077
    %4079 = vmatpush1.msra.mxu0 %v4078
    %4080 = vmatprep.subr.mxu0 0.0
    %v4081 = vand.u32 %v2780, 4294901760
    %v4082 = vsub.f32 %v2780, %v4081
    %4083 = vmatpush1.msra.mxu0 %v4082
    %4084 = vmatprep.subr.mxu0 0.0
    %v4085 = vand.u32 %v2781, 4294901760
    %v4086 = vsub.f32 %v2781, %v4085
    %4087 = vmatpush1.msra.mxu0 %v4086
    %4088 = vmatprep.subr.mxu0 0.0
    %v4089 = vand.u32 %v2782, 4294901760
    %v4090 = vsub.f32 %v2782, %v4089
    %4091 = vmatpush1.msra.mxu0 %v4090
    %4092 = vmatprep.subr.mxu0 0.0
    %v4093 = vand.u32 %v2783, 4294901760
    %v4094 = vsub.f32 %v2783, %v4093
    %4095 = vmatpush1.msra.mxu0 %v4094
    %4096 = vmatprep.subr.mxu0 0.0
    %v4097 = vand.u32 %v2784, 4294901760
    %v4098 = vsub.f32 %v2784, %v4097
    %4099 = vmatpush1.msra.mxu0 %v4098
    %4100 = vmatprep.subr.mxu0 0.0
    %v4101 = vand.u32 %v2785, 4294901760
    %v4102 = vsub.f32 %v2785, %v4101
    %4103 = vmatpush1.msra.mxu0 %v4102
    %4104 = vmatprep.subr.mxu0 0.0
    %v4105 = vand.u32 %v2786, 4294901760
    %v4106 = vsub.f32 %v2786, %v4105
    %4107 = vmatpush1.msra.mxu0 %v4106
    %4108 = vmatprep.subr.mxu0 0.0
    %v4109 = vand.u32 %v2787, 4294901760
    %v4110 = vsub.f32 %v2787, %v4109
    %4111 = vmatpush1.msra.mxu0 %v4110
    %4112 = vmatprep.subr.mxu0 0.0
    %v4113 = vand.u32 %v2788, 4294901760
    %v4114 = vsub.f32 %v2788, %v4113
    %4115 = vmatpush1.msra.mxu0 %v4114
    %4116 = vmatprep.subr.mxu0 0.0
    %v4117 = vand.u32 %v2789, 4294901760
    %v4118 = vsub.f32 %v2789, %v4117
    %4119 = vmatpush1.msra.mxu0 %v4118
    %4120 = vmatprep.subr.mxu0 0.0
    %v4121 = vand.u32 %v2790, 4294901760
    %v4122 = vsub.f32 %v2790, %v4121
    %4123 = vmatpush1.msra.mxu0 %v4122
    %4124 = vmatprep.subr.mxu0 0.0
    %v4125 = vand.u32 %v2791, 4294901760
    %v4126 = vsub.f32 %v2791, %v4125
    %4127 = vmatpush1.msra.mxu0 %v4126
    %4128 = vmatprep.subr.mxu0 0.0
    %v4129 = vand.u32 %v2792, 4294901760
    %v4130 = vsub.f32 %v2792, %v4129
    %4131 = vmatpush1.msra.mxu0 %v4130
    %4132 = vmatprep.subr.mxu0 0.0
    %v4133 = vand.u32 %v2793, 4294901760
    %v4134 = vsub.f32 %v2793, %v4133
    %4135 = vmatpush1.msra.mxu0 %v4134
    %4136 = vmatprep.subr.mxu0 0.0
    %v4137 = vand.u32 %v2794, 4294901760
    %v4138 = vsub.f32 %v2794, %v4137
    %4139 = vmatpush1.msra.mxu0 %v4138
    %4140 = vmatprep.subr.mxu0 0.0
    %v4141 = vand.u32 %v2795, 4294901760
    %v4142 = vsub.f32 %v2795, %v4141
    %4143 = vmatpush1.msra.mxu0 %v4142
    %4144 = vmatprep.subr.mxu0 0.0
    %v4145 = vand.u32 %v2796, 4294901760
    %v4146 = vsub.f32 %v2796, %v4145
    %4147 = vmatpush1.msra.mxu0 %v4146
    %4148 = vmatprep.subr.mxu0 0.0
    %v4149 = vand.u32 %v2797, 4294901760
    %v4150 = vsub.f32 %v2797, %v4149
    %4151 = vmatpush1.msra.mxu0 %v4150
    %4152 = vmatprep.subr.mxu0 0.0
    %v4153 = vand.u32 %v2798, 4294901760
    %v4154 = vsub.f32 %v2798, %v4153
    %4155 = vmatpush1.msra.mxu0 %v4154
    %4156 = vmatprep.subr.mxu0 0.0
    %v4157 = vand.u32 %v2799, 4294901760
    %v4158 = vsub.f32 %v2799, %v4157
    %4159 = vmatpush1.msra.mxu0 %v4158
    %4160 = vmatprep.subr.mxu0 0.0
    %v4161 = vand.u32 %v2800, 4294901760
    %v4162 = vsub.f32 %v2800, %v4161
    %4163 = vmatpush1.msra.mxu0 %v4162
    %4164 = vmatprep.subr.mxu0 0.0
    %v4165 = vand.u32 %v2801, 4294901760
    %v4166 = vsub.f32 %v2801, %v4165
    %4167 = vmatpush1.msra.mxu0 %v4166
    %v4168 = vand.u32 %v2735, 4294901760
    %v4169 = vsub.f32 %v2735, %v4168
    %4170 = vmatprep.mubr.f32.mxu0 %v4169
    %v4171 = vand.u32 %v2734, 4294901760
    %v4172 = vsub.f32 %v2734, %v4171
    %4173 = vmatmul.mubr.f32.gmra.mrb[0].mxu0 %v4172
    %v4174 = vpop.f32.mrb[0].mxu0
    %v4175 = vadd.f32 %v4037, %v4174
    %v4176 = vpop.f32.mrb[0].mxu0
    %4177 = vdwg.mxu0
    %4178 = vmatprep.subr.mxu0 0.0
    %v4179 = vand.u32 %v2770, 4294901760
    %4180 = vmatpush1.msra.mxu0 %v4179
    %4181 = vmatprep.subr.mxu0 0.0
    %v4182 = vand.u32 %v2771, 4294901760
    %4183 = vmatpush1.msra.mxu0 %v4182
    %4184 = vmatprep.subr.mxu0 0.0
    %v4185 = vand.u32 %v2772, 4294901760
    %4186 = vmatpush1.msra.mxu0 %v4185
    %4187 = vmatprep.subr.mxu0 0.0
    %v4188 = vand.u32 %v2773, 4294901760
    %4189 = vmatpush1.msra.mxu0 %v4188
    %4190 = vmatprep.subr.mxu0 0.0
    %v4191 = vand.u32 %v2774, 4294901760
    %4192 = vmatpush1.msra.mxu0 %v4191
    %4193 = vmatprep.subr.mxu0 0.0
    %v4194 = vand.u32 %v2775, 4294901760
    %4195 = vmatpush1.msra.mxu0 %v4194
    %4196 = vmatprep.subr.mxu0 0.0
    %v4197 = vand.u32 %v2776, 4294901760
    %4198 = vmatpush1.msra.mxu0 %v4197
    %4199 = vmatprep.subr.mxu0 0.0
    %v4200 = vand.u32 %v2777, 4294901760
    %4201 = vmatpush1.msra.mxu0 %v4200
    %4202 = vmatprep.subr.mxu0 0.0
    %v4203 = vand.u32 %v2778, 4294901760
    %4204 = vmatpush1.msra.mxu0 %v4203
    %4205 = vmatprep.subr.mxu0 0.0
    %v4206 = vand.u32 %v2779, 4294901760
    %4207 = vmatpush1.msra.mxu0 %v4206
    %4208 = vmatprep.subr.mxu0 0.0
    %v4209 = vand.u32 %v2780, 4294901760
    %4210 = vmatpush1.msra.mxu0 %v4209
    %4211 = vmatprep.subr.mxu0 0.0
    %v4212 = vand.u32 %v2781, 4294901760
    %4213 = vmatpush1.msra.mxu0 %v4212
    %4214 = vmatprep.subr.mxu0 0.0
    %v4215 = vand.u32 %v2782, 4294901760
    %4216 = vmatpush1.msra.mxu0 %v4215
    %4217 = vmatprep.subr.mxu0 0.0
    %v4218 = vand.u32 %v2783, 4294901760
    %4219 = vmatpush1.msra.mxu0 %v4218
    %4220 = vmatprep.subr.mxu0 0.0
    %v4221 = vand.u32 %v2784, 4294901760
    %4222 = vmatpush1.msra.mxu0 %v4221
    %4223 = vmatprep.subr.mxu0 0.0
    %v4224 = vand.u32 %v2785, 4294901760
    %4225 = vmatpush1.msra.mxu0 %v4224
    %4226 = vmatprep.subr.mxu0 0.0
    %v4227 = vand.u32 %v2786, 4294901760
    %4228 = vmatpush1.msra.mxu0 %v4227
    %4229 = vmatprep.subr.mxu0 0.0
    %v4230 = vand.u32 %v2787, 4294901760
    %4231 = vmatpush1.msra.mxu0 %v4230
    %4232 = vmatprep.subr.mxu0 0.0
    %v4233 = vand.u32 %v2788, 4294901760
    %4234 = vmatpush1.msra.mxu0 %v4233
    %4235 = vmatprep.subr.mxu0 0.0
    %v4236 = vand.u32 %v2789, 4294901760
    %4237 = vmatpush1.msra.mxu0 %v4236
    %4238 = vmatprep.subr.mxu0 0.0
    %v4239 = vand.u32 %v2790, 4294901760
    %4240 = vmatpush1.msra.mxu0 %v4239
    %4241 = vmatprep.subr.mxu0 0.0
    %v4242 = vand.u32 %v2791, 4294901760
    %4243 = vmatpush1.msra.mxu0 %v4242
    %4244 = vmatprep.subr.mxu0 0.0
    %v4245 = vand.u32 %v2792, 4294901760
    %4246 = vmatpush1.msra.mxu0 %v4245
    %4247 = vmatprep.subr.mxu0 0.0
    %v4248 = vand.u32 %v2793, 4294901760
    %4249 = vmatpush1.msra.mxu0 %v4248
    %4250 = vmatprep.subr.mxu0 0.0
    %v4251 = vand.u32 %v2794, 4294901760
    %4252 = vmatpush1.msra.mxu0 %v4251
    %4253 = vmatprep.subr.mxu0 0.0
    %v4254 = vand.u32 %v2795, 4294901760
    %4255 = vmatpush1.msra.mxu0 %v4254
    %4256 = vmatprep.subr.mxu0 0.0
    %v4257 = vand.u32 %v2796, 4294901760
    %4258 = vmatpush1.msra.mxu0 %v4257
    %4259 = vmatprep.subr.mxu0 0.0
    %v4260 = vand.u32 %v2797, 4294901760
    %4261 = vmatpush1.msra.mxu0 %v4260
    %4262 = vmatprep.subr.mxu0 0.0
    %v4263 = vand.u32 %v2798, 4294901760
    %4264 = vmatpush1.msra.mxu0 %v4263
    %4265 = vmatprep.subr.mxu0 0.0
    %v4266 = vand.u32 %v2799, 4294901760
    %4267 = vmatpush1.msra.mxu0 %v4266
    %4268 = vmatprep.subr.mxu0 0.0
    %v4269 = vand.u32 %v2800, 4294901760
    %4270 = vmatpush1.msra.mxu0 %v4269
    %4271 = vmatprep.subr.mxu0 0.0
    %v4272 = vand.u32 %v2801, 4294901760
    %4273 = vmatpush1.msra.mxu0 %v4272
    %v4274 = vand.u32 %v2735, 4294901760
    %v4275 = vsub.f32 %v2735, %v4274
    %v4276 = vand.u32 %v4275, 4294901760
    %4277 = vmatprep.mubr.f32.mxu0 %v4276
    %v4278 = vand.u32 %v2734, 4294901760
    %v4279 = vsub.f32 %v2734, %v4278
    %v4280 = vand.u32 %v4279, 4294901760
    %4281 = vmatmul.mubr.f32.gmra.mrb[0].mxu0 %v4280
    %v4282 = vpop.f32.mrb[0].mxu0
    %v4283 = vadd.f32 %v4175, %v4282
    %v4284 = vpop.f32.mrb[0].mxu0
    %4285 = vdwg.mxu0
    %4286 = vmatprep.subr.mxu0 0.0
    %v4287 = vand.u32 %v2770, 4294901760
    %v4288 = vsub.f32 %v2770, %v4287
    %v4289 = vand.u32 %v4288, 4294901760
    %4290 = vmatpush1.msra.mxu0 %v4289
    %4291 = vmatprep.subr.mxu0 0.0
    %v4292 = vand.u32 %v2771, 4294901760
    %v4293 = vsub.f32 %v2771, %v4292
    %v4294 = vand.u32 %v4293, 4294901760
    %4295 = vmatpush1.msra.mxu0 %v4294
    %4296 = vmatprep.subr.mxu0 0.0
    %v4297 = vand.u32 %v2772, 4294901760
    %v4298 = vsub.f32 %v2772, %v4297
    %v4299 = vand.u32 %v4298, 4294901760
    %4300 = vmatpush1.msra.mxu0 %v4299
    %4301 = vmatprep.subr.mxu0 0.0
    %v4302 = vand.u32 %v2773, 4294901760
    %v4303 = vsub.f32 %v2773, %v4302
    %v4304 = vand.u32 %v4303, 4294901760
    %4305 = vmatpush1.msra.mxu0 %v4304
    %4306 = vmatprep.subr.mxu0 0.0
    %v4307 = vand.u32 %v2774, 4294901760
    %v4308 = vsub.f32 %v2774, %v4307
    %v4309 = vand.u32 %v4308, 4294901760
    %4310 = vmatpush1.msra.mxu0 %v4309
    %4311 = vmatprep.subr.mxu0 0.0
    %v4312 = vand.u32 %v2775, 4294901760
    %v4313 = vsub.f32 %v2775, %v4312
    %v4314 = vand.u32 %v4313, 4294901760
    %4315 = vmatpush1.msra.mxu0 %v4314
    %4316 = vmatprep.subr.mxu0 0.0
    %v4317 = vand.u32 %v2776, 4294901760
    %v4318 = vsub.f32 %v2776, %v4317
    %v4319 = vand.u32 %v4318, 4294901760
    %4320 = vmatpush1.msra.mxu0 %v4319
    %4321 = vmatprep.subr.mxu0 0.0
    %v4322 = vand.u32 %v2777, 4294901760
    %v4323 = vsub.f32 %v2777, %v4322
    %v4324 = vand.u32 %v4323, 4294901760
    %4325 = vmatpush1.msra.mxu0 %v4324
    %4326 = vmatprep.subr.mxu0 0.0
    %v4327 = vand.u32 %v2778, 4294901760
    %v4328 = vsub.f32 %v2778, %v4327
    %v4329 = vand.u32 %v4328, 4294901760
    %4330 = vmatpush1.msra.mxu0 %v4329
    %4331 = vmatprep.subr.mxu0 0.0
    %v4332 = vand.u32 %v2779, 4294901760
    %v4333 = vsub.f32 %v2779, %v4332
    %v4334 = vand.u32 %v4333, 4294901760
    %4335 = vmatpush1.msra.mxu0 %v4334
    %4336 = vmatprep.subr.mxu0 0.0
    %v4337 = vand.u32 %v2780, 4294901760
    %v4338 = vsub.f32 %v2780, %v4337
    %v4339 = vand.u32 %v4338, 4294901760
    %4340 = vmatpush1.msra.mxu0 %v4339
    %4341 = vmatprep.subr.mxu0 0.0
    %v4342 = vand.u32 %v2781, 4294901760
    %v4343 = vsub.f32 %v2781, %v4342
    %v4344 = vand.u32 %v4343, 4294901760
    %4345 = vmatpush1.msra.mxu0 %v4344
    %4346 = vmatprep.subr.mxu0 0.0
    %v4347 = vand.u32 %v2782, 4294901760
    %v4348 = vsub.f32 %v2782, %v4347
    %v4349 = vand.u32 %v4348, 4294901760
    %4350 = vmatpush1.msra.mxu0 %v4349
    %4351 = vmatprep.subr.mxu0 0.0
    %v4352 = vand.u32 %v2783, 4294901760
    %v4353 = vsub.f32 %v2783, %v4352
    %v4354 = vand.u32 %v4353, 4294901760
    %4355 = vmatpush1.msra.mxu0 %v4354
    %4356 = vmatprep.subr.mxu0 0.0
    %v4357 = vand.u32 %v2784, 4294901760
    %v4358 = vsub.f32 %v2784, %v4357
    %v4359 = vand.u32 %v4358, 4294901760
    %4360 = vmatpush1.msra.mxu0 %v4359
    %4361 = vmatprep.subr.mxu0 0.0
    %v4362 = vand.u32 %v2785, 4294901760
    %v4363 = vsub.f32 %v2785, %v4362
    %v4364 = vand.u32 %v4363, 4294901760
    %4365 = vmatpush1.msra.mxu0 %v4364
    %4366 = vmatprep.subr.mxu0 0.0
    %v4367 = vand.u32 %v2786, 4294901760
    %v4368 = vsub.f32 %v2786, %v4367
    %v4369 = vand.u32 %v4368, 4294901760
    %4370 = vmatpush1.msra.mxu0 %v4369
    %4371 = vmatprep.subr.mxu0 0.0
    %v4372 = vand.u32 %v2787, 4294901760
    %v4373 = vsub.f32 %v2787, %v4372
    %v4374 = vand.u32 %v4373, 4294901760
    %4375 = vmatpush1.msra.mxu0 %v4374
    %4376 = vmatprep.subr.mxu0 0.0
    %v4377 = vand.u32 %v2788, 4294901760
    %v4378 = vsub.f32 %v2788, %v4377
    %v4379 = vand.u32 %v4378, 4294901760
    %4380 = vmatpush1.msra.mxu0 %v4379
    %4381 = vmatprep.subr.mxu0 0.0
    %v4382 = vand.u32 %v2789, 4294901760
    %v4383 = vsub.f32 %v2789, %v4382
    %v4384 = vand.u32 %v4383, 4294901760
    %4385 = vmatpush1.msra.mxu0 %v4384
    %4386 = vmatprep.subr.mxu0 0.0
    %v4387 = vand.u32 %v2790, 4294901760
    %v4388 = vsub.f32 %v2790, %v4387
    %v4389 = vand.u32 %v4388, 4294901760
    %4390 = vmatpush1.msra.mxu0 %v4389
    %4391 = vmatprep.subr.mxu0 0.0
    %v4392 = vand.u32 %v2791, 4294901760
    %v4393 = vsub.f32 %v2791, %v4392
    %v4394 = vand.u32 %v4393, 4294901760
    %4395 = vmatpush1.msra.mxu0 %v4394
    %4396 = vmatprep.subr.mxu0 0.0
    %v4397 = vand.u32 %v2792, 4294901760
    %v4398 = vsub.f32 %v2792, %v4397
    %v4399 = vand.u32 %v4398, 4294901760
    %4400 = vmatpush1.msra.mxu0 %v4399
    %4401 = vmatprep.subr.mxu0 0.0
    %v4402 = vand.u32 %v2793, 4294901760
    %v4403 = vsub.f32 %v2793, %v4402
    %v4404 = vand.u32 %v4403, 4294901760
    %4405 = vmatpush1.msra.mxu0 %v4404
    %4406 = vmatprep.subr.mxu0 0.0
    %v4407 = vand.u32 %v2794, 4294901760
    %v4408 = vsub.f32 %v2794, %v4407
    %v4409 = vand.u32 %v4408, 4294901760
    %4410 = vmatpush1.msra.mxu0 %v4409
    %4411 = vmatprep.subr.mxu0 0.0
    %v4412 = vand.u32 %v2795, 4294901760
    %v4413 = vsub.f32 %v2795, %v4412
    %v4414 = vand.u32 %v4413, 4294901760
    %4415 = vmatpush1.msra.mxu0 %v4414
    %4416 = vmatprep.subr.mxu0 0.0
    %v4417 = vand.u32 %v2796, 4294901760
    %v4418 = vsub.f32 %v2796, %v4417
    %v4419 = vand.u32 %v4418, 4294901760
    %4420 = vmatpush1.msra.mxu0 %v4419
    %4421 = vmatprep.subr.mxu0 0.0
    %v4422 = vand.u32 %v2797, 4294901760
    %v4423 = vsub.f32 %v2797, %v4422
    %v4424 = vand.u32 %v4423, 4294901760
    %4425 = vmatpush1.msra.mxu0 %v4424
    %4426 = vmatprep.subr.mxu0 0.0
    %v4427 = vand.u32 %v2798, 4294901760
    %v4428 = vsub.f32 %v2798, %v4427
    %v4429 = vand.u32 %v4428, 4294901760
    %4430 = vmatpush1.msra.mxu0 %v4429
    %4431 = vmatprep.subr.mxu0 0.0
    %v4432 = vand.u32 %v2799, 4294901760
    %v4433 = vsub.f32 %v2799, %v4432
    %v4434 = vand.u32 %v4433, 4294901760
    %4435 = vmatpush1.msra.mxu0 %v4434
    %4436 = vmatprep.subr.mxu0 0.0
    %v4437 = vand.u32 %v2800, 4294901760
    %v4438 = vsub.f32 %v2800, %v4437
    %v4439 = vand.u32 %v4438, 4294901760
    %4440 = vmatpush1.msra.mxu0 %v4439
    %4441 = vmatprep.subr.mxu0 0.0
    %v4442 = vand.u32 %v2801, 4294901760
    %v4443 = vsub.f32 %v2801, %v4442
    %v4444 = vand.u32 %v4443, 4294901760
    %4445 = vmatpush1.msra.mxu0 %v4444
    %v4446 = vand.u32 %v2735, 4294901760
    %4447 = vmatprep.mubr.f32.mxu0 %v4446
    %v4448 = vand.u32 %v2734, 4294901760
    %4449 = vmatmul.mubr.f32.gmra.mrb[0].mxu0 %v4448
    %v4450 = vpop.f32.mrb[0].mxu0
    %v4451 = vadd.f32 %v4283, %v4450
    %v4452 = vpop.f32.mrb[0].mxu0
    %4453 = vdwg.mxu0
    %4454 = vmatprep.subr.mxu0 0.0
    %v4455 = vand.u32 %v2770, 4294901760
    %4456 = vmatpush1.msra.mxu0 %v4455
    %4457 = vmatprep.subr.mxu0 0.0
    %v4458 = vand.u32 %v2771, 4294901760
    %4459 = vmatpush1.msra.mxu0 %v4458
    %4460 = vmatprep.subr.mxu0 0.0
    %v4461 = vand.u32 %v2772, 4294901760
    %4462 = vmatpush1.msra.mxu0 %v4461
    %4463 = vmatprep.subr.mxu0 0.0
    %v4464 = vand.u32 %v2773, 4294901760
    %4465 = vmatpush1.msra.mxu0 %v4464
    %4466 = vmatprep.subr.mxu0 0.0
    %v4467 = vand.u32 %v2774, 4294901760
    %4468 = vmatpush1.msra.mxu0 %v4467
    %4469 = vmatprep.subr.mxu0 0.0
    %v4470 = vand.u32 %v2775, 4294901760
    %4471 = vmatpush1.msra.mxu0 %v4470
    %4472 = vmatprep.subr.mxu0 0.0
    %v4473 = vand.u32 %v2776, 4294901760
    %4474 = vmatpush1.msra.mxu0 %v4473
    %4475 = vmatprep.subr.mxu0 0.0
    %v4476 = vand.u32 %v2777, 4294901760
    %4477 = vmatpush1.msra.mxu0 %v4476
    %4478 = vmatprep.subr.mxu0 0.0
    %v4479 = vand.u32 %v2778, 4294901760
    %4480 = vmatpush1.msra.mxu0 %v4479
    %4481 = vmatprep.subr.mxu0 0.0
    %v4482 = vand.u32 %v2779, 4294901760
    %4483 = vmatpush1.msra.mxu0 %v4482
    %4484 = vmatprep.subr.mxu0 0.0
    %v4485 = vand.u32 %v2780, 4294901760
    %4486 = vmatpush1.msra.mxu0 %v4485
    %4487 = vmatprep.subr.mxu0 0.0
    %v4488 = vand.u32 %v2781, 4294901760
    %4489 = vmatpush1.msra.mxu0 %v4488
    %4490 = vmatprep.subr.mxu0 0.0
    %v4491 = vand.u32 %v2782, 4294901760
    %4492 = vmatpush1.msra.mxu0 %v4491
    %4493 = vmatprep.subr.mxu0 0.0
    %v4494 = vand.u32 %v2783, 4294901760
    %4495 = vmatpush1.msra.mxu0 %v4494
    %4496 = vmatprep.subr.mxu0 0.0
    %v4497 = vand.u32 %v2784, 4294901760
    %4498 = vmatpush1.msra.mxu0 %v4497
    %4499 = vmatprep.subr.mxu0 0.0
    %v4500 = vand.u32 %v2785, 4294901760
    %4501 = vmatpush1.msra.mxu0 %v4500
    %4502 = vmatprep.subr.mxu0 0.0
    %v4503 = vand.u32 %v2786, 4294901760
    %4504 = vmatpush1.msra.mxu0 %v4503
    %4505 = vmatprep.subr.mxu0 0.0
    %v4506 = vand.u32 %v2787, 4294901760
    %4507 = vmatpush1.msra.mxu0 %v4506
    %4508 = vmatprep.subr.mxu0 0.0
    %v4509 = vand.u32 %v2788, 4294901760
    %4510 = vmatpush1.msra.mxu0 %v4509
    %4511 = vmatprep.subr.mxu0 0.0
    %v4512 = vand.u32 %v2789, 4294901760
    %4513 = vmatpush1.msra.mxu0 %v4512
    %4514 = vmatprep.subr.mxu0 0.0
    %v4515 = vand.u32 %v2790, 4294901760
    %4516 = vmatpush1.msra.mxu0 %v4515
    %4517 = vmatprep.subr.mxu0 0.0
    %v4518 = vand.u32 %v2791, 4294901760
    %4519 = vmatpush1.msra.mxu0 %v4518
    %4520 = vmatprep.subr.mxu0 0.0
    %v4521 = vand.u32 %v2792, 4294901760
    %4522 = vmatpush1.msra.mxu0 %v4521
    %4523 = vmatprep.subr.mxu0 0.0
    %v4524 = vand.u32 %v2793, 4294901760
    %4525 = vmatpush1.msra.mxu0 %v4524
    %4526 = vmatprep.subr.mxu0 0.0
    %v4527 = vand.u32 %v2794, 4294901760
    %4528 = vmatpush1.msra.mxu0 %v4527
    %4529 = vmatprep.subr.mxu0 0.0
    %v4530 = vand.u32 %v2795, 4294901760
    %4531 = vmatpush1.msra.mxu0 %v4530
    %4532 = vmatprep.subr.mxu0 0.0
    %v4533 = vand.u32 %v2796, 4294901760
    %4534 = vmatpush1.msra.mxu0 %v4533
    %4535 = vmatprep.subr.mxu0 0.0
    %v4536 = vand.u32 %v2797, 4294901760
    %4537 = vmatpush1.msra.mxu0 %v4536
    %4538 = vmatprep.subr.mxu0 0.0
    %v4539 = vand.u32 %v2798, 4294901760
    %4540 = vmatpush1.msra.mxu0 %v4539
    %4541 = vmatprep.subr.mxu0 0.0
    %v4542 = vand.u32 %v2799, 4294901760
    %4543 = vmatpush1.msra.mxu0 %v4542
    %4544 = vmatprep.subr.mxu0 0.0
    %v4545 = vand.u32 %v2800, 4294901760
    %4546 = vmatpush1.msra.mxu0 %v4545
    %4547 = vmatprep.subr.mxu0 0.0
    %v4548 = vand.u32 %v2801, 4294901760
    %4549 = vmatpush1.msra.mxu0 %v4548
    %v4550 = vand.u32 %v2735, 4294901760
    %4551 = vmatprep.mubr.f32.mxu0 %v4550
    %v4552 = vand.u32 %v2734, 4294901760
    %4553 = vmatmul.mubr.f32.gmra.mrb[0].mxu0 %v4552
    %v4554 = vpop.f32.mrb[0].mxu0
    %v4555 = vadd.f32 %v4451, %v4554
    %v4556 = vpop.f32.mrb[0].mxu0
    %4557 = vdwg.mxu0
    %4558 = vmatprep.subr.mxu0 0.0
    %v4559 = vand.u32 %v2802, 4294901760
    %4560 = vmatpush1.msra.mxu0 %v4559
    %4561 = vmatprep.subr.mxu0 0.0
    %v4562 = vand.u32 %v2803, 4294901760
    %4563 = vmatpush1.msra.mxu0 %v4562
    %4564 = vmatprep.subr.mxu0 0.0
    %v4565 = vand.u32 %v2804, 4294901760
    %4566 = vmatpush1.msra.mxu0 %v4565
    %4567 = vmatprep.subr.mxu0 0.0
    %v4568 = vand.u32 %v2805, 4294901760
    %4569 = vmatpush1.msra.mxu0 %v4568
    %4570 = vmatprep.subr.mxu0 0.0
    %v4571 = vand.u32 %v2806, 4294901760
    %4572 = vmatpush1.msra.mxu0 %v4571
    %4573 = vmatprep.subr.mxu0 0.0
    %v4574 = vand.u32 %v2807, 4294901760
    %4575 = vmatpush1.msra.mxu0 %v4574
    %4576 = vmatprep.subr.mxu0 0.0
    %v4577 = vand.u32 %v2808, 4294901760
    %4578 = vmatpush1.msra.mxu0 %v4577
    %4579 = vmatprep.subr.mxu0 0.0
    %v4580 = vand.u32 %v2809, 4294901760
    %4581 = vmatpush1.msra.mxu0 %v4580
    %4582 = vmatprep.subr.mxu0 0.0
    %v4583 = vand.u32 %v2810, 4294901760
    %4584 = vmatpush1.msra.mxu0 %v4583
    %4585 = vmatprep.subr.mxu0 0.0
    %v4586 = vand.u32 %v2811, 4294901760
    %4587 = vmatpush1.msra.mxu0 %v4586
    %4588 = vmatprep.subr.mxu0 0.0
    %v4589 = vand.u32 %v2812, 4294901760
    %4590 = vmatpush1.msra.mxu0 %v4589
    %4591 = vmatprep.subr.mxu0 0.0
    %v4592 = vand.u32 %v2813, 4294901760
    %4593 = vmatpush1.msra.mxu0 %v4592
    %4594 = vmatprep.subr.mxu0 0.0
    %v4595 = vand.u32 %v2814, 4294901760
    %4596 = vmatpush1.msra.mxu0 %v4595
    %4597 = vmatprep.subr.mxu0 0.0
    %v4598 = vand.u32 %v2815, 4294901760
    %4599 = vmatpush1.msra.mxu0 %v4598
    %4600 = vmatprep.subr.mxu0 0.0
    %v4601 = vand.u32 %v2816, 4294901760
    %4602 = vmatpush1.msra.mxu0 %v4601
    %4603 = vmatprep.subr.mxu0 0.0
    %v4604 = vand.u32 %v2817, 4294901760
    %4605 = vmatpush1.msra.mxu0 %v4604
    %4606 = vmatprep.subr.mxu0 0.0
    %v4607 = vand.u32 %v2818, 4294901760
    %4608 = vmatpush1.msra.mxu0 %v4607
    %4609 = vmatprep.subr.mxu0 0.0
    %v4610 = vand.u32 %v2819, 4294901760
    %4611 = vmatpush1.msra.mxu0 %v4610
    %4612 = vmatprep.subr.mxu0 0.0
    %v4613 = vand.u32 %v2820, 4294901760
    %4614 = vmatpush1.msra.mxu0 %v4613
    %4615 = vmatprep.subr.mxu0 0.0
    %v4616 = vand.u32 %v2821, 4294901760
    %4617 = vmatpush1.msra.mxu0 %v4616
    %4618 = vmatprep.subr.mxu0 0.0
    %v4619 = vand.u32 %v2822, 4294901760
    %4620 = vmatpush1.msra.mxu0 %v4619
    %4621 = vmatprep.subr.mxu0 0.0
    %v4622 = vand.u32 %v2823, 4294901760
    %4623 = vmatpush1.msra.mxu0 %v4622
    %4624 = vmatprep.subr.mxu0 0.0
    %v4625 = vand.u32 %v2824, 4294901760
    %4626 = vmatpush1.msra.mxu0 %v4625
    %4627 = vmatprep.subr.mxu0 0.0
    %v4628 = vand.u32 %v2825, 4294901760
    %4629 = vmatpush1.msra.mxu0 %v4628
    %4630 = vmatprep.subr.mxu0 0.0
    %v4631 = vand.u32 %v2826, 4294901760
    %4632 = vmatpush1.msra.mxu0 %v4631
    %4633 = vmatprep.subr.mxu0 0.0
    %v4634 = vand.u32 %v2827, 4294901760
    %4635 = vmatpush1.msra.mxu0 %v4634
    %4636 = vmatprep.subr.mxu0 0.0
    %v4637 = vand.u32 %v2828, 4294901760
    %4638 = vmatpush1.msra.mxu0 %v4637
    %4639 = vmatprep.subr.mxu0 0.0
    %v4640 = vand.u32 %v2829, 4294901760
    %4641 = vmatpush1.msra.mxu0 %v4640
    %4642 = vmatprep.subr.mxu0 0.0
    %v4643 = vand.u32 %v2830, 4294901760
    %4644 = vmatpush1.msra.mxu0 %v4643
    %4645 = vmatprep.subr.mxu0 0.0
    %v4646 = vand.u32 %v2831, 4294901760
    %4647 = vmatpush1.msra.mxu0 %v4646
    %4648 = vmatprep.subr.mxu0 0.0
    %v4649 = vand.u32 %v2832, 4294901760
    %4650 = vmatpush1.msra.mxu0 %v4649
    %4651 = vmatprep.subr.mxu0 0.0
    %v4652 = vand.u32 %v2833, 4294901760
    %4653 = vmatpush1.msra.mxu0 %v4652
    %v4654 = vand.u32 %v2737, 4294901760
    %v4655 = vsub.f32 %v2737, %v4654
    %v4656 = vand.u32 %v4655, 4294901760
    %v4657 = vsub.f32 %v4655, %v4656
    %v4658 = vand.u32 %v4657, 4294901760
    %4659 = vmatprep.mubr.f32.mxu0 %v4658
    %v4660 = vand.u32 %v2736, 4294901760
    %v4661 = vsub.f32 %v2736, %v4660
    %v4662 = vand.u32 %v4661, 4294901760
    %v4663 = vsub.f32 %v4661, %v4662
    %v4664 = vand.u32 %v4663, 4294901760
    %4665 = vmatmul.mubr.f32.gmra.mrb[0].mxu0 %v4664
    %v4666 = vpop.f32.mrb[0].mxu0
    %v4667 = vadd.f32 %v4555, %v4666
    %v4668 = vpop.f32.mrb[0].mxu0
    %4669 = vdwg.mxu0
    %4670 = vmatprep.subr.mxu0 0.0
    %v4671 = vand.u32 %v2802, 4294901760
    %v4672 = vsub.f32 %v2802, %v4671
    %v4673 = vand.u32 %v4672, 4294901760
    %v4674 = vsub.f32 %v4672, %v4673
    %v4675 = vand.u32 %v4674, 4294901760
    %4676 = vmatpush1.msra.mxu0 %v4675
    %4677 = vmatprep.subr.mxu0 0.0
    %v4678 = vand.u32 %v2803, 4294901760
    %v4679 = vsub.f32 %v2803, %v4678
    %v4680 = vand.u32 %v4679, 4294901760
    %v4681 = vsub.f32 %v4679, %v4680
    %v4682 = vand.u32 %v4681, 4294901760
    %4683 = vmatpush1.msra.mxu0 %v4682
    %4684 = vmatprep.subr.mxu0 0.0
    %v4685 = vand.u32 %v2804, 4294901760
    %v4686 = vsub.f32 %v2804, %v4685
    %v4687 = vand.u32 %v4686, 4294901760
    %v4688 = vsub.f32 %v4686, %v4687
    %v4689 = vand.u32 %v4688, 4294901760
    %4690 = vmatpush1.msra.mxu0 %v4689
    %4691 = vmatprep.subr.mxu0 0.0
    %v4692 = vand.u32 %v2805, 4294901760
    %v4693 = vsub.f32 %v2805, %v4692
    %v4694 = vand.u32 %v4693, 4294901760
    %v4695 = vsub.f32 %v4693, %v4694
    %v4696 = vand.u32 %v4695, 4294901760
    %4697 = vmatpush1.msra.mxu0 %v4696
    %4698 = vmatprep.subr.mxu0 0.0
    %v4699 = vand.u32 %v2806, 4294901760
    %v4700 = vsub.f32 %v2806, %v4699
    %v4701 = vand.u32 %v4700, 4294901760
    %v4702 = vsub.f32 %v4700, %v4701
    %v4703 = vand.u32 %v4702, 4294901760
    %4704 = vmatpush1.msra.mxu0 %v4703
    %4705 = vmatprep.subr.mxu0 0.0
    %v4706 = vand.u32 %v2807, 4294901760
    %v4707 = vsub.f32 %v2807, %v4706
    %v4708 = vand.u32 %v4707, 4294901760
    %v4709 = vsub.f32 %v4707, %v4708
    %v4710 = vand.u32 %v4709, 4294901760
    %4711 = vmatpush1.msra.mxu0 %v4710
    %4712 = vmatprep.subr.mxu0 0.0
    %v4713 = vand.u32 %v2808, 4294901760
    %v4714 = vsub.f32 %v2808, %v4713
    %v4715 = vand.u32 %v4714, 4294901760
    %v4716 = vsub.f32 %v4714, %v4715
    %v4717 = vand.u32 %v4716, 4294901760
    %4718 = vmatpush1.msra.mxu0 %v4717
    %4719 = vmatprep.subr.mxu0 0.0
    %v4720 = vand.u32 %v2809, 4294901760
    %v4721 = vsub.f32 %v2809, %v4720
    %v4722 = vand.u32 %v4721, 4294901760
    %v4723 = vsub.f32 %v4721, %v4722
    %v4724 = vand.u32 %v4723, 4294901760
    %4725 = vmatpush1.msra.mxu0 %v4724
    %4726 = vmatprep.subr.mxu0 0.0
    %v4727 = vand.u32 %v2810, 4294901760
    %v4728 = vsub.f32 %v2810, %v4727
    %v4729 = vand.u32 %v4728, 4294901760
    %v4730 = vsub.f32 %v4728, %v4729
    %v4731 = vand.u32 %v4730, 4294901760
    %4732 = vmatpush1.msra.mxu0 %v4731
    %4733 = vmatprep.subr.mxu0 0.0
    %v4734 = vand.u32 %v2811, 4294901760
    %v4735 = vsub.f32 %v2811, %v4734
    %v4736 = vand.u32 %v4735, 4294901760
    %v4737 = vsub.f32 %v4735, %v4736
    %v4738 = vand.u32 %v4737, 4294901760
    %4739 = vmatpush1.msra.mxu0 %v4738
    %4740 = vmatprep.subr.mxu0 0.0
    %v4741 = vand.u32 %v2812, 4294901760
    %v4742 = vsub.f32 %v2812, %v4741
    %v4743 = vand.u32 %v4742, 4294901760
    %v4744 = vsub.f32 %v4742, %v4743
    %v4745 = vand.u32 %v4744, 4294901760
    %4746 = vmatpush1.msra.mxu0 %v4745
    %4747 = vmatprep.subr.mxu0 0.0
    %v4748 = vand.u32 %v2813, 4294901760
    %v4749 = vsub.f32 %v2813, %v4748
    %v4750 = vand.u32 %v4749, 4294901760
    %v4751 = vsub.f32 %v4749, %v4750
    %v4752 = vand.u32 %v4751, 4294901760
    %4753 = vmatpush1.msra.mxu0 %v4752
    %4754 = vmatprep.subr.mxu0 0.0
    %v4755 = vand.u32 %v2814, 4294901760
    %v4756 = vsub.f32 %v2814, %v4755
    %v4757 = vand.u32 %v4756, 4294901760
    %v4758 = vsub.f32 %v4756, %v4757
    %v4759 = vand.u32 %v4758, 4294901760
    %4760 = vmatpush1.msra.mxu0 %v4759
    %4761 = vmatprep.subr.mxu0 0.0
    %v4762 = vand.u32 %v2815, 4294901760
    %v4763 = vsub.f32 %v2815, %v4762
    %v4764 = vand.u32 %v4763, 4294901760
    %v4765 = vsub.f32 %v4763, %v4764
    %v4766 = vand.u32 %v4765, 4294901760
    %4767 = vmatpush1.msra.mxu0 %v4766
    %4768 = vmatprep.subr.mxu0 0.0
    %v4769 = vand.u32 %v2816, 4294901760
    %v4770 = vsub.f32 %v2816, %v4769
    %v4771 = vand.u32 %v4770, 4294901760
    %v4772 = vsub.f32 %v4770, %v4771
    %v4773 = vand.u32 %v4772, 4294901760
    %4774 = vmatpush1.msra.mxu0 %v4773
    %4775 = vmatprep.subr.mxu0 0.0
    %v4776 = vand.u32 %v2817, 4294901760
    %v4777 = vsub.f32 %v2817, %v4776
    %v4778 = vand.u32 %v4777, 4294901760
    %v4779 = vsub.f32 %v4777, %v4778
    %v4780 = vand.u32 %v4779, 4294901760
    %4781 = vmatpush1.msra.mxu0 %v4780
    %4782 = vmatprep.subr.mxu0 0.0
    %v4783 = vand.u32 %v2818, 4294901760
    %v4784 = vsub.f32 %v2818, %v4783
    %v4785 = vand.u32 %v4784, 4294901760
    %v4786 = vsub.f32 %v4784, %v4785
    %v4787 = vand.u32 %v4786, 4294901760
    %4788 = vmatpush1.msra.mxu0 %v4787
    %4789 = vmatprep.subr.mxu0 0.0
    %v4790 = vand.u32 %v2819, 4294901760
    %v4791 = vsub.f32 %v2819, %v4790
    %v4792 = vand.u32 %v4791, 4294901760
    %v4793 = vsub.f32 %v4791, %v4792
    %v4794 = vand.u32 %v4793, 4294901760
    %4795 = vmatpush1.msra.mxu0 %v4794
    %4796 = vmatprep.subr.mxu0 0.0
    %v4797 = vand.u32 %v2820, 4294901760
    %v4798 = vsub.f32 %v2820, %v4797
    %v4799 = vand.u32 %v4798, 4294901760
    %v4800 = vsub.f32 %v4798, %v4799
    %v4801 = vand.u32 %v4800, 4294901760
    %4802 = vmatpush1.msra.mxu0 %v4801
    %4803 = vmatprep.subr.mxu0 0.0
    %v4804 = vand.u32 %v2821, 4294901760
    %v4805 = vsub.f32 %v2821, %v4804
    %v4806 = vand.u32 %v4805, 4294901760
    %v4807 = vsub.f32 %v4805, %v4806
    %v4808 = vand.u32 %v4807, 4294901760
    %4809 = vmatpush1.msra.mxu0 %v4808
    %4810 = vmatprep.subr.mxu0 0.0
    %v4811 = vand.u32 %v2822, 4294901760
    %v4812 = vsub.f32 %v2822, %v4811
    %v4813 = vand.u32 %v4812, 4294901760
    %v4814 = vsub.f32 %v4812, %v4813
    %v4815 = vand.u32 %v4814, 4294901760
    %4816 = vmatpush1.msra.mxu0 %v4815
    %4817 = vmatprep.subr.mxu0 0.0
    %v4818 = vand.u32 %v2823, 4294901760
    %v4819 = vsub.f32 %v2823, %v4818
    %v4820 = vand.u32 %v4819, 4294901760
    %v4821 = vsub.f32 %v4819, %v4820
    %v4822 = vand.u32 %v4821, 4294901760
    %4823 = vmatpush1.msra.mxu0 %v4822
    %4824 = vmatprep.subr.mxu0 0.0
    %v4825 = vand.u32 %v2824, 4294901760
    %v4826 = vsub.f32 %v2824, %v4825
    %v4827 = vand.u32 %v4826, 4294901760
    %v4828 = vsub.f32 %v4826, %v4827
    %v4829 = vand.u32 %v4828, 4294901760
    %4830 = vmatpush1.msra.mxu0 %v4829
    %4831 = vmatprep.subr.mxu0 0.0
    %v4832 = vand.u32 %v2825, 4294901760
    %v4833 = vsub.f32 %v2825, %v4832
    %v4834 = vand.u32 %v4833, 4294901760
    %v4835 = vsub.f32 %v4833, %v4834
    %v4836 = vand.u32 %v4835, 4294901760
    %4837 = vmatpush1.msra.mxu0 %v4836
    %4838 = vmatprep.subr.mxu0 0.0
    %v4839 = vand.u32 %v2826, 4294901760
    %v4840 = vsub.f32 %v2826, %v4839
    %v4841 = vand.u32 %v4840, 4294901760
    %v4842 = vsub.f32 %v4840, %v4841
    %v4843 = vand.u32 %v4842, 4294901760
    %4844 = vmatpush1.msra.mxu0 %v4843
    %4845 = vmatprep.subr.mxu0 0.0
    %v4846 = vand.u32 %v2827, 4294901760
    %v4847 = vsub.f32 %v2827, %v4846
    %v4848 = vand.u32 %v4847, 4294901760
    %v4849 = vsub.f32 %v4847, %v4848
    %v4850 = vand.u32 %v4849, 4294901760
    %4851 = vmatpush1.msra.mxu0 %v4850
    %4852 = vmatprep.subr.mxu0 0.0
    %v4853 = vand.u32 %v2828, 4294901760
    %v4854 = vsub.f32 %v2828, %v4853
    %v4855 = vand.u32 %v4854, 4294901760
    %v4856 = vsub.f32 %v4854, %v4855
    %v4857 = vand.u32 %v4856, 4294901760
    %4858 = vmatpush1.msra.mxu0 %v4857
    %4859 = vmatprep.subr.mxu0 0.0
    %v4860 = vand.u32 %v2829, 4294901760
    %v4861 = vsub.f32 %v2829, %v4860
    %v4862 = vand.u32 %v4861, 4294901760
    %v4863 = vsub.f32 %v4861, %v4862
    %v4864 = vand.u32 %v4863, 4294901760
    %4865 = vmatpush1.msra.mxu0 %v4864
    %4866 = vmatprep.subr.mxu0 0.0
    %v4867 = vand.u32 %v2830, 4294901760
    %v4868 = vsub.f32 %v2830, %v4867
    %v4869 = vand.u32 %v4868, 4294901760
    %v4870 = vsub.f32 %v4868, %v4869
    %v4871 = vand.u32 %v4870, 4294901760
    %4872 = vmatpush1.msra.mxu0 %v4871
    %4873 = vmatprep.subr.mxu0 0.0
    %v4874 = vand.u32 %v2831, 4294901760
    %v4875 = vsub.f32 %v2831, %v4874
    %v4876 = vand.u32 %v4875, 4294901760
    %v4877 = vsub.f32 %v4875, %v4876
    %v4878 = vand.u32 %v4877, 4294901760
    %4879 = vmatpush1.msra.mxu0 %v4878
    %4880 = vmatprep.subr.mxu0 0.0
    %v4881 = vand.u32 %v2832, 4294901760
    %v4882 = vsub.f32 %v2832, %v4881
    %v4883 = vand.u32 %v4882, 4294901760
    %v4884 = vsub.f32 %v4882, %v4883
    %v4885 = vand.u32 %v4884, 4294901760
    %4886 = vmatpush1.msra.mxu0 %v4885
    %4887 = vmatprep.subr.mxu0 0.0
    %v4888 = vand.u32 %v2833, 4294901760
    %v4889 = vsub.f32 %v2833, %v4888
    %v4890 = vand.u32 %v4889, 4294901760
    %v4891 = vsub.f32 %v4889, %v4890
    %v4892 = vand.u32 %v4891, 4294901760
    %4893 = vmatpush1.msra.mxu0 %v4892
    %v4894 = vand.u32 %v2737, 4294901760
    %4895 = vmatprep.mubr.f32.mxu0 %v4894
    %v4896 = vand.u32 %v2736, 4294901760
    %4897 = vmatmul.mubr.f32.gmra.mrb[0].mxu0 %v4896
    %v4898 = vpop.f32.mrb[0].mxu0
    %v4899 = vadd.f32 %v4667, %v4898
    %v4900 = vpop.f32.mrb[0].mxu0
    %4901 = vdwg.mxu0
    %4902 = vmatprep.subr.mxu0 0.0
    %v4903 = vand.u32 %v2802, 4294901760
    %v4904 = vsub.f32 %v2802, %v4903
    %4905 = vmatpush1.msra.mxu0 %v4904
    %4906 = vmatprep.subr.mxu0 0.0
    %v4907 = vand.u32 %v2803, 4294901760
    %v4908 = vsub.f32 %v2803, %v4907
    %4909 = vmatpush1.msra.mxu0 %v4908
    %4910 = vmatprep.subr.mxu0 0.0
    %v4911 = vand.u32 %v2804, 4294901760
    %v4912 = vsub.f32 %v2804, %v4911
    %4913 = vmatpush1.msra.mxu0 %v4912
    %4914 = vmatprep.subr.mxu0 0.0
    %v4915 = vand.u32 %v2805, 4294901760
    %v4916 = vsub.f32 %v2805, %v4915
    %4917 = vmatpush1.msra.mxu0 %v4916
    %4918 = vmatprep.subr.mxu0 0.0
    %v4919 = vand.u32 %v2806, 4294901760
    %v4920 = vsub.f32 %v2806, %v4919
    %4921 = vmatpush1.msra.mxu0 %v4920
    %4922 = vmatprep.subr.mxu0 0.0
    %v4923 = vand.u32 %v2807, 4294901760
    %v4924 = vsub.f32 %v2807, %v4923
    %4925 = vmatpush1.msra.mxu0 %v4924
    %4926 = vmatprep.subr.mxu0 0.0
    %v4927 = vand.u32 %v2808, 4294901760
    %v4928 = vsub.f32 %v2808, %v4927
    %4929 = vmatpush1.msra.mxu0 %v4928
    %4930 = vmatprep.subr.mxu0 0.0
    %v4931 = vand.u32 %v2809, 4294901760
    %v4932 = vsub.f32 %v2809, %v4931
    %4933 = vmatpush1.msra.mxu0 %v4932
    %4934 = vmatprep.subr.mxu0 0.0
    %v4935 = vand.u32 %v2810, 4294901760
    %v4936 = vsub.f32 %v2810, %v4935
    %4937 = vmatpush1.msra.mxu0 %v4936
    %4938 = vmatprep.subr.mxu0 0.0
    %v4939 = vand.u32 %v2811, 4294901760
    %v4940 = vsub.f32 %v2811, %v4939
    %4941 = vmatpush1.msra.mxu0 %v4940
    %4942 = vmatprep.subr.mxu0 0.0
    %v4943 = vand.u32 %v2812, 4294901760
    %v4944 = vsub.f32 %v2812, %v4943
    %4945 = vmatpush1.msra.mxu0 %v4944
    %4946 = vmatprep.subr.mxu0 0.0
    %v4947 = vand.u32 %v2813, 4294901760
    %v4948 = vsub.f32 %v2813, %v4947
    %4949 = vmatpush1.msra.mxu0 %v4948
    %4950 = vmatprep.subr.mxu0 0.0
    %v4951 = vand.u32 %v2814, 4294901760
    %v4952 = vsub.f32 %v2814, %v4951
    %4953 = vmatpush1.msra.mxu0 %v4952
    %4954 = vmatprep.subr.mxu0 0.0
    %v4955 = vand.u32 %v2815, 4294901760
    %v4956 = vsub.f32 %v2815, %v4955
    %4957 = vmatpush1.msra.mxu0 %v4956
    %4958 = vmatprep.subr.mxu0 0.0
    %v4959 = vand.u32 %v2816, 4294901760
    %v4960 = vsub.f32 %v2816, %v4959
    %4961 = vmatpush1.msra.mxu0 %v4960
    %4962 = vmatprep.subr.mxu0 0.0
    %v4963 = vand.u32 %v2817, 4294901760
    %v4964 = vsub.f32 %v2817, %v4963
    %4965 = vmatpush1.msra.mxu0 %v4964
    %4966 = vmatprep.subr.mxu0 0.0
    %v4967 = vand.u32 %v2818, 4294901760
    %v4968 = vsub.f32 %v2818, %v4967
    %4969 = vmatpush1.msra.mxu0 %v4968
    %4970 = vmatprep.subr.mxu0 0.0
    %v4971 = vand.u32 %v2819, 4294901760
    %v4972 = vsub.f32 %v2819, %v4971
    %4973 = vmatpush1.msra.mxu0 %v4972
    %4974 = vmatprep.subr.mxu0 0.0
    %v4975 = vand.u32 %v2820, 4294901760
    %v4976 = vsub.f32 %v2820, %v4975
    %4977 = vmatpush1.msra.mxu0 %v4976
    %4978 = vmatprep.subr.mxu0 0.0
    %v4979 = vand.u32 %v2821, 4294901760
    %v4980 = vsub.f32 %v2821, %v4979
    %4981 = vmatpush1.msra.mxu0 %v4980
    %4982 = vmatprep.subr.mxu0 0.0
    %v4983 = vand.u32 %v2822, 4294901760
    %v4984 = vsub.f32 %v2822, %v4983
    %4985 = vmatpush1.msra.mxu0 %v4984
    %4986 = vmatprep.subr.mxu0 0.0
    %v4987 = vand.u32 %v2823, 4294901760
    %v4988 = vsub.f32 %v2823, %v4987
    %4989 = vmatpush1.msra.mxu0 %v4988
    %4990 = vmatprep.subr.mxu0 0.0
    %v4991 = vand.u32 %v2824, 4294901760
    %v4992 = vsub.f32 %v2824, %v4991
    %4993 = vmatpush1.msra.mxu0 %v4992
    %4994 = vmatprep.subr.mxu0 0.0
    %v4995 = vand.u32 %v2825, 4294901760
    %v4996 = vsub.f32 %v2825, %v4995
    %4997 = vmatpush1.msra.mxu0 %v4996
    %4998 = vmatprep.subr.mxu0 0.0
    %v4999 = vand.u32 %v2826, 4294901760
    %v5000 = vsub.f32 %v2826, %v4999
    %5001 = vmatpush1.msra.mxu0 %v5000
    %5002 = vmatprep.subr.mxu0 0.0
    %v5003 = vand.u32 %v2827, 4294901760
    %v5004 = vsub.f32 %v2827, %v5003
    %5005 = vmatpush1.msra.mxu0 %v5004
    %5006 = vmatprep.subr.mxu0 0.0
    %v5007 = vand.u32 %v2828, 4294901760
    %v5008 = vsub.f32 %v2828, %v5007
    %5009 = vmatpush1.msra.mxu0 %v5008
    %5010 = vmatprep.subr.mxu0 0.0
    %v5011 = vand.u32 %v2829, 4294901760
    %v5012 = vsub.f32 %v2829, %v5011
    %5013 = vmatpush1.msra.mxu0 %v5012
    %5014 = vmatprep.subr.mxu0 0.0
    %v5015 = vand.u32 %v2830, 4294901760
    %v5016 = vsub.f32 %v2830, %v5015
    %5017 = vmatpush1.msra.mxu0 %v5016
    %5018 = vmatprep.subr.mxu0 0.0
    %v5019 = vand.u32 %v2831, 4294901760
    %v5020 = vsub.f32 %v2831, %v5019
    %5021 = vmatpush1.msra.mxu0 %v5020
    %5022 = vmatprep.subr.mxu0 0.0
    %v5023 = vand.u32 %v2832, 4294901760
    %v5024 = vsub.f32 %v2832, %v5023
    %5025 = vmatpush1.msra.mxu0 %v5024
    %5026 = vmatprep.subr.mxu0 0.0
    %v5027 = vand.u32 %v2833, 4294901760
    %v5028 = vsub.f32 %v2833, %v5027
    %5029 = vmatpush1.msra.mxu0 %v5028
    %v5030 = vand.u32 %v2737, 4294901760
    %v5031 = vsub.f32 %v2737, %v5030
    %5032 = vmatprep.mubr.f32.mxu0 %v5031
    %v5033 = vand.u32 %v2736, 4294901760
    %v5034 = vsub.f32 %v2736, %v5033
    %5035 = vmatmul.mubr.f32.gmra.mrb[0].mxu0 %v5034
    %v5036 = vpop.f32.mrb[0].mxu0
    %v5037 = vadd.f32 %v4899, %v5036
    %v5038 = vpop.f32.mrb[0].mxu0
    %5039 = vdwg.mxu0
    %5040 = vmatprep.subr.mxu0 0.0
    %v5041 = vand.u32 %v2802, 4294901760
    %5042 = vmatpush1.msra.mxu0 %v5041
    %5043 = vmatprep.subr.mxu0 0.0
    %v5044 = vand.u32 %v2803, 4294901760
    %5045 = vmatpush1.msra.mxu0 %v5044
    %5046 = vmatprep.subr.mxu0 0.0
    %v5047 = vand.u32 %v2804, 4294901760
    %5048 = vmatpush1.msra.mxu0 %v5047
    %5049 = vmatprep.subr.mxu0 0.0
    %v5050 = vand.u32 %v2805, 4294901760
    %5051 = vmatpush1.msra.mxu0 %v5050
    %5052 = vmatprep.subr.mxu0 0.0
    %v5053 = vand.u32 %v2806, 4294901760
    %5054 = vmatpush1.msra.mxu0 %v5053
    %5055 = vmatprep.subr.mxu0 0.0
    %v5056 = vand.u32 %v2807, 4294901760
    %5057 = vmatpush1.msra.mxu0 %v5056
    %5058 = vmatprep.subr.mxu0 0.0
    %v5059 = vand.u32 %v2808, 4294901760
    %5060 = vmatpush1.msra.mxu0 %v5059
    %5061 = vmatprep.subr.mxu0 0.0
    %v5062 = vand.u32 %v2809, 4294901760
    %5063 = vmatpush1.msra.mxu0 %v5062
    %5064 = vmatprep.subr.mxu0 0.0
    %v5065 = vand.u32 %v2810, 4294901760
    %5066 = vmatpush1.msra.mxu0 %v5065
    %5067 = vmatprep.subr.mxu0 0.0
    %v5068 = vand.u32 %v2811, 4294901760
    %5069 = vmatpush1.msra.mxu0 %v5068
    %5070 = vmatprep.subr.mxu0 0.0
    %v5071 = vand.u32 %v2812, 4294901760
    %5072 = vmatpush1.msra.mxu0 %v5071
    %5073 = vmatprep.subr.mxu0 0.0
    %v5074 = vand.u32 %v2813, 4294901760
    %5075 = vmatpush1.msra.mxu0 %v5074
    %5076 = vmatprep.subr.mxu0 0.0
    %v5077 = vand.u32 %v2814, 4294901760
    %5078 = vmatpush1.msra.mxu0 %v5077
    %5079 = vmatprep.subr.mxu0 0.0
    %v5080 = vand.u32 %v2815, 4294901760
    %5081 = vmatpush1.msra.mxu0 %v5080
    %5082 = vmatprep.subr.mxu0 0.0
    %v5083 = vand.u32 %v2816, 4294901760
    %5084 = vmatpush1.msra.mxu0 %v5083
    %5085 = vmatprep.subr.mxu0 0.0
    %v5086 = vand.u32 %v2817, 4294901760
    %5087 = vmatpush1.msra.mxu0 %v5086
    %5088 = vmatprep.subr.mxu0 0.0
    %v5089 = vand.u32 %v2818, 4294901760
    %5090 = vmatpush1.msra.mxu0 %v5089
    %5091 = vmatprep.subr.mxu0 0.0
    %v5092 = vand.u32 %v2819, 4294901760
    %5093 = vmatpush1.msra.mxu0 %v5092
    %5094 = vmatprep.subr.mxu0 0.0
    %v5095 = vand.u32 %v2820, 4294901760
    %5096 = vmatpush1.msra.mxu0 %v5095
    %5097 = vmatprep.subr.mxu0 0.0
    %v5098 = vand.u32 %v2821, 4294901760
    %5099 = vmatpush1.msra.mxu0 %v5098
    %5100 = vmatprep.subr.mxu0 0.0
    %v5101 = vand.u32 %v2822, 4294901760
    %5102 = vmatpush1.msra.mxu0 %v5101
    %5103 = vmatprep.subr.mxu0 0.0
    %v5104 = vand.u32 %v2823, 4294901760
    %5105 = vmatpush1.msra.mxu0 %v5104
    %5106 = vmatprep.subr.mxu0 0.0
    %v5107 = vand.u32 %v2824, 4294901760
    %5108 = vmatpush1.msra.mxu0 %v5107
    %5109 = vmatprep.subr.mxu0 0.0
    %v5110 = vand.u32 %v2825, 4294901760
    %5111 = vmatpush1.msra.mxu0 %v5110
    %5112 = vmatprep.subr.mxu0 0.0
    %v5113 = vand.u32 %v2826, 4294901760
    %5114 = vmatpush1.msra.mxu0 %v5113
    %5115 = vmatprep.subr.mxu0 0.0
    %v5116 = vand.u32 %v2827, 4294901760
    %5117 = vmatpush1.msra.mxu0 %v5116
    %5118 = vmatprep.subr.mxu0 0.0
    %v5119 = vand.u32 %v2828, 4294901760
    %5120 = vmatpush1.msra.mxu0 %v5119
    %5121 = vmatprep.subr.mxu0 0.0
    %v5122 = vand.u32 %v2829, 4294901760
    %5123 = vmatpush1.msra.mxu0 %v5122
    %5124 = vmatprep.subr.mxu0 0.0
    %v5125 = vand.u32 %v2830, 4294901760
    %5126 = vmatpush1.msra.mxu0 %v5125
    %5127 = vmatprep.subr.mxu0 0.0
    %v5128 = vand.u32 %v2831, 4294901760
    %5129 = vmatpush1.msra.mxu0 %v5128
    %5130 = vmatprep.subr.mxu0 0.0
    %v5131 = vand.u32 %v2832, 4294901760
    %5132 = vmatpush1.msra.mxu0 %v5131
    %5133 = vmatprep.subr.mxu0 0.0
    %v5134 = vand.u32 %v2833, 4294901760
    %5135 = vmatpush1.msra.mxu0 %v5134
    %v5136 = vand.u32 %v2737, 4294901760
    %v5137 = vsub.f32 %v2737, %v5136
    %v5138 = vand.u32 %v5137, 4294901760
    %5139 = vmatprep.mubr.f32.mxu0 %v5138
    %v5140 = vand.u32 %v2736, 4294901760
    %v5141 = vsub.f32 %v2736, %v5140
    %v5142 = vand.u32 %v5141, 4294901760
    %5143 = vmatmul.mubr.f32.gmra.mrb[0].mxu0 %v5142
    %v5144 = vpop.f32.mrb[0].mxu0
    %v5145 = vadd.f32 %v5037, %v5144
    %v5146 = vpop.f32.mrb[0].mxu0
    %5147 = vdwg.mxu0
    %5148 = vmatprep.subr.mxu0 0.0
    %v5149 = vand.u32 %v2802, 4294901760
    %v5150 = vsub.f32 %v2802, %v5149
    %v5151 = vand.u32 %v5150, 4294901760
    %5152 = vmatpush1.msra.mxu0 %v5151
    %5153 = vmatprep.subr.mxu0 0.0
    %v5154 = vand.u32 %v2803, 4294901760
    %v5155 = vsub.f32 %v2803, %v5154
    %v5156 = vand.u32 %v5155, 4294901760
    %5157 = vmatpush1.msra.mxu0 %v5156
    %5158 = vmatprep.subr.mxu0 0.0
    %v5159 = vand.u32 %v2804, 4294901760
    %v5160 = vsub.f32 %v2804, %v5159
    %v5161 = vand.u32 %v5160, 4294901760
    %5162 = vmatpush1.msra.mxu0 %v5161
    %5163 = vmatprep.subr.mxu0 0.0
    %v5164 = vand.u32 %v2805, 4294901760
    %v5165 = vsub.f32 %v2805, %v5164
    %v5166 = vand.u32 %v5165, 4294901760
    %5167 = vmatpush1.msra.mxu0 %v5166
    %5168 = vmatprep.subr.mxu0 0.0
    %v5169 = vand.u32 %v2806, 4294901760
    %v5170 = vsub.f32 %v2806, %v5169
    %v5171 = vand.u32 %v5170, 4294901760
    %5172 = vmatpush1.msra.mxu0 %v5171
    %5173 = vmatprep.subr.mxu0 0.0
    %v5174 = vand.u32 %v2807, 4294901760
    %v5175 = vsub.f32 %v2807, %v5174
    %v5176 = vand.u32 %v5175, 4294901760
    %5177 = vmatpush1.msra.mxu0 %v5176
    %5178 = vmatprep.subr.mxu0 0.0
    %v5179 = vand.u32 %v2808, 4294901760
    %v5180 = vsub.f32 %v2808, %v5179
    %v5181 = vand.u32 %v5180, 4294901760
    %5182 = vmatpush1.msra.mxu0 %v5181
    %5183 = vmatprep.subr.mxu0 0.0
    %v5184 = vand.u32 %v2809, 4294901760
    %v5185 = vsub.f32 %v2809, %v5184
    %v5186 = vand.u32 %v5185, 4294901760
    %5187 = vmatpush1.msra.mxu0 %v5186
    %5188 = vmatprep.subr.mxu0 0.0
    %v5189 = vand.u32 %v2810, 4294901760
    %v5190 = vsub.f32 %v2810, %v5189
    %v5191 = vand.u32 %v5190, 4294901760
    %5192 = vmatpush1.msra.mxu0 %v5191
    %5193 = vmatprep.subr.mxu0 0.0
    %v5194 = vand.u32 %v2811, 4294901760
    %v5195 = vsub.f32 %v2811, %v5194
    %v5196 = vand.u32 %v5195, 4294901760
    %5197 = vmatpush1.msra.mxu0 %v5196
    %5198 = vmatprep.subr.mxu0 0.0
    %v5199 = vand.u32 %v2812, 4294901760
    %v5200 = vsub.f32 %v2812, %v5199
    %v5201 = vand.u32 %v5200, 4294901760
    %5202 = vmatpush1.msra.mxu0 %v5201
    %5203 = vmatprep.subr.mxu0 0.0
    %v5204 = vand.u32 %v2813, 4294901760
    %v5205 = vsub.f32 %v2813, %v5204
    %v5206 = vand.u32 %v5205, 4294901760
    %5207 = vmatpush1.msra.mxu0 %v5206
    %5208 = vmatprep.subr.mxu0 0.0
    %v5209 = vand.u32 %v2814, 4294901760
    %v5210 = vsub.f32 %v2814, %v5209
    %v5211 = vand.u32 %v5210, 4294901760
    %5212 = vmatpush1.msra.mxu0 %v5211
    %5213 = vmatprep.subr.mxu0 0.0
    %v5214 = vand.u32 %v2815, 4294901760
    %v5215 = vsub.f32 %v2815, %v5214
    %v5216 = vand.u32 %v5215, 4294901760
    %5217 = vmatpush1.msra.mxu0 %v5216
    %5218 = vmatprep.subr.mxu0 0.0
    %v5219 = vand.u32 %v2816, 4294901760
    %v5220 = vsub.f32 %v2816, %v5219
    %v5221 = vand.u32 %v5220, 4294901760
    %5222 = vmatpush1.msra.mxu0 %v5221
    %5223 = vmatprep.subr.mxu0 0.0
    %v5224 = vand.u32 %v2817, 4294901760
    %v5225 = vsub.f32 %v2817, %v5224
    %v5226 = vand.u32 %v5225, 4294901760
    %5227 = vmatpush1.msra.mxu0 %v5226
    %5228 = vmatprep.subr.mxu0 0.0
    %v5229 = vand.u32 %v2818, 4294901760
    %v5230 = vsub.f32 %v2818, %v5229
    %v5231 = vand.u32 %v5230, 4294901760
    %5232 = vmatpush1.msra.mxu0 %v5231
    %5233 = vmatprep.subr.mxu0 0.0
    %v5234 = vand.u32 %v2819, 4294901760
    %v5235 = vsub.f32 %v2819, %v5234
    %v5236 = vand.u32 %v5235, 4294901760
    %5237 = vmatpush1.msra.mxu0 %v5236
    %5238 = vmatprep.subr.mxu0 0.0
    %v5239 = vand.u32 %v2820, 4294901760
    %v5240 = vsub.f32 %v2820, %v5239
    %v5241 = vand.u32 %v5240, 4294901760
    %5242 = vmatpush1.msra.mxu0 %v5241
    %5243 = vmatprep.subr.mxu0 0.0
    %v5244 = vand.u32 %v2821, 4294901760
    %v5245 = vsub.f32 %v2821, %v5244
    %v5246 = vand.u32 %v5245, 4294901760
    %5247 = vmatpush1.msra.mxu0 %v5246
    %5248 = vmatprep.subr.mxu0 0.0
    %v5249 = vand.u32 %v2822, 4294901760
    %v5250 = vsub.f32 %v2822, %v5249
    %v5251 = vand.u32 %v5250, 4294901760
    %5252 = vmatpush1.msra.mxu0 %v5251
    %5253 = vmatprep.subr.mxu0 0.0
    %v5254 = vand.u32 %v2823, 4294901760
    %v5255 = vsub.f32 %v2823, %v5254
    %v5256 = vand.u32 %v5255, 4294901760
    %5257 = vmatpush1.msra.mxu0 %v5256
    %5258 = vmatprep.subr.mxu0 0.0
    %v5259 = vand.u32 %v2824, 4294901760
    %v5260 = vsub.f32 %v2824, %v5259
    %v5261 = vand.u32 %v5260, 4294901760
    %5262 = vmatpush1.msra.mxu0 %v5261
    %5263 = vmatprep.subr.mxu0 0.0
    %v5264 = vand.u32 %v2825, 4294901760
    %v5265 = vsub.f32 %v2825, %v5264
    %v5266 = vand.u32 %v5265, 4294901760
    %5267 = vmatpush1.msra.mxu0 %v5266
    %5268 = vmatprep.subr.mxu0 0.0
    %v5269 = vand.u32 %v2826, 4294901760
    %v5270 = vsub.f32 %v2826, %v5269
    %v5271 = vand.u32 %v5270, 4294901760
    %5272 = vmatpush1.msra.mxu0 %v5271
    %5273 = vmatprep.subr.mxu0 0.0
    %v5274 = vand.u32 %v2827, 4294901760
    %v5275 = vsub.f32 %v2827, %v5274
    %v5276 = vand.u32 %v5275, 4294901760
    %5277 = vmatpush1.msra.mxu0 %v5276
    %5278 = vmatprep.subr.mxu0 0.0
    %v5279 = vand.u32 %v2828, 4294901760
    %v5280 = vsub.f32 %v2828, %v5279
    %v5281 = vand.u32 %v5280, 4294901760
    %5282 = vmatpush1.msra.mxu0 %v5281
    %5283 = vmatprep.subr.mxu0 0.0
    %v5284 = vand.u32 %v2829, 4294901760
    %v5285 = vsub.f32 %v2829, %v5284
    %v5286 = vand.u32 %v5285, 4294901760
    %5287 = vmatpush1.msra.mxu0 %v5286
    %5288 = vmatprep.subr.mxu0 0.0
    %v5289 = vand.u32 %v2830, 4294901760
    %v5290 = vsub.f32 %v2830, %v5289
    %v5291 = vand.u32 %v5290, 4294901760
    %5292 = vmatpush1.msra.mxu0 %v5291
    %5293 = vmatprep.subr.mxu0 0.0
    %v5294 = vand.u32 %v2831, 4294901760
    %v5295 = vsub.f32 %v2831, %v5294
    %v5296 = vand.u32 %v5295, 4294901760
    %5297 = vmatpush1.msra.mxu0 %v5296
    %5298 = vmatprep.subr.mxu0 0.0
    %v5299 = vand.u32 %v2832, 4294901760
    %v5300 = vsub.f32 %v2832, %v5299
    %v5301 = vand.u32 %v5300, 4294901760
    %5302 = vmatpush1.msra.mxu0 %v5301
    %5303 = vmatprep.subr.mxu0 0.0
    %v5304 = vand.u32 %v2833, 4294901760
    %v5305 = vsub.f32 %v2833, %v5304
    %v5306 = vand.u32 %v5305, 4294901760
    %5307 = vmatpush1.msra.mxu0 %v5306
    %v5308 = vand.u32 %v2737, 4294901760
    %5309 = vmatprep.mubr.f32.mxu0 %v5308
    %v5310 = vand.u32 %v2736, 4294901760
    %5311 = vmatmul.mubr.f32.gmra.mrb[0].mxu0 %v5310
    %v5312 = vpop.f32.mrb[0].mxu0
    %v5313 = vadd.f32 %v5145, %v5312
    %v5314 = vpop.f32.mrb[0].mxu0
    %5315 = vdwg.mxu0
    %5316 = vmatprep.subr.mxu0 0.0
    %v5317 = vand.u32 %v2802, 4294901760
    %5318 = vmatpush1.msra.mxu0 %v5317
    %5319 = vmatprep.subr.mxu0 0.0
    %v5320 = vand.u32 %v2803, 4294901760
    %5321 = vmatpush1.msra.mxu0 %v5320
    %5322 = vmatprep.subr.mxu0 0.0
    %v5323 = vand.u32 %v2804, 4294901760
    %5324 = vmatpush1.msra.mxu0 %v5323
    %5325 = vmatprep.subr.mxu0 0.0
    %v5326 = vand.u32 %v2805, 4294901760
    %5327 = vmatpush1.msra.mxu0 %v5326
    %5328 = vmatprep.subr.mxu0 0.0
    %v5329 = vand.u32 %v2806, 4294901760
    %5330 = vmatpush1.msra.mxu0 %v5329
    %5331 = vmatprep.subr.mxu0 0.0
    %v5332 = vand.u32 %v2807, 4294901760
    %5333 = vmatpush1.msra.mxu0 %v5332
    %5334 = vmatprep.subr.mxu0 0.0
    %v5335 = vand.u32 %v2808, 4294901760
    %5336 = vmatpush1.msra.mxu0 %v5335
    %5337 = vmatprep.subr.mxu0 0.0
    %v5338 = vand.u32 %v2809, 4294901760
    %5339 = vmatpush1.msra.mxu0 %v5338
    %5340 = vmatprep.subr.mxu0 0.0
    %v5341 = vand.u32 %v2810, 4294901760
    %5342 = vmatpush1.msra.mxu0 %v5341
    %5343 = vmatprep.subr.mxu0 0.0
    %v5344 = vand.u32 %v2811, 4294901760
    %5345 = vmatpush1.msra.mxu0 %v5344
    %5346 = vmatprep.subr.mxu0 0.0
    %v5347 = vand.u32 %v2812, 4294901760
    %5348 = vmatpush1.msra.mxu0 %v5347
    %5349 = vmatprep.subr.mxu0 0.0
    %v5350 = vand.u32 %v2813, 4294901760
    %5351 = vmatpush1.msra.mxu0 %v5350
    %5352 = vmatprep.subr.mxu0 0.0
    %v5353 = vand.u32 %v2814, 4294901760
    %5354 = vmatpush1.msra.mxu0 %v5353
    %5355 = vmatprep.subr.mxu0 0.0
    %v5356 = vand.u32 %v2815, 4294901760
    %5357 = vmatpush1.msra.mxu0 %v5356
    %5358 = vmatprep.subr.mxu0 0.0
    %v5359 = vand.u32 %v2816, 4294901760
    %5360 = vmatpush1.msra.mxu0 %v5359
    %5361 = vmatprep.subr.mxu0 0.0
    %v5362 = vand.u32 %v2817, 4294901760
    %5363 = vmatpush1.msra.mxu0 %v5362
    %5364 = vmatprep.subr.mxu0 0.0
    %v5365 = vand.u32 %v2818, 4294901760
    %5366 = vmatpush1.msra.mxu0 %v5365
    %5367 = vmatprep.subr.mxu0 0.0
    %v5368 = vand.u32 %v2819, 4294901760
    %5369 = vmatpush1.msra.mxu0 %v5368
    %5370 = vmatprep.subr.mxu0 0.0
    %v5371 = vand.u32 %v2820, 4294901760
    %5372 = vmatpush1.msra.mxu0 %v5371
    %5373 = vmatprep.subr.mxu0 0.0
    %v5374 = vand.u32 %v2821, 4294901760
    %5375 = vmatpush1.msra.mxu0 %v5374
    %5376 = vmatprep.subr.mxu0 0.0
    %v5377 = vand.u32 %v2822, 4294901760
    %5378 = vmatpush1.msra.mxu0 %v5377
    %5379 = vmatprep.subr.mxu0 0.0
    %v5380 = vand.u32 %v2823, 4294901760
    %5381 = vmatpush1.msra.mxu0 %v5380
    %5382 = vmatprep.subr.mxu0 0.0
    %v5383 = vand.u32 %v2824, 4294901760
    %5384 = vmatpush1.msra.mxu0 %v5383
    %5385 = vmatprep.subr.mxu0 0.0
    %v5386 = vand.u32 %v2825, 4294901760
    %5387 = vmatpush1.msra.mxu0 %v5386
    %5388 = vmatprep.subr.mxu0 0.0
    %v5389 = vand.u32 %v2826, 4294901760
    %5390 = vmatpush1.msra.mxu0 %v5389
    %5391 = vmatprep.subr.mxu0 0.0
    %v5392 = vand.u32 %v2827, 4294901760
    %5393 = vmatpush1.msra.mxu0 %v5392
    %5394 = vmatprep.subr.mxu0 0.0
    %v5395 = vand.u32 %v2828, 4294901760
    %5396 = vmatpush1.msra.mxu0 %v5395
    %5397 = vmatprep.subr.mxu0 0.0
    %v5398 = vand.u32 %v2829, 4294901760
    %5399 = vmatpush1.msra.mxu0 %v5398
    %5400 = vmatprep.subr.mxu0 0.0
    %v5401 = vand.u32 %v2830, 4294901760
    %5402 = vmatpush1.msra.mxu0 %v5401
    %5403 = vmatprep.subr.mxu0 0.0
    %v5404 = vand.u32 %v2831, 4294901760
    %5405 = vmatpush1.msra.mxu0 %v5404
    %5406 = vmatprep.subr.mxu0 0.0
    %v5407 = vand.u32 %v2832, 4294901760
    %5408 = vmatpush1.msra.mxu0 %v5407
    %5409 = vmatprep.subr.mxu0 0.0
    %v5410 = vand.u32 %v2833, 4294901760
    %5411 = vmatpush1.msra.mxu0 %v5410
    %v5412 = vand.u32 %v2737, 4294901760
    %5413 = vmatprep.mubr.f32.mxu0 %v5412
    %v5414 = vand.u32 %v2736, 4294901760
    %5415 = vmatmul.mubr.f32.gmra.mrb[0].mxu0 %v5414
    %v5416 = vpop.f32.mrb[0].mxu0
    %v5417 = vadd.f32 %v5313, %v5416
    %v5418 = vpop.f32.mrb[0].mxu0
    %5419 = vdwg.mxu0
    %v5420 = vmul.f32 %v5417, %v2189
    %v5421 = vadd.f32 %v5420, %v2187
    %v5422 = vmax.f32 %v5421, 0.0
    %5424 = vrot.lane.b32.xlu0 %v5422, 32
    %v5425 = vpop.permute.xlu0 %5424
    %v5427 = vsel %vm719, %v5422, %v5425
    %5429 = vrot.lane.b32.xlu0 %v5427, 64
    %v5430 = vpop.permute.xlu0 %5429
    %vm5432 = vcmask 523264
    %v5433 = vsel %vm5432, %v5427, %v5430
    %v5434 = vmul.f32 %v2258, %v5433
    %v5435 = vmul.f32 %v2260, %v5433
    %v5436 = vmul.f32 %v2329, %v5433
    %v5437 = vmul.f32 %v2331, %v5433
    %v5438 = vmul.f32 %v2400, %v5433
    %v5439 = vmul.f32 %v2402, %v5433
    %v5440 = vmul.f32 %v2471, %v5433
    %v5441 = vmul.f32 %v2473, %v5433
    %v5442 = vld [vmem:[%s10] sm:$0xff]
    %v5443 = vld [vmem:[%s10 + $0x8] sm:$0xff]
    %v5444 = vld [vmem:[%s10 + $0x10] sm:$0xff]
    %v5445 = vld [vmem:[%s10 + $0x18] sm:$0xff]
    %v5446 = vld [vmem:[%s10 + $0x20] sm:$0xff]
    %v5447 = vld [vmem:[%s10 + $0x28] sm:$0xff]
    %v5448 = vld [vmem:[%s10 + $0x30] sm:$0xff]
    %v5449 = vld [vmem:[%s10 + $0x38] sm:$0xff]
    %v5450 = vld [vmem:[%s10 + $0x40] sm:$0xff]
    %v5451 = vld [vmem:[%s10 + $0x48] sm:$0xff]
    %v5452 = vld [vmem:[%s10 + $0x50] sm:$0xff]
    %v5453 = vld [vmem:[%s10 + $0x58] sm:$0xff]
    %v5454 = vld [vmem:[%s10 + $0x60] sm:$0xff]
    %v5455 = vld [vmem:[%s10 + $0x68] sm:$0xff]
    %v5456 = vld [vmem:[%s10 + $0x70] sm:$0xff]
    %v5457 = vld [vmem:[%s10 + $0x78] sm:$0xff]
    %v5458 = vld [vmem:[%s10 + $0x80] sm:$0xff]
    %v5459 = vld [vmem:[%s10 + $0x88] sm:$0xff]
    %v5460 = vld [vmem:[%s10 + $0x90] sm:$0xff]
    %v5461 = vld [vmem:[%s10 + $0x98] sm:$0xff]
    %v5462 = vld [vmem:[%s10 + $0xa0] sm:$0xff]
    %v5463 = vld [vmem:[%s10 + $0xa8] sm:$0xff]
    %v5464 = vld [vmem:[%s10 + $0xb0] sm:$0xff]
    %v5465 = vld [vmem:[%s10 + $0xb8] sm:$0xff]
    %v5466 = vld [vmem:[%s10 + $0xc0] sm:$0xff]
    %v5467 = vld [vmem:[%s10 + $0xc8] sm:$0xff]
    %v5468 = vld [vmem:[%s10 + $0xd0] sm:$0xff]
    %v5469 = vld [vmem:[%s10 + $0xd8] sm:$0xff]
    %v5470 = vld [vmem:[%s10 + $0xe0] sm:$0xff]
    %v5471 = vld [vmem:[%s10 + $0xe8] sm:$0xff]
    %v5472 = vld [vmem:[%s10 + $0xf0] sm:$0xff]
    %v5473 = vld [vmem:[%s10 + $0xf8] sm:$0xff]
    %v5474 = vld [vmem:[%s10 + $0x100] sm:$0xff]
    %v5475 = vld [vmem:[%s10 + $0x108] sm:$0xff]
    %v5476 = vld [vmem:[%s10 + $0x110] sm:$0xff]
    %v5477 = vld [vmem:[%s10 + $0x118] sm:$0xff]
    %v5478 = vld [vmem:[%s10 + $0x120] sm:$0xff]
    %v5479 = vld [vmem:[%s10 + $0x128] sm:$0xff]
    %v5480 = vld [vmem:[%s10 + $0x130] sm:$0xff]
    %v5481 = vld [vmem:[%s10 + $0x138] sm:$0xff]
    %v5482 = vld [vmem:[%s10 + $0x140] sm:$0xff]
    %v5483 = vld [vmem:[%s10 + $0x148] sm:$0xff]
    %v5484 = vld [vmem:[%s10 + $0x150] sm:$0xff]
    %v5485 = vld [vmem:[%s10 + $0x158] sm:$0xff]
    %v5486 = vld [vmem:[%s10 + $0x160] sm:$0xff]
    %v5487 = vld [vmem:[%s10 + $0x168] sm:$0xff]
    %v5488 = vld [vmem:[%s10 + $0x170] sm:$0xff]
    %v5489 = vld [vmem:[%s10 + $0x178] sm:$0xff]
    %v5490 = vld [vmem:[%s10 + $0x180] sm:$0xff]
    %v5491 = vld [vmem:[%s10 + $0x188] sm:$0xff]
    %v5492 = vld [vmem:[%s10 + $0x190] sm:$0xff]
    %v5493 = vld [vmem:[%s10 + $0x198] sm:$0xff]
    %v5494 = vld [vmem:[%s10 + $0x1a0] sm:$0xff]
    %v5495 = vld [vmem:[%s10 + $0x1a8] sm:$0xff]
    %v5496 = vld [vmem:[%s10 + $0x1b0] sm:$0xff]
    %v5497 = vld [vmem:[%s10 + $0x1b8] sm:$0xff]
    %v5498 = vld [vmem:[%s10 + $0x1c0] sm:$0xff]
    %v5499 = vld [vmem:[%s10 + $0x1c8] sm:$0xff]
    %v5500 = vld [vmem:[%s10 + $0x1d0] sm:$0xff]
    %v5501 = vld [vmem:[%s10 + $0x1d8] sm:$0xff]
    %v5502 = vld [vmem:[%s10 + $0x1e0] sm:$0xff]
    %v5503 = vld [vmem:[%s10 + $0x1e8] sm:$0xff]
    %v5504 = vld [vmem:[%s10 + $0x1f0] sm:$0xff]
    %v5505 = vld [vmem:[%s10 + $0x1f8] sm:$0xff]
    %v5506 = vld [vmem:[%s10 + $0x200] sm:$0xff]
    %v5507 = vld [vmem:[%s10 + $0x208] sm:$0xff]
    %v5508 = vld [vmem:[%s10 + $0x210] sm:$0xff]
    %v5509 = vld [vmem:[%s10 + $0x218] sm:$0xff]
    %v5510 = vld [vmem:[%s10 + $0x220] sm:$0xff]
    %v5511 = vld [vmem:[%s10 + $0x228] sm:$0xff]
    %v5512 = vld [vmem:[%s10 + $0x230] sm:$0xff]
    %v5513 = vld [vmem:[%s10 + $0x238] sm:$0xff]
    %v5514 = vld [vmem:[%s10 + $0x240] sm:$0xff]
    %v5515 = vld [vmem:[%s10 + $0x248] sm:$0xff]
    %v5516 = vld [vmem:[%s10 + $0x250] sm:$0xff]
    %v5517 = vld [vmem:[%s10 + $0x258] sm:$0xff]
    %v5518 = vld [vmem:[%s10 + $0x260] sm:$0xff]
    %v5519 = vld [vmem:[%s10 + $0x268] sm:$0xff]
    %v5520 = vld [vmem:[%s10 + $0x270] sm:$0xff]
    %v5521 = vld [vmem:[%s10 + $0x278] sm:$0xff]
    %v5522 = vld [vmem:[%s10 + $0x280] sm:$0xff]
    %v5523 = vld [vmem:[%s10 + $0x288] sm:$0xff]
    %v5524 = vld [vmem:[%s10 + $0x290] sm:$0xff]
    %v5525 = vld [vmem:[%s10 + $0x298] sm:$0xff]
    %v5526 = vld [vmem:[%s10 + $0x2a0] sm:$0xff]
    %v5527 = vld [vmem:[%s10 + $0x2a8] sm:$0xff]
    %v5528 = vld [vmem:[%s10 + $0x2b0] sm:$0xff]
    %v5529 = vld [vmem:[%s10 + $0x2b8] sm:$0xff]
    %v5530 = vld [vmem:[%s10 + $0x2c0] sm:$0xff]
    %v5531 = vld [vmem:[%s10 + $0x2c8] sm:$0xff]
    %v5532 = vld [vmem:[%s10 + $0x2d0] sm:$0xff]
    %v5533 = vld [vmem:[%s10 + $0x2d8] sm:$0xff]
    %v5534 = vld [vmem:[%s10 + $0x2e0] sm:$0xff]
    %v5535 = vld [vmem:[%s10 + $0x2e8] sm:$0xff]
    %v5536 = vld [vmem:[%s10 + $0x2f0] sm:$0xff]
    %v5537 = vld [vmem:[%s10 + $0x2f8] sm:$0xff]
    %v5538 = vld [vmem:[%s10 + $0x300] sm:$0xff]
    %v5539 = vld [vmem:[%s10 + $0x308] sm:$0xff]
    %v5540 = vld [vmem:[%s10 + $0x310] sm:$0xff]
    %v5541 = vld [vmem:[%s10 + $0x318] sm:$0xff]
    %v5542 = vld [vmem:[%s10 + $0x320] sm:$0xff]
    %v5543 = vld [vmem:[%s10 + $0x328] sm:$0xff]
    %v5544 = vld [vmem:[%s10 + $0x330] sm:$0xff]
    %v5545 = vld [vmem:[%s10 + $0x338] sm:$0xff]
    %v5546 = vld [vmem:[%s10 + $0x340] sm:$0xff]
    %v5547 = vld [vmem:[%s10 + $0x348] sm:$0xff]
    %v5548 = vld [vmem:[%s10 + $0x350] sm:$0xff]
    %v5549 = vld [vmem:[%s10 + $0x358] sm:$0xff]
    %v5550 = vld [vmem:[%s10 + $0x360] sm:$0xff]
    %v5551 = vld [vmem:[%s10 + $0x368] sm:$0xff]
    %v5552 = vld [vmem:[%s10 + $0x370] sm:$0xff]
    %v5553 = vld [vmem:[%s10 + $0x378] sm:$0xff]
    %v5554 = vld [vmem:[%s10 + $0x380] sm:$0xff]
    %v5555 = vld [vmem:[%s10 + $0x388] sm:$0xff]
    %v5556 = vld [vmem:[%s10 + $0x390] sm:$0xff]
    %v5557 = vld [vmem:[%s10 + $0x398] sm:$0xff]
    %v5558 = vld [vmem:[%s10 + $0x3a0] sm:$0xff]
    %v5559 = vld [vmem:[%s10 + $0x3a8] sm:$0xff]
    %v5560 = vld [vmem:[%s10 + $0x3b0] sm:$0xff]
    %v5561 = vld [vmem:[%s10 + $0x3b8] sm:$0xff]
    %v5562 = vld [vmem:[%s10 + $0x3c0] sm:$0xff]
    %v5563 = vld [vmem:[%s10 + $0x3c8] sm:$0xff]
    %v5564 = vld [vmem:[%s10 + $0x3d0] sm:$0xff]
    %v5565 = vld [vmem:[%s10 + $0x3d8] sm:$0xff]
    %v5566 = vld [vmem:[%s10 + $0x3e0] sm:$0xff]
    %v5567 = vld [vmem:[%s10 + $0x3e8] sm:$0xff]
    %v5568 = vld [vmem:[%s10 + $0x3f0] sm:$0xff]
    %v5569 = vld [vmem:[%s10 + $0x3f8] sm:$0xff]
    %5570 = vmatprep.subr.mxu0 0.0
    %v5571 = vand.u32 %v5442, 4294901760
    %5572 = vmatpush1.msra.mxu0 %v5571
    %5573 = vmatprep.subr.mxu0 0.0
    %v5574 = vand.u32 %v5443, 4294901760
    %5575 = vmatpush1.msra.mxu0 %v5574
    %5576 = vmatprep.subr.mxu0 0.0
    %v5577 = vand.u32 %v5444, 4294901760
    %5578 = vmatpush1.msra.mxu0 %v5577
    %5579 = vmatprep.subr.mxu0 0.0
    %v5580 = vand.u32 %v5445, 4294901760
    %5581 = vmatpush1.msra.mxu0 %v5580
    %5582 = vmatprep.subr.mxu0 0.0
    %v5583 = vand.u32 %v5446, 4294901760
    %5584 = vmatpush1.msra.mxu0 %v5583
    %5585 = vmatprep.subr.mxu0 0.0
    %v5586 = vand.u32 %v5447, 4294901760
    %5587 = vmatpush1.msra.mxu0 %v5586
    %5588 = vmatprep.subr.mxu0 0.0
    %v5589 = vand.u32 %v5448, 4294901760
    %5590 = vmatpush1.msra.mxu0 %v5589
    %5591 = vmatprep.subr.mxu0 0.0
    %v5592 = vand.u32 %v5449, 4294901760
    %5593 = vmatpush1.msra.mxu0 %v5592
    %5594 = vmatprep.subr.mxu0 0.0
    %v5595 = vand.u32 %v5450, 4294901760
    %5596 = vmatpush1.msra.mxu0 %v5595
    %5597 = vmatprep.subr.mxu0 0.0
    %v5598 = vand.u32 %v5451, 4294901760
    %5599 = vmatpush1.msra.mxu0 %v5598
    %5600 = vmatprep.subr.mxu0 0.0
    %v5601 = vand.u32 %v5452, 4294901760
    %5602 = vmatpush1.msra.mxu0 %v5601
    %5603 = vmatprep.subr.mxu0 0.0
    %v5604 = vand.u32 %v5453, 4294901760
    %5605 = vmatpush1.msra.mxu0 %v5604
    %5606 = vmatprep.subr.mxu0 0.0
    %v5607 = vand.u32 %v5454, 4294901760
    %5608 = vmatpush1.msra.mxu0 %v5607
    %5609 = vmatprep.subr.mxu0 0.0
    %v5610 = vand.u32 %v5455, 4294901760
    %5611 = vmatpush1.msra.mxu0 %v5610
    %5612 = vmatprep.subr.mxu0 0.0
    %v5613 = vand.u32 %v5456, 4294901760
    %5614 = vmatpush1.msra.mxu0 %v5613
    %5615 = vmatprep.subr.mxu0 0.0
    %v5616 = vand.u32 %v5457, 4294901760
    %5617 = vmatpush1.msra.mxu0 %v5616
    %5618 = vmatprep.subr.mxu0 0.0
    %v5619 = vand.u32 %v5458, 4294901760
    %5620 = vmatpush1.msra.mxu0 %v5619
    %5621 = vmatprep.subr.mxu0 0.0
    %v5622 = vand.u32 %v5459, 4294901760
    %5623 = vmatpush1.msra.mxu0 %v5622
    %5624 = vmatprep.subr.mxu0 0.0
    %v5625 = vand.u32 %v5460, 4294901760
    %5626 = vmatpush1.msra.mxu0 %v5625
    %5627 = vmatprep.subr.mxu0 0.0
    %v5628 = vand.u32 %v5461, 4294901760
    %5629 = vmatpush1.msra.mxu0 %v5628
    %5630 = vmatprep.subr.mxu0 0.0
    %v5631 = vand.u32 %v5462, 4294901760
    %5632 = vmatpush1.msra.mxu0 %v5631
    %5633 = vmatprep.subr.mxu0 0.0
    %v5634 = vand.u32 %v5463, 4294901760
    %5635 = vmatpush1.msra.mxu0 %v5634
    %5636 = vmatprep.subr.mxu0 0.0
    %v5637 = vand.u32 %v5464, 4294901760
    %5638 = vmatpush1.msra.mxu0 %v5637
    %5639 = vmatprep.subr.mxu0 0.0
    %v5640 = vand.u32 %v5465, 4294901760
    %5641 = vmatpush1.msra.mxu0 %v5640
    %5642 = vmatprep.subr.mxu0 0.0
    %v5643 = vand.u32 %v5466, 4294901760
    %5644 = vmatpush1.msra.mxu0 %v5643
    %5645 = vmatprep.subr.mxu0 0.0
    %v5646 = vand.u32 %v5467, 4294901760
    %5647 = vmatpush1.msra.mxu0 %v5646
    %5648 = vmatprep.subr.mxu0 0.0
    %v5649 = vand.u32 %v5468, 4294901760
    %5650 = vmatpush1.msra.mxu0 %v5649
    %5651 = vmatprep.subr.mxu0 0.0
    %v5652 = vand.u32 %v5469, 4294901760
    %5653 = vmatpush1.msra.mxu0 %v5652
    %5654 = vmatprep.subr.mxu0 0.0
    %v5655 = vand.u32 %v5470, 4294901760
    %5656 = vmatpush1.msra.mxu0 %v5655
    %5657 = vmatprep.subr.mxu0 0.0
    %v5658 = vand.u32 %v5471, 4294901760
    %5659 = vmatpush1.msra.mxu0 %v5658
    %5660 = vmatprep.subr.mxu0 0.0
    %v5661 = vand.u32 %v5472, 4294901760
    %5662 = vmatpush1.msra.mxu0 %v5661
    %5663 = vmatprep.subr.mxu0 0.0
    %v5664 = vand.u32 %v5473, 4294901760
    %5665 = vmatpush1.msra.mxu0 %v5664
    %v5666 = vand.u32 %v5435, 4294901760
    %v5667 = vsub.f32 %v5435, %v5666
    %v5668 = vand.u32 %v5667, 4294901760
    %v5669 = vsub.f32 %v5667, %v5668
    %v5670 = vand.u32 %v5669, 4294901760
    %5671 = vmatprep.mubr.f32.mxu0 %v5670
    %v5672 = vand.u32 %v5434, 4294901760
    %v5673 = vsub.f32 %v5434, %v5672
    %v5674 = vand.u32 %v5673, 4294901760
    %v5675 = vsub.f32 %v5673, %v5674
    %v5676 = vand.u32 %v5675, 4294901760
    %5677 = vmatmul.mubr.f32.gmra.mrb[0].mxu0 %v5676
    %v5678 = vpop.f32.mrb[0].mxu0
    %v5679 = vadd.f32 0.0, %v5678
    %v5680 = vpop.f32.mrb[0].mxu0
    %5681 = vdwg.mxu0
    %5682 = vmatprep.subr.mxu0 0.0
    %v5683 = vand.u32 %v5442, 4294901760
    %v5684 = vsub.f32 %v5442, %v5683
    %v5685 = vand.u32 %v5684, 4294901760
    %v5686 = vsub.f32 %v5684, %v5685
    %v5687 = vand.u32 %v5686, 4294901760
    %5688 = vmatpush1.msra.mxu0 %v5687
    %5689 = vmatprep.subr.mxu0 0.0
    %v5690 = vand.u32 %v5443, 4294901760
    %v5691 = vsub.f32 %v5443, %v5690
    %v5692 = vand.u32 %v5691, 4294901760
    %v5693 = vsub.f32 %v5691, %v5692
    %v5694 = vand.u32 %v5693, 4294901760
    %5695 = vmatpush1.msra.mxu0 %v5694
    %5696 = vmatprep.subr.mxu0 0.0
    %v5697 = vand.u32 %v5444, 4294901760
    %v5698 = vsub.f32 %v5444, %v5697
    %v5699 = vand.u32 %v5698, 4294901760
    %v5700 = vsub.f32 %v5698, %v5699
    %v5701 = vand.u32 %v5700, 4294901760
    %5702 = vmatpush1.msra.mxu0 %v5701
    %5703 = vmatprep.subr.mxu0 0.0
    %v5704 = vand.u32 %v5445, 4294901760
    %v5705 = vsub.f32 %v5445, %v5704
    %v5706 = vand.u32 %v5705, 4294901760
    %v5707 = vsub.f32 %v5705, %v5706
    %v5708 = vand.u32 %v5707, 4294901760
    %5709 = vmatpush1.msra.mxu0 %v5708
    %5710 = vmatprep.subr.mxu0 0.0
    %v5711 = vand.u32 %v5446, 4294901760
    %v5712 = vsub.f32 %v5446, %v5711
    %v5713 = vand.u32 %v5712, 4294901760
    %v5714 = vsub.f32 %v5712, %v5713
    %v5715 = vand.u32 %v5714, 4294901760
    %5716 = vmatpush1.msra.mxu0 %v5715
    %5717 = vmatprep.subr.mxu0 0.0
    %v5718 = vand.u32 %v5447, 4294901760
    %v5719 = vsub.f32 %v5447, %v5718
    %v5720 = vand.u32 %v5719, 4294901760
    %v5721 = vsub.f32 %v5719, %v5720
    %v5722 = vand.u32 %v5721, 4294901760
    %5723 = vmatpush1.msra.mxu0 %v5722
    %5724 = vmatprep.subr.mxu0 0.0
    %v5725 = vand.u32 %v5448, 4294901760
    %v5726 = vsub.f32 %v5448, %v5725
    %v5727 = vand.u32 %v5726, 4294901760
    %v5728 = vsub.f32 %v5726, %v5727
    %v5729 = vand.u32 %v5728, 4294901760
    %5730 = vmatpush1.msra.mxu0 %v5729
    %5731 = vmatprep.subr.mxu0 0.0
    %v5732 = vand.u32 %v5449, 4294901760
    %v5733 = vsub.f32 %v5449, %v5732
    %v5734 = vand.u32 %v5733, 4294901760
    %v5735 = vsub.f32 %v5733, %v5734
    %v5736 = vand.u32 %v5735, 4294901760
    %5737 = vmatpush1.msra.mxu0 %v5736
    %5738 = vmatprep.subr.mxu0 0.0
    %v5739 = vand.u32 %v5450, 4294901760
    %v5740 = vsub.f32 %v5450, %v5739
    %v5741 = vand.u32 %v5740, 4294901760
    %v5742 = vsub.f32 %v5740, %v5741
    %v5743 = vand.u32 %v5742, 4294901760
    %5744 = vmatpush1.msra.mxu0 %v5743
    %5745 = vmatprep.subr.mxu0 0.0
    %v5746 = vand.u32 %v5451, 4294901760
    %v5747 = vsub.f32 %v5451, %v5746
    %v5748 = vand.u32 %v5747, 4294901760
    %v5749 = vsub.f32 %v5747, %v5748
    %v5750 = vand.u32 %v5749, 4294901760
    %5751 = vmatpush1.msra.mxu0 %v5750
    %5752 = vmatprep.subr.mxu0 0.0
    %v5753 = vand.u32 %v5452, 4294901760
    %v5754 = vsub.f32 %v5452, %v5753
    %v5755 = vand.u32 %v5754, 4294901760
    %v5756 = vsub.f32 %v5754, %v5755
    %v5757 = vand.u32 %v5756, 4294901760
    %5758 = vmatpush1.msra.mxu0 %v5757
    %5759 = vmatprep.subr.mxu0 0.0
    %v5760 = vand.u32 %v5453, 4294901760
    %v5761 = vsub.f32 %v5453, %v5760
    %v5762 = vand.u32 %v5761, 4294901760
    %v5763 = vsub.f32 %v5761, %v5762
    %v5764 = vand.u32 %v5763, 4294901760
    %5765 = vmatpush1.msra.mxu0 %v5764
    %5766 = vmatprep.subr.mxu0 0.0
    %v5767 = vand.u32 %v5454, 4294901760
    %v5768 = vsub.f32 %v5454, %v5767
    %v5769 = vand.u32 %v5768, 4294901760
    %v5770 = vsub.f32 %v5768, %v5769
    %v5771 = vand.u32 %v5770, 4294901760
    %5772 = vmatpush1.msra.mxu0 %v5771
    %5773 = vmatprep.subr.mxu0 0.0
    %v5774 = vand.u32 %v5455, 4294901760
    %v5775 = vsub.f32 %v5455, %v5774
    %v5776 = vand.u32 %v5775, 4294901760
    %v5777 = vsub.f32 %v5775, %v5776
    %v5778 = vand.u32 %v5777, 4294901760
    %5779 = vmatpush1.msra.mxu0 %v5778
    %5780 = vmatprep.subr.mxu0 0.0
    %v5781 = vand.u32 %v5456, 4294901760
    %v5782 = vsub.f32 %v5456, %v5781
    %v5783 = vand.u32 %v5782, 4294901760
    %v5784 = vsub.f32 %v5782, %v5783
    %v5785 = vand.u32 %v5784, 4294901760
    %5786 = vmatpush1.msra.mxu0 %v5785
    %5787 = vmatprep.subr.mxu0 0.0
    %v5788 = vand.u32 %v5457, 4294901760
    %v5789 = vsub.f32 %v5457, %v5788
    %v5790 = vand.u32 %v5789, 4294901760
    %v5791 = vsub.f32 %v5789, %v5790
    %v5792 = vand.u32 %v5791, 4294901760
    %5793 = vmatpush1.msra.mxu0 %v5792
    %5794 = vmatprep.subr.mxu0 0.0
    %v5795 = vand.u32 %v5458, 4294901760
    %v5796 = vsub.f32 %v5458, %v5795
    %v5797 = vand.u32 %v5796, 4294901760
    %v5798 = vsub.f32 %v5796, %v5797
    %v5799 = vand.u32 %v5798, 4294901760
    %5800 = vmatpush1.msra.mxu0 %v5799
    %5801 = vmatprep.subr.mxu0 0.0
    %v5802 = vand.u32 %v5459, 4294901760
    %v5803 = vsub.f32 %v5459, %v5802
    %v5804 = vand.u32 %v5803, 4294901760
    %v5805 = vsub.f32 %v5803, %v5804
    %v5806 = vand.u32 %v5805, 4294901760
    %5807 = vmatpush1.msra.mxu0 %v5806
    %5808 = vmatprep.subr.mxu0 0.0
    %v5809 = vand.u32 %v5460, 4294901760
    %v5810 = vsub.f32 %v5460, %v5809
    %v5811 = vand.u32 %v5810, 4294901760
    %v5812 = vsub.f32 %v5810, %v5811
    %v5813 = vand.u32 %v5812, 4294901760
    %5814 = vmatpush1.msra.mxu0 %v5813
    %5815 = vmatprep.subr.mxu0 0.0
    %v5816 = vand.u32 %v5461, 4294901760
    %v5817 = vsub.f32 %v5461, %v5816
    %v5818 = vand.u32 %v5817, 4294901760
    %v5819 = vsub.f32 %v5817, %v5818
    %v5820 = vand.u32 %v5819, 4294901760
    %5821 = vmatpush1.msra.mxu0 %v5820
    %5822 = vmatprep.subr.mxu0 0.0
    %v5823 = vand.u32 %v5462, 4294901760
    %v5824 = vsub.f32 %v5462, %v5823
    %v5825 = vand.u32 %v5824, 4294901760
    %v5826 = vsub.f32 %v5824, %v5825
    %v5827 = vand.u32 %v5826, 4294901760
    %5828 = vmatpush1.msra.mxu0 %v5827
    %5829 = vmatprep.subr.mxu0 0.0
    %v5830 = vand.u32 %v5463, 4294901760
    %v5831 = vsub.f32 %v5463, %v5830
    %v5832 = vand.u32 %v5831, 4294901760
    %v5833 = vsub.f32 %v5831, %v5832
    %v5834 = vand.u32 %v5833, 4294901760
    %5835 = vmatpush1.msra.mxu0 %v5834
    %5836 = vmatprep.subr.mxu0 0.0
    %v5837 = vand.u32 %v5464, 4294901760
    %v5838 = vsub.f32 %v5464, %v5837
    %v5839 = vand.u32 %v5838, 4294901760
    %v5840 = vsub.f32 %v5838, %v5839
    %v5841 = vand.u32 %v5840, 4294901760
    %5842 = vmatpush1.msra.mxu0 %v5841
    %5843 = vmatprep.subr.mxu0 0.0
    %v5844 = vand.u32 %v5465, 4294901760
    %v5845 = vsub.f32 %v5465, %v5844
    %v5846 = vand.u32 %v5845, 4294901760
    %v5847 = vsub.f32 %v5845, %v5846
    %v5848 = vand.u32 %v5847, 4294901760
    %5849 = vmatpush1.msra.mxu0 %v5848
    %5850 = vmatprep.subr.mxu0 0.0
    %v5851 = vand.u32 %v5466, 4294901760
    %v5852 = vsub.f32 %v5466, %v5851
    %v5853 = vand.u32 %v5852, 4294901760
    %v5854 = vsub.f32 %v5852, %v5853
    %v5855 = vand.u32 %v5854, 4294901760
    %5856 = vmatpush1.msra.mxu0 %v5855
    %5857 = vmatprep.subr.mxu0 0.0
    %v5858 = vand.u32 %v5467, 4294901760
    %v5859 = vsub.f32 %v5467, %v5858
    %v5860 = vand.u32 %v5859, 4294901760
    %v5861 = vsub.f32 %v5859, %v5860
    %v5862 = vand.u32 %v5861, 4294901760
    %5863 = vmatpush1.msra.mxu0 %v5862
    %5864 = vmatprep.subr.mxu0 0.0
    %v5865 = vand.u32 %v5468, 4294901760
    %v5866 = vsub.f32 %v5468, %v5865
    %v5867 = vand.u32 %v5866, 4294901760
    %v5868 = vsub.f32 %v5866, %v5867
    %v5869 = vand.u32 %v5868, 4294901760
    %5870 = vmatpush1.msra.mxu0 %v5869
    %5871 = vmatprep.subr.mxu0 0.0
    %v5872 = vand.u32 %v5469, 4294901760
    %v5873 = vsub.f32 %v5469, %v5872
    %v5874 = vand.u32 %v5873, 4294901760
    %v5875 = vsub.f32 %v5873, %v5874
    %v5876 = vand.u32 %v5875, 4294901760
    %5877 = vmatpush1.msra.mxu0 %v5876
    %5878 = vmatprep.subr.mxu0 0.0
    %v5879 = vand.u32 %v5470, 4294901760
    %v5880 = vsub.f32 %v5470, %v5879
    %v5881 = vand.u32 %v5880, 4294901760
    %v5882 = vsub.f32 %v5880, %v5881
    %v5883 = vand.u32 %v5882, 4294901760
    %5884 = vmatpush1.msra.mxu0 %v5883
    %5885 = vmatprep.subr.mxu0 0.0
    %v5886 = vand.u32 %v5471, 4294901760
    %v5887 = vsub.f32 %v5471, %v5886
    %v5888 = vand.u32 %v5887, 4294901760
    %v5889 = vsub.f32 %v5887, %v5888
    %v5890 = vand.u32 %v5889, 4294901760
    %5891 = vmatpush1.msra.mxu0 %v5890
    %5892 = vmatprep.subr.mxu0 0.0
    %v5893 = vand.u32 %v5472, 4294901760
    %v5894 = vsub.f32 %v5472, %v5893
    %v5895 = vand.u32 %v5894, 4294901760
    %v5896 = vsub.f32 %v5894, %v5895
    %v5897 = vand.u32 %v5896, 4294901760
    %5898 = vmatpush1.msra.mxu0 %v5897
    %5899 = vmatprep.subr.mxu0 0.0
    %v5900 = vand.u32 %v5473, 4294901760
    %v5901 = vsub.f32 %v5473, %v5900
    %v5902 = vand.u32 %v5901, 4294901760
    %v5903 = vsub.f32 %v5901, %v5902
    %v5904 = vand.u32 %v5903, 4294901760
    %5905 = vmatpush1.msra.mxu0 %v5904
    %v5906 = vand.u32 %v5435, 4294901760
    %5907 = vmatprep.mubr.f32.mxu0 %v5906
    %v5908 = vand.u32 %v5434, 4294901760
    %5909 = vmatmul.mubr.f32.gmra.mrb[0].mxu0 %v5908
    %v5910 = vpop.f32.mrb[0].mxu0
    %v5911 = vadd.f32 %v5679, %v5910
    %v5912 = vpop.f32.mrb[0].mxu0
    %5913 = vdwg.mxu0
    %5914 = vmatprep.subr.mxu0 0.0
    %v5915 = vand.u32 %v5442, 4294901760
    %v5916 = vsub.f32 %v5442, %v5915
    %5917 = vmatpush1.msra.mxu0 %v5916
    %5918 = vmatprep.subr.mxu0 0.0
    %v5919 = vand.u32 %v5443, 4294901760
    %v5920 = vsub.f32 %v5443, %v5919
    %5921 = vmatpush1.msra.mxu0 %v5920
    %5922 = vmatprep.subr.mxu0 0.0
    %v5923 = vand.u32 %v5444, 4294901760
    %v5924 = vsub.f32 %v5444, %v5923
    %5925 = vmatpush1.msra.mxu0 %v5924
    %5926 = vmatprep.subr.mxu0 0.0
    %v5927 = vand.u32 %v5445, 4294901760
    %v5928 = vsub.f32 %v5445, %v5927
    %5929 = vmatpush1.msra.mxu0 %v5928
    %5930 = vmatprep.subr.mxu0 0.0
    %v5931 = vand.u32 %v5446, 4294901760
    %v5932 = vsub.f32 %v5446, %v5931
    %5933 = vmatpush1.msra.mxu0 %v5932
    %5934 = vmatprep.subr.mxu0 0.0
    %v5935 = vand.u32 %v5447, 4294901760
    %v5936 = vsub.f32 %v5447, %v5935
    %5937 = vmatpush1.msra.mxu0 %v5936
    %5938 = vmatprep.subr.mxu0 0.0
    %v5939 = vand.u32 %v5448, 4294901760
    %v5940 = vsub.f32 %v5448, %v5939
    %5941 = vmatpush1.msra.mxu0 %v5940
    %5942 = vmatprep.subr.mxu0 0.0
    %v5943 = vand.u32 %v5449, 4294901760
    %v5944 = vsub.f32 %v5449, %v5943
    %5945 = vmatpush1.msra.mxu0 %v5944
    %5946 = vmatprep.subr.mxu0 0.0
    %v5947 = vand.u32 %v5450, 4294901760
    %v5948 = vsub.f32 %v5450, %v5947
    %5949 = vmatpush1.msra.mxu0 %v5948
    %5950 = vmatprep.subr.mxu0 0.0
    %v5951 = vand.u32 %v5451, 4294901760
    %v5952 = vsub.f32 %v5451, %v5951
    %5953 = vmatpush1.msra.mxu0 %v5952
    %5954 = vmatprep.subr.mxu0 0.0
    %v5955 = vand.u32 %v5452, 4294901760
    %v5956 = vsub.f32 %v5452, %v5955
    %5957 = vmatpush1.msra.mxu0 %v5956
    %5958 = vmatprep.subr.mxu0 0.0
    %v5959 = vand.u32 %v5453, 4294901760
    %v5960 = vsub.f32 %v5453, %v5959
    %5961 = vmatpush1.msra.mxu0 %v5960
    %5962 = vmatprep.subr.mxu0 0.0
    %v5963 = vand.u32 %v5454, 4294901760
    %v5964 = vsub.f32 %v5454, %v5963
    %5965 = vmatpush1.msra.mxu0 %v5964
    %5966 = vmatprep.subr.mxu0 0.0
    %v5967 = vand.u32 %v5455, 4294901760
    %v5968 = vsub.f32 %v5455, %v5967
    %5969 = vmatpush1.msra.mxu0 %v5968
    %5970 = vmatprep.subr.mxu0 0.0
    %v5971 = vand.u32 %v5456, 4294901760
    %v5972 = vsub.f32 %v5456, %v5971
    %5973 = vmatpush1.msra.mxu0 %v5972
    %5974 = vmatprep.subr.mxu0 0.0
    %v5975 = vand.u32 %v5457, 4294901760
    %v5976 = vsub.f32 %v5457, %v5975
    %5977 = vmatpush1.msra.mxu0 %v5976
    %5978 = vmatprep.subr.mxu0 0.0
    %v5979 = vand.u32 %v5458, 4294901760
    %v5980 = vsub.f32 %v5458, %v5979
    %5981 = vmatpush1.msra.mxu0 %v5980
    %5982 = vmatprep.subr.mxu0 0.0
    %v5983 = vand.u32 %v5459, 4294901760
    %v5984 = vsub.f32 %v5459, %v5983
    %5985 = vmatpush1.msra.mxu0 %v5984
    %5986 = vmatprep.subr.mxu0 0.0
    %v5987 = vand.u32 %v5460, 4294901760
    %v5988 = vsub.f32 %v5460, %v5987
    %5989 = vmatpush1.msra.mxu0 %v5988
    %5990 = vmatprep.subr.mxu0 0.0
    %v5991 = vand.u32 %v5461, 4294901760
    %v5992 = vsub.f32 %v5461, %v5991
    %5993 = vmatpush1.msra.mxu0 %v5992
    %5994 = vmatprep.subr.mxu0 0.0
    %v5995 = vand.u32 %v5462, 4294901760
    %v5996 = vsub.f32 %v5462, %v5995
    %5997 = vmatpush1.msra.mxu0 %v5996
    %5998 = vmatprep.subr.mxu0 0.0
    %v5999 = vand.u32 %v5463, 4294901760
    %v6000 = vsub.f32 %v5463, %v5999
    %6001 = vmatpush1.msra.mxu0 %v6000
    %6002 = vmatprep.subr.mxu0 0.0
    %v6003 = vand.u32 %v5464, 4294901760
    %v6004 = vsub.f32 %v5464, %v6003
    %6005 = vmatpush1.msra.mxu0 %v6004
    %6006 = vmatprep.subr.mxu0 0.0
    %v6007 = vand.u32 %v5465, 4294901760
    %v6008 = vsub.f32 %v5465, %v6007
    %6009 = vmatpush1.msra.mxu0 %v6008
    %6010 = vmatprep.subr.mxu0 0.0
    %v6011 = vand.u32 %v5466, 4294901760
    %v6012 = vsub.f32 %v5466, %v6011
    %6013 = vmatpush1.msra.mxu0 %v6012
    %6014 = vmatprep.subr.mxu0 0.0
    %v6015 = vand.u32 %v5467, 4294901760
    %v6016 = vsub.f32 %v5467, %v6015
    %6017 = vmatpush1.msra.mxu0 %v6016
    %6018 = vmatprep.subr.mxu0 0.0
    %v6019 = vand.u32 %v5468, 4294901760
    %v6020 = vsub.f32 %v5468, %v6019
    %6021 = vmatpush1.msra.mxu0 %v6020
    %6022 = vmatprep.subr.mxu0 0.0
    %v6023 = vand.u32 %v5469, 4294901760
    %v6024 = vsub.f32 %v5469, %v6023
    %6025 = vmatpush1.msra.mxu0 %v6024
    %6026 = vmatprep.subr.mxu0 0.0
    %v6027 = vand.u32 %v5470, 4294901760
    %v6028 = vsub.f32 %v5470, %v6027
    %6029 = vmatpush1.msra.mxu0 %v6028
    %6030 = vmatprep.subr.mxu0 0.0
    %v6031 = vand.u32 %v5471, 4294901760
    %v6032 = vsub.f32 %v5471, %v6031
    %6033 = vmatpush1.msra.mxu0 %v6032
    %6034 = vmatprep.subr.mxu0 0.0
    %v6035 = vand.u32 %v5472, 4294901760
    %v6036 = vsub.f32 %v5472, %v6035
    %6037 = vmatpush1.msra.mxu0 %v6036
    %6038 = vmatprep.subr.mxu0 0.0
    %v6039 = vand.u32 %v5473, 4294901760
    %v6040 = vsub.f32 %v5473, %v6039
    %6041 = vmatpush1.msra.mxu0 %v6040
    %v6042 = vand.u32 %v5435, 4294901760
    %v6043 = vsub.f32 %v5435, %v6042
    %6044 = vmatprep.mubr.f32.mxu0 %v6043
    %v6045 = vand.u32 %v5434, 4294901760
    %v6046 = vsub.f32 %v5434, %v6045
    %6047 = vmatmul.mubr.f32.gmra.mrb[0].mxu0 %v6046
    %v6048 = vpop.f32.mrb[0].mxu0
    %v6049 = vadd.f32 %v5911, %v6048
    %v6050 = vpop.f32.mrb[0].mxu0
    %6051 = vdwg.mxu0
    %6052 = vmatprep.subr.mxu0 0.0
    %v6053 = vand.u32 %v5442, 4294901760
    %6054 = vmatpush1.msra.mxu0 %v6053
    %6055 = vmatprep.subr.mxu0 0.0
    %v6056 = vand.u32 %v5443, 4294901760
    %6057 = vmatpush1.msra.mxu0 %v6056
    %6058 = vmatprep.subr.mxu0 0.0
    %v6059 = vand.u32 %v5444, 4294901760
    %6060 = vmatpush1.msra.mxu0 %v6059
    %6061 = vmatprep.subr.mxu0 0.0
    %v6062 = vand.u32 %v5445, 4294901760
    %6063 = vmatpush1.msra.mxu0 %v6062
    %6064 = vmatprep.subr.mxu0 0.0
    %v6065 = vand.u32 %v5446, 4294901760
    %6066 = vmatpush1.msra.mxu0 %v6065
    %6067 = vmatprep.subr.mxu0 0.0
    %v6068 = vand.u32 %v5447, 4294901760
    %6069 = vmatpush1.msra.mxu0 %v6068
    %6070 = vmatprep.subr.mxu0 0.0
    %v6071 = vand.u32 %v5448, 4294901760
    %6072 = vmatpush1.msra.mxu0 %v6071
    %6073 = vmatprep.subr.mxu0 0.0
    %v6074 = vand.u32 %v5449, 4294901760
    %6075 = vmatpush1.msra.mxu0 %v6074
    %6076 = vmatprep.subr.mxu0 0.0
    %v6077 = vand.u32 %v5450, 4294901760
    %6078 = vmatpush1.msra.mxu0 %v6077
    %6079 = vmatprep.subr.mxu0 0.0
    %v6080 = vand.u32 %v5451, 4294901760
    %6081 = vmatpush1.msra.mxu0 %v6080
    %6082 = vmatprep.subr.mxu0 0.0
    %v6083 = vand.u32 %v5452, 4294901760
    %6084 = vmatpush1.msra.mxu0 %v6083
    %6085 = vmatprep.subr.mxu0 0.0
    %v6086 = vand.u32 %v5453, 4294901760
    %6087 = vmatpush1.msra.mxu0 %v6086
    %6088 = vmatprep.subr.mxu0 0.0
    %v6089 = vand.u32 %v5454, 4294901760
    %6090 = vmatpush1.msra.mxu0 %v6089
    %6091 = vmatprep.subr.mxu0 0.0
    %v6092 = vand.u32 %v5455, 4294901760
    %6093 = vmatpush1.msra.mxu0 %v6092
    %6094 = vmatprep.subr.mxu0 0.0
    %v6095 = vand.u32 %v5456, 4294901760
    %6096 = vmatpush1.msra.mxu0 %v6095
    %6097 = vmatprep.subr.mxu0 0.0
    %v6098 = vand.u32 %v5457, 4294901760
    %6099 = vmatpush1.msra.mxu0 %v6098
    %6100 = vmatprep.subr.mxu0 0.0
    %v6101 = vand.u32 %v5458, 4294901760
    %6102 = vmatpush1.msra.mxu0 %v6101
    %6103 = vmatprep.subr.mxu0 0.0
    %v6104 = vand.u32 %v5459, 4294901760
    %6105 = vmatpush1.msra.mxu0 %v6104
    %6106 = vmatprep.subr.mxu0 0.0
    %v6107 = vand.u32 %v5460, 4294901760
    %6108 = vmatpush1.msra.mxu0 %v6107
    %6109 = vmatprep.subr.mxu0 0.0
    %v6110 = vand.u32 %v5461, 4294901760
    %6111 = vmatpush1.msra.mxu0 %v6110
    %6112 = vmatprep.subr.mxu0 0.0
    %v6113 = vand.u32 %v5462, 4294901760
    %6114 = vmatpush1.msra.mxu0 %v6113
    %6115 = vmatprep.subr.mxu0 0.0
    %v6116 = vand.u32 %v5463, 4294901760
    %6117 = vmatpush1.msra.mxu0 %v6116
    %6118 = vmatprep.subr.mxu0 0.0
    %v6119 = vand.u32 %v5464, 4294901760
    %6120 = vmatpush1.msra.mxu0 %v6119
    %6121 = vmatprep.subr.mxu0 0.0
    %v6122 = vand.u32 %v5465, 4294901760
    %6123 = vmatpush1.msra.mxu0 %v6122
    %6124 = vmatprep.subr.mxu0 0.0
    %v6125 = vand.u32 %v5466, 4294901760
    %6126 = vmatpush1.msra.mxu0 %v6125
    %6127 = vmatprep.subr.mxu0 0.0
    %v6128 = vand.u32 %v5467, 4294901760
    %6129 = vmatpush1.msra.mxu0 %v6128
    %6130 = vmatprep.subr.mxu0 0.0
    %v6131 = vand.u32 %v5468, 4294901760
    %6132 = vmatpush1.msra.mxu0 %v6131
    %6133 = vmatprep.subr.mxu0 0.0
    %v6134 = vand.u32 %v5469, 4294901760
    %6135 = vmatpush1.msra.mxu0 %v6134
    %6136 = vmatprep.subr.mxu0 0.0
    %v6137 = vand.u32 %v5470, 4294901760
    %6138 = vmatpush1.msra.mxu0 %v6137
    %6139 = vmatprep.subr.mxu0 0.0
    %v6140 = vand.u32 %v5471, 4294901760
    %6141 = vmatpush1.msra.mxu0 %v6140
    %6142 = vmatprep.subr.mxu0 0.0
    %v6143 = vand.u32 %v5472, 4294901760
    %6144 = vmatpush1.msra.mxu0 %v6143
    %6145 = vmatprep.subr.mxu0 0.0
    %v6146 = vand.u32 %v5473, 4294901760
    %6147 = vmatpush1.msra.mxu0 %v6146
    %v6148 = vand.u32 %v5435, 4294901760
    %v6149 = vsub.f32 %v5435, %v6148
    %v6150 = vand.u32 %v6149, 4294901760
    %6151 = vmatprep.mubr.f32.mxu0 %v6150
    %v6152 = vand.u32 %v5434, 4294901760
    %v6153 = vsub.f32 %v5434, %v6152
    %v6154 = vand.u32 %v6153, 4294901760
    %6155 = vmatmul.mubr.f32.gmra.mrb[0].mxu0 %v6154
    %v6156 = vpop.f32.mrb[0].mxu0
    %v6157 = vadd.f32 %v6049, %v6156
    %v6158 = vpop.f32.mrb[0].mxu0
    %6159 = vdwg.mxu0
    %6160 = vmatprep.subr.mxu0 0.0
    %v6161 = vand.u32 %v5442, 4294901760
    %v6162 = vsub.f32 %v5442, %v6161
    %v6163 = vand.u32 %v6162, 4294901760
    %6164 = vmatpush1.msra.mxu0 %v6163
    %6165 = vmatprep.subr.mxu0 0.0
    %v6166 = vand.u32 %v5443, 4294901760
    %v6167 = vsub.f32 %v5443, %v6166
    %v6168 = vand.u32 %v6167, 4294901760
    %6169 = vmatpush1.msra.mxu0 %v6168
    %6170 = vmatprep.subr.mxu0 0.0
    %v6171 = vand.u32 %v5444, 4294901760
    %v6172 = vsub.f32 %v5444, %v6171
    %v6173 = vand.u32 %v6172, 4294901760
    %6174 = vmatpush1.msra.mxu0 %v6173
    %6175 = vmatprep.subr.mxu0 0.0
    %v6176 = vand.u32 %v5445, 4294901760
    %v6177 = vsub.f32 %v5445, %v6176
    %v6178 = vand.u32 %v6177, 4294901760
    %6179 = vmatpush1.msra.mxu0 %v6178
    %6180 = vmatprep.subr.mxu0 0.0
    %v6181 = vand.u32 %v5446, 4294901760
    %v6182 = vsub.f32 %v5446, %v6181
    %v6183 = vand.u32 %v6182, 4294901760
    %6184 = vmatpush1.msra.mxu0 %v6183
    %6185 = vmatprep.subr.mxu0 0.0
    %v6186 = vand.u32 %v5447, 4294901760
    %v6187 = vsub.f32 %v5447, %v6186
    %v6188 = vand.u32 %v6187, 4294901760
    %6189 = vmatpush1.msra.mxu0 %v6188
    %6190 = vmatprep.subr.mxu0 0.0
    %v6191 = vand.u32 %v5448, 4294901760
    %v6192 = vsub.f32 %v5448, %v6191
    %v6193 = vand.u32 %v6192, 4294901760
    %6194 = vmatpush1.msra.mxu0 %v6193
    %6195 = vmatprep.subr.mxu0 0.0
    %v6196 = vand.u32 %v5449, 4294901760
    %v6197 = vsub.f32 %v5449, %v6196
    %v6198 = vand.u32 %v6197, 4294901760
    %6199 = vmatpush1.msra.mxu0 %v6198
    %6200 = vmatprep.subr.mxu0 0.0
    %v6201 = vand.u32 %v5450, 4294901760
    %v6202 = vsub.f32 %v5450, %v6201
    %v6203 = vand.u32 %v6202, 4294901760
    %6204 = vmatpush1.msra.mxu0 %v6203
    %6205 = vmatprep.subr.mxu0 0.0
    %v6206 = vand.u32 %v5451, 4294901760
    %v6207 = vsub.f32 %v5451, %v6206
    %v6208 = vand.u32 %v6207, 4294901760
    %6209 = vmatpush1.msra.mxu0 %v6208
    %6210 = vmatprep.subr.mxu0 0.0
    %v6211 = vand.u32 %v5452, 4294901760
    %v6212 = vsub.f32 %v5452, %v6211
    %v6213 = vand.u32 %v6212, 4294901760
    %6214 = vmatpush1.msra.mxu0 %v6213
    %6215 = vmatprep.subr.mxu0 0.0
    %v6216 = vand.u32 %v5453, 4294901760
    %v6217 = vsub.f32 %v5453, %v6216
    %v6218 = vand.u32 %v6217, 4294901760
    %6219 = vmatpush1.msra.mxu0 %v6218
    %6220 = vmatprep.subr.mxu0 0.0
    %v6221 = vand.u32 %v5454, 4294901760
    %v6222 = vsub.f32 %v5454, %v6221
    %v6223 = vand.u32 %v6222, 4294901760
    %6224 = vmatpush1.msra.mxu0 %v6223
    %6225 = vmatprep.subr.mxu0 0.0
    %v6226 = vand.u32 %v5455, 4294901760
    %v6227 = vsub.f32 %v5455, %v6226
    %v6228 = vand.u32 %v6227, 4294901760
    %6229 = vmatpush1.msra.mxu0 %v6228
    %6230 = vmatprep.subr.mxu0 0.0
    %v6231 = vand.u32 %v5456, 4294901760
    %v6232 = vsub.f32 %v5456, %v6231
    %v6233 = vand.u32 %v6232, 4294901760
    %6234 = vmatpush1.msra.mxu0 %v6233
    %6235 = vmatprep.subr.mxu0 0.0
    %v6236 = vand.u32 %v5457, 4294901760
    %v6237 = vsub.f32 %v5457, %v6236
    %v6238 = vand.u32 %v6237, 4294901760
    %6239 = vmatpush1.msra.mxu0 %v6238
    %6240 = vmatprep.subr.mxu0 0.0
    %v6241 = vand.u32 %v5458, 4294901760
    %v6242 = vsub.f32 %v5458, %v6241
    %v6243 = vand.u32 %v6242, 4294901760
    %6244 = vmatpush1.msra.mxu0 %v6243
    %6245 = vmatprep.subr.mxu0 0.0
    %v6246 = vand.u32 %v5459, 4294901760
    %v6247 = vsub.f32 %v5459, %v6246
    %v6248 = vand.u32 %v6247, 4294901760
    %6249 = vmatpush1.msra.mxu0 %v6248
    %6250 = vmatprep.subr.mxu0 0.0
    %v6251 = vand.u32 %v5460, 4294901760
    %v6252 = vsub.f32 %v5460, %v6251
    %v6253 = vand.u32 %v6252, 4294901760
    %6254 = vmatpush1.msra.mxu0 %v6253
    %6255 = vmatprep.subr.mxu0 0.0
    %v6256 = vand.u32 %v5461, 4294901760
    %v6257 = vsub.f32 %v5461, %v6256
    %v6258 = vand.u32 %v6257, 4294901760
    %6259 = vmatpush1.msra.mxu0 %v6258
    %6260 = vmatprep.subr.mxu0 0.0
    %v6261 = vand.u32 %v5462, 4294901760
    %v6262 = vsub.f32 %v5462, %v6261
    %v6263 = vand.u32 %v6262, 4294901760
    %6264 = vmatpush1.msra.mxu0 %v6263
    %6265 = vmatprep.subr.mxu0 0.0
    %v6266 = vand.u32 %v5463, 4294901760
    %v6267 = vsub.f32 %v5463, %v6266
    %v6268 = vand.u32 %v6267, 4294901760
    %6269 = vmatpush1.msra.mxu0 %v6268
    %6270 = vmatprep.subr.mxu0 0.0
    %v6271 = vand.u32 %v5464, 4294901760
    %v6272 = vsub.f32 %v5464, %v6271
    %v6273 = vand.u32 %v6272, 4294901760
    %6274 = vmatpush1.msra.mxu0 %v6273
    %6275 = vmatprep.subr.mxu0 0.0
    %v6276 = vand.u32 %v5465, 4294901760
    %v6277 = vsub.f32 %v5465, %v6276
    %v6278 = vand.u32 %v6277, 4294901760
    %6279 = vmatpush1.msra.mxu0 %v6278
    %6280 = vmatprep.subr.mxu0 0.0
    %v6281 = vand.u32 %v5466, 4294901760
    %v6282 = vsub.f32 %v5466, %v6281
    %v6283 = vand.u32 %v6282, 4294901760
    %6284 = vmatpush1.msra.mxu0 %v6283
    %6285 = vmatprep.subr.mxu0 0.0
    %v6286 = vand.u32 %v5467, 4294901760
    %v6287 = vsub.f32 %v5467, %v6286
    %v6288 = vand.u32 %v6287, 4294901760
    %6289 = vmatpush1.msra.mxu0 %v6288
    %6290 = vmatprep.subr.mxu0 0.0
    %v6291 = vand.u32 %v5468, 4294901760
    %v6292 = vsub.f32 %v5468, %v6291
    %v6293 = vand.u32 %v6292, 4294901760
    %6294 = vmatpush1.msra.mxu0 %v6293
    %6295 = vmatprep.subr.mxu0 0.0
    %v6296 = vand.u32 %v5469, 4294901760
    %v6297 = vsub.f32 %v5469, %v6296
    %v6298 = vand.u32 %v6297, 4294901760
    %6299 = vmatpush1.msra.mxu0 %v6298
    %6300 = vmatprep.subr.mxu0 0.0
    %v6301 = vand.u32 %v5470, 4294901760
    %v6302 = vsub.f32 %v5470, %v6301
    %v6303 = vand.u32 %v6302, 4294901760
    %6304 = vmatpush1.msra.mxu0 %v6303
    %6305 = vmatprep.subr.mxu0 0.0
    %v6306 = vand.u32 %v5471, 4294901760
    %v6307 = vsub.f32 %v5471, %v6306
    %v6308 = vand.u32 %v6307, 4294901760
    %6309 = vmatpush1.msra.mxu0 %v6308
    %6310 = vmatprep.subr.mxu0 0.0
    %v6311 = vand.u32 %v5472, 4294901760
    %v6312 = vsub.f32 %v5472, %v6311
    %v6313 = vand.u32 %v6312, 4294901760
    %6314 = vmatpush1.msra.mxu0 %v6313
    %6315 = vmatprep.subr.mxu0 0.0
    %v6316 = vand.u32 %v5473, 4294901760
    %v6317 = vsub.f32 %v5473, %v6316
    %v6318 = vand.u32 %v6317, 4294901760
    %6319 = vmatpush1.msra.mxu0 %v6318
    %v6320 = vand.u32 %v5435, 4294901760
    %6321 = vmatprep.mubr.f32.mxu0 %v6320
    %v6322 = vand.u32 %v5434, 4294901760
    %6323 = vmatmul.mubr.f32.gmra.mrb[0].mxu0 %v6322
    %v6324 = vpop.f32.mrb[0].mxu0
    %v6325 = vadd.f32 %v6157, %v6324
    %v6326 = vpop.f32.mrb[0].mxu0
    %6327 = vdwg.mxu0
    %6328 = vmatprep.subr.mxu0 0.0
    %v6329 = vand.u32 %v5442, 4294901760
    %6330 = vmatpush1.msra.mxu0 %v6329
    %6331 = vmatprep.subr.mxu0 0.0
    %v6332 = vand.u32 %v5443, 4294901760
    %6333 = vmatpush1.msra.mxu0 %v6332
    %6334 = vmatprep.subr.mxu0 0.0
    %v6335 = vand.u32 %v5444, 4294901760
    %6336 = vmatpush1.msra.mxu0 %v6335
    %6337 = vmatprep.subr.mxu0 0.0
    %v6338 = vand.u32 %v5445, 4294901760
    %6339 = vmatpush1.msra.mxu0 %v6338
    %6340 = vmatprep.subr.mxu0 0.0
    %v6341 = vand.u32 %v5446, 4294901760
    %6342 = vmatpush1.msra.mxu0 %v6341
    %6343 = vmatprep.subr.mxu0 0.0
    %v6344 = vand.u32 %v5447, 4294901760
    %6345 = vmatpush1.msra.mxu0 %v6344
    %6346 = vmatprep.subr.mxu0 0.0
    %v6347 = vand.u32 %v5448, 4294901760
    %6348 = vmatpush1.msra.mxu0 %v6347
    %6349 = vmatprep.subr.mxu0 0.0
    %v6350 = vand.u32 %v5449, 4294901760
    %6351 = vmatpush1.msra.mxu0 %v6350
    %6352 = vmatprep.subr.mxu0 0.0
    %v6353 = vand.u32 %v5450, 4294901760
    %6354 = vmatpush1.msra.mxu0 %v6353
    %6355 = vmatprep.subr.mxu0 0.0
    %v6356 = vand.u32 %v5451, 4294901760
    %6357 = vmatpush1.msra.mxu0 %v6356
    %6358 = vmatprep.subr.mxu0 0.0
    %v6359 = vand.u32 %v5452, 4294901760
    %6360 = vmatpush1.msra.mxu0 %v6359
    %6361 = vmatprep.subr.mxu0 0.0
    %v6362 = vand.u32 %v5453, 4294901760
    %6363 = vmatpush1.msra.mxu0 %v6362
    %6364 = vmatprep.subr.mxu0 0.0
    %v6365 = vand.u32 %v5454, 4294901760
    %6366 = vmatpush1.msra.mxu0 %v6365
    %6367 = vmatprep.subr.mxu0 0.0
    %v6368 = vand.u32 %v5455, 4294901760
    %6369 = vmatpush1.msra.mxu0 %v6368
    %6370 = vmatprep.subr.mxu0 0.0
    %v6371 = vand.u32 %v5456, 4294901760
    %6372 = vmatpush1.msra.mxu0 %v6371
    %6373 = vmatprep.subr.mxu0 0.0
    %v6374 = vand.u32 %v5457, 4294901760
    %6375 = vmatpush1.msra.mxu0 %v6374
    %6376 = vmatprep.subr.mxu0 0.0
    %v6377 = vand.u32 %v5458, 4294901760
    %6378 = vmatpush1.msra.mxu0 %v6377
    %6379 = vmatprep.subr.mxu0 0.0
    %v6380 = vand.u32 %v5459, 4294901760
    %6381 = vmatpush1.msra.mxu0 %v6380
    %6382 = vmatprep.subr.mxu0 0.0
    %v6383 = vand.u32 %v5460, 4294901760
    %6384 = vmatpush1.msra.mxu0 %v6383
    %6385 = vmatprep.subr.mxu0 0.0
    %v6386 = vand.u32 %v5461, 4294901760
    %6387 = vmatpush1.msra.mxu0 %v6386
    %6388 = vmatprep.subr.mxu0 0.0
    %v6389 = vand.u32 %v5462, 4294901760
    %6390 = vmatpush1.msra.mxu0 %v6389
    %6391 = vmatprep.subr.mxu0 0.0
    %v6392 = vand.u32 %v5463, 4294901760
    %6393 = vmatpush1.msra.mxu0 %v6392
    %6394 = vmatprep.subr.mxu0 0.0
    %v6395 = vand.u32 %v5464, 4294901760
    %6396 = vmatpush1.msra.mxu0 %v6395
    %6397 = vmatprep.subr.mxu0 0.0
    %v6398 = vand.u32 %v5465, 4294901760
    %6399 = vmatpush1.msra.mxu0 %v6398
    %6400 = vmatprep.subr.mxu0 0.0
    %v6401 = vand.u32 %v5466, 4294901760
    %6402 = vmatpush1.msra.mxu0 %v6401
    %6403 = vmatprep.subr.mxu0 0.0
    %v6404 = vand.u32 %v5467, 4294901760
    %6405 = vmatpush1.msra.mxu0 %v6404
    %6406 = vmatprep.subr.mxu0 0.0
    %v6407 = vand.u32 %v5468, 4294901760
    %6408 = vmatpush1.msra.mxu0 %v6407
    %6409 = vmatprep.subr.mxu0 0.0
    %v6410 = vand.u32 %v5469, 4294901760
    %6411 = vmatpush1.msra.mxu0 %v6410
    %6412 = vmatprep.subr.mxu0 0.0
    %v6413 = vand.u32 %v5470, 4294901760
    %6414 = vmatpush1.msra.mxu0 %v6413
    %6415 = vmatprep.subr.mxu0 0.0
    %v6416 = vand.u32 %v5471, 4294901760
    %6417 = vmatpush1.msra.mxu0 %v6416
    %6418 = vmatprep.subr.mxu0 0.0
    %v6419 = vand.u32 %v5472, 4294901760
    %6420 = vmatpush1.msra.mxu0 %v6419
    %6421 = vmatprep.subr.mxu0 0.0
    %v6422 = vand.u32 %v5473, 4294901760
    %6423 = vmatpush1.msra.mxu0 %v6422
    %v6424 = vand.u32 %v5435, 4294901760
    %6425 = vmatprep.mubr.f32.mxu0 %v6424
    %v6426 = vand.u32 %v5434, 4294901760
    %6427 = vmatmul.mubr.f32.gmra.mrb[0].mxu0 %v6426
    %v6428 = vpop.f32.mrb[0].mxu0
    %v6429 = vadd.f32 %v6325, %v6428
    %v6430 = vpop.f32.mrb[0].mxu0
    %6431 = vdwg.mxu0
    %6432 = vmatprep.subr.mxu0 0.0
    %v6433 = vand.u32 %v5474, 4294901760
    %6434 = vmatpush1.msra.mxu0 %v6433
    %6435 = vmatprep.subr.mxu0 0.0
    %v6436 = vand.u32 %v5475, 4294901760
    %6437 = vmatpush1.msra.mxu0 %v6436
    %6438 = vmatprep.subr.mxu0 0.0
    %v6439 = vand.u32 %v5476, 4294901760
    %6440 = vmatpush1.msra.mxu0 %v6439
    %6441 = vmatprep.subr.mxu0 0.0
    %v6442 = vand.u32 %v5477, 4294901760
    %6443 = vmatpush1.msra.mxu0 %v6442
    %6444 = vmatprep.subr.mxu0 0.0
    %v6445 = vand.u32 %v5478, 4294901760
    %6446 = vmatpush1.msra.mxu0 %v6445
    %6447 = vmatprep.subr.mxu0 0.0
    %v6448 = vand.u32 %v5479, 4294901760
    %6449 = vmatpush1.msra.mxu0 %v6448
    %6450 = vmatprep.subr.mxu0 0.0
    %v6451 = vand.u32 %v5480, 4294901760
    %6452 = vmatpush1.msra.mxu0 %v6451
    %6453 = vmatprep.subr.mxu0 0.0
    %v6454 = vand.u32 %v5481, 4294901760
    %6455 = vmatpush1.msra.mxu0 %v6454
    %6456 = vmatprep.subr.mxu0 0.0
    %v6457 = vand.u32 %v5482, 4294901760
    %6458 = vmatpush1.msra.mxu0 %v6457
    %6459 = vmatprep.subr.mxu0 0.0
    %v6460 = vand.u32 %v5483, 4294901760
    %6461 = vmatpush1.msra.mxu0 %v6460
    %6462 = vmatprep.subr.mxu0 0.0
    %v6463 = vand.u32 %v5484, 4294901760
    %6464 = vmatpush1.msra.mxu0 %v6463
    %6465 = vmatprep.subr.mxu0 0.0
    %v6466 = vand.u32 %v5485, 4294901760
    %6467 = vmatpush1.msra.mxu0 %v6466
    %6468 = vmatprep.subr.mxu0 0.0
    %v6469 = vand.u32 %v5486, 4294901760
    %6470 = vmatpush1.msra.mxu0 %v6469
    %6471 = vmatprep.subr.mxu0 0.0
    %v6472 = vand.u32 %v5487, 4294901760
    %6473 = vmatpush1.msra.mxu0 %v6472
    %6474 = vmatprep.subr.mxu0 0.0
    %v6475 = vand.u32 %v5488, 4294901760
    %6476 = vmatpush1.msra.mxu0 %v6475
    %6477 = vmatprep.subr.mxu0 0.0
    %v6478 = vand.u32 %v5489, 4294901760
    %6479 = vmatpush1.msra.mxu0 %v6478
    %6480 = vmatprep.subr.mxu0 0.0
    %v6481 = vand.u32 %v5490, 4294901760
    %6482 = vmatpush1.msra.mxu0 %v6481
    %6483 = vmatprep.subr.mxu0 0.0
    %v6484 = vand.u32 %v5491, 4294901760
    %6485 = vmatpush1.msra.mxu0 %v6484
    %6486 = vmatprep.subr.mxu0 0.0
    %v6487 = vand.u32 %v5492, 4294901760
    %6488 = vmatpush1.msra.mxu0 %v6487
    %6489 = vmatprep.subr.mxu0 0.0
    %v6490 = vand.u32 %v5493, 4294901760
    %6491 = vmatpush1.msra.mxu0 %v6490
    %6492 = vmatprep.subr.mxu0 0.0
    %v6493 = vand.u32 %v5494, 4294901760
    %6494 = vmatpush1.msra.mxu0 %v6493
    %6495 = vmatprep.subr.mxu0 0.0
    %v6496 = vand.u32 %v5495, 4294901760
    %6497 = vmatpush1.msra.mxu0 %v6496
    %6498 = vmatprep.subr.mxu0 0.0
    %v6499 = vand.u32 %v5496, 4294901760
    %6500 = vmatpush1.msra.mxu0 %v6499
    %6501 = vmatprep.subr.mxu0 0.0
    %v6502 = vand.u32 %v5497, 4294901760
    %6503 = vmatpush1.msra.mxu0 %v6502
    %6504 = vmatprep.subr.mxu0 0.0
    %v6505 = vand.u32 %v5498, 4294901760
    %6506 = vmatpush1.msra.mxu0 %v6505
    %6507 = vmatprep.subr.mxu0 0.0
    %v6508 = vand.u32 %v5499, 4294901760
    %6509 = vmatpush1.msra.mxu0 %v6508
    %6510 = vmatprep.subr.mxu0 0.0
    %v6511 = vand.u32 %v5500, 4294901760
    %6512 = vmatpush1.msra.mxu0 %v6511
    %6513 = vmatprep.subr.mxu0 0.0
    %v6514 = vand.u32 %v5501, 4294901760
    %6515 = vmatpush1.msra.mxu0 %v6514
    %6516 = vmatprep.subr.mxu0 0.0
    %v6517 = vand.u32 %v5502, 4294901760
    %6518 = vmatpush1.msra.mxu0 %v6517
    %6519 = vmatprep.subr.mxu0 0.0
    %v6520 = vand.u32 %v5503, 4294901760
    %6521 = vmatpush1.msra.mxu0 %v6520
    %6522 = vmatprep.subr.mxu0 0.0
    %v6523 = vand.u32 %v5504, 4294901760
    %6524 = vmatpush1.msra.mxu0 %v6523
    %6525 = vmatprep.subr.mxu0 0.0
    %v6526 = vand.u32 %v5505, 4294901760
    %6527 = vmatpush1.msra.mxu0 %v6526
    %v6528 = vand.u32 %v5437, 4294901760
    %v6529 = vsub.f32 %v5437, %v6528
    %v6530 = vand.u32 %v6529, 4294901760
    %v6531 = vsub.f32 %v6529, %v6530
    %v6532 = vand.u32 %v6531, 4294901760
    %6533 = vmatprep.mubr.f32.mxu0 %v6532
    %v6534 = vand.u32 %v5436, 4294901760
    %v6535 = vsub.f32 %v5436, %v6534
    %v6536 = vand.u32 %v6535, 4294901760
    %v6537 = vsub.f32 %v6535, %v6536
    %v6538 = vand.u32 %v6537, 4294901760
    %6539 = vmatmul.mubr.f32.gmra.mrb[0].mxu0 %v6538
    %v6540 = vpop.f32.mrb[0].mxu0
    %v6541 = vadd.f32 %v6429, %v6540
    %v6542 = vpop.f32.mrb[0].mxu0
    %6543 = vdwg.mxu0
    %6544 = vmatprep.subr.mxu0 0.0
    %v6545 = vand.u32 %v5474, 4294901760
    %v6546 = vsub.f32 %v5474, %v6545
    %v6547 = vand.u32 %v6546, 4294901760
    %v6548 = vsub.f32 %v6546, %v6547
    %v6549 = vand.u32 %v6548, 4294901760
    %6550 = vmatpush1.msra.mxu0 %v6549
    %6551 = vmatprep.subr.mxu0 0.0
    %v6552 = vand.u32 %v5475, 4294901760
    %v6553 = vsub.f32 %v5475, %v6552
    %v6554 = vand.u32 %v6553, 4294901760
    %v6555 = vsub.f32 %v6553, %v6554
    %v6556 = vand.u32 %v6555, 4294901760
    %6557 = vmatpush1.msra.mxu0 %v6556
    %6558 = vmatprep.subr.mxu0 0.0
    %v6559 = vand.u32 %v5476, 4294901760
    %v6560 = vsub.f32 %v5476, %v6559
    %v6561 = vand.u32 %v6560, 4294901760
    %v6562 = vsub.f32 %v6560, %v6561
    %v6563 = vand.u32 %v6562, 4294901760
    %6564 = vmatpush1.msra.mxu0 %v6563
    %6565 = vmatprep.subr.mxu0 0.0
    %v6566 = vand.u32 %v5477, 4294901760
    %v6567 = vsub.f32 %v5477, %v6566
    %v6568 = vand.u32 %v6567, 4294901760
    %v6569 = vsub.f32 %v6567, %v6568
    %v6570 = vand.u32 %v6569, 4294901760
    %6571 = vmatpush1.msra.mxu0 %v6570
    %6572 = vmatprep.subr.mxu0 0.0
    %v6573 = vand.u32 %v5478, 4294901760
    %v6574 = vsub.f32 %v5478, %v6573
    %v6575 = vand.u32 %v6574, 4294901760
    %v6576 = vsub.f32 %v6574, %v6575
    %v6577 = vand.u32 %v6576, 4294901760
    %6578 = vmatpush1.msra.mxu0 %v6577
    %6579 = vmatprep.subr.mxu0 0.0
    %v6580 = vand.u32 %v5479, 4294901760
    %v6581 = vsub.f32 %v5479, %v6580
    %v6582 = vand.u32 %v6581, 4294901760
    %v6583 = vsub.f32 %v6581, %v6582
    %v6584 = vand.u32 %v6583, 4294901760
    %6585 = vmatpush1.msra.mxu0 %v6584
    %6586 = vmatprep.subr.mxu0 0.0
    %v6587 = vand.u32 %v5480, 4294901760
    %v6588 = vsub.f32 %v5480, %v6587
    %v6589 = vand.u32 %v6588, 4294901760
    %v6590 = vsub.f32 %v6588, %v6589
    %v6591 = vand.u32 %v6590, 4294901760
    %6592 = vmatpush1.msra.mxu0 %v6591
    %6593 = vmatprep.subr.mxu0 0.0
    %v6594 = vand.u32 %v5481, 4294901760
    %v6595 = vsub.f32 %v5481, %v6594
    %v6596 = vand.u32 %v6595, 4294901760
    %v6597 = vsub.f32 %v6595, %v6596
    %v6598 = vand.u32 %v6597, 4294901760
    %6599 = vmatpush1.msra.mxu0 %v6598
    %6600 = vmatprep.subr.mxu0 0.0
    %v6601 = vand.u32 %v5482, 4294901760
    %v6602 = vsub.f32 %v5482, %v6601
    %v6603 = vand.u32 %v6602, 4294901760
    %v6604 = vsub.f32 %v6602, %v6603
    %v6605 = vand.u32 %v6604, 4294901760
    %6606 = vmatpush1.msra.mxu0 %v6605
    %6607 = vmatprep.subr.mxu0 0.0
    %v6608 = vand.u32 %v5483, 4294901760
    %v6609 = vsub.f32 %v5483, %v6608
    %v6610 = vand.u32 %v6609, 4294901760
    %v6611 = vsub.f32 %v6609, %v6610
    %v6612 = vand.u32 %v6611, 4294901760
    %6613 = vmatpush1.msra.mxu0 %v6612
    %6614 = vmatprep.subr.mxu0 0.0
    %v6615 = vand.u32 %v5484, 4294901760
    %v6616 = vsub.f32 %v5484, %v6615
    %v6617 = vand.u32 %v6616, 4294901760
    %v6618 = vsub.f32 %v6616, %v6617
    %v6619 = vand.u32 %v6618, 4294901760
    %6620 = vmatpush1.msra.mxu0 %v6619
    %6621 = vmatprep.subr.mxu0 0.0
    %v6622 = vand.u32 %v5485, 4294901760
    %v6623 = vsub.f32 %v5485, %v6622
    %v6624 = vand.u32 %v6623, 4294901760
    %v6625 = vsub.f32 %v6623, %v6624
    %v6626 = vand.u32 %v6625, 4294901760
    %6627 = vmatpush1.msra.mxu0 %v6626
    %6628 = vmatprep.subr.mxu0 0.0
    %v6629 = vand.u32 %v5486, 4294901760
    %v6630 = vsub.f32 %v5486, %v6629
    %v6631 = vand.u32 %v6630, 4294901760
    %v6632 = vsub.f32 %v6630, %v6631
    %v6633 = vand.u32 %v6632, 4294901760
    %6634 = vmatpush1.msra.mxu0 %v6633
    %6635 = vmatprep.subr.mxu0 0.0
    %v6636 = vand.u32 %v5487, 4294901760
    %v6637 = vsub.f32 %v5487, %v6636
    %v6638 = vand.u32 %v6637, 4294901760
    %v6639 = vsub.f32 %v6637, %v6638
    %v6640 = vand.u32 %v6639, 4294901760
    %6641 = vmatpush1.msra.mxu0 %v6640
    %6642 = vmatprep.subr.mxu0 0.0
    %v6643 = vand.u32 %v5488, 4294901760
    %v6644 = vsub.f32 %v5488, %v6643
    %v6645 = vand.u32 %v6644, 4294901760
    %v6646 = vsub.f32 %v6644, %v6645
    %v6647 = vand.u32 %v6646, 4294901760
    %6648 = vmatpush1.msra.mxu0 %v6647
    %6649 = vmatprep.subr.mxu0 0.0
    %v6650 = vand.u32 %v5489, 4294901760
    %v6651 = vsub.f32 %v5489, %v6650
    %v6652 = vand.u32 %v6651, 4294901760
    %v6653 = vsub.f32 %v6651, %v6652
    %v6654 = vand.u32 %v6653, 4294901760
    %6655 = vmatpush1.msra.mxu0 %v6654
    %6656 = vmatprep.subr.mxu0 0.0
    %v6657 = vand.u32 %v5490, 4294901760
    %v6658 = vsub.f32 %v5490, %v6657
    %v6659 = vand.u32 %v6658, 4294901760
    %v6660 = vsub.f32 %v6658, %v6659
    %v6661 = vand.u32 %v6660, 4294901760
    %6662 = vmatpush1.msra.mxu0 %v6661
    %6663 = vmatprep.subr.mxu0 0.0
    %v6664 = vand.u32 %v5491, 4294901760
    %v6665 = vsub.f32 %v5491, %v6664
    %v6666 = vand.u32 %v6665, 4294901760
    %v6667 = vsub.f32 %v6665, %v6666
    %v6668 = vand.u32 %v6667, 4294901760
    %6669 = vmatpush1.msra.mxu0 %v6668
    %6670 = vmatprep.subr.mxu0 0.0
    %v6671 = vand.u32 %v5492, 4294901760
    %v6672 = vsub.f32 %v5492, %v6671
    %v6673 = vand.u32 %v6672, 4294901760
    %v6674 = vsub.f32 %v6672, %v6673
    %v6675 = vand.u32 %v6674, 4294901760
    %6676 = vmatpush1.msra.mxu0 %v6675
    %6677 = vmatprep.subr.mxu0 0.0
    %v6678 = vand.u32 %v5493, 4294901760
    %v6679 = vsub.f32 %v5493, %v6678
    %v6680 = vand.u32 %v6679, 4294901760
    %v6681 = vsub.f32 %v6679, %v6680
    %v6682 = vand.u32 %v6681, 4294901760
    %6683 = vmatpush1.msra.mxu0 %v6682
    %6684 = vmatprep.subr.mxu0 0.0
    %v6685 = vand.u32 %v5494, 4294901760
    %v6686 = vsub.f32 %v5494, %v6685
    %v6687 = vand.u32 %v6686, 4294901760
    %v6688 = vsub.f32 %v6686, %v6687
    %v6689 = vand.u32 %v6688, 4294901760
    %6690 = vmatpush1.msra.mxu0 %v6689
    %6691 = vmatprep.subr.mxu0 0.0
    %v6692 = vand.u32 %v5495, 4294901760
    %v6693 = vsub.f32 %v5495, %v6692
    %v6694 = vand.u32 %v6693, 4294901760
    %v6695 = vsub.f32 %v6693, %v6694
    %v6696 = vand.u32 %v6695, 4294901760
    %6697 = vmatpush1.msra.mxu0 %v6696
    %6698 = vmatprep.subr.mxu0 0.0
    %v6699 = vand.u32 %v5496, 4294901760
    %v6700 = vsub.f32 %v5496, %v6699
    %v6701 = vand.u32 %v6700, 4294901760
    %v6702 = vsub.f32 %v6700, %v6701
    %v6703 = vand.u32 %v6702, 4294901760
    %6704 = vmatpush1.msra.mxu0 %v6703
    %6705 = vmatprep.subr.mxu0 0.0
    %v6706 = vand.u32 %v5497, 4294901760
    %v6707 = vsub.f32 %v5497, %v6706
    %v6708 = vand.u32 %v6707, 4294901760
    %v6709 = vsub.f32 %v6707, %v6708
    %v6710 = vand.u32 %v6709, 4294901760
    %6711 = vmatpush1.msra.mxu0 %v6710
    %6712 = vmatprep.subr.mxu0 0.0
    %v6713 = vand.u32 %v5498, 4294901760
    %v6714 = vsub.f32 %v5498, %v6713
    %v6715 = vand.u32 %v6714, 4294901760
    %v6716 = vsub.f32 %v6714, %v6715
    %v6717 = vand.u32 %v6716, 4294901760
    %6718 = vmatpush1.msra.mxu0 %v6717
    %6719 = vmatprep.subr.mxu0 0.0
    %v6720 = vand.u32 %v5499, 4294901760
    %v6721 = vsub.f32 %v5499, %v6720
    %v6722 = vand.u32 %v6721, 4294901760
    %v6723 = vsub.f32 %v6721, %v6722
    %v6724 = vand.u32 %v6723, 4294901760
    %6725 = vmatpush1.msra.mxu0 %v6724
    %6726 = vmatprep.subr.mxu0 0.0
    %v6727 = vand.u32 %v5500, 4294901760
    %v6728 = vsub.f32 %v5500, %v6727
    %v6729 = vand.u32 %v6728, 4294901760
    %v6730 = vsub.f32 %v6728, %v6729
    %v6731 = vand.u32 %v6730, 4294901760
    %6732 = vmatpush1.msra.mxu0 %v6731
    %6733 = vmatprep.subr.mxu0 0.0
    %v6734 = vand.u32 %v5501, 4294901760
    %v6735 = vsub.f32 %v5501, %v6734
    %v6736 = vand.u32 %v6735, 4294901760
    %v6737 = vsub.f32 %v6735, %v6736
    %v6738 = vand.u32 %v6737, 4294901760
    %6739 = vmatpush1.msra.mxu0 %v6738
    %6740 = vmatprep.subr.mxu0 0.0
    %v6741 = vand.u32 %v5502, 4294901760
    %v6742 = vsub.f32 %v5502, %v6741
    %v6743 = vand.u32 %v6742, 4294901760
    %v6744 = vsub.f32 %v6742, %v6743
    %v6745 = vand.u32 %v6744, 4294901760
    %6746 = vmatpush1.msra.mxu0 %v6745
    %6747 = vmatprep.subr.mxu0 0.0
    %v6748 = vand.u32 %v5503, 4294901760
    %v6749 = vsub.f32 %v5503, %v6748
    %v6750 = vand.u32 %v6749, 4294901760
    %v6751 = vsub.f32 %v6749, %v6750
    %v6752 = vand.u32 %v6751, 4294901760
    %6753 = vmatpush1.msra.mxu0 %v6752
    %6754 = vmatprep.subr.mxu0 0.0
    %v6755 = vand.u32 %v5504, 4294901760
    %v6756 = vsub.f32 %v5504, %v6755
    %v6757 = vand.u32 %v6756, 4294901760
    %v6758 = vsub.f32 %v6756, %v6757
    %v6759 = vand.u32 %v6758, 4294901760
    %6760 = vmatpush1.msra.mxu0 %v6759
    %6761 = vmatprep.subr.mxu0 0.0
    %v6762 = vand.u32 %v5505, 4294901760
    %v6763 = vsub.f32 %v5505, %v6762
    %v6764 = vand.u32 %v6763, 4294901760
    %v6765 = vsub.f32 %v6763, %v6764
    %v6766 = vand.u32 %v6765, 4294901760
    %6767 = vmatpush1.msra.mxu0 %v6766
    %v6768 = vand.u32 %v5437, 4294901760
    %6769 = vmatprep.mubr.f32.mxu0 %v6768
    %v6770 = vand.u32 %v5436, 4294901760
    %6771 = vmatmul.mubr.f32.gmra.mrb[0].mxu0 %v6770
    %v6772 = vpop.f32.mrb[0].mxu0
    %v6773 = vadd.f32 %v6541, %v6772
    %v6774 = vpop.f32.mrb[0].mxu0
    %6775 = vdwg.mxu0
    %6776 = vmatprep.subr.mxu0 0.0
    %v6777 = vand.u32 %v5474, 4294901760
    %v6778 = vsub.f32 %v5474, %v6777
    %6779 = vmatpush1.msra.mxu0 %v6778
    %6780 = vmatprep.subr.mxu0 0.0
    %v6781 = vand.u32 %v5475, 4294901760
    %v6782 = vsub.f32 %v5475, %v6781
    %6783 = vmatpush1.msra.mxu0 %v6782
    %6784 = vmatprep.subr.mxu0 0.0
    %v6785 = vand.u32 %v5476, 4294901760
    %v6786 = vsub.f32 %v5476, %v6785
    %6787 = vmatpush1.msra.mxu0 %v6786
    %6788 = vmatprep.subr.mxu0 0.0
    %v6789 = vand.u32 %v5477, 4294901760
    %v6790 = vsub.f32 %v5477, %v6789
    %6791 = vmatpush1.msra.mxu0 %v6790
    %6792 = vmatprep.subr.mxu0 0.0
    %v6793 = vand.u32 %v5478, 4294901760
    %v6794 = vsub.f32 %v5478, %v6793
    %6795 = vmatpush1.msra.mxu0 %v6794
    %6796 = vmatprep.subr.mxu0 0.0
    %v6797 = vand.u32 %v5479, 4294901760
    %v6798 = vsub.f32 %v5479, %v6797
    %6799 = vmatpush1.msra.mxu0 %v6798
    %6800 = vmatprep.subr.mxu0 0.0
    %v6801 = vand.u32 %v5480, 4294901760
    %v6802 = vsub.f32 %v5480, %v6801
    %6803 = vmatpush1.msra.mxu0 %v6802
    %6804 = vmatprep.subr.mxu0 0.0
    %v6805 = vand.u32 %v5481, 4294901760
    %v6806 = vsub.f32 %v5481, %v6805
    %6807 = vmatpush1.msra.mxu0 %v6806
    %6808 = vmatprep.subr.mxu0 0.0
    %v6809 = vand.u32 %v5482, 4294901760
    %v6810 = vsub.f32 %v5482, %v6809
    %6811 = vmatpush1.msra.mxu0 %v6810
    %6812 = vmatprep.subr.mxu0 0.0
    %v6813 = vand.u32 %v5483, 4294901760
    %v6814 = vsub.f32 %v5483, %v6813
    %6815 = vmatpush1.msra.mxu0 %v6814
    %6816 = vmatprep.subr.mxu0 0.0
    %v6817 = vand.u32 %v5484, 4294901760
    %v6818 = vsub.f32 %v5484, %v6817
    %6819 = vmatpush1.msra.mxu0 %v6818
    %6820 = vmatprep.subr.mxu0 0.0
    %v6821 = vand.u32 %v5485, 4294901760
    %v6822 = vsub.f32 %v5485, %v6821
    %6823 = vmatpush1.msra.mxu0 %v6822
    %6824 = vmatprep.subr.mxu0 0.0
    %v6825 = vand.u32 %v5486, 4294901760
    %v6826 = vsub.f32 %v5486, %v6825
    %6827 = vmatpush1.msra.mxu0 %v6826
    %6828 = vmatprep.subr.mxu0 0.0
    %v6829 = vand.u32 %v5487, 4294901760
    %v6830 = vsub.f32 %v5487, %v6829
    %6831 = vmatpush1.msra.mxu0 %v6830
    %6832 = vmatprep.subr.mxu0 0.0
    %v6833 = vand.u32 %v5488, 4294901760
    %v6834 = vsub.f32 %v5488, %v6833
    %6835 = vmatpush1.msra.mxu0 %v6834
    %6836 = vmatprep.subr.mxu0 0.0
    %v6837 = vand.u32 %v5489, 4294901760
    %v6838 = vsub.f32 %v5489, %v6837
    %6839 = vmatpush1.msra.mxu0 %v6838
    %6840 = vmatprep.subr.mxu0 0.0
    %v6841 = vand.u32 %v5490, 4294901760
    %v6842 = vsub.f32 %v5490, %v6841
    %6843 = vmatpush1.msra.mxu0 %v6842
    %6844 = vmatprep.subr.mxu0 0.0
    %v6845 = vand.u32 %v5491, 4294901760
    %v6846 = vsub.f32 %v5491, %v6845
    %6847 = vmatpush1.msra.mxu0 %v6846
    %6848 = vmatprep.subr.mxu0 0.0
    %v6849 = vand.u32 %v5492, 4294901760
    %v6850 = vsub.f32 %v5492, %v6849
    %6851 = vmatpush1.msra.mxu0 %v6850
    %6852 = vmatprep.subr.mxu0 0.0
    %v6853 = vand.u32 %v5493, 4294901760
    %v6854 = vsub.f32 %v5493, %v6853
    %6855 = vmatpush1.msra.mxu0 %v6854
    %6856 = vmatprep.subr.mxu0 0.0
    %v6857 = vand.u32 %v5494, 4294901760
    %v6858 = vsub.f32 %v5494, %v6857
    %6859 = vmatpush1.msra.mxu0 %v6858
    %6860 = vmatprep.subr.mxu0 0.0
    %v6861 = vand.u32 %v5495, 4294901760
    %v6862 = vsub.f32 %v5495, %v6861
    %6863 = vmatpush1.msra.mxu0 %v6862
    %6864 = vmatprep.subr.mxu0 0.0
    %v6865 = vand.u32 %v5496, 4294901760
    %v6866 = vsub.f32 %v5496, %v6865
    %6867 = vmatpush1.msra.mxu0 %v6866
    %6868 = vmatprep.subr.mxu0 0.0
    %v6869 = vand.u32 %v5497, 4294901760
    %v6870 = vsub.f32 %v5497, %v6869
    %6871 = vmatpush1.msra.mxu0 %v6870
    %6872 = vmatprep.subr.mxu0 0.0
    %v6873 = vand.u32 %v5498, 4294901760
    %v6874 = vsub.f32 %v5498, %v6873
    %6875 = vmatpush1.msra.mxu0 %v6874
    %6876 = vmatprep.subr.mxu0 0.0
    %v6877 = vand.u32 %v5499, 4294901760
    %v6878 = vsub.f32 %v5499, %v6877
    %6879 = vmatpush1.msra.mxu0 %v6878
    %6880 = vmatprep.subr.mxu0 0.0
    %v6881 = vand.u32 %v5500, 4294901760
    %v6882 = vsub.f32 %v5500, %v6881
    %6883 = vmatpush1.msra.mxu0 %v6882
    %6884 = vmatprep.subr.mxu0 0.0
    %v6885 = vand.u32 %v5501, 4294901760
    %v6886 = vsub.f32 %v5501, %v6885
    %6887 = vmatpush1.msra.mxu0 %v6886
    %6888 = vmatprep.subr.mxu0 0.0
    %v6889 = vand.u32 %v5502, 4294901760
    %v6890 = vsub.f32 %v5502, %v6889
    %6891 = vmatpush1.msra.mxu0 %v6890
    %6892 = vmatprep.subr.mxu0 0.0
    %v6893 = vand.u32 %v5503, 4294901760
    %v6894 = vsub.f32 %v5503, %v6893
    %6895 = vmatpush1.msra.mxu0 %v6894
    %6896 = vmatprep.subr.mxu0 0.0
    %v6897 = vand.u32 %v5504, 4294901760
    %v6898 = vsub.f32 %v5504, %v6897
    %6899 = vmatpush1.msra.mxu0 %v6898
    %6900 = vmatprep.subr.mxu0 0.0
    %v6901 = vand.u32 %v5505, 4294901760
    %v6902 = vsub.f32 %v5505, %v6901
    %6903 = vmatpush1.msra.mxu0 %v6902
    %v6904 = vand.u32 %v5437, 4294901760
    %v6905 = vsub.f32 %v5437, %v6904
    %6906 = vmatprep.mubr.f32.mxu0 %v6905
    %v6907 = vand.u32 %v5436, 4294901760
    %v6908 = vsub.f32 %v5436, %v6907
    %6909 = vmatmul.mubr.f32.gmra.mrb[0].mxu0 %v6908
    %v6910 = vpop.f32.mrb[0].mxu0
    %v6911 = vadd.f32 %v6773, %v6910
    %v6912 = vpop.f32.mrb[0].mxu0
    %6913 = vdwg.mxu0
    %6914 = vmatprep.subr.mxu0 0.0
    %v6915 = vand.u32 %v5474, 4294901760
    %6916 = vmatpush1.msra.mxu0 %v6915
    %6917 = vmatprep.subr.mxu0 0.0
    %v6918 = vand.u32 %v5475, 4294901760
    %6919 = vmatpush1.msra.mxu0 %v6918
    %6920 = vmatprep.subr.mxu0 0.0
    %v6921 = vand.u32 %v5476, 4294901760
    %6922 = vmatpush1.msra.mxu0 %v6921
    %6923 = vmatprep.subr.mxu0 0.0
    %v6924 = vand.u32 %v5477, 4294901760
    %6925 = vmatpush1.msra.mxu0 %v6924
    %6926 = vmatprep.subr.mxu0 0.0
    %v6927 = vand.u32 %v5478, 4294901760
    %6928 = vmatpush1.msra.mxu0 %v6927
    %6929 = vmatprep.subr.mxu0 0.0
    %v6930 = vand.u32 %v5479, 4294901760
    %6931 = vmatpush1.msra.mxu0 %v6930
    %6932 = vmatprep.subr.mxu0 0.0
    %v6933 = vand.u32 %v5480, 4294901760
    %6934 = vmatpush1.msra.mxu0 %v6933
    %6935 = vmatprep.subr.mxu0 0.0
    %v6936 = vand.u32 %v5481, 4294901760
    %6937 = vmatpush1.msra.mxu0 %v6936
    %6938 = vmatprep.subr.mxu0 0.0
    %v6939 = vand.u32 %v5482, 4294901760
    %6940 = vmatpush1.msra.mxu0 %v6939
    %6941 = vmatprep.subr.mxu0 0.0
    %v6942 = vand.u32 %v5483, 4294901760
    %6943 = vmatpush1.msra.mxu0 %v6942
    %6944 = vmatprep.subr.mxu0 0.0
    %v6945 = vand.u32 %v5484, 4294901760
    %6946 = vmatpush1.msra.mxu0 %v6945
    %6947 = vmatprep.subr.mxu0 0.0
    %v6948 = vand.u32 %v5485, 4294901760
    %6949 = vmatpush1.msra.mxu0 %v6948
    %6950 = vmatprep.subr.mxu0 0.0
    %v6951 = vand.u32 %v5486, 4294901760
    %6952 = vmatpush1.msra.mxu0 %v6951
    %6953 = vmatprep.subr.mxu0 0.0
    %v6954 = vand.u32 %v5487, 4294901760
    %6955 = vmatpush1.msra.mxu0 %v6954
    %6956 = vmatprep.subr.mxu0 0.0
    %v6957 = vand.u32 %v5488, 4294901760
    %6958 = vmatpush1.msra.mxu0 %v6957
    %6959 = vmatprep.subr.mxu0 0.0
    %v6960 = vand.u32 %v5489, 4294901760
    %6961 = vmatpush1.msra.mxu0 %v6960
    %6962 = vmatprep.subr.mxu0 0.0
    %v6963 = vand.u32 %v5490, 4294901760
    %6964 = vmatpush1.msra.mxu0 %v6963
    %6965 = vmatprep.subr.mxu0 0.0
    %v6966 = vand.u32 %v5491, 4294901760
    %6967 = vmatpush1.msra.mxu0 %v6966
    %6968 = vmatprep.subr.mxu0 0.0
    %v6969 = vand.u32 %v5492, 4294901760
    %6970 = vmatpush1.msra.mxu0 %v6969
    %6971 = vmatprep.subr.mxu0 0.0
    %v6972 = vand.u32 %v5493, 4294901760
    %6973 = vmatpush1.msra.mxu0 %v6972
    %6974 = vmatprep.subr.mxu0 0.0
    %v6975 = vand.u32 %v5494, 4294901760
    %6976 = vmatpush1.msra.mxu0 %v6975
    %6977 = vmatprep.subr.mxu0 0.0
    %v6978 = vand.u32 %v5495, 4294901760
    %6979 = vmatpush1.msra.mxu0 %v6978
    %6980 = vmatprep.subr.mxu0 0.0
    %v6981 = vand.u32 %v5496, 4294901760
    %6982 = vmatpush1.msra.mxu0 %v6981
    %6983 = vmatprep.subr.mxu0 0.0
    %v6984 = vand.u32 %v5497, 4294901760
    %6985 = vmatpush1.msra.mxu0 %v6984
    %6986 = vmatprep.subr.mxu0 0.0
    %v6987 = vand.u32 %v5498, 4294901760
    %6988 = vmatpush1.msra.mxu0 %v6987
    %6989 = vmatprep.subr.mxu0 0.0
    %v6990 = vand.u32 %v5499, 4294901760
    %6991 = vmatpush1.msra.mxu0 %v6990
    %6992 = vmatprep.subr.mxu0 0.0
    %v6993 = vand.u32 %v5500, 4294901760
    %6994 = vmatpush1.msra.mxu0 %v6993
    %6995 = vmatprep.subr.mxu0 0.0
    %v6996 = vand.u32 %v5501, 4294901760
    %6997 = vmatpush1.msra.mxu0 %v6996
    %6998 = vmatprep.subr.mxu0 0.0
    %v6999 = vand.u32 %v5502, 4294901760
    %7000 = vmatpush1.msra.mxu0 %v6999
    %7001 = vmatprep.subr.mxu0 0.0
    %v7002 = vand.u32 %v5503, 4294901760
    %7003 = vmatpush1.msra.mxu0 %v7002
    %7004 = vmatprep.subr.mxu0 0.0
    %v7005 = vand.u32 %v5504, 4294901760
    %7006 = vmatpush1.msra.mxu0 %v7005
    %7007 = vmatprep.subr.mxu0 0.0
    %v7008 = vand.u32 %v5505, 4294901760
    %7009 = vmatpush1.msra.mxu0 %v7008
    %v7010 = vand.u32 %v5437, 4294901760
    %v7011 = vsub.f32 %v5437, %v7010
    %v7012 = vand.u32 %v7011, 4294901760
    %7013 = vmatprep.mubr.f32.mxu0 %v7012
    %v7014 = vand.u32 %v5436, 4294901760
    %v7015 = vsub.f32 %v5436, %v7014
    %v7016 = vand.u32 %v7015, 4294901760
    %7017 = vmatmul.mubr.f32.gmra.mrb[0].mxu0 %v7016
    %v7018 = vpop.f32.mrb[0].mxu0
    %v7019 = vadd.f32 %v6911, %v7018
    %v7020 = vpop.f32.mrb[0].mxu0
    %7021 = vdwg.mxu0
    %7022 = vmatprep.subr.mxu0 0.0
    %v7023 = vand.u32 %v5474, 4294901760
    %v7024 = vsub.f32 %v5474, %v7023
    %v7025 = vand.u32 %v7024, 4294901760
    %7026 = vmatpush1.msra.mxu0 %v7025
    %7027 = vmatprep.subr.mxu0 0.0
    %v7028 = vand.u32 %v5475, 4294901760
    %v7029 = vsub.f32 %v5475, %v7028
    %v7030 = vand.u32 %v7029, 4294901760
    %7031 = vmatpush1.msra.mxu0 %v7030
    %7032 = vmatprep.subr.mxu0 0.0
    %v7033 = vand.u32 %v5476, 4294901760
    %v7034 = vsub.f32 %v5476, %v7033
    %v7035 = vand.u32 %v7034, 4294901760
    %7036 = vmatpush1.msra.mxu0 %v7035
    %7037 = vmatprep.subr.mxu0 0.0
    %v7038 = vand.u32 %v5477, 4294901760
    %v7039 = vsub.f32 %v5477, %v7038
    %v7040 = vand.u32 %v7039, 4294901760
    %7041 = vmatpush1.msra.mxu0 %v7040
    %7042 = vmatprep.subr.mxu0 0.0
    %v7043 = vand.u32 %v5478, 4294901760
    %v7044 = vsub.f32 %v5478, %v7043
    %v7045 = vand.u32 %v7044, 4294901760
    %7046 = vmatpush1.msra.mxu0 %v7045
    %7047 = vmatprep.subr.mxu0 0.0
    %v7048 = vand.u32 %v5479, 4294901760
    %v7049 = vsub.f32 %v5479, %v7048
    %v7050 = vand.u32 %v7049, 4294901760
    %7051 = vmatpush1.msra.mxu0 %v7050
    %7052 = vmatprep.subr.mxu0 0.0
    %v7053 = vand.u32 %v5480, 4294901760
    %v7054 = vsub.f32 %v5480, %v7053
    %v7055 = vand.u32 %v7054, 4294901760
    %7056 = vmatpush1.msra.mxu0 %v7055
    %7057 = vmatprep.subr.mxu0 0.0
    %v7058 = vand.u32 %v5481, 4294901760
    %v7059 = vsub.f32 %v5481, %v7058
    %v7060 = vand.u32 %v7059, 4294901760
    %7061 = vmatpush1.msra.mxu0 %v7060
    %7062 = vmatprep.subr.mxu0 0.0
    %v7063 = vand.u32 %v5482, 4294901760
    %v7064 = vsub.f32 %v5482, %v7063
    %v7065 = vand.u32 %v7064, 4294901760
    %7066 = vmatpush1.msra.mxu0 %v7065
    %7067 = vmatprep.subr.mxu0 0.0
    %v7068 = vand.u32 %v5483, 4294901760
    %v7069 = vsub.f32 %v5483, %v7068
    %v7070 = vand.u32 %v7069, 4294901760
    %7071 = vmatpush1.msra.mxu0 %v7070
    %7072 = vmatprep.subr.mxu0 0.0
    %v7073 = vand.u32 %v5484, 4294901760
    %v7074 = vsub.f32 %v5484, %v7073
    %v7075 = vand.u32 %v7074, 4294901760
    %7076 = vmatpush1.msra.mxu0 %v7075
    %7077 = vmatprep.subr.mxu0 0.0
    %v7078 = vand.u32 %v5485, 4294901760
    %v7079 = vsub.f32 %v5485, %v7078
    %v7080 = vand.u32 %v7079, 4294901760
    %7081 = vmatpush1.msra.mxu0 %v7080
    %7082 = vmatprep.subr.mxu0 0.0
    %v7083 = vand.u32 %v5486, 4294901760
    %v7084 = vsub.f32 %v5486, %v7083
    %v7085 = vand.u32 %v7084, 4294901760
    %7086 = vmatpush1.msra.mxu0 %v7085
    %7087 = vmatprep.subr.mxu0 0.0
    %v7088 = vand.u32 %v5487, 4294901760
    %v7089 = vsub.f32 %v5487, %v7088
    %v7090 = vand.u32 %v7089, 4294901760
    %7091 = vmatpush1.msra.mxu0 %v7090
    %7092 = vmatprep.subr.mxu0 0.0
    %v7093 = vand.u32 %v5488, 4294901760
    %v7094 = vsub.f32 %v5488, %v7093
    %v7095 = vand.u32 %v7094, 4294901760
    %7096 = vmatpush1.msra.mxu0 %v7095
    %7097 = vmatprep.subr.mxu0 0.0
    %v7098 = vand.u32 %v5489, 4294901760
    %v7099 = vsub.f32 %v5489, %v7098
    %v7100 = vand.u32 %v7099, 4294901760
    %7101 = vmatpush1.msra.mxu0 %v7100
    %7102 = vmatprep.subr.mxu0 0.0
    %v7103 = vand.u32 %v5490, 4294901760
    %v7104 = vsub.f32 %v5490, %v7103
    %v7105 = vand.u32 %v7104, 4294901760
    %7106 = vmatpush1.msra.mxu0 %v7105
    %7107 = vmatprep.subr.mxu0 0.0
    %v7108 = vand.u32 %v5491, 4294901760
    %v7109 = vsub.f32 %v5491, %v7108
    %v7110 = vand.u32 %v7109, 4294901760
    %7111 = vmatpush1.msra.mxu0 %v7110
    %7112 = vmatprep.subr.mxu0 0.0
    %v7113 = vand.u32 %v5492, 4294901760
    %v7114 = vsub.f32 %v5492, %v7113
    %v7115 = vand.u32 %v7114, 4294901760
    %7116 = vmatpush1.msra.mxu0 %v7115
    %7117 = vmatprep.subr.mxu0 0.0
    %v7118 = vand.u32 %v5493, 4294901760
    %v7119 = vsub.f32 %v5493, %v7118
    %v7120 = vand.u32 %v7119, 4294901760
    %7121 = vmatpush1.msra.mxu0 %v7120
    %7122 = vmatprep.subr.mxu0 0.0
    %v7123 = vand.u32 %v5494, 4294901760
    %v7124 = vsub.f32 %v5494, %v7123
    %v7125 = vand.u32 %v7124, 4294901760
    %7126 = vmatpush1.msra.mxu0 %v7125
    %7127 = vmatprep.subr.mxu0 0.0
    %v7128 = vand.u32 %v5495, 4294901760
    %v7129 = vsub.f32 %v5495, %v7128
    %v7130 = vand.u32 %v7129, 4294901760
    %7131 = vmatpush1.msra.mxu0 %v7130
    %7132 = vmatprep.subr.mxu0 0.0
    %v7133 = vand.u32 %v5496, 4294901760
    %v7134 = vsub.f32 %v5496, %v7133
    %v7135 = vand.u32 %v7134, 4294901760
    %7136 = vmatpush1.msra.mxu0 %v7135
    %7137 = vmatprep.subr.mxu0 0.0
    %v7138 = vand.u32 %v5497, 4294901760
    %v7139 = vsub.f32 %v5497, %v7138
    %v7140 = vand.u32 %v7139, 4294901760
    %7141 = vmatpush1.msra.mxu0 %v7140
    %7142 = vmatprep.subr.mxu0 0.0
    %v7143 = vand.u32 %v5498, 4294901760
    %v7144 = vsub.f32 %v5498, %v7143
    %v7145 = vand.u32 %v7144, 4294901760
    %7146 = vmatpush1.msra.mxu0 %v7145
    %7147 = vmatprep.subr.mxu0 0.0
    %v7148 = vand.u32 %v5499, 4294901760
    %v7149 = vsub.f32 %v5499, %v7148
    %v7150 = vand.u32 %v7149, 4294901760
    %7151 = vmatpush1.msra.mxu0 %v7150
    %7152 = vmatprep.subr.mxu0 0.0
    %v7153 = vand.u32 %v5500, 4294901760
    %v7154 = vsub.f32 %v5500, %v7153
    %v7155 = vand.u32 %v7154, 4294901760
    %7156 = vmatpush1.msra.mxu0 %v7155
    %7157 = vmatprep.subr.mxu0 0.0
    %v7158 = vand.u32 %v5501, 4294901760
    %v7159 = vsub.f32 %v5501, %v7158
    %v7160 = vand.u32 %v7159, 4294901760
    %7161 = vmatpush1.msra.mxu0 %v7160
    %7162 = vmatprep.subr.mxu0 0.0
    %v7163 = vand.u32 %v5502, 4294901760
    %v7164 = vsub.f32 %v5502, %v7163
    %v7165 = vand.u32 %v7164, 4294901760
    %7166 = vmatpush1.msra.mxu0 %v7165
    %7167 = vmatprep.subr.mxu0 0.0
    %v7168 = vand.u32 %v5503, 4294901760
    %v7169 = vsub.f32 %v5503, %v7168
    %v7170 = vand.u32 %v7169, 4294901760
    %7171 = vmatpush1.msra.mxu0 %v7170
    %7172 = vmatprep.subr.mxu0 0.0
    %v7173 = vand.u32 %v5504, 4294901760
    %v7174 = vsub.f32 %v5504, %v7173
    %v7175 = vand.u32 %v7174, 4294901760
    %7176 = vmatpush1.msra.mxu0 %v7175
    %7177 = vmatprep.subr.mxu0 0.0
    %v7178 = vand.u32 %v5505, 4294901760
    %v7179 = vsub.f32 %v5505, %v7178
    %v7180 = vand.u32 %v7179, 4294901760
    %7181 = vmatpush1.msra.mxu0 %v7180
    %v7182 = vand.u32 %v5437, 4294901760
    %7183 = vmatprep.mubr.f32.mxu0 %v7182
    %v7184 = vand.u32 %v5436, 4294901760
    %7185 = vmatmul.mubr.f32.gmra.mrb[0].mxu0 %v7184
    %v7186 = vpop.f32.mrb[0].mxu0
    %v7187 = vadd.f32 %v7019, %v7186
    %v7188 = vpop.f32.mrb[0].mxu0
    %7189 = vdwg.mxu0
    %7190 = vmatprep.subr.mxu0 0.0
    %v7191 = vand.u32 %v5474, 4294901760
    %7192 = vmatpush1.msra.mxu0 %v7191
    %7193 = vmatprep.subr.mxu0 0.0
    %v7194 = vand.u32 %v5475, 4294901760
    %7195 = vmatpush1.msra.mxu0 %v7194
    %7196 = vmatprep.subr.mxu0 0.0
    %v7197 = vand.u32 %v5476, 4294901760
    %7198 = vmatpush1.msra.mxu0 %v7197
    %7199 = vmatprep.subr.mxu0 0.0
    %v7200 = vand.u32 %v5477, 4294901760
    %7201 = vmatpush1.msra.mxu0 %v7200
    %7202 = vmatprep.subr.mxu0 0.0
    %v7203 = vand.u32 %v5478, 4294901760
    %7204 = vmatpush1.msra.mxu0 %v7203
    %7205 = vmatprep.subr.mxu0 0.0
    %v7206 = vand.u32 %v5479, 4294901760
    %7207 = vmatpush1.msra.mxu0 %v7206
    %7208 = vmatprep.subr.mxu0 0.0
    %v7209 = vand.u32 %v5480, 4294901760
    %7210 = vmatpush1.msra.mxu0 %v7209
    %7211 = vmatprep.subr.mxu0 0.0
    %v7212 = vand.u32 %v5481, 4294901760
    %7213 = vmatpush1.msra.mxu0 %v7212
    %7214 = vmatprep.subr.mxu0 0.0
    %v7215 = vand.u32 %v5482, 4294901760
    %7216 = vmatpush1.msra.mxu0 %v7215
    %7217 = vmatprep.subr.mxu0 0.0
    %v7218 = vand.u32 %v5483, 4294901760
    %7219 = vmatpush1.msra.mxu0 %v7218
    %7220 = vmatprep.subr.mxu0 0.0
    %v7221 = vand.u32 %v5484, 4294901760
    %7222 = vmatpush1.msra.mxu0 %v7221
    %7223 = vmatprep.subr.mxu0 0.0
    %v7224 = vand.u32 %v5485, 4294901760
    %7225 = vmatpush1.msra.mxu0 %v7224
    %7226 = vmatprep.subr.mxu0 0.0
    %v7227 = vand.u32 %v5486, 4294901760
    %7228 = vmatpush1.msra.mxu0 %v7227
    %7229 = vmatprep.subr.mxu0 0.0
    %v7230 = vand.u32 %v5487, 4294901760
    %7231 = vmatpush1.msra.mxu0 %v7230
    %7232 = vmatprep.subr.mxu0 0.0
    %v7233 = vand.u32 %v5488, 4294901760
    %7234 = vmatpush1.msra.mxu0 %v7233
    %7235 = vmatprep.subr.mxu0 0.0
    %v7236 = vand.u32 %v5489, 4294901760
    %7237 = vmatpush1.msra.mxu0 %v7236
    %7238 = vmatprep.subr.mxu0 0.0
    %v7239 = vand.u32 %v5490, 4294901760
    %7240 = vmatpush1.msra.mxu0 %v7239
    %7241 = vmatprep.subr.mxu0 0.0
    %v7242 = vand.u32 %v5491, 4294901760
    %7243 = vmatpush1.msra.mxu0 %v7242
    %7244 = vmatprep.subr.mxu0 0.0
    %v7245 = vand.u32 %v5492, 4294901760
    %7246 = vmatpush1.msra.mxu0 %v7245
    %7247 = vmatprep.subr.mxu0 0.0
    %v7248 = vand.u32 %v5493, 4294901760
    %7249 = vmatpush1.msra.mxu0 %v7248
    %7250 = vmatprep.subr.mxu0 0.0
    %v7251 = vand.u32 %v5494, 4294901760
    %7252 = vmatpush1.msra.mxu0 %v7251
    %7253 = vmatprep.subr.mxu0 0.0
    %v7254 = vand.u32 %v5495, 4294901760
    %7255 = vmatpush1.msra.mxu0 %v7254
    %7256 = vmatprep.subr.mxu0 0.0
    %v7257 = vand.u32 %v5496, 4294901760
    %7258 = vmatpush1.msra.mxu0 %v7257
    %7259 = vmatprep.subr.mxu0 0.0
    %v7260 = vand.u32 %v5497, 4294901760
    %7261 = vmatpush1.msra.mxu0 %v7260
    %7262 = vmatprep.subr.mxu0 0.0
    %v7263 = vand.u32 %v5498, 4294901760
    %7264 = vmatpush1.msra.mxu0 %v7263
    %7265 = vmatprep.subr.mxu0 0.0
    %v7266 = vand.u32 %v5499, 4294901760
    %7267 = vmatpush1.msra.mxu0 %v7266
    %7268 = vmatprep.subr.mxu0 0.0
    %v7269 = vand.u32 %v5500, 4294901760
    %7270 = vmatpush1.msra.mxu0 %v7269
    %7271 = vmatprep.subr.mxu0 0.0
    %v7272 = vand.u32 %v5501, 4294901760
    %7273 = vmatpush1.msra.mxu0 %v7272
    %7274 = vmatprep.subr.mxu0 0.0
    %v7275 = vand.u32 %v5502, 4294901760
    %7276 = vmatpush1.msra.mxu0 %v7275
    %7277 = vmatprep.subr.mxu0 0.0
    %v7278 = vand.u32 %v5503, 4294901760
    %7279 = vmatpush1.msra.mxu0 %v7278
    %7280 = vmatprep.subr.mxu0 0.0
    %v7281 = vand.u32 %v5504, 4294901760
    %7282 = vmatpush1.msra.mxu0 %v7281
    %7283 = vmatprep.subr.mxu0 0.0
    %v7284 = vand.u32 %v5505, 4294901760
    %7285 = vmatpush1.msra.mxu0 %v7284
    %v7286 = vand.u32 %v5437, 4294901760
    %7287 = vmatprep.mubr.f32.mxu0 %v7286
    %v7288 = vand.u32 %v5436, 4294901760
    %7289 = vmatmul.mubr.f32.gmra.mrb[0].mxu0 %v7288
    %v7290 = vpop.f32.mrb[0].mxu0
    %v7291 = vadd.f32 %v7187, %v7290
    %v7292 = vpop.f32.mrb[0].mxu0
    %7293 = vdwg.mxu0
    %7294 = vmatprep.subr.mxu0 0.0
    %v7295 = vand.u32 %v5506, 4294901760
    %7296 = vmatpush1.msra.mxu0 %v7295
    %7297 = vmatprep.subr.mxu0 0.0
    %v7298 = vand.u32 %v5507, 4294901760
    %7299 = vmatpush1.msra.mxu0 %v7298
    %7300 = vmatprep.subr.mxu0 0.0
    %v7301 = vand.u32 %v5508, 4294901760
    %7302 = vmatpush1.msra.mxu0 %v7301
    %7303 = vmatprep.subr.mxu0 0.0
    %v7304 = vand.u32 %v5509, 4294901760
    %7305 = vmatpush1.msra.mxu0 %v7304
    %7306 = vmatprep.subr.mxu0 0.0
    %v7307 = vand.u32 %v5510, 4294901760
    %7308 = vmatpush1.msra.mxu0 %v7307
    %7309 = vmatprep.subr.mxu0 0.0
    %v7310 = vand.u32 %v5511, 4294901760
    %7311 = vmatpush1.msra.mxu0 %v7310
    %7312 = vmatprep.subr.mxu0 0.0
    %v7313 = vand.u32 %v5512, 4294901760
    %7314 = vmatpush1.msra.mxu0 %v7313
    %7315 = vmatprep.subr.mxu0 0.0
    %v7316 = vand.u32 %v5513, 4294901760
    %7317 = vmatpush1.msra.mxu0 %v7316
    %7318 = vmatprep.subr.mxu0 0.0
    %v7319 = vand.u32 %v5514, 4294901760
    %7320 = vmatpush1.msra.mxu0 %v7319
    %7321 = vmatprep.subr.mxu0 0.0
    %v7322 = vand.u32 %v5515, 4294901760
    %7323 = vmatpush1.msra.mxu0 %v7322
    %7324 = vmatprep.subr.mxu0 0.0
    %v7325 = vand.u32 %v5516, 4294901760
    %7326 = vmatpush1.msra.mxu0 %v7325
    %7327 = vmatprep.subr.mxu0 0.0
    %v7328 = vand.u32 %v5517, 4294901760
    %7329 = vmatpush1.msra.mxu0 %v7328
    %7330 = vmatprep.subr.mxu0 0.0
    %v7331 = vand.u32 %v5518, 4294901760
    %7332 = vmatpush1.msra.mxu0 %v7331
    %7333 = vmatprep.subr.mxu0 0.0
    %v7334 = vand.u32 %v5519, 4294901760
    %7335 = vmatpush1.msra.mxu0 %v7334
    %7336 = vmatprep.subr.mxu0 0.0
    %v7337 = vand.u32 %v5520, 4294901760
    %7338 = vmatpush1.msra.mxu0 %v7337
    %7339 = vmatprep.subr.mxu0 0.0
    %v7340 = vand.u32 %v5521, 4294901760
    %7341 = vmatpush1.msra.mxu0 %v7340
    %7342 = vmatprep.subr.mxu0 0.0
    %v7343 = vand.u32 %v5522, 4294901760
    %7344 = vmatpush1.msra.mxu0 %v7343
    %7345 = vmatprep.subr.mxu0 0.0
    %v7346 = vand.u32 %v5523, 4294901760
    %7347 = vmatpush1.msra.mxu0 %v7346
    %7348 = vmatprep.subr.mxu0 0.0
    %v7349 = vand.u32 %v5524, 4294901760
    %7350 = vmatpush1.msra.mxu0 %v7349
    %7351 = vmatprep.subr.mxu0 0.0
    %v7352 = vand.u32 %v5525, 4294901760
    %7353 = vmatpush1.msra.mxu0 %v7352
    %7354 = vmatprep.subr.mxu0 0.0
    %v7355 = vand.u32 %v5526, 4294901760
    %7356 = vmatpush1.msra.mxu0 %v7355
    %7357 = vmatprep.subr.mxu0 0.0
    %v7358 = vand.u32 %v5527, 4294901760
    %7359 = vmatpush1.msra.mxu0 %v7358
    %7360 = vmatprep.subr.mxu0 0.0
    %v7361 = vand.u32 %v5528, 4294901760
    %7362 = vmatpush1.msra.mxu0 %v7361
    %7363 = vmatprep.subr.mxu0 0.0
    %v7364 = vand.u32 %v5529, 4294901760
    %7365 = vmatpush1.msra.mxu0 %v7364
    %7366 = vmatprep.subr.mxu0 0.0
    %v7367 = vand.u32 %v5530, 4294901760
    %7368 = vmatpush1.msra.mxu0 %v7367
    %7369 = vmatprep.subr.mxu0 0.0
    %v7370 = vand.u32 %v5531, 4294901760
    %7371 = vmatpush1.msra.mxu0 %v7370
    %7372 = vmatprep.subr.mxu0 0.0
    %v7373 = vand.u32 %v5532, 4294901760
    %7374 = vmatpush1.msra.mxu0 %v7373
    %7375 = vmatprep.subr.mxu0 0.0
    %v7376 = vand.u32 %v5533, 4294901760
    %7377 = vmatpush1.msra.mxu0 %v7376
    %7378 = vmatprep.subr.mxu0 0.0
    %v7379 = vand.u32 %v5534, 4294901760
    %7380 = vmatpush1.msra.mxu0 %v7379
    %7381 = vmatprep.subr.mxu0 0.0
    %v7382 = vand.u32 %v5535, 4294901760
    %7383 = vmatpush1.msra.mxu0 %v7382
    %7384 = vmatprep.subr.mxu0 0.0
    %v7385 = vand.u32 %v5536, 4294901760
    %7386 = vmatpush1.msra.mxu0 %v7385
    %7387 = vmatprep.subr.mxu0 0.0
    %v7388 = vand.u32 %v5537, 4294901760
    %7389 = vmatpush1.msra.mxu0 %v7388
    %v7390 = vand.u32 %v5439, 4294901760
    %v7391 = vsub.f32 %v5439, %v7390
    %v7392 = vand.u32 %v7391, 4294901760
    %v7393 = vsub.f32 %v7391, %v7392
    %v7394 = vand.u32 %v7393, 4294901760
    %7395 = vmatprep.mubr.f32.mxu0 %v7394
    %v7396 = vand.u32 %v5438, 4294901760
    %v7397 = vsub.f32 %v5438, %v7396
    %v7398 = vand.u32 %v7397, 4294901760
    %v7399 = vsub.f32 %v7397, %v7398
    %v7400 = vand.u32 %v7399, 4294901760
    %7401 = vmatmul.mubr.f32.gmra.mrb[0].mxu0 %v7400
    %v7402 = vpop.f32.mrb[0].mxu0
    %v7403 = vadd.f32 %v7291, %v7402
    %v7404 = vpop.f32.mrb[0].mxu0
    %7405 = vdwg.mxu0
    %7406 = vmatprep.subr.mxu0 0.0
    %v7407 = vand.u32 %v5506, 4294901760
    %v7408 = vsub.f32 %v5506, %v7407
    %v7409 = vand.u32 %v7408, 4294901760
    %v7410 = vsub.f32 %v7408, %v7409
    %v7411 = vand.u32 %v7410, 4294901760
    %7412 = vmatpush1.msra.mxu0 %v7411
    %7413 = vmatprep.subr.mxu0 0.0
    %v7414 = vand.u32 %v5507, 4294901760
    %v7415 = vsub.f32 %v5507, %v7414
    %v7416 = vand.u32 %v7415, 4294901760
    %v7417 = vsub.f32 %v7415, %v7416
    %v7418 = vand.u32 %v7417, 4294901760
    %7419 = vmatpush1.msra.mxu0 %v7418
    %7420 = vmatprep.subr.mxu0 0.0
    %v7421 = vand.u32 %v5508, 4294901760
    %v7422 = vsub.f32 %v5508, %v7421
    %v7423 = vand.u32 %v7422, 4294901760
    %v7424 = vsub.f32 %v7422, %v7423
    %v7425 = vand.u32 %v7424, 4294901760
    %7426 = vmatpush1.msra.mxu0 %v7425
    %7427 = vmatprep.subr.mxu0 0.0
    %v7428 = vand.u32 %v5509, 4294901760
    %v7429 = vsub.f32 %v5509, %v7428
    %v7430 = vand.u32 %v7429, 4294901760
    %v7431 = vsub.f32 %v7429, %v7430
    %v7432 = vand.u32 %v7431, 4294901760
    %7433 = vmatpush1.msra.mxu0 %v7432
    %7434 = vmatprep.subr.mxu0 0.0
    %v7435 = vand.u32 %v5510, 4294901760
    %v7436 = vsub.f32 %v5510, %v7435
    %v7437 = vand.u32 %v7436, 4294901760
    %v7438 = vsub.f32 %v7436, %v7437
    %v7439 = vand.u32 %v7438, 4294901760
    %7440 = vmatpush1.msra.mxu0 %v7439
    %7441 = vmatprep.subr.mxu0 0.0
    %v7442 = vand.u32 %v5511, 4294901760
    %v7443 = vsub.f32 %v5511, %v7442
    %v7444 = vand.u32 %v7443, 4294901760
    %v7445 = vsub.f32 %v7443, %v7444
    %v7446 = vand.u32 %v7445, 4294901760
    %7447 = vmatpush1.msra.mxu0 %v7446
    %7448 = vmatprep.subr.mxu0 0.0
    %v7449 = vand.u32 %v5512, 4294901760
    %v7450 = vsub.f32 %v5512, %v7449
    %v7451 = vand.u32 %v7450, 4294901760
    %v7452 = vsub.f32 %v7450, %v7451
    %v7453 = vand.u32 %v7452, 4294901760
    %7454 = vmatpush1.msra.mxu0 %v7453
    %7455 = vmatprep.subr.mxu0 0.0
    %v7456 = vand.u32 %v5513, 4294901760
    %v7457 = vsub.f32 %v5513, %v7456
    %v7458 = vand.u32 %v7457, 4294901760
    %v7459 = vsub.f32 %v7457, %v7458
    %v7460 = vand.u32 %v7459, 4294901760
    %7461 = vmatpush1.msra.mxu0 %v7460
    %7462 = vmatprep.subr.mxu0 0.0
    %v7463 = vand.u32 %v5514, 4294901760
    %v7464 = vsub.f32 %v5514, %v7463
    %v7465 = vand.u32 %v7464, 4294901760
    %v7466 = vsub.f32 %v7464, %v7465
    %v7467 = vand.u32 %v7466, 4294901760
    %7468 = vmatpush1.msra.mxu0 %v7467
    %7469 = vmatprep.subr.mxu0 0.0
    %v7470 = vand.u32 %v5515, 4294901760
    %v7471 = vsub.f32 %v5515, %v7470
    %v7472 = vand.u32 %v7471, 4294901760
    %v7473 = vsub.f32 %v7471, %v7472
    %v7474 = vand.u32 %v7473, 4294901760
    %7475 = vmatpush1.msra.mxu0 %v7474
    %7476 = vmatprep.subr.mxu0 0.0
    %v7477 = vand.u32 %v5516, 4294901760
    %v7478 = vsub.f32 %v5516, %v7477
    %v7479 = vand.u32 %v7478, 4294901760
    %v7480 = vsub.f32 %v7478, %v7479
    %v7481 = vand.u32 %v7480, 4294901760
    %7482 = vmatpush1.msra.mxu0 %v7481
    %7483 = vmatprep.subr.mxu0 0.0
    %v7484 = vand.u32 %v5517, 4294901760
    %v7485 = vsub.f32 %v5517, %v7484
    %v7486 = vand.u32 %v7485, 4294901760
    %v7487 = vsub.f32 %v7485, %v7486
    %v7488 = vand.u32 %v7487, 4294901760
    %7489 = vmatpush1.msra.mxu0 %v7488
    %7490 = vmatprep.subr.mxu0 0.0
    %v7491 = vand.u32 %v5518, 4294901760
    %v7492 = vsub.f32 %v5518, %v7491
    %v7493 = vand.u32 %v7492, 4294901760
    %v7494 = vsub.f32 %v7492, %v7493
    %v7495 = vand.u32 %v7494, 4294901760
    %7496 = vmatpush1.msra.mxu0 %v7495
    %7497 = vmatprep.subr.mxu0 0.0
    %v7498 = vand.u32 %v5519, 4294901760
    %v7499 = vsub.f32 %v5519, %v7498
    %v7500 = vand.u32 %v7499, 4294901760
    %v7501 = vsub.f32 %v7499, %v7500
    %v7502 = vand.u32 %v7501, 4294901760
    %7503 = vmatpush1.msra.mxu0 %v7502
    %7504 = vmatprep.subr.mxu0 0.0
    %v7505 = vand.u32 %v5520, 4294901760
    %v7506 = vsub.f32 %v5520, %v7505
    %v7507 = vand.u32 %v7506, 4294901760
    %v7508 = vsub.f32 %v7506, %v7507
    %v7509 = vand.u32 %v7508, 4294901760
    %7510 = vmatpush1.msra.mxu0 %v7509
    %7511 = vmatprep.subr.mxu0 0.0
    %v7512 = vand.u32 %v5521, 4294901760
    %v7513 = vsub.f32 %v5521, %v7512
    %v7514 = vand.u32 %v7513, 4294901760
    %v7515 = vsub.f32 %v7513, %v7514
    %v7516 = vand.u32 %v7515, 4294901760
    %7517 = vmatpush1.msra.mxu0 %v7516
    %7518 = vmatprep.subr.mxu0 0.0
    %v7519 = vand.u32 %v5522, 4294901760
    %v7520 = vsub.f32 %v5522, %v7519
    %v7521 = vand.u32 %v7520, 4294901760
    %v7522 = vsub.f32 %v7520, %v7521
    %v7523 = vand.u32 %v7522, 4294901760
    %7524 = vmatpush1.msra.mxu0 %v7523
    %7525 = vmatprep.subr.mxu0 0.0
    %v7526 = vand.u32 %v5523, 4294901760
    %v7527 = vsub.f32 %v5523, %v7526
    %v7528 = vand.u32 %v7527, 4294901760
    %v7529 = vsub.f32 %v7527, %v7528
    %v7530 = vand.u32 %v7529, 4294901760
    %7531 = vmatpush1.msra.mxu0 %v7530
    %7532 = vmatprep.subr.mxu0 0.0
    %v7533 = vand.u32 %v5524, 4294901760
    %v7534 = vsub.f32 %v5524, %v7533
    %v7535 = vand.u32 %v7534, 4294901760
    %v7536 = vsub.f32 %v7534, %v7535
    %v7537 = vand.u32 %v7536, 4294901760
    %7538 = vmatpush1.msra.mxu0 %v7537
    %7539 = vmatprep.subr.mxu0 0.0
    %v7540 = vand.u32 %v5525, 4294901760
    %v7541 = vsub.f32 %v5525, %v7540
    %v7542 = vand.u32 %v7541, 4294901760
    %v7543 = vsub.f32 %v7541, %v7542
    %v7544 = vand.u32 %v7543, 4294901760
    %7545 = vmatpush1.msra.mxu0 %v7544
    %7546 = vmatprep.subr.mxu0 0.0
    %v7547 = vand.u32 %v5526, 4294901760
    %v7548 = vsub.f32 %v5526, %v7547
    %v7549 = vand.u32 %v7548, 4294901760
    %v7550 = vsub.f32 %v7548, %v7549
    %v7551 = vand.u32 %v7550, 4294901760
    %7552 = vmatpush1.msra.mxu0 %v7551
    %7553 = vmatprep.subr.mxu0 0.0
    %v7554 = vand.u32 %v5527, 4294901760
    %v7555 = vsub.f32 %v5527, %v7554
    %v7556 = vand.u32 %v7555, 4294901760
    %v7557 = vsub.f32 %v7555, %v7556
    %v7558 = vand.u32 %v7557, 4294901760
    %7559 = vmatpush1.msra.mxu0 %v7558
    %7560 = vmatprep.subr.mxu0 0.0
    %v7561 = vand.u32 %v5528, 4294901760
    %v7562 = vsub.f32 %v5528, %v7561
    %v7563 = vand.u32 %v7562, 4294901760
    %v7564 = vsub.f32 %v7562, %v7563
    %v7565 = vand.u32 %v7564, 4294901760
    %7566 = vmatpush1.msra.mxu0 %v7565
    %7567 = vmatprep.subr.mxu0 0.0
    %v7568 = vand.u32 %v5529, 4294901760
    %v7569 = vsub.f32 %v5529, %v7568
    %v7570 = vand.u32 %v7569, 4294901760
    %v7571 = vsub.f32 %v7569, %v7570
    %v7572 = vand.u32 %v7571, 4294901760
    %7573 = vmatpush1.msra.mxu0 %v7572
    %7574 = vmatprep.subr.mxu0 0.0
    %v7575 = vand.u32 %v5530, 4294901760
    %v7576 = vsub.f32 %v5530, %v7575
    %v7577 = vand.u32 %v7576, 4294901760
    %v7578 = vsub.f32 %v7576, %v7577
    %v7579 = vand.u32 %v7578, 4294901760
    %7580 = vmatpush1.msra.mxu0 %v7579
    %7581 = vmatprep.subr.mxu0 0.0
    %v7582 = vand.u32 %v5531, 4294901760
    %v7583 = vsub.f32 %v5531, %v7582
    %v7584 = vand.u32 %v7583, 4294901760
    %v7585 = vsub.f32 %v7583, %v7584
    %v7586 = vand.u32 %v7585, 4294901760
    %7587 = vmatpush1.msra.mxu0 %v7586
    %7588 = vmatprep.subr.mxu0 0.0
    %v7589 = vand.u32 %v5532, 4294901760
    %v7590 = vsub.f32 %v5532, %v7589
    %v7591 = vand.u32 %v7590, 4294901760
    %v7592 = vsub.f32 %v7590, %v7591
    %v7593 = vand.u32 %v7592, 4294901760
    %7594 = vmatpush1.msra.mxu0 %v7593
    %7595 = vmatprep.subr.mxu0 0.0
    %v7596 = vand.u32 %v5533, 4294901760
    %v7597 = vsub.f32 %v5533, %v7596
    %v7598 = vand.u32 %v7597, 4294901760
    %v7599 = vsub.f32 %v7597, %v7598
    %v7600 = vand.u32 %v7599, 4294901760
    %7601 = vmatpush1.msra.mxu0 %v7600
    %7602 = vmatprep.subr.mxu0 0.0
    %v7603 = vand.u32 %v5534, 4294901760
    %v7604 = vsub.f32 %v5534, %v7603
    %v7605 = vand.u32 %v7604, 4294901760
    %v7606 = vsub.f32 %v7604, %v7605
    %v7607 = vand.u32 %v7606, 4294901760
    %7608 = vmatpush1.msra.mxu0 %v7607
    %7609 = vmatprep.subr.mxu0 0.0
    %v7610 = vand.u32 %v5535, 4294901760
    %v7611 = vsub.f32 %v5535, %v7610
    %v7612 = vand.u32 %v7611, 4294901760
    %v7613 = vsub.f32 %v7611, %v7612
    %v7614 = vand.u32 %v7613, 4294901760
    %7615 = vmatpush1.msra.mxu0 %v7614
    %7616 = vmatprep.subr.mxu0 0.0
    %v7617 = vand.u32 %v5536, 4294901760
    %v7618 = vsub.f32 %v5536, %v7617
    %v7619 = vand.u32 %v7618, 4294901760
    %v7620 = vsub.f32 %v7618, %v7619
    %v7621 = vand.u32 %v7620, 4294901760
    %7622 = vmatpush1.msra.mxu0 %v7621
    %7623 = vmatprep.subr.mxu0 0.0
    %v7624 = vand.u32 %v5537, 4294901760
    %v7625 = vsub.f32 %v5537, %v7624
    %v7626 = vand.u32 %v7625, 4294901760
    %v7627 = vsub.f32 %v7625, %v7626
    %v7628 = vand.u32 %v7627, 4294901760
    %7629 = vmatpush1.msra.mxu0 %v7628
    %v7630 = vand.u32 %v5439, 4294901760
    %7631 = vmatprep.mubr.f32.mxu0 %v7630
    %v7632 = vand.u32 %v5438, 4294901760
    %7633 = vmatmul.mubr.f32.gmra.mrb[0].mxu0 %v7632
    %v7634 = vpop.f32.mrb[0].mxu0
    %v7635 = vadd.f32 %v7403, %v7634
    %v7636 = vpop.f32.mrb[0].mxu0
    %7637 = vdwg.mxu0
    %7638 = vmatprep.subr.mxu0 0.0
    %v7639 = vand.u32 %v5506, 4294901760
    %v7640 = vsub.f32 %v5506, %v7639
    %7641 = vmatpush1.msra.mxu0 %v7640
    %7642 = vmatprep.subr.mxu0 0.0
    %v7643 = vand.u32 %v5507, 4294901760
    %v7644 = vsub.f32 %v5507, %v7643
    %7645 = vmatpush1.msra.mxu0 %v7644
    %7646 = vmatprep.subr.mxu0 0.0
    %v7647 = vand.u32 %v5508, 4294901760
    %v7648 = vsub.f32 %v5508, %v7647
    %7649 = vmatpush1.msra.mxu0 %v7648
    %7650 = vmatprep.subr.mxu0 0.0
    %v7651 = vand.u32 %v5509, 4294901760
    %v7652 = vsub.f32 %v5509, %v7651
    %7653 = vmatpush1.msra.mxu0 %v7652
    %7654 = vmatprep.subr.mxu0 0.0
    %v7655 = vand.u32 %v5510, 4294901760
    %v7656 = vsub.f32 %v5510, %v7655
    %7657 = vmatpush1.msra.mxu0 %v7656
    %7658 = vmatprep.subr.mxu0 0.0
    %v7659 = vand.u32 %v5511, 4294901760
    %v7660 = vsub.f32 %v5511, %v7659
    %7661 = vmatpush1.msra.mxu0 %v7660
    %7662 = vmatprep.subr.mxu0 0.0
    %v7663 = vand.u32 %v5512, 4294901760
    %v7664 = vsub.f32 %v5512, %v7663
    %7665 = vmatpush1.msra.mxu0 %v7664
    %7666 = vmatprep.subr.mxu0 0.0
    %v7667 = vand.u32 %v5513, 4294901760
    %v7668 = vsub.f32 %v5513, %v7667
    %7669 = vmatpush1.msra.mxu0 %v7668
    %7670 = vmatprep.subr.mxu0 0.0
    %v7671 = vand.u32 %v5514, 4294901760
    %v7672 = vsub.f32 %v5514, %v7671
    %7673 = vmatpush1.msra.mxu0 %v7672
    %7674 = vmatprep.subr.mxu0 0.0
    %v7675 = vand.u32 %v5515, 4294901760
    %v7676 = vsub.f32 %v5515, %v7675
    %7677 = vmatpush1.msra.mxu0 %v7676
    %7678 = vmatprep.subr.mxu0 0.0
    %v7679 = vand.u32 %v5516, 4294901760
    %v7680 = vsub.f32 %v5516, %v7679
    %7681 = vmatpush1.msra.mxu0 %v7680
    %7682 = vmatprep.subr.mxu0 0.0
    %v7683 = vand.u32 %v5517, 4294901760
    %v7684 = vsub.f32 %v5517, %v7683
    %7685 = vmatpush1.msra.mxu0 %v7684
    %7686 = vmatprep.subr.mxu0 0.0
    %v7687 = vand.u32 %v5518, 4294901760
    %v7688 = vsub.f32 %v5518, %v7687
    %7689 = vmatpush1.msra.mxu0 %v7688
    %7690 = vmatprep.subr.mxu0 0.0
    %v7691 = vand.u32 %v5519, 4294901760
    %v7692 = vsub.f32 %v5519, %v7691
    %7693 = vmatpush1.msra.mxu0 %v7692
    %7694 = vmatprep.subr.mxu0 0.0
    %v7695 = vand.u32 %v5520, 4294901760
    %v7696 = vsub.f32 %v5520, %v7695
    %7697 = vmatpush1.msra.mxu0 %v7696
    %7698 = vmatprep.subr.mxu0 0.0
    %v7699 = vand.u32 %v5521, 4294901760
    %v7700 = vsub.f32 %v5521, %v7699
    %7701 = vmatpush1.msra.mxu0 %v7700
    %7702 = vmatprep.subr.mxu0 0.0
    %v7703 = vand.u32 %v5522, 4294901760
    %v7704 = vsub.f32 %v5522, %v7703
    %7705 = vmatpush1.msra.mxu0 %v7704
    %7706 = vmatprep.subr.mxu0 0.0
    %v7707 = vand.u32 %v5523, 4294901760
    %v7708 = vsub.f32 %v5523, %v7707
    %7709 = vmatpush1.msra.mxu0 %v7708
    %7710 = vmatprep.subr.mxu0 0.0
    %v7711 = vand.u32 %v5524, 4294901760
    %v7712 = vsub.f32 %v5524, %v7711
    %7713 = vmatpush1.msra.mxu0 %v7712
    %7714 = vmatprep.subr.mxu0 0.0
    %v7715 = vand.u32 %v5525, 4294901760
    %v7716 = vsub.f32 %v5525, %v7715
    %7717 = vmatpush1.msra.mxu0 %v7716
    %7718 = vmatprep.subr.mxu0 0.0
    %v7719 = vand.u32 %v5526, 4294901760
    %v7720 = vsub.f32 %v5526, %v7719
    %7721 = vmatpush1.msra.mxu0 %v7720
    %7722 = vmatprep.subr.mxu0 0.0
    %v7723 = vand.u32 %v5527, 4294901760
    %v7724 = vsub.f32 %v5527, %v7723
    %7725 = vmatpush1.msra.mxu0 %v7724
    %7726 = vmatprep.subr.mxu0 0.0
    %v7727 = vand.u32 %v5528, 4294901760
    %v7728 = vsub.f32 %v5528, %v7727
    %7729 = vmatpush1.msra.mxu0 %v7728
    %7730 = vmatprep.subr.mxu0 0.0
    %v7731 = vand.u32 %v5529, 4294901760
    %v7732 = vsub.f32 %v5529, %v7731
    %7733 = vmatpush1.msra.mxu0 %v7732
    %7734 = vmatprep.subr.mxu0 0.0
    %v7735 = vand.u32 %v5530, 4294901760
    %v7736 = vsub.f32 %v5530, %v7735
    %7737 = vmatpush1.msra.mxu0 %v7736
    %7738 = vmatprep.subr.mxu0 0.0
    %v7739 = vand.u32 %v5531, 4294901760
    %v7740 = vsub.f32 %v5531, %v7739
    %7741 = vmatpush1.msra.mxu0 %v7740
    %7742 = vmatprep.subr.mxu0 0.0
    %v7743 = vand.u32 %v5532, 4294901760
    %v7744 = vsub.f32 %v5532, %v7743
    %7745 = vmatpush1.msra.mxu0 %v7744
    %7746 = vmatprep.subr.mxu0 0.0
    %v7747 = vand.u32 %v5533, 4294901760
    %v7748 = vsub.f32 %v5533, %v7747
    %7749 = vmatpush1.msra.mxu0 %v7748
    %7750 = vmatprep.subr.mxu0 0.0
    %v7751 = vand.u32 %v5534, 4294901760
    %v7752 = vsub.f32 %v5534, %v7751
    %7753 = vmatpush1.msra.mxu0 %v7752
    %7754 = vmatprep.subr.mxu0 0.0
    %v7755 = vand.u32 %v5535, 4294901760
    %v7756 = vsub.f32 %v5535, %v7755
    %7757 = vmatpush1.msra.mxu0 %v7756
    %7758 = vmatprep.subr.mxu0 0.0
    %v7759 = vand.u32 %v5536, 4294901760
    %v7760 = vsub.f32 %v5536, %v7759
    %7761 = vmatpush1.msra.mxu0 %v7760
    %7762 = vmatprep.subr.mxu0 0.0
    %v7763 = vand.u32 %v5537, 4294901760
    %v7764 = vsub.f32 %v5537, %v7763
    %7765 = vmatpush1.msra.mxu0 %v7764
    %v7766 = vand.u32 %v5439, 4294901760
    %v7767 = vsub.f32 %v5439, %v7766
    %7768 = vmatprep.mubr.f32.mxu0 %v7767
    %v7769 = vand.u32 %v5438, 4294901760
    %v7770 = vsub.f32 %v5438, %v7769
    %7771 = vmatmul.mubr.f32.gmra.mrb[0].mxu0 %v7770
    %v7772 = vpop.f32.mrb[0].mxu0
    %v7773 = vadd.f32 %v7635, %v7772
    %v7774 = vpop.f32.mrb[0].mxu0
    %7775 = vdwg.mxu0
    %7776 = vmatprep.subr.mxu0 0.0
    %v7777 = vand.u32 %v5506, 4294901760
    %7778 = vmatpush1.msra.mxu0 %v7777
    %7779 = vmatprep.subr.mxu0 0.0
    %v7780 = vand.u32 %v5507, 4294901760
    %7781 = vmatpush1.msra.mxu0 %v7780
    %7782 = vmatprep.subr.mxu0 0.0
    %v7783 = vand.u32 %v5508, 4294901760
    %7784 = vmatpush1.msra.mxu0 %v7783
    %7785 = vmatprep.subr.mxu0 0.0
    %v7786 = vand.u32 %v5509, 4294901760
    %7787 = vmatpush1.msra.mxu0 %v7786
    %7788 = vmatprep.subr.mxu0 0.0
    %v7789 = vand.u32 %v5510, 4294901760
    %7790 = vmatpush1.msra.mxu0 %v7789
    %7791 = vmatprep.subr.mxu0 0.0
    %v7792 = vand.u32 %v5511, 4294901760
    %7793 = vmatpush1.msra.mxu0 %v7792
    %7794 = vmatprep.subr.mxu0 0.0
    %v7795 = vand.u32 %v5512, 4294901760
    %7796 = vmatpush1.msra.mxu0 %v7795
    %7797 = vmatprep.subr.mxu0 0.0
    %v7798 = vand.u32 %v5513, 4294901760
    %7799 = vmatpush1.msra.mxu0 %v7798
    %7800 = vmatprep.subr.mxu0 0.0
    %v7801 = vand.u32 %v5514, 4294901760
    %7802 = vmatpush1.msra.mxu0 %v7801
    %7803 = vmatprep.subr.mxu0 0.0
    %v7804 = vand.u32 %v5515, 4294901760
    %7805 = vmatpush1.msra.mxu0 %v7804
    %7806 = vmatprep.subr.mxu0 0.0
    %v7807 = vand.u32 %v5516, 4294901760
    %7808 = vmatpush1.msra.mxu0 %v7807
    %7809 = vmatprep.subr.mxu0 0.0
    %v7810 = vand.u32 %v5517, 4294901760
    %7811 = vmatpush1.msra.mxu0 %v7810
    %7812 = vmatprep.subr.mxu0 0.0
    %v7813 = vand.u32 %v5518, 4294901760
    %7814 = vmatpush1.msra.mxu0 %v7813
    %7815 = vmatprep.subr.mxu0 0.0
    %v7816 = vand.u32 %v5519, 4294901760
    %7817 = vmatpush1.msra.mxu0 %v7816
    %7818 = vmatprep.subr.mxu0 0.0
    %v7819 = vand.u32 %v5520, 4294901760
    %7820 = vmatpush1.msra.mxu0 %v7819
    %7821 = vmatprep.subr.mxu0 0.0
    %v7822 = vand.u32 %v5521, 4294901760
    %7823 = vmatpush1.msra.mxu0 %v7822
    %7824 = vmatprep.subr.mxu0 0.0
    %v7825 = vand.u32 %v5522, 4294901760
    %7826 = vmatpush1.msra.mxu0 %v7825
    %7827 = vmatprep.subr.mxu0 0.0
    %v7828 = vand.u32 %v5523, 4294901760
    %7829 = vmatpush1.msra.mxu0 %v7828
    %7830 = vmatprep.subr.mxu0 0.0
    %v7831 = vand.u32 %v5524, 4294901760
    %7832 = vmatpush1.msra.mxu0 %v7831
    %7833 = vmatprep.subr.mxu0 0.0
    %v7834 = vand.u32 %v5525, 4294901760
    %7835 = vmatpush1.msra.mxu0 %v7834
    %7836 = vmatprep.subr.mxu0 0.0
    %v7837 = vand.u32 %v5526, 4294901760
    %7838 = vmatpush1.msra.mxu0 %v7837
    %7839 = vmatprep.subr.mxu0 0.0
    %v7840 = vand.u32 %v5527, 4294901760
    %7841 = vmatpush1.msra.mxu0 %v7840
    %7842 = vmatprep.subr.mxu0 0.0
    %v7843 = vand.u32 %v5528, 4294901760
    %7844 = vmatpush1.msra.mxu0 %v7843
    %7845 = vmatprep.subr.mxu0 0.0
    %v7846 = vand.u32 %v5529, 4294901760
    %7847 = vmatpush1.msra.mxu0 %v7846
    %7848 = vmatprep.subr.mxu0 0.0
    %v7849 = vand.u32 %v5530, 4294901760
    %7850 = vmatpush1.msra.mxu0 %v7849
    %7851 = vmatprep.subr.mxu0 0.0
    %v7852 = vand.u32 %v5531, 4294901760
    %7853 = vmatpush1.msra.mxu0 %v7852
    %7854 = vmatprep.subr.mxu0 0.0
    %v7855 = vand.u32 %v5532, 4294901760
    %7856 = vmatpush1.msra.mxu0 %v7855
    %7857 = vmatprep.subr.mxu0 0.0
    %v7858 = vand.u32 %v5533, 4294901760
    %7859 = vmatpush1.msra.mxu0 %v7858
    %7860 = vmatprep.subr.mxu0 0.0
    %v7861 = vand.u32 %v5534, 4294901760
    %7862 = vmatpush1.msra.mxu0 %v7861
    %7863 = vmatprep.subr.mxu0 0.0
    %v7864 = vand.u32 %v5535, 4294901760
    %7865 = vmatpush1.msra.mxu0 %v7864
    %7866 = vmatprep.subr.mxu0 0.0
    %v7867 = vand.u32 %v5536, 4294901760
    %7868 = vmatpush1.msra.mxu0 %v7867
    %7869 = vmatprep.subr.mxu0 0.0
    %v7870 = vand.u32 %v5537, 4294901760
    %7871 = vmatpush1.msra.mxu0 %v7870
    %v7872 = vand.u32 %v5439, 4294901760
    %v7873 = vsub.f32 %v5439, %v7872
    %v7874 = vand.u32 %v7873, 4294901760
    %7875 = vmatprep.mubr.f32.mxu0 %v7874
    %v7876 = vand.u32 %v5438, 4294901760
    %v7877 = vsub.f32 %v5438, %v7876
    %v7878 = vand.u32 %v7877, 4294901760
    %7879 = vmatmul.mubr.f32.gmra.mrb[0].mxu0 %v7878
    %v7880 = vpop.f32.mrb[0].mxu0
    %v7881 = vadd.f32 %v7773, %v7880
    %v7882 = vpop.f32.mrb[0].mxu0
    %7883 = vdwg.mxu0
    %7884 = vmatprep.subr.mxu0 0.0
    %v7885 = vand.u32 %v5506, 4294901760
    %v7886 = vsub.f32 %v5506, %v7885
    %v7887 = vand.u32 %v7886, 4294901760
    %7888 = vmatpush1.msra.mxu0 %v7887
    %7889 = vmatprep.subr.mxu0 0.0
    %v7890 = vand.u32 %v5507, 4294901760
    %v7891 = vsub.f32 %v5507, %v7890
    %v7892 = vand.u32 %v7891, 4294901760
    %7893 = vmatpush1.msra.mxu0 %v7892
    %7894 = vmatprep.subr.mxu0 0.0
    %v7895 = vand.u32 %v5508, 4294901760
    %v7896 = vsub.f32 %v5508, %v7895
    %v7897 = vand.u32 %v7896, 4294901760
    %7898 = vmatpush1.msra.mxu0 %v7897
    %7899 = vmatprep.subr.mxu0 0.0
    %v7900 = vand.u32 %v5509, 4294901760
    %v7901 = vsub.f32 %v5509, %v7900
    %v7902 = vand.u32 %v7901, 4294901760
    %7903 = vmatpush1.msra.mxu0 %v7902
    %7904 = vmatprep.subr.mxu0 0.0
    %v7905 = vand.u32 %v5510, 4294901760
    %v7906 = vsub.f32 %v5510, %v7905
    %v7907 = vand.u32 %v7906, 4294901760
    %7908 = vmatpush1.msra.mxu0 %v7907
    %7909 = vmatprep.subr.mxu0 0.0
    %v7910 = vand.u32 %v5511, 4294901760
    %v7911 = vsub.f32 %v5511, %v7910
    %v7912 = vand.u32 %v7911, 4294901760
    %7913 = vmatpush1.msra.mxu0 %v7912
    %7914 = vmatprep.subr.mxu0 0.0
    %v7915 = vand.u32 %v5512, 4294901760
    %v7916 = vsub.f32 %v5512, %v7915
    %v7917 = vand.u32 %v7916, 4294901760
    %7918 = vmatpush1.msra.mxu0 %v7917
    %7919 = vmatprep.subr.mxu0 0.0
    %v7920 = vand.u32 %v5513, 4294901760
    %v7921 = vsub.f32 %v5513, %v7920
    %v7922 = vand.u32 %v7921, 4294901760
    %7923 = vmatpush1.msra.mxu0 %v7922
    %7924 = vmatprep.subr.mxu0 0.0
    %v7925 = vand.u32 %v5514, 4294901760
    %v7926 = vsub.f32 %v5514, %v7925
    %v7927 = vand.u32 %v7926, 4294901760
    %7928 = vmatpush1.msra.mxu0 %v7927
    %7929 = vmatprep.subr.mxu0 0.0
    %v7930 = vand.u32 %v5515, 4294901760
    %v7931 = vsub.f32 %v5515, %v7930
    %v7932 = vand.u32 %v7931, 4294901760
    %7933 = vmatpush1.msra.mxu0 %v7932
    %7934 = vmatprep.subr.mxu0 0.0
    %v7935 = vand.u32 %v5516, 4294901760
    %v7936 = vsub.f32 %v5516, %v7935
    %v7937 = vand.u32 %v7936, 4294901760
    %7938 = vmatpush1.msra.mxu0 %v7937
    %7939 = vmatprep.subr.mxu0 0.0
    %v7940 = vand.u32 %v5517, 4294901760
    %v7941 = vsub.f32 %v5517, %v7940
    %v7942 = vand.u32 %v7941, 4294901760
    %7943 = vmatpush1.msra.mxu0 %v7942
    %7944 = vmatprep.subr.mxu0 0.0
    %v7945 = vand.u32 %v5518, 4294901760
    %v7946 = vsub.f32 %v5518, %v7945
    %v7947 = vand.u32 %v7946, 4294901760
    %7948 = vmatpush1.msra.mxu0 %v7947
    %7949 = vmatprep.subr.mxu0 0.0
    %v7950 = vand.u32 %v5519, 4294901760
    %v7951 = vsub.f32 %v5519, %v7950
    %v7952 = vand.u32 %v7951, 4294901760
    %7953 = vmatpush1.msra.mxu0 %v7952
    %7954 = vmatprep.subr.mxu0 0.0
    %v7955 = vand.u32 %v5520, 4294901760
    %v7956 = vsub.f32 %v5520, %v7955
    %v7957 = vand.u32 %v7956, 4294901760
    %7958 = vmatpush1.msra.mxu0 %v7957
    %7959 = vmatprep.subr.mxu0 0.0
    %v7960 = vand.u32 %v5521, 4294901760
    %v7961 = vsub.f32 %v5521, %v7960
    %v7962 = vand.u32 %v7961, 4294901760
    %7963 = vmatpush1.msra.mxu0 %v7962
    %7964 = vmatprep.subr.mxu0 0.0
    %v7965 = vand.u32 %v5522, 4294901760
    %v7966 = vsub.f32 %v5522, %v7965
    %v7967 = vand.u32 %v7966, 4294901760
    %7968 = vmatpush1.msra.mxu0 %v7967
    %7969 = vmatprep.subr.mxu0 0.0
    %v7970 = vand.u32 %v5523, 4294901760
    %v7971 = vsub.f32 %v5523, %v7970
    %v7972 = vand.u32 %v7971, 4294901760
    %7973 = vmatpush1.msra.mxu0 %v7972
    %7974 = vmatprep.subr.mxu0 0.0
    %v7975 = vand.u32 %v5524, 4294901760
    %v7976 = vsub.f32 %v5524, %v7975
    %v7977 = vand.u32 %v7976, 4294901760
    %7978 = vmatpush1.msra.mxu0 %v7977
    %7979 = vmatprep.subr.mxu0 0.0
    %v7980 = vand.u32 %v5525, 4294901760
    %v7981 = vsub.f32 %v5525, %v7980
    %v7982 = vand.u32 %v7981, 4294901760
    %7983 = vmatpush1.msra.mxu0 %v7982
    %7984 = vmatprep.subr.mxu0 0.0
    %v7985 = vand.u32 %v5526, 4294901760
    %v7986 = vsub.f32 %v5526, %v7985
    %v7987 = vand.u32 %v7986, 4294901760
    %7988 = vmatpush1.msra.mxu0 %v7987
    %7989 = vmatprep.subr.mxu0 0.0
    %v7990 = vand.u32 %v5527, 4294901760
    %v7991 = vsub.f32 %v5527, %v7990
    %v7992 = vand.u32 %v7991, 4294901760
    %7993 = vmatpush1.msra.mxu0 %v7992
    %7994 = vmatprep.subr.mxu0 0.0
    %v7995 = vand.u32 %v5528, 4294901760
    %v7996 = vsub.f32 %v5528, %v7995
    %v7997 = vand.u32 %v7996, 4294901760
    %7998 = vmatpush1.msra.mxu0 %v7997
    %7999 = vmatprep.subr.mxu0 0.0
    %v8000 = vand.u32 %v5529, 4294901760
    %v8001 = vsub.f32 %v5529, %v8000
    %v8002 = vand.u32 %v8001, 4294901760
    %8003 = vmatpush1.msra.mxu0 %v8002
    %8004 = vmatprep.subr.mxu0 0.0
    %v8005 = vand.u32 %v5530, 4294901760
    %v8006 = vsub.f32 %v5530, %v8005
    %v8007 = vand.u32 %v8006, 4294901760
    %8008 = vmatpush1.msra.mxu0 %v8007
    %8009 = vmatprep.subr.mxu0 0.0
    %v8010 = vand.u32 %v5531, 4294901760
    %v8011 = vsub.f32 %v5531, %v8010
    %v8012 = vand.u32 %v8011, 4294901760
    %8013 = vmatpush1.msra.mxu0 %v8012
    %8014 = vmatprep.subr.mxu0 0.0
    %v8015 = vand.u32 %v5532, 4294901760
    %v8016 = vsub.f32 %v5532, %v8015
    %v8017 = vand.u32 %v8016, 4294901760
    %8018 = vmatpush1.msra.mxu0 %v8017
    %8019 = vmatprep.subr.mxu0 0.0
    %v8020 = vand.u32 %v5533, 4294901760
    %v8021 = vsub.f32 %v5533, %v8020
    %v8022 = vand.u32 %v8021, 4294901760
    %8023 = vmatpush1.msra.mxu0 %v8022
    %8024 = vmatprep.subr.mxu0 0.0
    %v8025 = vand.u32 %v5534, 4294901760
    %v8026 = vsub.f32 %v5534, %v8025
    %v8027 = vand.u32 %v8026, 4294901760
    %8028 = vmatpush1.msra.mxu0 %v8027
    %8029 = vmatprep.subr.mxu0 0.0
    %v8030 = vand.u32 %v5535, 4294901760
    %v8031 = vsub.f32 %v5535, %v8030
    %v8032 = vand.u32 %v8031, 4294901760
    %8033 = vmatpush1.msra.mxu0 %v8032
    %8034 = vmatprep.subr.mxu0 0.0
    %v8035 = vand.u32 %v5536, 4294901760
    %v8036 = vsub.f32 %v5536, %v8035
    %v8037 = vand.u32 %v8036, 4294901760
    %8038 = vmatpush1.msra.mxu0 %v8037
    %8039 = vmatprep.subr.mxu0 0.0
    %v8040 = vand.u32 %v5537, 4294901760
    %v8041 = vsub.f32 %v5537, %v8040
    %v8042 = vand.u32 %v8041, 4294901760
    %8043 = vmatpush1.msra.mxu0 %v8042
    %v8044 = vand.u32 %v5439, 4294901760
    %8045 = vmatprep.mubr.f32.mxu0 %v8044
    %v8046 = vand.u32 %v5438, 4294901760
    %8047 = vmatmul.mubr.f32.gmra.mrb[0].mxu0 %v8046
    %v8048 = vpop.f32.mrb[0].mxu0
    %v8049 = vadd.f32 %v7881, %v8048
    %v8050 = vpop.f32.mrb[0].mxu0
    %8051 = vdwg.mxu0
    %8052 = vmatprep.subr.mxu0 0.0
    %v8053 = vand.u32 %v5506, 4294901760
    %8054 = vmatpush1.msra.mxu0 %v8053
    %8055 = vmatprep.subr.mxu0 0.0
    %v8056 = vand.u32 %v5507, 4294901760
    %8057 = vmatpush1.msra.mxu0 %v8056
    %8058 = vmatprep.subr.mxu0 0.0
    %v8059 = vand.u32 %v5508, 4294901760
    %8060 = vmatpush1.msra.mxu0 %v8059
    %8061 = vmatprep.subr.mxu0 0.0
    %v8062 = vand.u32 %v5509, 4294901760
    %8063 = vmatpush1.msra.mxu0 %v8062
    %8064 = vmatprep.subr.mxu0 0.0
    %v8065 = vand.u32 %v5510, 4294901760
    %8066 = vmatpush1.msra.mxu0 %v8065
    %8067 = vmatprep.subr.mxu0 0.0
    %v8068 = vand.u32 %v5511, 4294901760
    %8069 = vmatpush1.msra.mxu0 %v8068
    %8070 = vmatprep.subr.mxu0 0.0
    %v8071 = vand.u32 %v5512, 4294901760
    %8072 = vmatpush1.msra.mxu0 %v8071
    %8073 = vmatprep.subr.mxu0 0.0
    %v8074 = vand.u32 %v5513, 4294901760
    %8075 = vmatpush1.msra.mxu0 %v8074
    %8076 = vmatprep.subr.mxu0 0.0
    %v8077 = vand.u32 %v5514, 4294901760
    %8078 = vmatpush1.msra.mxu0 %v8077
    %8079 = vmatprep.subr.mxu0 0.0
    %v8080 = vand.u32 %v5515, 4294901760
    %8081 = vmatpush1.msra.mxu0 %v8080
    %8082 = vmatprep.subr.mxu0 0.0
    %v8083 = vand.u32 %v5516, 4294901760
    %8084 = vmatpush1.msra.mxu0 %v8083
    %8085 = vmatprep.subr.mxu0 0.0
    %v8086 = vand.u32 %v5517, 4294901760
    %8087 = vmatpush1.msra.mxu0 %v8086
    %8088 = vmatprep.subr.mxu0 0.0
    %v8089 = vand.u32 %v5518, 4294901760
    %8090 = vmatpush1.msra.mxu0 %v8089
    %8091 = vmatprep.subr.mxu0 0.0
    %v8092 = vand.u32 %v5519, 4294901760
    %8093 = vmatpush1.msra.mxu0 %v8092
    %8094 = vmatprep.subr.mxu0 0.0
    %v8095 = vand.u32 %v5520, 4294901760
    %8096 = vmatpush1.msra.mxu0 %v8095
    %8097 = vmatprep.subr.mxu0 0.0
    %v8098 = vand.u32 %v5521, 4294901760
    %8099 = vmatpush1.msra.mxu0 %v8098
    %8100 = vmatprep.subr.mxu0 0.0
    %v8101 = vand.u32 %v5522, 4294901760
    %8102 = vmatpush1.msra.mxu0 %v8101
    %8103 = vmatprep.subr.mxu0 0.0
    %v8104 = vand.u32 %v5523, 4294901760
    %8105 = vmatpush1.msra.mxu0 %v8104
    %8106 = vmatprep.subr.mxu0 0.0
    %v8107 = vand.u32 %v5524, 4294901760
    %8108 = vmatpush1.msra.mxu0 %v8107
    %8109 = vmatprep.subr.mxu0 0.0
    %v8110 = vand.u32 %v5525, 4294901760
    %8111 = vmatpush1.msra.mxu0 %v8110
    %8112 = vmatprep.subr.mxu0 0.0
    %v8113 = vand.u32 %v5526, 4294901760
    %8114 = vmatpush1.msra.mxu0 %v8113
    %8115 = vmatprep.subr.mxu0 0.0
    %v8116 = vand.u32 %v5527, 4294901760
    %8117 = vmatpush1.msra.mxu0 %v8116
    %8118 = vmatprep.subr.mxu0 0.0
    %v8119 = vand.u32 %v5528, 4294901760
    %8120 = vmatpush1.msra.mxu0 %v8119
    %8121 = vmatprep.subr.mxu0 0.0
    %v8122 = vand.u32 %v5529, 4294901760
    %8123 = vmatpush1.msra.mxu0 %v8122
    %8124 = vmatprep.subr.mxu0 0.0
    %v8125 = vand.u32 %v5530, 4294901760
    %8126 = vmatpush1.msra.mxu0 %v8125
    %8127 = vmatprep.subr.mxu0 0.0
    %v8128 = vand.u32 %v5531, 4294901760
    %8129 = vmatpush1.msra.mxu0 %v8128
    %8130 = vmatprep.subr.mxu0 0.0
    %v8131 = vand.u32 %v5532, 4294901760
    %8132 = vmatpush1.msra.mxu0 %v8131
    %8133 = vmatprep.subr.mxu0 0.0
    %v8134 = vand.u32 %v5533, 4294901760
    %8135 = vmatpush1.msra.mxu0 %v8134
    %8136 = vmatprep.subr.mxu0 0.0
    %v8137 = vand.u32 %v5534, 4294901760
    %8138 = vmatpush1.msra.mxu0 %v8137
    %8139 = vmatprep.subr.mxu0 0.0
    %v8140 = vand.u32 %v5535, 4294901760
    %8141 = vmatpush1.msra.mxu0 %v8140
    %8142 = vmatprep.subr.mxu0 0.0
    %v8143 = vand.u32 %v5536, 4294901760
    %8144 = vmatpush1.msra.mxu0 %v8143
    %8145 = vmatprep.subr.mxu0 0.0
    %v8146 = vand.u32 %v5537, 4294901760
    %8147 = vmatpush1.msra.mxu0 %v8146
    %v8148 = vand.u32 %v5439, 4294901760
    %8149 = vmatprep.mubr.f32.mxu0 %v8148
    %v8150 = vand.u32 %v5438, 4294901760
    %8151 = vmatmul.mubr.f32.gmra.mrb[0].mxu0 %v8150
    %v8152 = vpop.f32.mrb[0].mxu0
    %v8153 = vadd.f32 %v8049, %v8152
    %v8154 = vpop.f32.mrb[0].mxu0
    %8155 = vdwg.mxu0
    %8156 = vmatprep.subr.mxu0 0.0
    %v8157 = vand.u32 %v5538, 4294901760
    %8158 = vmatpush1.msra.mxu0 %v8157
    %8159 = vmatprep.subr.mxu0 0.0
    %v8160 = vand.u32 %v5539, 4294901760
    %8161 = vmatpush1.msra.mxu0 %v8160
    %8162 = vmatprep.subr.mxu0 0.0
    %v8163 = vand.u32 %v5540, 4294901760
    %8164 = vmatpush1.msra.mxu0 %v8163
    %8165 = vmatprep.subr.mxu0 0.0
    %v8166 = vand.u32 %v5541, 4294901760
    %8167 = vmatpush1.msra.mxu0 %v8166
    %8168 = vmatprep.subr.mxu0 0.0
    %v8169 = vand.u32 %v5542, 4294901760
    %8170 = vmatpush1.msra.mxu0 %v8169
    %8171 = vmatprep.subr.mxu0 0.0
    %v8172 = vand.u32 %v5543, 4294901760
    %8173 = vmatpush1.msra.mxu0 %v8172
    %8174 = vmatprep.subr.mxu0 0.0
    %v8175 = vand.u32 %v5544, 4294901760
    %8176 = vmatpush1.msra.mxu0 %v8175
    %8177 = vmatprep.subr.mxu0 0.0
    %v8178 = vand.u32 %v5545, 4294901760
    %8179 = vmatpush1.msra.mxu0 %v8178
    %8180 = vmatprep.subr.mxu0 0.0
    %v8181 = vand.u32 %v5546, 4294901760
    %8182 = vmatpush1.msra.mxu0 %v8181
    %8183 = vmatprep.subr.mxu0 0.0
    %v8184 = vand.u32 %v5547, 4294901760
    %8185 = vmatpush1.msra.mxu0 %v8184
    %8186 = vmatprep.subr.mxu0 0.0
    %v8187 = vand.u32 %v5548, 4294901760
    %8188 = vmatpush1.msra.mxu0 %v8187
    %8189 = vmatprep.subr.mxu0 0.0
    %v8190 = vand.u32 %v5549, 4294901760
    %8191 = vmatpush1.msra.mxu0 %v8190
    %8192 = vmatprep.subr.mxu0 0.0
    %v8193 = vand.u32 %v5550, 4294901760
    %8194 = vmatpush1.msra.mxu0 %v8193
    %8195 = vmatprep.subr.mxu0 0.0
    %v8196 = vand.u32 %v5551, 4294901760
    %8197 = vmatpush1.msra.mxu0 %v8196
    %8198 = vmatprep.subr.mxu0 0.0
    %v8199 = vand.u32 %v5552, 4294901760
    %8200 = vmatpush1.msra.mxu0 %v8199
    %8201 = vmatprep.subr.mxu0 0.0
    %v8202 = vand.u32 %v5553, 4294901760
    %8203 = vmatpush1.msra.mxu0 %v8202
    %8204 = vmatprep.subr.mxu0 0.0
    %v8205 = vand.u32 %v5554, 4294901760
    %8206 = vmatpush1.msra.mxu0 %v8205
    %8207 = vmatprep.subr.mxu0 0.0
    %v8208 = vand.u32 %v5555, 4294901760
    %8209 = vmatpush1.msra.mxu0 %v8208
    %8210 = vmatprep.subr.mxu0 0.0
    %v8211 = vand.u32 %v5556, 4294901760
    %8212 = vmatpush1.msra.mxu0 %v8211
    %8213 = vmatprep.subr.mxu0 0.0
    %v8214 = vand.u32 %v5557, 4294901760
    %8215 = vmatpush1.msra.mxu0 %v8214
    %8216 = vmatprep.subr.mxu0 0.0
    %v8217 = vand.u32 %v5558, 4294901760
    %8218 = vmatpush1.msra.mxu0 %v8217
    %8219 = vmatprep.subr.mxu0 0.0
    %v8220 = vand.u32 %v5559, 4294901760
    %8221 = vmatpush1.msra.mxu0 %v8220
    %8222 = vmatprep.subr.mxu0 0.0
    %v8223 = vand.u32 %v5560, 4294901760
    %8224 = vmatpush1.msra.mxu0 %v8223
    %8225 = vmatprep.subr.mxu0 0.0
    %v8226 = vand.u32 %v5561, 4294901760
    %8227 = vmatpush1.msra.mxu0 %v8226
    %8228 = vmatprep.subr.mxu0 0.0
    %v8229 = vand.u32 %v5562, 4294901760
    %8230 = vmatpush1.msra.mxu0 %v8229
    %8231 = vmatprep.subr.mxu0 0.0
    %v8232 = vand.u32 %v5563, 4294901760
    %8233 = vmatpush1.msra.mxu0 %v8232
    %8234 = vmatprep.subr.mxu0 0.0
    %v8235 = vand.u32 %v5564, 4294901760
    %8236 = vmatpush1.msra.mxu0 %v8235
    %8237 = vmatprep.subr.mxu0 0.0
    %v8238 = vand.u32 %v5565, 4294901760
    %8239 = vmatpush1.msra.mxu0 %v8238
    %8240 = vmatprep.subr.mxu0 0.0
    %v8241 = vand.u32 %v5566, 4294901760
    %8242 = vmatpush1.msra.mxu0 %v8241
    %8243 = vmatprep.subr.mxu0 0.0
    %v8244 = vand.u32 %v5567, 4294901760
    %8245 = vmatpush1.msra.mxu0 %v8244
    %8246 = vmatprep.subr.mxu0 0.0
    %v8247 = vand.u32 %v5568, 4294901760
    %8248 = vmatpush1.msra.mxu0 %v8247
    %8249 = vmatprep.subr.mxu0 0.0
    %v8250 = vand.u32 %v5569, 4294901760
    %8251 = vmatpush1.msra.mxu0 %v8250
    %v8252 = vand.u32 %v5441, 4294901760
    %v8253 = vsub.f32 %v5441, %v8252
    %v8254 = vand.u32 %v8253, 4294901760
    %v8255 = vsub.f32 %v8253, %v8254
    %v8256 = vand.u32 %v8255, 4294901760
    %8257 = vmatprep.mubr.f32.mxu0 %v8256
    %v8258 = vand.u32 %v5440, 4294901760
    %v8259 = vsub.f32 %v5440, %v8258
    %v8260 = vand.u32 %v8259, 4294901760
    %v8261 = vsub.f32 %v8259, %v8260
    %v8262 = vand.u32 %v8261, 4294901760
    %8263 = vmatmul.mubr.f32.gmra.mrb[0].mxu0 %v8262
    %v8264 = vpop.f32.mrb[0].mxu0
    %v8265 = vadd.f32 %v8153, %v8264
    %v8266 = vpop.f32.mrb[0].mxu0
    %8267 = vdwg.mxu0
    %8268 = vmatprep.subr.mxu0 0.0
    %v8269 = vand.u32 %v5538, 4294901760
    %v8270 = vsub.f32 %v5538, %v8269
    %v8271 = vand.u32 %v8270, 4294901760
    %v8272 = vsub.f32 %v8270, %v8271
    %v8273 = vand.u32 %v8272, 4294901760
    %8274 = vmatpush1.msra.mxu0 %v8273
    %8275 = vmatprep.subr.mxu0 0.0
    %v8276 = vand.u32 %v5539, 4294901760
    %v8277 = vsub.f32 %v5539, %v8276
    %v8278 = vand.u32 %v8277, 4294901760
    %v8279 = vsub.f32 %v8277, %v8278
    %v8280 = vand.u32 %v8279, 4294901760
    %8281 = vmatpush1.msra.mxu0 %v8280
    %8282 = vmatprep.subr.mxu0 0.0
    %v8283 = vand.u32 %v5540, 4294901760
    %v8284 = vsub.f32 %v5540, %v8283
    %v8285 = vand.u32 %v8284, 4294901760
    %v8286 = vsub.f32 %v8284, %v8285
    %v8287 = vand.u32 %v8286, 4294901760
    %8288 = vmatpush1.msra.mxu0 %v8287
    %8289 = vmatprep.subr.mxu0 0.0
    %v8290 = vand.u32 %v5541, 4294901760
    %v8291 = vsub.f32 %v5541, %v8290
    %v8292 = vand.u32 %v8291, 4294901760
    %v8293 = vsub.f32 %v8291, %v8292
    %v8294 = vand.u32 %v8293, 4294901760
    %8295 = vmatpush1.msra.mxu0 %v8294
    %8296 = vmatprep.subr.mxu0 0.0
    %v8297 = vand.u32 %v5542, 4294901760
    %v8298 = vsub.f32 %v5542, %v8297
    %v8299 = vand.u32 %v8298, 4294901760
    %v8300 = vsub.f32 %v8298, %v8299
    %v8301 = vand.u32 %v8300, 4294901760
    %8302 = vmatpush1.msra.mxu0 %v8301
    %8303 = vmatprep.subr.mxu0 0.0
    %v8304 = vand.u32 %v5543, 4294901760
    %v8305 = vsub.f32 %v5543, %v8304
    %v8306 = vand.u32 %v8305, 4294901760
    %v8307 = vsub.f32 %v8305, %v8306
    %v8308 = vand.u32 %v8307, 4294901760
    %8309 = vmatpush1.msra.mxu0 %v8308
    %8310 = vmatprep.subr.mxu0 0.0
    %v8311 = vand.u32 %v5544, 4294901760
    %v8312 = vsub.f32 %v5544, %v8311
    %v8313 = vand.u32 %v8312, 4294901760
    %v8314 = vsub.f32 %v8312, %v8313
    %v8315 = vand.u32 %v8314, 4294901760
    %8316 = vmatpush1.msra.mxu0 %v8315
    %8317 = vmatprep.subr.mxu0 0.0
    %v8318 = vand.u32 %v5545, 4294901760
    %v8319 = vsub.f32 %v5545, %v8318
    %v8320 = vand.u32 %v8319, 4294901760
    %v8321 = vsub.f32 %v8319, %v8320
    %v8322 = vand.u32 %v8321, 4294901760
    %8323 = vmatpush1.msra.mxu0 %v8322
    %8324 = vmatprep.subr.mxu0 0.0
    %v8325 = vand.u32 %v5546, 4294901760
    %v8326 = vsub.f32 %v5546, %v8325
    %v8327 = vand.u32 %v8326, 4294901760
    %v8328 = vsub.f32 %v8326, %v8327
    %v8329 = vand.u32 %v8328, 4294901760
    %8330 = vmatpush1.msra.mxu0 %v8329
    %8331 = vmatprep.subr.mxu0 0.0
    %v8332 = vand.u32 %v5547, 4294901760
    %v8333 = vsub.f32 %v5547, %v8332
    %v8334 = vand.u32 %v8333, 4294901760
    %v8335 = vsub.f32 %v8333, %v8334
    %v8336 = vand.u32 %v8335, 4294901760
    %8337 = vmatpush1.msra.mxu0 %v8336
    %8338 = vmatprep.subr.mxu0 0.0
    %v8339 = vand.u32 %v5548, 4294901760
    %v8340 = vsub.f32 %v5548, %v8339
    %v8341 = vand.u32 %v8340, 4294901760
    %v8342 = vsub.f32 %v8340, %v8341
    %v8343 = vand.u32 %v8342, 4294901760
    %8344 = vmatpush1.msra.mxu0 %v8343
    %8345 = vmatprep.subr.mxu0 0.0
    %v8346 = vand.u32 %v5549, 4294901760
    %v8347 = vsub.f32 %v5549, %v8346
    %v8348 = vand.u32 %v8347, 4294901760
    %v8349 = vsub.f32 %v8347, %v8348
    %v8350 = vand.u32 %v8349, 4294901760
    %8351 = vmatpush1.msra.mxu0 %v8350
    %8352 = vmatprep.subr.mxu0 0.0
    %v8353 = vand.u32 %v5550, 4294901760
    %v8354 = vsub.f32 %v5550, %v8353
    %v8355 = vand.u32 %v8354, 4294901760
    %v8356 = vsub.f32 %v8354, %v8355
    %v8357 = vand.u32 %v8356, 4294901760
    %8358 = vmatpush1.msra.mxu0 %v8357
    %8359 = vmatprep.subr.mxu0 0.0
    %v8360 = vand.u32 %v5551, 4294901760
    %v8361 = vsub.f32 %v5551, %v8360
    %v8362 = vand.u32 %v8361, 4294901760
    %v8363 = vsub.f32 %v8361, %v8362
    %v8364 = vand.u32 %v8363, 4294901760
    %8365 = vmatpush1.msra.mxu0 %v8364
    %8366 = vmatprep.subr.mxu0 0.0
    %v8367 = vand.u32 %v5552, 4294901760
    %v8368 = vsub.f32 %v5552, %v8367
    %v8369 = vand.u32 %v8368, 4294901760
    %v8370 = vsub.f32 %v8368, %v8369
    %v8371 = vand.u32 %v8370, 4294901760
    %8372 = vmatpush1.msra.mxu0 %v8371
    %8373 = vmatprep.subr.mxu0 0.0
    %v8374 = vand.u32 %v5553, 4294901760
    %v8375 = vsub.f32 %v5553, %v8374
    %v8376 = vand.u32 %v8375, 4294901760
    %v8377 = vsub.f32 %v8375, %v8376
    %v8378 = vand.u32 %v8377, 4294901760
    %8379 = vmatpush1.msra.mxu0 %v8378
    %8380 = vmatprep.subr.mxu0 0.0
    %v8381 = vand.u32 %v5554, 4294901760
    %v8382 = vsub.f32 %v5554, %v8381
    %v8383 = vand.u32 %v8382, 4294901760
    %v8384 = vsub.f32 %v8382, %v8383
    %v8385 = vand.u32 %v8384, 4294901760
    %8386 = vmatpush1.msra.mxu0 %v8385
    %8387 = vmatprep.subr.mxu0 0.0
    %v8388 = vand.u32 %v5555, 4294901760
    %v8389 = vsub.f32 %v5555, %v8388
    %v8390 = vand.u32 %v8389, 4294901760
    %v8391 = vsub.f32 %v8389, %v8390
    %v8392 = vand.u32 %v8391, 4294901760
    %8393 = vmatpush1.msra.mxu0 %v8392
    %8394 = vmatprep.subr.mxu0 0.0
    %v8395 = vand.u32 %v5556, 4294901760
    %v8396 = vsub.f32 %v5556, %v8395
    %v8397 = vand.u32 %v8396, 4294901760
    %v8398 = vsub.f32 %v8396, %v8397
    %v8399 = vand.u32 %v8398, 4294901760
    %8400 = vmatpush1.msra.mxu0 %v8399
    %8401 = vmatprep.subr.mxu0 0.0
    %v8402 = vand.u32 %v5557, 4294901760
    %v8403 = vsub.f32 %v5557, %v8402
    %v8404 = vand.u32 %v8403, 4294901760
    %v8405 = vsub.f32 %v8403, %v8404
    %v8406 = vand.u32 %v8405, 4294901760
    %8407 = vmatpush1.msra.mxu0 %v8406
    %8408 = vmatprep.subr.mxu0 0.0
    %v8409 = vand.u32 %v5558, 4294901760
    %v8410 = vsub.f32 %v5558, %v8409
    %v8411 = vand.u32 %v8410, 4294901760
    %v8412 = vsub.f32 %v8410, %v8411
    %v8413 = vand.u32 %v8412, 4294901760
    %8414 = vmatpush1.msra.mxu0 %v8413
    %8415 = vmatprep.subr.mxu0 0.0
    %v8416 = vand.u32 %v5559, 4294901760
    %v8417 = vsub.f32 %v5559, %v8416
    %v8418 = vand.u32 %v8417, 4294901760
    %v8419 = vsub.f32 %v8417, %v8418
    %v8420 = vand.u32 %v8419, 4294901760
    %8421 = vmatpush1.msra.mxu0 %v8420
    %8422 = vmatprep.subr.mxu0 0.0
    %v8423 = vand.u32 %v5560, 4294901760
    %v8424 = vsub.f32 %v5560, %v8423
    %v8425 = vand.u32 %v8424, 4294901760
    %v8426 = vsub.f32 %v8424, %v8425
    %v8427 = vand.u32 %v8426, 4294901760
    %8428 = vmatpush1.msra.mxu0 %v8427
    %8429 = vmatprep.subr.mxu0 0.0
    %v8430 = vand.u32 %v5561, 4294901760
    %v8431 = vsub.f32 %v5561, %v8430
    %v8432 = vand.u32 %v8431, 4294901760
    %v8433 = vsub.f32 %v8431, %v8432
    %v8434 = vand.u32 %v8433, 4294901760
    %8435 = vmatpush1.msra.mxu0 %v8434
    %8436 = vmatprep.subr.mxu0 0.0
    %v8437 = vand.u32 %v5562, 4294901760
    %v8438 = vsub.f32 %v5562, %v8437
    %v8439 = vand.u32 %v8438, 4294901760
    %v8440 = vsub.f32 %v8438, %v8439
    %v8441 = vand.u32 %v8440, 4294901760
    %8442 = vmatpush1.msra.mxu0 %v8441
    %8443 = vmatprep.subr.mxu0 0.0
    %v8444 = vand.u32 %v5563, 4294901760
    %v8445 = vsub.f32 %v5563, %v8444
    %v8446 = vand.u32 %v8445, 4294901760
    %v8447 = vsub.f32 %v8445, %v8446
    %v8448 = vand.u32 %v8447, 4294901760
    %8449 = vmatpush1.msra.mxu0 %v8448
    %8450 = vmatprep.subr.mxu0 0.0
    %v8451 = vand.u32 %v5564, 4294901760
    %v8452 = vsub.f32 %v5564, %v8451
    %v8453 = vand.u32 %v8452, 4294901760
    %v8454 = vsub.f32 %v8452, %v8453
    %v8455 = vand.u32 %v8454, 4294901760
    %8456 = vmatpush1.msra.mxu0 %v8455
    %8457 = vmatprep.subr.mxu0 0.0
    %v8458 = vand.u32 %v5565, 4294901760
    %v8459 = vsub.f32 %v5565, %v8458
    %v8460 = vand.u32 %v8459, 4294901760
    %v8461 = vsub.f32 %v8459, %v8460
    %v8462 = vand.u32 %v8461, 4294901760
    %8463 = vmatpush1.msra.mxu0 %v8462
    %8464 = vmatprep.subr.mxu0 0.0
    %v8465 = vand.u32 %v5566, 4294901760
    %v8466 = vsub.f32 %v5566, %v8465
    %v8467 = vand.u32 %v8466, 4294901760
    %v8468 = vsub.f32 %v8466, %v8467
    %v8469 = vand.u32 %v8468, 4294901760
    %8470 = vmatpush1.msra.mxu0 %v8469
    %8471 = vmatprep.subr.mxu0 0.0
    %v8472 = vand.u32 %v5567, 4294901760
    %v8473 = vsub.f32 %v5567, %v8472
    %v8474 = vand.u32 %v8473, 4294901760
    %v8475 = vsub.f32 %v8473, %v8474
    %v8476 = vand.u32 %v8475, 4294901760
    %8477 = vmatpush1.msra.mxu0 %v8476
    %8478 = vmatprep.subr.mxu0 0.0
    %v8479 = vand.u32 %v5568, 4294901760
    %v8480 = vsub.f32 %v5568, %v8479
    %v8481 = vand.u32 %v8480, 4294901760
    %v8482 = vsub.f32 %v8480, %v8481
    %v8483 = vand.u32 %v8482, 4294901760
    %8484 = vmatpush1.msra.mxu0 %v8483
    %8485 = vmatprep.subr.mxu0 0.0
    %v8486 = vand.u32 %v5569, 4294901760
    %v8487 = vsub.f32 %v5569, %v8486
    %v8488 = vand.u32 %v8487, 4294901760
    %v8489 = vsub.f32 %v8487, %v8488
    %v8490 = vand.u32 %v8489, 4294901760
    %8491 = vmatpush1.msra.mxu0 %v8490
    %v8492 = vand.u32 %v5441, 4294901760
    %8493 = vmatprep.mubr.f32.mxu0 %v8492
    %v8494 = vand.u32 %v5440, 4294901760
    %8495 = vmatmul.mubr.f32.gmra.mrb[0].mxu0 %v8494
    %v8496 = vpop.f32.mrb[0].mxu0
    %v8497 = vadd.f32 %v8265, %v8496
    %v8498 = vpop.f32.mrb[0].mxu0
    %8499 = vdwg.mxu0
    %8500 = vmatprep.subr.mxu0 0.0
    %v8501 = vand.u32 %v5538, 4294901760
    %v8502 = vsub.f32 %v5538, %v8501
    %8503 = vmatpush1.msra.mxu0 %v8502
    %8504 = vmatprep.subr.mxu0 0.0
    %v8505 = vand.u32 %v5539, 4294901760
    %v8506 = vsub.f32 %v5539, %v8505
    %8507 = vmatpush1.msra.mxu0 %v8506
    %8508 = vmatprep.subr.mxu0 0.0
    %v8509 = vand.u32 %v5540, 4294901760
    %v8510 = vsub.f32 %v5540, %v8509
    %8511 = vmatpush1.msra.mxu0 %v8510
    %8512 = vmatprep.subr.mxu0 0.0
    %v8513 = vand.u32 %v5541, 4294901760
    %v8514 = vsub.f32 %v5541, %v8513
    %8515 = vmatpush1.msra.mxu0 %v8514
    %8516 = vmatprep.subr.mxu0 0.0
    %v8517 = vand.u32 %v5542, 4294901760
    %v8518 = vsub.f32 %v5542, %v8517
    %8519 = vmatpush1.msra.mxu0 %v8518
    %8520 = vmatprep.subr.mxu0 0.0
    %v8521 = vand.u32 %v5543, 4294901760
    %v8522 = vsub.f32 %v5543, %v8521
    %8523 = vmatpush1.msra.mxu0 %v8522
    %8524 = vmatprep.subr.mxu0 0.0
    %v8525 = vand.u32 %v5544, 4294901760
    %v8526 = vsub.f32 %v5544, %v8525
    %8527 = vmatpush1.msra.mxu0 %v8526
    %8528 = vmatprep.subr.mxu0 0.0
    %v8529 = vand.u32 %v5545, 4294901760
    %v8530 = vsub.f32 %v5545, %v8529
    %8531 = vmatpush1.msra.mxu0 %v8530
    %8532 = vmatprep.subr.mxu0 0.0
    %v8533 = vand.u32 %v5546, 4294901760
    %v8534 = vsub.f32 %v5546, %v8533
    %8535 = vmatpush1.msra.mxu0 %v8534
    %8536 = vmatprep.subr.mxu0 0.0
    %v8537 = vand.u32 %v5547, 4294901760
    %v8538 = vsub.f32 %v5547, %v8537
    %8539 = vmatpush1.msra.mxu0 %v8538
    %8540 = vmatprep.subr.mxu0 0.0
    %v8541 = vand.u32 %v5548, 4294901760
    %v8542 = vsub.f32 %v5548, %v8541
    %8543 = vmatpush1.msra.mxu0 %v8542
    %8544 = vmatprep.subr.mxu0 0.0
    %v8545 = vand.u32 %v5549, 4294901760
    %v8546 = vsub.f32 %v5549, %v8545
    %8547 = vmatpush1.msra.mxu0 %v8546
    %8548 = vmatprep.subr.mxu0 0.0
    %v8549 = vand.u32 %v5550, 4294901760
    %v8550 = vsub.f32 %v5550, %v8549
    %8551 = vmatpush1.msra.mxu0 %v8550
    %8552 = vmatprep.subr.mxu0 0.0
    %v8553 = vand.u32 %v5551, 4294901760
    %v8554 = vsub.f32 %v5551, %v8553
    %8555 = vmatpush1.msra.mxu0 %v8554
    %8556 = vmatprep.subr.mxu0 0.0
    %v8557 = vand.u32 %v5552, 4294901760
    %v8558 = vsub.f32 %v5552, %v8557
    %8559 = vmatpush1.msra.mxu0 %v8558
    %8560 = vmatprep.subr.mxu0 0.0
    %v8561 = vand.u32 %v5553, 4294901760
    %v8562 = vsub.f32 %v5553, %v8561
    %8563 = vmatpush1.msra.mxu0 %v8562
    %8564 = vmatprep.subr.mxu0 0.0
    %v8565 = vand.u32 %v5554, 4294901760
    %v8566 = vsub.f32 %v5554, %v8565
    %8567 = vmatpush1.msra.mxu0 %v8566
    %8568 = vmatprep.subr.mxu0 0.0
    %v8569 = vand.u32 %v5555, 4294901760
    %v8570 = vsub.f32 %v5555, %v8569
    %8571 = vmatpush1.msra.mxu0 %v8570
    %8572 = vmatprep.subr.mxu0 0.0
    %v8573 = vand.u32 %v5556, 4294901760
    %v8574 = vsub.f32 %v5556, %v8573
    %8575 = vmatpush1.msra.mxu0 %v8574
    %8576 = vmatprep.subr.mxu0 0.0
    %v8577 = vand.u32 %v5557, 4294901760
    %v8578 = vsub.f32 %v5557, %v8577
    %8579 = vmatpush1.msra.mxu0 %v8578
    %8580 = vmatprep.subr.mxu0 0.0
    %v8581 = vand.u32 %v5558, 4294901760
    %v8582 = vsub.f32 %v5558, %v8581
    %8583 = vmatpush1.msra.mxu0 %v8582
    %8584 = vmatprep.subr.mxu0 0.0
    %v8585 = vand.u32 %v5559, 4294901760
    %v8586 = vsub.f32 %v5559, %v8585
    %8587 = vmatpush1.msra.mxu0 %v8586
    %8588 = vmatprep.subr.mxu0 0.0
    %v8589 = vand.u32 %v5560, 4294901760
    %v8590 = vsub.f32 %v5560, %v8589
    %8591 = vmatpush1.msra.mxu0 %v8590
    %8592 = vmatprep.subr.mxu0 0.0
    %v8593 = vand.u32 %v5561, 4294901760
    %v8594 = vsub.f32 %v5561, %v8593
    %8595 = vmatpush1.msra.mxu0 %v8594
    %8596 = vmatprep.subr.mxu0 0.0
    %v8597 = vand.u32 %v5562, 4294901760
    %v8598 = vsub.f32 %v5562, %v8597
    %8599 = vmatpush1.msra.mxu0 %v8598
    %8600 = vmatprep.subr.mxu0 0.0
    %v8601 = vand.u32 %v5563, 4294901760
    %v8602 = vsub.f32 %v5563, %v8601
    %8603 = vmatpush1.msra.mxu0 %v8602
    %8604 = vmatprep.subr.mxu0 0.0
    %v8605 = vand.u32 %v5564, 4294901760
    %v8606 = vsub.f32 %v5564, %v8605
    %8607 = vmatpush1.msra.mxu0 %v8606
    %8608 = vmatprep.subr.mxu0 0.0
    %v8609 = vand.u32 %v5565, 4294901760
    %v8610 = vsub.f32 %v5565, %v8609
    %8611 = vmatpush1.msra.mxu0 %v8610
    %8612 = vmatprep.subr.mxu0 0.0
    %v8613 = vand.u32 %v5566, 4294901760
    %v8614 = vsub.f32 %v5566, %v8613
    %8615 = vmatpush1.msra.mxu0 %v8614
    %8616 = vmatprep.subr.mxu0 0.0
    %v8617 = vand.u32 %v5567, 4294901760
    %v8618 = vsub.f32 %v5567, %v8617
    %8619 = vmatpush1.msra.mxu0 %v8618
    %8620 = vmatprep.subr.mxu0 0.0
    %v8621 = vand.u32 %v5568, 4294901760
    %v8622 = vsub.f32 %v5568, %v8621
    %8623 = vmatpush1.msra.mxu0 %v8622
    %8624 = vmatprep.subr.mxu0 0.0
    %v8625 = vand.u32 %v5569, 4294901760
    %v8626 = vsub.f32 %v5569, %v8625
    %8627 = vmatpush1.msra.mxu0 %v8626
    %v8628 = vand.u32 %v5441, 4294901760
    %v8629 = vsub.f32 %v5441, %v8628
    %8630 = vmatprep.mubr.f32.mxu0 %v8629
    %v8631 = vand.u32 %v5440, 4294901760
    %v8632 = vsub.f32 %v5440, %v8631
    %8633 = vmatmul.mubr.f32.gmra.mrb[0].mxu0 %v8632
    %v8634 = vpop.f32.mrb[0].mxu0
    %v8635 = vadd.f32 %v8497, %v8634
    %v8636 = vpop.f32.mrb[0].mxu0
    %8637 = vdwg.mxu0
    %8638 = vmatprep.subr.mxu0 0.0
    %v8639 = vand.u32 %v5538, 4294901760
    %8640 = vmatpush1.msra.mxu0 %v8639
    %8641 = vmatprep.subr.mxu0 0.0
    %v8642 = vand.u32 %v5539, 4294901760
    %8643 = vmatpush1.msra.mxu0 %v8642
    %8644 = vmatprep.subr.mxu0 0.0
    %v8645 = vand.u32 %v5540, 4294901760
    %8646 = vmatpush1.msra.mxu0 %v8645
    %8647 = vmatprep.subr.mxu0 0.0
    %v8648 = vand.u32 %v5541, 4294901760
    %8649 = vmatpush1.msra.mxu0 %v8648
    %8650 = vmatprep.subr.mxu0 0.0
    %v8651 = vand.u32 %v5542, 4294901760
    %8652 = vmatpush1.msra.mxu0 %v8651
    %8653 = vmatprep.subr.mxu0 0.0
    %v8654 = vand.u32 %v5543, 4294901760
    %8655 = vmatpush1.msra.mxu0 %v8654
    %8656 = vmatprep.subr.mxu0 0.0
    %v8657 = vand.u32 %v5544, 4294901760
    %8658 = vmatpush1.msra.mxu0 %v8657
    %8659 = vmatprep.subr.mxu0 0.0
    %v8660 = vand.u32 %v5545, 4294901760
    %8661 = vmatpush1.msra.mxu0 %v8660
    %8662 = vmatprep.subr.mxu0 0.0
    %v8663 = vand.u32 %v5546, 4294901760
    %8664 = vmatpush1.msra.mxu0 %v8663
    %8665 = vmatprep.subr.mxu0 0.0
    %v8666 = vand.u32 %v5547, 4294901760
    %8667 = vmatpush1.msra.mxu0 %v8666
    %8668 = vmatprep.subr.mxu0 0.0
    %v8669 = vand.u32 %v5548, 4294901760
    %8670 = vmatpush1.msra.mxu0 %v8669
    %8671 = vmatprep.subr.mxu0 0.0
    %v8672 = vand.u32 %v5549, 4294901760
    %8673 = vmatpush1.msra.mxu0 %v8672
    %8674 = vmatprep.subr.mxu0 0.0
    %v8675 = vand.u32 %v5550, 4294901760
    %8676 = vmatpush1.msra.mxu0 %v8675
    %8677 = vmatprep.subr.mxu0 0.0
    %v8678 = vand.u32 %v5551, 4294901760
    %8679 = vmatpush1.msra.mxu0 %v8678
    %8680 = vmatprep.subr.mxu0 0.0
    %v8681 = vand.u32 %v5552, 4294901760
    %8682 = vmatpush1.msra.mxu0 %v8681
    %8683 = vmatprep.subr.mxu0 0.0
    %v8684 = vand.u32 %v5553, 4294901760
    %8685 = vmatpush1.msra.mxu0 %v8684
    %8686 = vmatprep.subr.mxu0 0.0
    %v8687 = vand.u32 %v5554, 4294901760
    %8688 = vmatpush1.msra.mxu0 %v8687
    %8689 = vmatprep.subr.mxu0 0.0
    %v8690 = vand.u32 %v5555, 4294901760
    %8691 = vmatpush1.msra.mxu0 %v8690
    %8692 = vmatprep.subr.mxu0 0.0
    %v8693 = vand.u32 %v5556, 4294901760
    %8694 = vmatpush1.msra.mxu0 %v8693
    %8695 = vmatprep.subr.mxu0 0.0
    %v8696 = vand.u32 %v5557, 4294901760
    %8697 = vmatpush1.msra.mxu0 %v8696
    %8698 = vmatprep.subr.mxu0 0.0
    %v8699 = vand.u32 %v5558, 4294901760
    %8700 = vmatpush1.msra.mxu0 %v8699
    %8701 = vmatprep.subr.mxu0 0.0
    %v8702 = vand.u32 %v5559, 4294901760
    %8703 = vmatpush1.msra.mxu0 %v8702
    %8704 = vmatprep.subr.mxu0 0.0
    %v8705 = vand.u32 %v5560, 4294901760
    %8706 = vmatpush1.msra.mxu0 %v8705
    %8707 = vmatprep.subr.mxu0 0.0
    %v8708 = vand.u32 %v5561, 4294901760
    %8709 = vmatpush1.msra.mxu0 %v8708
    %8710 = vmatprep.subr.mxu0 0.0
    %v8711 = vand.u32 %v5562, 4294901760
    %8712 = vmatpush1.msra.mxu0 %v8711
    %8713 = vmatprep.subr.mxu0 0.0
    %v8714 = vand.u32 %v5563, 4294901760
    %8715 = vmatpush1.msra.mxu0 %v8714
    %8716 = vmatprep.subr.mxu0 0.0
    %v8717 = vand.u32 %v5564, 4294901760
    %8718 = vmatpush1.msra.mxu0 %v8717
    %8719 = vmatprep.subr.mxu0 0.0
    %v8720 = vand.u32 %v5565, 4294901760
    %8721 = vmatpush1.msra.mxu0 %v8720
    %8722 = vmatprep.subr.mxu0 0.0
    %v8723 = vand.u32 %v5566, 4294901760
    %8724 = vmatpush1.msra.mxu0 %v8723
    %8725 = vmatprep.subr.mxu0 0.0
    %v8726 = vand.u32 %v5567, 4294901760
    %8727 = vmatpush1.msra.mxu0 %v8726
    %8728 = vmatprep.subr.mxu0 0.0
    %v8729 = vand.u32 %v5568, 4294901760
    %8730 = vmatpush1.msra.mxu0 %v8729
    %8731 = vmatprep.subr.mxu0 0.0
    %v8732 = vand.u32 %v5569, 4294901760
    %8733 = vmatpush1.msra.mxu0 %v8732
    %v8734 = vand.u32 %v5441, 4294901760
    %v8735 = vsub.f32 %v5441, %v8734
    %v8736 = vand.u32 %v8735, 4294901760
    %8737 = vmatprep.mubr.f32.mxu0 %v8736
    %v8738 = vand.u32 %v5440, 4294901760
    %v8739 = vsub.f32 %v5440, %v8738
    %v8740 = vand.u32 %v8739, 4294901760
    %8741 = vmatmul.mubr.f32.gmra.mrb[0].mxu0 %v8740
    %v8742 = vpop.f32.mrb[0].mxu0
    %v8743 = vadd.f32 %v8635, %v8742
    %v8744 = vpop.f32.mrb[0].mxu0
    %8745 = vdwg.mxu0
    %8746 = vmatprep.subr.mxu0 0.0
    %v8747 = vand.u32 %v5538, 4294901760
    %v8748 = vsub.f32 %v5538, %v8747
    %v8749 = vand.u32 %v8748, 4294901760
    %8750 = vmatpush1.msra.mxu0 %v8749
    %8751 = vmatprep.subr.mxu0 0.0
    %v8752 = vand.u32 %v5539, 4294901760
    %v8753 = vsub.f32 %v5539, %v8752
    %v8754 = vand.u32 %v8753, 4294901760
    %8755 = vmatpush1.msra.mxu0 %v8754
    %8756 = vmatprep.subr.mxu0 0.0
    %v8757 = vand.u32 %v5540, 4294901760
    %v8758 = vsub.f32 %v5540, %v8757
    %v8759 = vand.u32 %v8758, 4294901760
    %8760 = vmatpush1.msra.mxu0 %v8759
    %8761 = vmatprep.subr.mxu0 0.0
    %v8762 = vand.u32 %v5541, 4294901760
    %v8763 = vsub.f32 %v5541, %v8762
    %v8764 = vand.u32 %v8763, 4294901760
    %8765 = vmatpush1.msra.mxu0 %v8764
    %8766 = vmatprep.subr.mxu0 0.0
    %v8767 = vand.u32 %v5542, 4294901760
    %v8768 = vsub.f32 %v5542, %v8767
    %v8769 = vand.u32 %v8768, 4294901760
    %8770 = vmatpush1.msra.mxu0 %v8769
    %8771 = vmatprep.subr.mxu0 0.0
    %v8772 = vand.u32 %v5543, 4294901760
    %v8773 = vsub.f32 %v5543, %v8772
    %v8774 = vand.u32 %v8773, 4294901760
    %8775 = vmatpush1.msra.mxu0 %v8774
    %8776 = vmatprep.subr.mxu0 0.0
    %v8777 = vand.u32 %v5544, 4294901760
    %v8778 = vsub.f32 %v5544, %v8777
    %v8779 = vand.u32 %v8778, 4294901760
    %8780 = vmatpush1.msra.mxu0 %v8779
    %8781 = vmatprep.subr.mxu0 0.0
    %v8782 = vand.u32 %v5545, 4294901760
    %v8783 = vsub.f32 %v5545, %v8782
    %v8784 = vand.u32 %v8783, 4294901760
    %8785 = vmatpush1.msra.mxu0 %v8784
    %8786 = vmatprep.subr.mxu0 0.0
    %v8787 = vand.u32 %v5546, 4294901760
    %v8788 = vsub.f32 %v5546, %v8787
    %v8789 = vand.u32 %v8788, 4294901760
    %8790 = vmatpush1.msra.mxu0 %v8789
    %8791 = vmatprep.subr.mxu0 0.0
    %v8792 = vand.u32 %v5547, 4294901760
    %v8793 = vsub.f32 %v5547, %v8792
    %v8794 = vand.u32 %v8793, 4294901760
    %8795 = vmatpush1.msra.mxu0 %v8794
    %8796 = vmatprep.subr.mxu0 0.0
    %v8797 = vand.u32 %v5548, 4294901760
    %v8798 = vsub.f32 %v5548, %v8797
    %v8799 = vand.u32 %v8798, 4294901760
    %8800 = vmatpush1.msra.mxu0 %v8799
    %8801 = vmatprep.subr.mxu0 0.0
    %v8802 = vand.u32 %v5549, 4294901760
    %v8803 = vsub.f32 %v5549, %v8802
    %v8804 = vand.u32 %v8803, 4294901760
    %8805 = vmatpush1.msra.mxu0 %v8804
    %8806 = vmatprep.subr.mxu0 0.0
    %v8807 = vand.u32 %v5550, 4294901760
    %v8808 = vsub.f32 %v5550, %v8807
    %v8809 = vand.u32 %v8808, 4294901760
    %8810 = vmatpush1.msra.mxu0 %v8809
    %8811 = vmatprep.subr.mxu0 0.0
    %v8812 = vand.u32 %v5551, 4294901760
    %v8813 = vsub.f32 %v5551, %v8812
    %v8814 = vand.u32 %v8813, 4294901760
    %8815 = vmatpush1.msra.mxu0 %v8814
    %8816 = vmatprep.subr.mxu0 0.0
    %v8817 = vand.u32 %v5552, 4294901760
    %v8818 = vsub.f32 %v5552, %v8817
    %v8819 = vand.u32 %v8818, 4294901760
    %8820 = vmatpush1.msra.mxu0 %v8819
    %8821 = vmatprep.subr.mxu0 0.0
    %v8822 = vand.u32 %v5553, 4294901760
    %v8823 = vsub.f32 %v5553, %v8822
    %v8824 = vand.u32 %v8823, 4294901760
    %8825 = vmatpush1.msra.mxu0 %v8824
    %8826 = vmatprep.subr.mxu0 0.0
    %v8827 = vand.u32 %v5554, 4294901760
    %v8828 = vsub.f32 %v5554, %v8827
    %v8829 = vand.u32 %v8828, 4294901760
    %8830 = vmatpush1.msra.mxu0 %v8829
    %8831 = vmatprep.subr.mxu0 0.0
    %v8832 = vand.u32 %v5555, 4294901760
    %v8833 = vsub.f32 %v5555, %v8832
    %v8834 = vand.u32 %v8833, 4294901760
    %8835 = vmatpush1.msra.mxu0 %v8834
    %8836 = vmatprep.subr.mxu0 0.0
    %v8837 = vand.u32 %v5556, 4294901760
    %v8838 = vsub.f32 %v5556, %v8837
    %v8839 = vand.u32 %v8838, 4294901760
    %8840 = vmatpush1.msra.mxu0 %v8839
    %8841 = vmatprep.subr.mxu0 0.0
    %v8842 = vand.u32 %v5557, 4294901760
    %v8843 = vsub.f32 %v5557, %v8842
    %v8844 = vand.u32 %v8843, 4294901760
    %8845 = vmatpush1.msra.mxu0 %v8844
    %8846 = vmatprep.subr.mxu0 0.0
    %v8847 = vand.u32 %v5558, 4294901760
    %v8848 = vsub.f32 %v5558, %v8847
    %v8849 = vand.u32 %v8848, 4294901760
    %8850 = vmatpush1.msra.mxu0 %v8849
    %8851 = vmatprep.subr.mxu0 0.0
    %v8852 = vand.u32 %v5559, 4294901760
    %v8853 = vsub.f32 %v5559, %v8852
    %v8854 = vand.u32 %v8853, 4294901760
    %8855 = vmatpush1.msra.mxu0 %v8854
    %8856 = vmatprep.subr.mxu0 0.0
    %v8857 = vand.u32 %v5560, 4294901760
    %v8858 = vsub.f32 %v5560, %v8857
    %v8859 = vand.u32 %v8858, 4294901760
    %8860 = vmatpush1.msra.mxu0 %v8859
    %8861 = vmatprep.subr.mxu0 0.0
    %v8862 = vand.u32 %v5561, 4294901760
    %v8863 = vsub.f32 %v5561, %v8862
    %v8864 = vand.u32 %v8863, 4294901760
    %8865 = vmatpush1.msra.mxu0 %v8864
    %8866 = vmatprep.subr.mxu0 0.0
    %v8867 = vand.u32 %v5562, 4294901760
    %v8868 = vsub.f32 %v5562, %v8867
    %v8869 = vand.u32 %v8868, 4294901760
    %8870 = vmatpush1.msra.mxu0 %v8869
    %8871 = vmatprep.subr.mxu0 0.0
    %v8872 = vand.u32 %v5563, 4294901760
    %v8873 = vsub.f32 %v5563, %v8872
    %v8874 = vand.u32 %v8873, 4294901760
    %8875 = vmatpush1.msra.mxu0 %v8874
    %8876 = vmatprep.subr.mxu0 0.0
    %v8877 = vand.u32 %v5564, 4294901760
    %v8878 = vsub.f32 %v5564, %v8877
    %v8879 = vand.u32 %v8878, 4294901760
    %8880 = vmatpush1.msra.mxu0 %v8879
    %8881 = vmatprep.subr.mxu0 0.0
    %v8882 = vand.u32 %v5565, 4294901760
    %v8883 = vsub.f32 %v5565, %v8882
    %v8884 = vand.u32 %v8883, 4294901760
    %8885 = vmatpush1.msra.mxu0 %v8884
    %8886 = vmatprep.subr.mxu0 0.0
    %v8887 = vand.u32 %v5566, 4294901760
    %v8888 = vsub.f32 %v5566, %v8887
    %v8889 = vand.u32 %v8888, 4294901760
    %8890 = vmatpush1.msra.mxu0 %v8889
    %8891 = vmatprep.subr.mxu0 0.0
    %v8892 = vand.u32 %v5567, 4294901760
    %v8893 = vsub.f32 %v5567, %v8892
    %v8894 = vand.u32 %v8893, 4294901760
    %8895 = vmatpush1.msra.mxu0 %v8894
    %8896 = vmatprep.subr.mxu0 0.0
    %v8897 = vand.u32 %v5568, 4294901760
    %v8898 = vsub.f32 %v5568, %v8897
    %v8899 = vand.u32 %v8898, 4294901760
    %8900 = vmatpush1.msra.mxu0 %v8899
    %8901 = vmatprep.subr.mxu0 0.0
    %v8902 = vand.u32 %v5569, 4294901760
    %v8903 = vsub.f32 %v5569, %v8902
    %v8904 = vand.u32 %v8903, 4294901760
    %8905 = vmatpush1.msra.mxu0 %v8904
    %v8906 = vand.u32 %v5441, 4294901760
    %8907 = vmatprep.mubr.f32.mxu0 %v8906
    %v8908 = vand.u32 %v5440, 4294901760
    %8909 = vmatmul.mubr.f32.gmra.mrb[0].mxu0 %v8908
    %v8910 = vpop.f32.mrb[0].mxu0
    %v8911 = vadd.f32 %v8743, %v8910
    %v8912 = vpop.f32.mrb[0].mxu0
    %8913 = vdwg.mxu0
    %8914 = vmatprep.subr.mxu0 0.0
    %v8915 = vand.u32 %v5538, 4294901760
    %8916 = vmatpush1.msra.mxu0 %v8915
    %8917 = vmatprep.subr.mxu0 0.0
    %v8918 = vand.u32 %v5539, 4294901760
    %8919 = vmatpush1.msra.mxu0 %v8918
    %8920 = vmatprep.subr.mxu0 0.0
    %v8921 = vand.u32 %v5540, 4294901760
    %8922 = vmatpush1.msra.mxu0 %v8921
    %8923 = vmatprep.subr.mxu0 0.0
    %v8924 = vand.u32 %v5541, 4294901760
    %8925 = vmatpush1.msra.mxu0 %v8924
    %8926 = vmatprep.subr.mxu0 0.0
    %v8927 = vand.u32 %v5542, 4294901760
    %8928 = vmatpush1.msra.mxu0 %v8927
    %8929 = vmatprep.subr.mxu0 0.0
    %v8930 = vand.u32 %v5543, 4294901760
    %8931 = vmatpush1.msra.mxu0 %v8930
    %8932 = vmatprep.subr.mxu0 0.0
    %v8933 = vand.u32 %v5544, 4294901760
    %8934 = vmatpush1.msra.mxu0 %v8933
    %8935 = vmatprep.subr.mxu0 0.0
    %v8936 = vand.u32 %v5545, 4294901760
    %8937 = vmatpush1.msra.mxu0 %v8936
    %8938 = vmatprep.subr.mxu0 0.0
    %v8939 = vand.u32 %v5546, 4294901760
    %8940 = vmatpush1.msra.mxu0 %v8939
    %8941 = vmatprep.subr.mxu0 0.0
    %v8942 = vand.u32 %v5547, 4294901760
    %8943 = vmatpush1.msra.mxu0 %v8942
    %8944 = vmatprep.subr.mxu0 0.0
    %v8945 = vand.u32 %v5548, 4294901760
    %8946 = vmatpush1.msra.mxu0 %v8945
    %8947 = vmatprep.subr.mxu0 0.0
    %v8948 = vand.u32 %v5549, 4294901760
    %8949 = vmatpush1.msra.mxu0 %v8948
    %8950 = vmatprep.subr.mxu0 0.0
    %v8951 = vand.u32 %v5550, 4294901760
    %8952 = vmatpush1.msra.mxu0 %v8951
    %8953 = vmatprep.subr.mxu0 0.0
    %v8954 = vand.u32 %v5551, 4294901760
    %8955 = vmatpush1.msra.mxu0 %v8954
    %8956 = vmatprep.subr.mxu0 0.0
    %v8957 = vand.u32 %v5552, 4294901760
    %8958 = vmatpush1.msra.mxu0 %v8957
    %8959 = vmatprep.subr.mxu0 0.0
    %v8960 = vand.u32 %v5553, 4294901760
    %8961 = vmatpush1.msra.mxu0 %v8960
    %8962 = vmatprep.subr.mxu0 0.0
    %v8963 = vand.u32 %v5554, 4294901760
    %8964 = vmatpush1.msra.mxu0 %v8963
    %8965 = vmatprep.subr.mxu0 0.0
    %v8966 = vand.u32 %v5555, 4294901760
    %8967 = vmatpush1.msra.mxu0 %v8966
    %8968 = vmatprep.subr.mxu0 0.0
    %v8969 = vand.u32 %v5556, 4294901760
    %8970 = vmatpush1.msra.mxu0 %v8969
    %8971 = vmatprep.subr.mxu0 0.0
    %v8972 = vand.u32 %v5557, 4294901760
    %8973 = vmatpush1.msra.mxu0 %v8972
    %8974 = vmatprep.subr.mxu0 0.0
    %v8975 = vand.u32 %v5558, 4294901760
    %8976 = vmatpush1.msra.mxu0 %v8975
    %8977 = vmatprep.subr.mxu0 0.0
    %v8978 = vand.u32 %v5559, 4294901760
    %8979 = vmatpush1.msra.mxu0 %v8978
    %8980 = vmatprep.subr.mxu0 0.0
    %v8981 = vand.u32 %v5560, 4294901760
    %8982 = vmatpush1.msra.mxu0 %v8981
    %8983 = vmatprep.subr.mxu0 0.0
    %v8984 = vand.u32 %v5561, 4294901760
    %8985 = vmatpush1.msra.mxu0 %v8984
    %8986 = vmatprep.subr.mxu0 0.0
    %v8987 = vand.u32 %v5562, 4294901760
    %8988 = vmatpush1.msra.mxu0 %v8987
    %8989 = vmatprep.subr.mxu0 0.0
    %v8990 = vand.u32 %v5563, 4294901760
    %8991 = vmatpush1.msra.mxu0 %v8990
    %8992 = vmatprep.subr.mxu0 0.0
    %v8993 = vand.u32 %v5564, 4294901760
    %8994 = vmatpush1.msra.mxu0 %v8993
    %8995 = vmatprep.subr.mxu0 0.0
    %v8996 = vand.u32 %v5565, 4294901760
    %8997 = vmatpush1.msra.mxu0 %v8996
    %8998 = vmatprep.subr.mxu0 0.0
    %v8999 = vand.u32 %v5566, 4294901760
    %9000 = vmatpush1.msra.mxu0 %v8999
    %9001 = vmatprep.subr.mxu0 0.0
    %v9002 = vand.u32 %v5567, 4294901760
    %9003 = vmatpush1.msra.mxu0 %v9002
    %9004 = vmatprep.subr.mxu0 0.0
    %v9005 = vand.u32 %v5568, 4294901760
    %9006 = vmatpush1.msra.mxu0 %v9005
    %9007 = vmatprep.subr.mxu0 0.0
    %v9008 = vand.u32 %v5569, 4294901760
    %9009 = vmatpush1.msra.mxu0 %v9008
    %v9010 = vand.u32 %v5441, 4294901760
    %9011 = vmatprep.mubr.f32.mxu0 %v9010
    %v9012 = vand.u32 %v5440, 4294901760
    %9013 = vmatmul.mubr.f32.gmra.mrb[0].mxu0 %v9012
    %v9014 = vpop.f32.mrb[0].mxu0
    %v9015 = vadd.f32 %v8911, %v9014
    %v9016 = vpop.f32.mrb[0].mxu0
    %9017 = vdwg.mxu0
    %v9018 = vmul.f32 %v9015, %v2544
    %v9019 = vadd.f32 %v9018, %v2542
    %v9020 = vmax.f32 %v9019, 0.0
    %9022 = vrot.lane.b32.xlu0 %v9020, 32
    %v9023 = vpop.permute.xlu0 %9022
    %v9025 = vsel %vm719, %v9020, %v9023
    %9027 = vrot.lane.b32.xlu0 %v9025, 32
    %v9028 = vpop.permute.xlu0 %9027
    %v9030 = vsel %vm719, %v9020, %v9028
    %v9031 = vsel %vm2730, %v9030, 0.0
    %v9032 = vmul.f32 %v2613, %v9031
    %v9033 = vld [vmem:[%s11] sm:$0xff]
    %v9034 = vld [vmem:[%s11 + $0x8] sm:$0xff]
    %v9035 = vld [vmem:[%s11 + $0x10] sm:$0xff]
    %v9036 = vld [vmem:[%s11 + $0x18] sm:$0xff]
    %v9037 = vld [vmem:[%s11 + $0x20] sm:$0xff]
    %v9038 = vld [vmem:[%s11 + $0x28] sm:$0xff]
    %v9039 = vld [vmem:[%s11 + $0x30] sm:$0xff]
    %v9040 = vld [vmem:[%s11 + $0x38] sm:$0xff]
    %v9041 = vld [vmem:[%s11 + $0x40] sm:$0xff]
    %v9042 = vld [vmem:[%s11 + $0x48] sm:$0xff]
    %v9043 = vld [vmem:[%s11 + $0x50] sm:$0xff]
    %v9044 = vld [vmem:[%s11 + $0x58] sm:$0xff]
    %v9045 = vld [vmem:[%s11 + $0x60] sm:$0xff]
    %v9046 = vld [vmem:[%s11 + $0x68] sm:$0xff]
    %v9047 = vld [vmem:[%s11 + $0x70] sm:$0xff]
    %v9048 = vld [vmem:[%s11 + $0x78] sm:$0xff]
    %9049 = vmatprep.subr.mxu0 0.0
    %v9050 = vand.u32 %v9033, 4294901760
    %9051 = vmatpush1.msra.mxu0 %v9050
    %9052 = vmatprep.subr.mxu0 0.0
    %v9053 = vand.u32 %v9034, 4294901760
    %9054 = vmatpush1.msra.mxu0 %v9053
    %9055 = vmatprep.subr.mxu0 0.0
    %v9056 = vand.u32 %v9035, 4294901760
    %9057 = vmatpush1.msra.mxu0 %v9056
    %9058 = vmatprep.subr.mxu0 0.0
    %v9059 = vand.u32 %v9036, 4294901760
    %9060 = vmatpush1.msra.mxu0 %v9059
    %9061 = vmatprep.subr.mxu0 0.0
    %v9062 = vand.u32 %v9037, 4294901760
    %9063 = vmatpush1.msra.mxu0 %v9062
    %9064 = vmatprep.subr.mxu0 0.0
    %v9065 = vand.u32 %v9038, 4294901760
    %9066 = vmatpush1.msra.mxu0 %v9065
    %9067 = vmatprep.subr.mxu0 0.0
    %v9068 = vand.u32 %v9039, 4294901760
    %9069 = vmatpush1.msra.mxu0 %v9068
    %9070 = vmatprep.subr.mxu0 0.0
    %v9071 = vand.u32 %v9040, 4294901760
    %9072 = vmatpush1.msra.mxu0 %v9071
    %9073 = vmatprep.subr.mxu0 0.0
    %v9074 = vand.u32 %v9041, 4294901760
    %9075 = vmatpush1.msra.mxu0 %v9074
    %9076 = vmatprep.subr.mxu0 0.0
    %v9077 = vand.u32 %v9042, 4294901760
    %9078 = vmatpush1.msra.mxu0 %v9077
    %9079 = vmatprep.subr.mxu0 0.0
    %v9080 = vand.u32 %v9043, 4294901760
    %9081 = vmatpush1.msra.mxu0 %v9080
    %9082 = vmatprep.subr.mxu0 0.0
    %v9083 = vand.u32 %v9044, 4294901760
    %9084 = vmatpush1.msra.mxu0 %v9083
    %9085 = vmatprep.subr.mxu0 0.0
    %v9086 = vand.u32 %v9045, 4294901760
    %9087 = vmatpush1.msra.mxu0 %v9086
    %9088 = vmatprep.subr.mxu0 0.0
    %v9089 = vand.u32 %v9046, 4294901760
    %9090 = vmatpush1.msra.mxu0 %v9089
    %9091 = vmatprep.subr.mxu0 0.0
    %v9092 = vand.u32 %v9047, 4294901760
    %9093 = vmatpush1.msra.mxu0 %v9092
    %9094 = vmatprep.subr.mxu0 0.0
    %v9095 = vand.u32 %v9048, 4294901760
    %9096 = vmatpush1.msra.mxu0 %v9095
    %9097 = vmatprep.subr.mxu0 0.0
    %9098 = vmatpush1.msra.mxu0 0.0
    %9099 = vmatprep.subr.mxu0 0.0
    %9100 = vmatpush1.msra.mxu0 0.0
    %9101 = vmatprep.subr.mxu0 0.0
    %9102 = vmatpush1.msra.mxu0 0.0
    %9103 = vmatprep.subr.mxu0 0.0
    %9104 = vmatpush1.msra.mxu0 0.0
    %9105 = vmatprep.subr.mxu0 0.0
    %9106 = vmatpush1.msra.mxu0 0.0
    %9107 = vmatprep.subr.mxu0 0.0
    %9108 = vmatpush1.msra.mxu0 0.0
    %9109 = vmatprep.subr.mxu0 0.0
    %9110 = vmatpush1.msra.mxu0 0.0
    %9111 = vmatprep.subr.mxu0 0.0
    %9112 = vmatpush1.msra.mxu0 0.0
    %9113 = vmatprep.subr.mxu0 0.0
    %9114 = vmatpush1.msra.mxu0 0.0
    %9115 = vmatprep.subr.mxu0 0.0
    %9116 = vmatpush1.msra.mxu0 0.0
    %9117 = vmatprep.subr.mxu0 0.0
    %9118 = vmatpush1.msra.mxu0 0.0
    %9119 = vmatprep.subr.mxu0 0.0
    %9120 = vmatpush1.msra.mxu0 0.0
    %9121 = vmatprep.subr.mxu0 0.0
    %9122 = vmatpush1.msra.mxu0 0.0
    %9123 = vmatprep.subr.mxu0 0.0
    %9124 = vmatpush1.msra.mxu0 0.0
    %9125 = vmatprep.subr.mxu0 0.0
    %9126 = vmatpush1.msra.mxu0 0.0
    %9127 = vmatprep.subr.mxu0 0.0
    %9128 = vmatpush1.msra.mxu0 0.0
    %9129 = vmatprep.mubr.f32.mxu0 0.0
    %v9130 = vand.u32 %v9032, 4294901760
    %v9131 = vsub.f32 %v9032, %v9130
    %v9132 = vand.u32 %v9131, 4294901760
    %v9133 = vsub.f32 %v9131, %v9132
    %v9134 = vand.u32 %v9133, 4294901760
    %9135 = vmatmul.mubr.f32.gmra.mrb[0].mxu0 %v9134
    %v9136 = vpop.f32.mrb[0].mxu0
    %v9137 = vadd.f32 0.0, %v9136
    %v9138 = vpop.f32.mrb[0].mxu0
    %9139 = vdwg.mxu0
    %9140 = vmatprep.subr.mxu0 0.0
    %v9141 = vand.u32 %v9033, 4294901760
    %v9142 = vsub.f32 %v9033, %v9141
    %v9143 = vand.u32 %v9142, 4294901760
    %v9144 = vsub.f32 %v9142, %v9143
    %v9145 = vand.u32 %v9144, 4294901760
    %9146 = vmatpush1.msra.mxu0 %v9145
    %9147 = vmatprep.subr.mxu0 0.0
    %v9148 = vand.u32 %v9034, 4294901760
    %v9149 = vsub.f32 %v9034, %v9148
    %v9150 = vand.u32 %v9149, 4294901760
    %v9151 = vsub.f32 %v9149, %v9150
    %v9152 = vand.u32 %v9151, 4294901760
    %9153 = vmatpush1.msra.mxu0 %v9152
    %9154 = vmatprep.subr.mxu0 0.0
    %v9155 = vand.u32 %v9035, 4294901760
    %v9156 = vsub.f32 %v9035, %v9155
    %v9157 = vand.u32 %v9156, 4294901760
    %v9158 = vsub.f32 %v9156, %v9157
    %v9159 = vand.u32 %v9158, 4294901760
    %9160 = vmatpush1.msra.mxu0 %v9159
    %9161 = vmatprep.subr.mxu0 0.0
    %v9162 = vand.u32 %v9036, 4294901760
    %v9163 = vsub.f32 %v9036, %v9162
    %v9164 = vand.u32 %v9163, 4294901760
    %v9165 = vsub.f32 %v9163, %v9164
    %v9166 = vand.u32 %v9165, 4294901760
    %9167 = vmatpush1.msra.mxu0 %v9166
    %9168 = vmatprep.subr.mxu0 0.0
    %v9169 = vand.u32 %v9037, 4294901760
    %v9170 = vsub.f32 %v9037, %v9169
    %v9171 = vand.u32 %v9170, 4294901760
    %v9172 = vsub.f32 %v9170, %v9171
    %v9173 = vand.u32 %v9172, 4294901760
    %9174 = vmatpush1.msra.mxu0 %v9173
    %9175 = vmatprep.subr.mxu0 0.0
    %v9176 = vand.u32 %v9038, 4294901760
    %v9177 = vsub.f32 %v9038, %v9176
    %v9178 = vand.u32 %v9177, 4294901760
    %v9179 = vsub.f32 %v9177, %v9178
    %v9180 = vand.u32 %v9179, 4294901760
    %9181 = vmatpush1.msra.mxu0 %v9180
    %9182 = vmatprep.subr.mxu0 0.0
    %v9183 = vand.u32 %v9039, 4294901760
    %v9184 = vsub.f32 %v9039, %v9183
    %v9185 = vand.u32 %v9184, 4294901760
    %v9186 = vsub.f32 %v9184, %v9185
    %v9187 = vand.u32 %v9186, 4294901760
    %9188 = vmatpush1.msra.mxu0 %v9187
    %9189 = vmatprep.subr.mxu0 0.0
    %v9190 = vand.u32 %v9040, 4294901760
    %v9191 = vsub.f32 %v9040, %v9190
    %v9192 = vand.u32 %v9191, 4294901760
    %v9193 = vsub.f32 %v9191, %v9192
    %v9194 = vand.u32 %v9193, 4294901760
    %9195 = vmatpush1.msra.mxu0 %v9194
    %9196 = vmatprep.subr.mxu0 0.0
    %v9197 = vand.u32 %v9041, 4294901760
    %v9198 = vsub.f32 %v9041, %v9197
    %v9199 = vand.u32 %v9198, 4294901760
    %v9200 = vsub.f32 %v9198, %v9199
    %v9201 = vand.u32 %v9200, 4294901760
    %9202 = vmatpush1.msra.mxu0 %v9201
    %9203 = vmatprep.subr.mxu0 0.0
    %v9204 = vand.u32 %v9042, 4294901760
    %v9205 = vsub.f32 %v9042, %v9204
    %v9206 = vand.u32 %v9205, 4294901760
    %v9207 = vsub.f32 %v9205, %v9206
    %v9208 = vand.u32 %v9207, 4294901760
    %9209 = vmatpush1.msra.mxu0 %v9208
    %9210 = vmatprep.subr.mxu0 0.0
    %v9211 = vand.u32 %v9043, 4294901760
    %v9212 = vsub.f32 %v9043, %v9211
    %v9213 = vand.u32 %v9212, 4294901760
    %v9214 = vsub.f32 %v9212, %v9213
    %v9215 = vand.u32 %v9214, 4294901760
    %9216 = vmatpush1.msra.mxu0 %v9215
    %9217 = vmatprep.subr.mxu0 0.0
    %v9218 = vand.u32 %v9044, 4294901760
    %v9219 = vsub.f32 %v9044, %v9218
    %v9220 = vand.u32 %v9219, 4294901760
    %v9221 = vsub.f32 %v9219, %v9220
    %v9222 = vand.u32 %v9221, 4294901760
    %9223 = vmatpush1.msra.mxu0 %v9222
    %9224 = vmatprep.subr.mxu0 0.0
    %v9225 = vand.u32 %v9045, 4294901760
    %v9226 = vsub.f32 %v9045, %v9225
    %v9227 = vand.u32 %v9226, 4294901760
    %v9228 = vsub.f32 %v9226, %v9227
    %v9229 = vand.u32 %v9228, 4294901760
    %9230 = vmatpush1.msra.mxu0 %v9229
    %9231 = vmatprep.subr.mxu0 0.0
    %v9232 = vand.u32 %v9046, 4294901760
    %v9233 = vsub.f32 %v9046, %v9232
    %v9234 = vand.u32 %v9233, 4294901760
    %v9235 = vsub.f32 %v9233, %v9234
    %v9236 = vand.u32 %v9235, 4294901760
    %9237 = vmatpush1.msra.mxu0 %v9236
    %9238 = vmatprep.subr.mxu0 0.0
    %v9239 = vand.u32 %v9047, 4294901760
    %v9240 = vsub.f32 %v9047, %v9239
    %v9241 = vand.u32 %v9240, 4294901760
    %v9242 = vsub.f32 %v9240, %v9241
    %v9243 = vand.u32 %v9242, 4294901760
    %9244 = vmatpush1.msra.mxu0 %v9243
    %9245 = vmatprep.subr.mxu0 0.0
    %v9246 = vand.u32 %v9048, 4294901760
    %v9247 = vsub.f32 %v9048, %v9246
    %v9248 = vand.u32 %v9247, 4294901760
    %v9249 = vsub.f32 %v9247, %v9248
    %v9250 = vand.u32 %v9249, 4294901760
    %9251 = vmatpush1.msra.mxu0 %v9250
    %9252 = vmatprep.subr.mxu0 0.0
    %9253 = vmatpush1.msra.mxu0 0.0
    %9254 = vmatprep.subr.mxu0 0.0
    %9255 = vmatpush1.msra.mxu0 0.0
    %9256 = vmatprep.subr.mxu0 0.0
    %9257 = vmatpush1.msra.mxu0 0.0
    %9258 = vmatprep.subr.mxu0 0.0
    %9259 = vmatpush1.msra.mxu0 0.0
    %9260 = vmatprep.subr.mxu0 0.0
    %9261 = vmatpush1.msra.mxu0 0.0
    %9262 = vmatprep.subr.mxu0 0.0
    %9263 = vmatpush1.msra.mxu0 0.0
    %9264 = vmatprep.subr.mxu0 0.0
    %9265 = vmatpush1.msra.mxu0 0.0
    %9266 = vmatprep.subr.mxu0 0.0
    %9267 = vmatpush1.msra.mxu0 0.0
    %9268 = vmatprep.subr.mxu0 0.0
    %9269 = vmatpush1.msra.mxu0 0.0
    %9270 = vmatprep.subr.mxu0 0.0
    %9271 = vmatpush1.msra.mxu0 0.0
    %9272 = vmatprep.subr.mxu0 0.0
    %9273 = vmatpush1.msra.mxu0 0.0
    %9274 = vmatprep.subr.mxu0 0.0
    %9275 = vmatpush1.msra.mxu0 0.0
    %9276 = vmatprep.subr.mxu0 0.0
    %9277 = vmatpush1.msra.mxu0 0.0
    %9278 = vmatprep.subr.mxu0 0.0
    %9279 = vmatpush1.msra.mxu0 0.0
    %9280 = vmatprep.subr.mxu0 0.0
    %9281 = vmatpush1.msra.mxu0 0.0
    %9282 = vmatprep.subr.mxu0 0.0
    %9283 = vmatpush1.msra.mxu0 0.0
    %9284 = vmatprep.mubr.f32.mxu0 0.0
    %v9285 = vand.u32 %v9032, 4294901760
    %9286 = vmatmul.mubr.f32.gmra.mrb[0].mxu0 %v9285
    %v9287 = vpop.f32.mrb[0].mxu0
    %v9288 = vadd.f32 %v9137, %v9287
    %v9289 = vpop.f32.mrb[0].mxu0
    %9290 = vdwg.mxu0
    %9291 = vmatprep.subr.mxu0 0.0
    %v9292 = vand.u32 %v9033, 4294901760
    %v9293 = vsub.f32 %v9033, %v9292
    %9294 = vmatpush1.msra.mxu0 %v9293
    %9295 = vmatprep.subr.mxu0 0.0
    %v9296 = vand.u32 %v9034, 4294901760
    %v9297 = vsub.f32 %v9034, %v9296
    %9298 = vmatpush1.msra.mxu0 %v9297
    %9299 = vmatprep.subr.mxu0 0.0
    %v9300 = vand.u32 %v9035, 4294901760
    %v9301 = vsub.f32 %v9035, %v9300
    %9302 = vmatpush1.msra.mxu0 %v9301
    %9303 = vmatprep.subr.mxu0 0.0
    %v9304 = vand.u32 %v9036, 4294901760
    %v9305 = vsub.f32 %v9036, %v9304
    %9306 = vmatpush1.msra.mxu0 %v9305
    %9307 = vmatprep.subr.mxu0 0.0
    %v9308 = vand.u32 %v9037, 4294901760
    %v9309 = vsub.f32 %v9037, %v9308
    %9310 = vmatpush1.msra.mxu0 %v9309
    %9311 = vmatprep.subr.mxu0 0.0
    %v9312 = vand.u32 %v9038, 4294901760
    %v9313 = vsub.f32 %v9038, %v9312
    %9314 = vmatpush1.msra.mxu0 %v9313
    %9315 = vmatprep.subr.mxu0 0.0
    %v9316 = vand.u32 %v9039, 4294901760
    %v9317 = vsub.f32 %v9039, %v9316
    %9318 = vmatpush1.msra.mxu0 %v9317
    %9319 = vmatprep.subr.mxu0 0.0
    %v9320 = vand.u32 %v9040, 4294901760
    %v9321 = vsub.f32 %v9040, %v9320
    %9322 = vmatpush1.msra.mxu0 %v9321
    %9323 = vmatprep.subr.mxu0 0.0
    %v9324 = vand.u32 %v9041, 4294901760
    %v9325 = vsub.f32 %v9041, %v9324
    %9326 = vmatpush1.msra.mxu0 %v9325
    %9327 = vmatprep.subr.mxu0 0.0
    %v9328 = vand.u32 %v9042, 4294901760
    %v9329 = vsub.f32 %v9042, %v9328
    %9330 = vmatpush1.msra.mxu0 %v9329
    %9331 = vmatprep.subr.mxu0 0.0
    %v9332 = vand.u32 %v9043, 4294901760
    %v9333 = vsub.f32 %v9043, %v9332
    %9334 = vmatpush1.msra.mxu0 %v9333
    %9335 = vmatprep.subr.mxu0 0.0
    %v9336 = vand.u32 %v9044, 4294901760
    %v9337 = vsub.f32 %v9044, %v9336
    %9338 = vmatpush1.msra.mxu0 %v9337
    %9339 = vmatprep.subr.mxu0 0.0
    %v9340 = vand.u32 %v9045, 4294901760
    %v9341 = vsub.f32 %v9045, %v9340
    %9342 = vmatpush1.msra.mxu0 %v9341
    %9343 = vmatprep.subr.mxu0 0.0
    %v9344 = vand.u32 %v9046, 4294901760
    %v9345 = vsub.f32 %v9046, %v9344
    %9346 = vmatpush1.msra.mxu0 %v9345
    %9347 = vmatprep.subr.mxu0 0.0
    %v9348 = vand.u32 %v9047, 4294901760
    %v9349 = vsub.f32 %v9047, %v9348
    %9350 = vmatpush1.msra.mxu0 %v9349
    %9351 = vmatprep.subr.mxu0 0.0
    %v9352 = vand.u32 %v9048, 4294901760
    %v9353 = vsub.f32 %v9048, %v9352
    %9354 = vmatpush1.msra.mxu0 %v9353
    %9355 = vmatprep.subr.mxu0 0.0
    %9356 = vmatpush1.msra.mxu0 0.0
    %9357 = vmatprep.subr.mxu0 0.0
    %9358 = vmatpush1.msra.mxu0 0.0
    %9359 = vmatprep.subr.mxu0 0.0
    %9360 = vmatpush1.msra.mxu0 0.0
    %9361 = vmatprep.subr.mxu0 0.0
    %9362 = vmatpush1.msra.mxu0 0.0
    %9363 = vmatprep.subr.mxu0 0.0
    %9364 = vmatpush1.msra.mxu0 0.0
    %9365 = vmatprep.subr.mxu0 0.0
    %9366 = vmatpush1.msra.mxu0 0.0
    %9367 = vmatprep.subr.mxu0 0.0
    %9368 = vmatpush1.msra.mxu0 0.0
    %9369 = vmatprep.subr.mxu0 0.0
    %9370 = vmatpush1.msra.mxu0 0.0
    %9371 = vmatprep.subr.mxu0 0.0
    %9372 = vmatpush1.msra.mxu0 0.0
    %9373 = vmatprep.subr.mxu0 0.0
    %9374 = vmatpush1.msra.mxu0 0.0
    %9375 = vmatprep.subr.mxu0 0.0
    %9376 = vmatpush1.msra.mxu0 0.0
    %9377 = vmatprep.subr.mxu0 0.0
    %9378 = vmatpush1.msra.mxu0 0.0
    %9379 = vmatprep.subr.mxu0 0.0
    %9380 = vmatpush1.msra.mxu0 0.0
    %9381 = vmatprep.subr.mxu0 0.0
    %9382 = vmatpush1.msra.mxu0 0.0
    %9383 = vmatprep.subr.mxu0 0.0
    %9384 = vmatpush1.msra.mxu0 0.0
    %9385 = vmatprep.subr.mxu0 0.0
    %9386 = vmatpush1.msra.mxu0 0.0
    %9387 = vmatprep.mubr.f32.mxu0 0.0
    %v9388 = vand.u32 %v9032, 4294901760
    %v9389 = vsub.f32 %v9032, %v9388
    %9390 = vmatmul.mubr.f32.gmra.mrb[0].mxu0 %v9389
    %v9391 = vpop.f32.mrb[0].mxu0
    %v9392 = vadd.f32 %v9288, %v9391
    %v9393 = vpop.f32.mrb[0].mxu0
    %9394 = vdwg.mxu0
    %9395 = vmatprep.subr.mxu0 0.0
    %v9396 = vand.u32 %v9033, 4294901760
    %9397 = vmatpush1.msra.mxu0 %v9396
    %9398 = vmatprep.subr.mxu0 0.0
    %v9399 = vand.u32 %v9034, 4294901760
    %9400 = vmatpush1.msra.mxu0 %v9399
    %9401 = vmatprep.subr.mxu0 0.0
    %v9402 = vand.u32 %v9035, 4294901760
    %9403 = vmatpush1.msra.mxu0 %v9402
    %9404 = vmatprep.subr.mxu0 0.0
    %v9405 = vand.u32 %v9036, 4294901760
    %9406 = vmatpush1.msra.mxu0 %v9405
    %9407 = vmatprep.subr.mxu0 0.0
    %v9408 = vand.u32 %v9037, 4294901760
    %9409 = vmatpush1.msra.mxu0 %v9408
    %9410 = vmatprep.subr.mxu0 0.0
    %v9411 = vand.u32 %v9038, 4294901760
    %9412 = vmatpush1.msra.mxu0 %v9411
    %9413 = vmatprep.subr.mxu0 0.0
    %v9414 = vand.u32 %v9039, 4294901760
    %9415 = vmatpush1.msra.mxu0 %v9414
    %9416 = vmatprep.subr.mxu0 0.0
    %v9417 = vand.u32 %v9040, 4294901760
    %9418 = vmatpush1.msra.mxu0 %v9417
    %9419 = vmatprep.subr.mxu0 0.0
    %v9420 = vand.u32 %v9041, 4294901760
    %9421 = vmatpush1.msra.mxu0 %v9420
    %9422 = vmatprep.subr.mxu0 0.0
    %v9423 = vand.u32 %v9042, 4294901760
    %9424 = vmatpush1.msra.mxu0 %v9423
    %9425 = vmatprep.subr.mxu0 0.0
    %v9426 = vand.u32 %v9043, 4294901760
    %9427 = vmatpush1.msra.mxu0 %v9426
    %9428 = vmatprep.subr.mxu0 0.0
    %v9429 = vand.u32 %v9044, 4294901760
    %9430 = vmatpush1.msra.mxu0 %v9429
    %9431 = vmatprep.subr.mxu0 0.0
    %v9432 = vand.u32 %v9045, 4294901760
    %9433 = vmatpush1.msra.mxu0 %v9432
    %9434 = vmatprep.subr.mxu0 0.0
    %v9435 = vand.u32 %v9046, 4294901760
    %9436 = vmatpush1.msra.mxu0 %v9435
    %9437 = vmatprep.subr.mxu0 0.0
    %v9438 = vand.u32 %v9047, 4294901760
    %9439 = vmatpush1.msra.mxu0 %v9438
    %9440 = vmatprep.subr.mxu0 0.0
    %v9441 = vand.u32 %v9048, 4294901760
    %9442 = vmatpush1.msra.mxu0 %v9441
    %9443 = vmatprep.subr.mxu0 0.0
    %9444 = vmatpush1.msra.mxu0 0.0
    %9445 = vmatprep.subr.mxu0 0.0
    %9446 = vmatpush1.msra.mxu0 0.0
    %9447 = vmatprep.subr.mxu0 0.0
    %9448 = vmatpush1.msra.mxu0 0.0
    %9449 = vmatprep.subr.mxu0 0.0
    %9450 = vmatpush1.msra.mxu0 0.0
    %9451 = vmatprep.subr.mxu0 0.0
    %9452 = vmatpush1.msra.mxu0 0.0
    %9453 = vmatprep.subr.mxu0 0.0
    %9454 = vmatpush1.msra.mxu0 0.0
    %9455 = vmatprep.subr.mxu0 0.0
    %9456 = vmatpush1.msra.mxu0 0.0
    %9457 = vmatprep.subr.mxu0 0.0
    %9458 = vmatpush1.msra.mxu0 0.0
    %9459 = vmatprep.subr.mxu0 0.0
    %9460 = vmatpush1.msra.mxu0 0.0
    %9461 = vmatprep.subr.mxu0 0.0
    %9462 = vmatpush1.msra.mxu0 0.0
    %9463 = vmatprep.subr.mxu0 0.0
    %9464 = vmatpush1.msra.mxu0 0.0
    %9465 = vmatprep.subr.mxu0 0.0
    %9466 = vmatpush1.msra.mxu0 0.0
    %9467 = vmatprep.subr.mxu0 0.0
    %9468 = vmatpush1.msra.mxu0 0.0
    %9469 = vmatprep.subr.mxu0 0.0
    %9470 = vmatpush1.msra.mxu0 0.0
    %9471 = vmatprep.subr.mxu0 0.0
    %9472 = vmatpush1.msra.mxu0 0.0
    %9473 = vmatprep.subr.mxu0 0.0
    %9474 = vmatpush1.msra.mxu0 0.0
    %9475 = vmatprep.mubr.f32.mxu0 0.0
    %v9476 = vand.u32 %v9032, 4294901760
    %v9477 = vsub.f32 %v9032, %v9476
    %v9478 = vand.u32 %v9477, 4294901760
    %9479 = vmatmul.mubr.f32.gmra.mrb[0].mxu0 %v9478
    %v9480 = vpop.f32.mrb[0].mxu0
    %v9481 = vadd.f32 %v9392, %v9480
    %v9482 = vpop.f32.mrb[0].mxu0
    %9483 = vdwg.mxu0
    %9484 = vmatprep.subr.mxu0 0.0
    %v9485 = vand.u32 %v9033, 4294901760
    %v9486 = vsub.f32 %v9033, %v9485
    %v9487 = vand.u32 %v9486, 4294901760
    %9488 = vmatpush1.msra.mxu0 %v9487
    %9489 = vmatprep.subr.mxu0 0.0
    %v9490 = vand.u32 %v9034, 4294901760
    %v9491 = vsub.f32 %v9034, %v9490
    %v9492 = vand.u32 %v9491, 4294901760
    %9493 = vmatpush1.msra.mxu0 %v9492
    %9494 = vmatprep.subr.mxu0 0.0
    %v9495 = vand.u32 %v9035, 4294901760
    %v9496 = vsub.f32 %v9035, %v9495
    %v9497 = vand.u32 %v9496, 4294901760
    %9498 = vmatpush1.msra.mxu0 %v9497
    %9499 = vmatprep.subr.mxu0 0.0
    %v9500 = vand.u32 %v9036, 4294901760
    %v9501 = vsub.f32 %v9036, %v9500
    %v9502 = vand.u32 %v9501, 4294901760
    %9503 = vmatpush1.msra.mxu0 %v9502
    %9504 = vmatprep.subr.mxu0 0.0
    %v9505 = vand.u32 %v9037, 4294901760
    %v9506 = vsub.f32 %v9037, %v9505
    %v9507 = vand.u32 %v9506, 4294901760
    %9508 = vmatpush1.msra.mxu0 %v9507
    %9509 = vmatprep.subr.mxu0 0.0
    %v9510 = vand.u32 %v9038, 4294901760
    %v9511 = vsub.f32 %v9038, %v9510
    %v9512 = vand.u32 %v9511, 4294901760
    %9513 = vmatpush1.msra.mxu0 %v9512
    %9514 = vmatprep.subr.mxu0 0.0
    %v9515 = vand.u32 %v9039, 4294901760
    %v9516 = vsub.f32 %v9039, %v9515
    %v9517 = vand.u32 %v9516, 4294901760
    %9518 = vmatpush1.msra.mxu0 %v9517
    %9519 = vmatprep.subr.mxu0 0.0
    %v9520 = vand.u32 %v9040, 4294901760
    %v9521 = vsub.f32 %v9040, %v9520
    %v9522 = vand.u32 %v9521, 4294901760
    %9523 = vmatpush1.msra.mxu0 %v9522
    %9524 = vmatprep.subr.mxu0 0.0
    %v9525 = vand.u32 %v9041, 4294901760
    %v9526 = vsub.f32 %v9041, %v9525
    %v9527 = vand.u32 %v9526, 4294901760
    %9528 = vmatpush1.msra.mxu0 %v9527
    %9529 = vmatprep.subr.mxu0 0.0
    %v9530 = vand.u32 %v9042, 4294901760
    %v9531 = vsub.f32 %v9042, %v9530
    %v9532 = vand.u32 %v9531, 4294901760
    %9533 = vmatpush1.msra.mxu0 %v9532
    %9534 = vmatprep.subr.mxu0 0.0
    %v9535 = vand.u32 %v9043, 4294901760
    %v9536 = vsub.f32 %v9043, %v9535
    %v9537 = vand.u32 %v9536, 4294901760
    %9538 = vmatpush1.msra.mxu0 %v9537
    %9539 = vmatprep.subr.mxu0 0.0
    %v9540 = vand.u32 %v9044, 4294901760
    %v9541 = vsub.f32 %v9044, %v9540
    %v9542 = vand.u32 %v9541, 4294901760
    %9543 = vmatpush1.msra.mxu0 %v9542
    %9544 = vmatprep.subr.mxu0 0.0
    %v9545 = vand.u32 %v9045, 4294901760
    %v9546 = vsub.f32 %v9045, %v9545
    %v9547 = vand.u32 %v9546, 4294901760
    %9548 = vmatpush1.msra.mxu0 %v9547
    %9549 = vmatprep.subr.mxu0 0.0
    %v9550 = vand.u32 %v9046, 4294901760
    %v9551 = vsub.f32 %v9046, %v9550
    %v9552 = vand.u32 %v9551, 4294901760
    %9553 = vmatpush1.msra.mxu0 %v9552
    %9554 = vmatprep.subr.mxu0 0.0
    %v9555 = vand.u32 %v9047, 4294901760
    %v9556 = vsub.f32 %v9047, %v9555
    %v9557 = vand.u32 %v9556, 4294901760
    %9558 = vmatpush1.msra.mxu0 %v9557
    %9559 = vmatprep.subr.mxu0 0.0
    %v9560 = vand.u32 %v9048, 4294901760
    %v9561 = vsub.f32 %v9048, %v9560
    %v9562 = vand.u32 %v9561, 4294901760
    %9563 = vmatpush1.msra.mxu0 %v9562
    %9564 = vmatprep.subr.mxu0 0.0
    %9565 = vmatpush1.msra.mxu0 0.0
    %9566 = vmatprep.subr.mxu0 0.0
    %9567 = vmatpush1.msra.mxu0 0.0
    %9568 = vmatprep.subr.mxu0 0.0
    %9569 = vmatpush1.msra.mxu0 0.0
    %9570 = vmatprep.subr.mxu0 0.0
    %9571 = vmatpush1.msra.mxu0 0.0
    %9572 = vmatprep.subr.mxu0 0.0
    %9573 = vmatpush1.msra.mxu0 0.0
    %9574 = vmatprep.subr.mxu0 0.0
    %9575 = vmatpush1.msra.mxu0 0.0
    %9576 = vmatprep.subr.mxu0 0.0
    %9577 = vmatpush1.msra.mxu0 0.0
    %9578 = vmatprep.subr.mxu0 0.0
    %9579 = vmatpush1.msra.mxu0 0.0
    %9580 = vmatprep.subr.mxu0 0.0
    %9581 = vmatpush1.msra.mxu0 0.0
    %9582 = vmatprep.subr.mxu0 0.0
    %9583 = vmatpush1.msra.mxu0 0.0
    %9584 = vmatprep.subr.mxu0 0.0
    %9585 = vmatpush1.msra.mxu0 0.0
    %9586 = vmatprep.subr.mxu0 0.0
    %9587 = vmatpush1.msra.mxu0 0.0
    %9588 = vmatprep.subr.mxu0 0.0
    %9589 = vmatpush1.msra.mxu0 0.0
    %9590 = vmatprep.subr.mxu0 0.0
    %9591 = vmatpush1.msra.mxu0 0.0
    %9592 = vmatprep.subr.mxu0 0.0
    %9593 = vmatpush1.msra.mxu0 0.0
    %9594 = vmatprep.subr.mxu0 0.0
    %9595 = vmatpush1.msra.mxu0 0.0
    %9596 = vmatprep.mubr.f32.mxu0 0.0
    %v9597 = vand.u32 %v9032, 4294901760
    %9598 = vmatmul.mubr.f32.gmra.mrb[0].mxu0 %v9597
    %v9599 = vpop.f32.mrb[0].mxu0
    %v9600 = vadd.f32 %v9481, %v9599
    %v9601 = vpop.f32.mrb[0].mxu0
    %9602 = vdwg.mxu0
    %9603 = vmatprep.subr.mxu0 0.0
    %v9604 = vand.u32 %v9033, 4294901760
    %9605 = vmatpush1.msra.mxu0 %v9604
    %9606 = vmatprep.subr.mxu0 0.0
    %v9607 = vand.u32 %v9034, 4294901760
    %9608 = vmatpush1.msra.mxu0 %v9607
    %9609 = vmatprep.subr.mxu0 0.0
    %v9610 = vand.u32 %v9035, 4294901760
    %9611 = vmatpush1.msra.mxu0 %v9610
    %9612 = vmatprep.subr.mxu0 0.0
    %v9613 = vand.u32 %v9036, 4294901760
    %9614 = vmatpush1.msra.mxu0 %v9613
    %9615 = vmatprep.subr.mxu0 0.0
    %v9616 = vand.u32 %v9037, 4294901760
    %9617 = vmatpush1.msra.mxu0 %v9616
    %9618 = vmatprep.subr.mxu0 0.0
    %v9619 = vand.u32 %v9038, 4294901760
    %9620 = vmatpush1.msra.mxu0 %v9619
    %9621 = vmatprep.subr.mxu0 0.0
    %v9622 = vand.u32 %v9039, 4294901760
    %9623 = vmatpush1.msra.mxu0 %v9622
    %9624 = vmatprep.subr.mxu0 0.0
    %v9625 = vand.u32 %v9040, 4294901760
    %9626 = vmatpush1.msra.mxu0 %v9625
    %9627 = vmatprep.subr.mxu0 0.0
    %v9628 = vand.u32 %v9041, 4294901760
    %9629 = vmatpush1.msra.mxu0 %v9628
    %9630 = vmatprep.subr.mxu0 0.0
    %v9631 = vand.u32 %v9042, 4294901760
    %9632 = vmatpush1.msra.mxu0 %v9631
    %9633 = vmatprep.subr.mxu0 0.0
    %v9634 = vand.u32 %v9043, 4294901760
    %9635 = vmatpush1.msra.mxu0 %v9634
    %9636 = vmatprep.subr.mxu0 0.0
    %v9637 = vand.u32 %v9044, 4294901760
    %9638 = vmatpush1.msra.mxu0 %v9637
    %9639 = vmatprep.subr.mxu0 0.0
    %v9640 = vand.u32 %v9045, 4294901760
    %9641 = vmatpush1.msra.mxu0 %v9640
    %9642 = vmatprep.subr.mxu0 0.0
    %v9643 = vand.u32 %v9046, 4294901760
    %9644 = vmatpush1.msra.mxu0 %v9643
    %9645 = vmatprep.subr.mxu0 0.0
    %v9646 = vand.u32 %v9047, 4294901760
    %9647 = vmatpush1.msra.mxu0 %v9646
    %9648 = vmatprep.subr.mxu0 0.0
    %v9649 = vand.u32 %v9048, 4294901760
    %9650 = vmatpush1.msra.mxu0 %v9649
    %9651 = vmatprep.subr.mxu0 0.0
    %9652 = vmatpush1.msra.mxu0 0.0
    %9653 = vmatprep.subr.mxu0 0.0
    %9654 = vmatpush1.msra.mxu0 0.0
    %9655 = vmatprep.subr.mxu0 0.0
    %9656 = vmatpush1.msra.mxu0 0.0
    %9657 = vmatprep.subr.mxu0 0.0
    %9658 = vmatpush1.msra.mxu0 0.0
    %9659 = vmatprep.subr.mxu0 0.0
    %9660 = vmatpush1.msra.mxu0 0.0
    %9661 = vmatprep.subr.mxu0 0.0
    %9662 = vmatpush1.msra.mxu0 0.0
    %9663 = vmatprep.subr.mxu0 0.0
    %9664 = vmatpush1.msra.mxu0 0.0
    %9665 = vmatprep.subr.mxu0 0.0
    %9666 = vmatpush1.msra.mxu0 0.0
    %9667 = vmatprep.subr.mxu0 0.0
    %9668 = vmatpush1.msra.mxu0 0.0
    %9669 = vmatprep.subr.mxu0 0.0
    %9670 = vmatpush1.msra.mxu0 0.0
    %9671 = vmatprep.subr.mxu0 0.0
    %9672 = vmatpush1.msra.mxu0 0.0
    %9673 = vmatprep.subr.mxu0 0.0
    %9674 = vmatpush1.msra.mxu0 0.0
    %9675 = vmatprep.subr.mxu0 0.0
    %9676 = vmatpush1.msra.mxu0 0.0
    %9677 = vmatprep.subr.mxu0 0.0
    %9678 = vmatpush1.msra.mxu0 0.0
    %9679 = vmatprep.subr.mxu0 0.0
    %9680 = vmatpush1.msra.mxu0 0.0
    %9681 = vmatprep.subr.mxu0 0.0
    %9682 = vmatpush1.msra.mxu0 0.0
    %9683 = vmatprep.mubr.f32.mxu0 0.0
    %v9684 = vand.u32 %v9032, 4294901760
    %9685 = vmatmul.mubr.f32.gmra.mrb[0].mxu0 %v9684
    %v9686 = vpop.f32.mrb[0].mxu0
    %v9687 = vadd.f32 %v9600, %v9686
    %v9688 = vpop.f32.mrb[0].mxu0
    %9689 = vdwg.mxu0
    %v9690 = vmul.f32 %v9687, %v2684
    %v9691 = vadd.f32 %v9690, %v2615
    %9692 = vst [vmem:[#allocation2] sm:$0xff] %v9691
    // Predicated region
    $region50: #{tpu_custom_call.1} parent=1 // pred_check
      _
    $region51: #{tpu_custom_call.1} parent=1 // pred_check_branch
      %9694 = sbr.rel (0) target = $region53
    $region52: #{tpu_custom_call.1} parent=1 // pred_region
      %s9696 = ssub.s32 128, 128
      %9697 = vsyncadd [#allocation3], %s9696
      %s9699 = sshll.u32 [#allocation2], 4
      %s9700 = int_to_ptr.vmem [resolvable:$true] %s9699
      %9702 = dma.vmem_to_hbm [thread:$0]  %s9700, 128, %s12, [#allocation3]
    $region53: #{tpu_custom_call.1} parent=1 // pred_fallthru
      _
    // Predicated region
    $region54: #{tpu_custom_call.1} parent=1 // pred_check
      _
    $region55: #{tpu_custom_call.1} parent=1 // pred_check_branch
      %9704 = sbr.rel (0) target = $region57
    $region56: #{tpu_custom_call.1} parent=1 // pred_region
      %9705 = dma.done [#allocation3], 128
    $region57: #{tpu_custom_call.1} parent=1 // pred_fallthru
      _
    %9706 = vsyncpa [#allocation3], 1

</llo_original>
